<compile_context>
chip_gen: v5e
topology: v5e:2x2
jax: 0.10.0
libtpu: 0.0.40
codegen_flags: <defaults>
</compile_context>

<pallas_src>
import functools

import jax
import jax.numpy as jnp
from jax import lax
from jax.experimental import pallas as pl
from jax.experimental.pallas import tpu as pltpu

TM_MAX = 2048   # max flattened output rows per grid step
TN_MAX = 256    # max output-channel tile (MXU-friendly)


def _cdiv(a, b):
    return -(-a // b)


def _round_up(a, b):
    return _cdiv(a, b) * b


# ----------------------------------------------------------------------------
# Pallas kernel: implicit-im2col conv tile
#   x_ref : (1, slab, Cin)       bf16   flattened input rows for this tile
#   w_ref : (taps, Cin, TN)      bf16
#   b_ref : (1, TN)              f32
#   res   : (1, TM, TN)          f32    (optional fused residual)
#   o_ref : (1, TM, TN)          f32
# ----------------------------------------------------------------------------
def _conv_tap_kernel(x_ref, w_ref, b_ref, *rest, offs, relu, has_res):
    if has_res:
        res_ref, o_ref = rest
    else:
        (o_ref,) = rest
        res_ref = None

    tm = o_ref.shape[1]
    acc = None
    for t, off in enumerate(offs):                       # statically unrolled taps
        lhs = x_ref[0, pl.ds(off, tm), :]                # (TM, Cin) bf16
        part = jnp.dot(lhs, w_ref[t], preferred_element_type=jnp.float32)
        acc = part if acc is None else acc + part

    acc = acc + b_ref[...]                               # (1, TN) broadcast
    if has_res:
        acc = acc + res_ref[0]
    if relu:
        acc = jnp.maximum(acc, 0.0)
    o_ref[0] = acc.astype(o_ref.dtype)


# ----------------------------------------------------------------------------
# Stride-1 "wide" conv driver (implicit im2col)
# ----------------------------------------------------------------------------
def _wide_conv(x, w, b, Ho, Wo, relu, residual):
    """Stride-1 conv of NHWC `x` (already padded / space-to-depth'ed) with HWIO
    weights `w`; keeps the first Ho output rows and Wo output columns.

    Implicit im2col: with rows flattened as p = ho*W1 + wo, the tap (di, dj)
    contribution for output row p is x_flat[p + di*W1 + dj] @ W[di, dj]; the
    columns Wo <= wo < W1 are junk and sliced away afterwards."""
    B, H1, W1, Cin = x.shape
    kh, kw, _, Cout = w.shape

    # Pad K to a multiple of 8 (only matters for the 3-channel stem layers).
    cin_p = _round_up(Cin, 8)
    if cin_p != Cin:
        x = jnp.pad(x, ((0, 0), (0, 0), (0, 0), (0, cin_p - Cin)))
        w = jnp.pad(w, ((0, 0), (0, 0), (0, cin_p - Cin), (0, 0)))

    offs = tuple(di * W1 + dj for di in range(kh) for dj in range(kw))
    off_max = offs[-1]

    m_exact = Ho * W1                                    # "wide" rows per image
    if m_exact <= TM_MAX:
        tm, n_mt = _round_up(m_exact, 8), 1
    else:
        tm, n_mt = TM_MAX, _cdiv(m_exact, TM_MAX)
    m_pad = n_mt * tm
    slab = tm + off_max                                  # input rows per tile
    rows_needed = (n_mt - 1) * tm + slab

    x_flat = x.reshape(B, H1 * W1, cin_p)
    if rows_needed > H1 * W1:
        x_flat = jnp.pad(x_flat, ((0, 0), (0, rows_needed - H1 * W1), (0, 0)))
    if n_mt == 1:
        x_slab = x_flat[:, :slab, :][:, None]
    else:
        x_slab = jnp.stack(
            [x_flat[:, m * tm:m * tm + slab, :] for m in range(n_mt)], axis=1)
    x_slab = x_slab.reshape(B * n_mt, slab, cin_p).astype(jnp.bfloat16)

    w_r = w.reshape(kh * kw, cin_p, Cout).astype(jnp.bfloat16)
    b_r = b.reshape(1, Cout).astype(jnp.float32)

    if Cout <= TN_MAX or Cout % TN_MAX != 0:
        tn, n_ct = Cout, 1                               # full-extent N block
    else:
        tn, n_ct = TN_MAX, Cout // TN_MAX

    inputs = [x_slab, w_r, b_r]
    in_specs = [
        pl.BlockSpec((1, slab, cin_p), lambda m, n: (m, 0, 0)),
        pl.BlockSpec((kh * kw, cin_p, tn), lambda m, n: (0, 0, n)),
        pl.BlockSpec((1, tn), lambda m, n: (0, n)),
    ]

    has_res = residual is not None
    if has_res:
        r = residual
        if W1 > r.shape[2]:
            r = jnp.pad(r, ((0, 0), (0, 0), (0, W1 - r.shape[2]), (0, 0)))
        r = r.reshape(B, Ho * W1, Cout)
        if m_pad > Ho * W1:
            r = jnp.pad(r, ((0, 0), (0, m_pad - Ho * W1), (0, 0)))
        r = r.reshape(B * n_mt, tm, Cout).astype(jnp.float32)
        inputs.append(r)
        in_specs.append(pl.BlockSpec((1, tm, tn), lambda m, n: (m, 0, n)))

    out = pl.pallas_call(
        functools.partial(_conv_tap_kernel, offs=offs, relu=relu,
                          has_res=has_res),
        out_shape=jax.ShapeDtypeStruct((B * n_mt, tm, Cout), jnp.float32),
        grid_spec=pltpu.PrefetchScalarGridSpec(
            num_scalar_prefetch=0,
            grid=(B * n_mt, n_ct),
            in_specs=in_specs,
            out_specs=pl.BlockSpec((1, tm, tn), lambda m, n: (m, 0, n)),
        ),
        compiler_params=pltpu.CompilerParams(
            dimension_semantics=("parallel", "parallel"),
            vmem_limit_bytes=64 * 1024 * 1024),
    )(*inputs)

    out = out.reshape(B, m_pad, Cout)[:, :m_exact]
    out = out.reshape(B, Ho, W1, Cout)[:, :, :Wo, :]
    return out


# ----------------------------------------------------------------------------
# Conv2d front-end: padding, stride handling (space-to-depth), layouts
# ----------------------------------------------------------------------------
def _space_to_depth(x, s):
    B, H, W, C = x.shape
    H2, W2 = _round_up(H, s), _round_up(W, s)
    if (H2, W2) != (H, W):
        x = jnp.pad(x, ((0, 0), (0, H2 - H), (0, W2 - W), (0, 0)))
    x = x.reshape(B, H2 // s, s, W2 // s, s, C)
    x = jnp.transpose(x, (0, 1, 3, 2, 4, 5))
    return x.reshape(B, H2 // s, W2 // s, s * s * C)


def _weights_space_to_depth(w, s):
    kh, kw, Cin, Cout = w.shape
    kh2, kw2 = _cdiv(kh, s), _cdiv(kw, s)
    w = jnp.pad(w, ((0, kh2 * s - kh), (0, kw2 * s - kw), (0, 0), (0, 0)))
    w = w.reshape(kh2, s, kw2, s, Cin, Cout)
    w = jnp.transpose(w, (0, 2, 1, 3, 4, 5))             # (kh2, kw2, p, q, Cin, Cout)
    return w.reshape(kh2, kw2, s * s * Cin, Cout)


@functools.partial(jax.jit, static_argnames=("stride", "padding", "relu"))
def conv2d(x, w_oihw, b=None, residual=None, *, stride=1, padding=0, relu=False):
    """NHWC conv.  w_oihw: (Cout, Cin, kh, kw) (PyTorch layout).  Optional fused
    residual add (same NHWC shape as the output) followed by optional ReLU."""
    Cout = w_oihw.shape[0]
    if b is None:
        b = jnp.zeros((Cout,), jnp.float32)
    w = jnp.transpose(w_oihw, (2, 3, 1, 0))              # HWIO
    kh, kw = int(w.shape[0]), int(w.shape[1])

    if padding > 0:
        x = jnp.pad(x, ((0, 0), (padding, padding), (padding, padding), (0, 0)))
    Hp, Wp = int(x.shape[1]), int(x.shape[2])
    Ho = (Hp - kh) // stride + 1
    Wo = (Wp - kw) // stride + 1

    if stride > 1:
        if kh == 1 and kw == 1:
            x = x[:, ::stride, ::stride, :]
        else:
            x = _space_to_depth(x, stride)
            w = _weights_space_to_depth(w, stride)
            kh, kw = int(w.shape[0]), int(w.shape[1])

    return _wide_conv(x, w, b, Ho, Wo, relu, residual)


# ----------------------------------------------------------------------------
# Plain-JAX glue (NHWC): maxpool, bilinear resize, BN folding
# TODO(synk): maxpool / bilinear blend / pad+concat stay as XLA ops (glue).
# ----------------------------------------------------------------------------
def maxpool3x3s2(x):
    return lax.reduce_window(
        x, -jnp.inf, lax.max,
        window_dimensions=(1, 3, 3, 1),
        window_strides=(1, 2, 2, 1),
        padding=((0, 0), (1, 1), (1, 1), (0, 0)))


def _interp_matrix(n_in, n_out):
    # align_corners=True bilinear weights, closed form, gather-free.
    denom = max(n_out - 1, 1)
    src = jnp.arange(n_out, dtype=jnp.float32) * (float(n_in - 1) / float(denom))
    idx = jnp.arange(n_in, dtype=jnp.float32)
    return jnp.maximum(0.0, 1.0 - jnp.abs(src[:, None] - idx[None, :]))


def bilinear_resize(x, out_hw):
    """NHWC bilinear resize, align_corners=True, gather-free (dense blend)."""
    Ho, Wo = int(out_hw[0]), int(out_hw[1])
    B, H, W, C = x.shape
    if (Ho, Wo) == (H, W):
        return x
    if Ho != H:
        x = jnp.einsum("oh,bhwc->bowc", _interp_matrix(H, Ho), x)
    if Wo != W:
        x = jnp.einsum("ow,bhwc->bhoc", _interp_matrix(W, Wo), x)
    return x


def fold_bn(w, conv_b, bn, eps=1e-5):
    scale = bn["gamma"] / jnp.sqrt(bn["var"] + eps)
    w2 = w * scale[:, None, None, None]
    b0 = conv_b if conv_b is not None else 0.0
    b2 = (b0 - bn["mean"]) * scale + bn["beta"]
    return w2, b2


# ----------------------------------------------------------------------------
# Deterministic parameter construction (synthetic init, no checkpoint load)
# ----------------------------------------------------------------------------
class PInit:
    def __init__(self, seed=0):
        self.key = jax.random.PRNGKey(seed)

    def normal(self, shape, scale=0.05):
        self.key, sub = jax.random.split(self.key)
        return scale * jax.random.normal(sub, shape, jnp.float32)

    def conv(self, cout, cin, k, bias=True):
        fan_in = cin * k * k
        w = self.normal((cout, cin, k, k), scale=1.0 / (fan_in ** 0.5))
        b = self.normal((cout,)) if bias else None
        return {"w": w, "b": b}

    def bn(self, c):
        return {"gamma": 1.0 + self.normal((c,)),
                "beta": self.normal((c,)),
                "mean": self.normal((c,)),
                "var": 1.0 + jnp.abs(self.normal((c,)))}


def make_basic_block(pi, cin, cout, stride):
    blk = {"stride": stride,
           "conv1": pi.conv(cout, cin, 3, bias=False), "bn1": pi.bn(cout),
           "conv2": pi.conv(cout, cout, 3, bias=False), "bn2": pi.bn(cout)}
    if stride != 1 or cin != cout:
        blk["down_conv"] = pi.conv(cout, cin, 1, bias=False)
        blk["down_bn"] = pi.bn(cout)
    return blk


def make_resnet34(pi):
    params = {"conv1": pi.conv(64, 3, 7, bias=False), "bn1": pi.bn(64)}
    cfg = [("layer1", 64, 64, 3, 1), ("layer2", 64, 128, 4, 2),
           ("layer3", 128, 256, 6, 2), ("layer4", 256, 512, 3, 2)]
    for name, cin, cout, n_blocks, stride in cfg:
        blocks = []
        for bi in range(n_blocks):
            s = stride if bi == 0 else 1
            c_in = cin if bi == 0 else cout
            blocks.append(make_basic_block(pi, c_in, cout, s))
        params[name] = blocks
    return params


def make_unet_params(n_class, seed=0):
    pi = PInit(seed)
    return {"resnet": make_resnet34(pi),
            "layer0_1x1": pi.conv(64, 64, 1),
            "layer1_1x1": pi.conv(64, 64, 1),
            "layer2_1x1": pi.conv(128, 128, 1),
            "layer3_1x1": pi.conv(256, 256, 1),
            "layer4_1x1": pi.conv(512, 512, 1),
            "conv_up3": pi.conv(512, 256 + 512, 3),
            "conv_up2": pi.conv(256, 128 + 512, 3),
            "conv_up1": pi.conv(256, 64 + 256, 3),
            "conv_up0": pi.conv(128, 64 + 256, 3),
            "conv_original_size0": pi.conv(64, 3, 3),
            "conv_original_size1": pi.conv(64, 64, 3),
            "conv_original_size2": pi.conv(64, 64 + 128, 3),
            "conv_last": pi.conv(n_class, 64, 1)}


# ----------------------------------------------------------------------------
# Forward pass (NHWC internally)
# ----------------------------------------------------------------------------
def convrelu_fwd(x, pconv, padding):
    return conv2d(x, pconv["w"], pconv["b"], stride=1, padding=padding, relu=True)


def basic_block_fwd(x, blk):
    stride = blk["stride"]
    w1, b1 = fold_bn(blk["conv1"]["w"], None, blk["bn1"])
    out = conv2d(x, w1, b1, stride=stride, padding=1, relu=True)
    if "down_conv" in blk:
        wd, bd = fold_bn(blk["down_conv"]["w"], None, blk["down_bn"])
        identity = conv2d(x, wd, bd, stride=stride, padding=0, relu=False)
    else:
        identity = x
    w2, b2 = fold_bn(blk["conv2"]["w"], None, blk["bn2"])
    # residual add + ReLU fused into the conv2 epilogue (single HBM pass)
    return conv2d(out, w2, b2, residual=identity, stride=1, padding=1, relu=True)


def resnet_encoder(x, rp):
    w, b = fold_bn(rp["conv1"]["w"], None, rp["bn1"])
    layer0 = conv2d(x, w, b, stride=2, padding=3, relu=True)
    h = maxpool3x3s2(layer0)
    feats = []
    for name in ("layer1", "layer2", "layer3", "layer4"):
        for blk in rp[name]:
            h = basic_block_fwd(h, blk)
        feats.append(h)
    layer1, layer2, layer3, layer4 = feats
    return layer0, layer1, layer2, layer3, layer4


def resnet_unet_forward(x_nchw, p):
    x = jnp.transpose(x_nchw, (0, 2, 3, 1))          # NHWC internally

    x_original = convrelu_fwd(x, p["conv_original_size0"], 1)
    x_original = convrelu_fwd(x_original, p["conv_original_size1"], 1)

    layer0, layer1, layer2, layer3, layer4 = resnet_encoder(x, p["resnet"])

    layer4 = convrelu_fwd(layer4, p["layer4_1x1"], 0)
    u = bilinear_resize(layer4, (layer4.shape[1] * 2, layer4.shape[2] * 2))
    layer3 = convrelu_fwd(layer3, p["layer3_1x1"], 0)
    if u.shape[1:3] != layer3.shape[1:3]:
        u = bilinear_resize(u, layer3.shape[1:3])
    u = jnp.concatenate([u, layer3], axis=-1)
    u = convrelu_fwd(u, p["conv_up3"], 1)

    u = bilinear_resize(u, (u.shape[1] * 2, u.shape[2] * 2))
    layer2 = convrelu_fwd(layer2, p["layer2_1x1"], 0)
    if u.shape[1:3] != layer2.shape[1:3]:
        u = bilinear_resize(u, layer2.shape[1:3])
    u = jnp.concatenate([u, layer2], axis=-1)
    u = convrelu_fwd(u, p["conv_up2"], 1)

    u = bilinear_resize(u, (u.shape[1] * 2, u.shape[2] * 2))
    layer1 = convrelu_fwd(layer1, p["layer1_1x1"], 0)
    if u.shape[1:3] != layer1.shape[1:3]:
        u = bilinear_resize(u, layer1.shape[1:3])
    u = jnp.concatenate([u, layer1], axis=-1)
    u = convrelu_fwd(u, p["conv_up1"], 1)

    u = bilinear_resize(u, (u.shape[1] * 2, u.shape[2] * 2))
    layer0 = convrelu_fwd(layer0, p["layer0_1x1"], 0)
    if u.shape[1:3] != layer0.shape[1:3]:
        u = bilinear_resize(u, layer0.shape[1:3])
    u = jnp.concatenate([u, layer0], axis=-1)
    u = convrelu_fwd(u, p["conv_up0"], 1)

    u = bilinear_resize(u, (u.shape[1] * 2, u.shape[2] * 2))
    if u.shape[1:3] != x_original.shape[1:3]:
        u = bilinear_resize(u, x_original.shape[1:3])
    u = jnp.concatenate([u, x_original], axis=-1)
    u = convrelu_fwd(u, p["conv_original_size2"], 1)

    out = conv2d(u, p["conv_last"]["w"], p["conv_last"]["b"],
                 stride=1, padding=0, relu=False)
    return jnp.transpose(out, (0, 3, 1, 2))          # back to NCHW


# ----------------------------------------------------------------------------
if __name__ == "__main__":
    n_class = 3
    B, C, H, W = 2, 3, 32, 32  # small but divisible by 32 (encoder stride)

    key = jax.random.PRNGKey(0)
    x = jax.random.normal(key, (B, C, H, W), jnp.float32)

    params = make_unet_params(n_class, seed=0)

    out = resnet_unet_forward(x, params)
    out = jax.block_until_ready(out)

    assert out.shape == (B, n_class, H, W), out.shape
    assert bool(jnp.all(jnp.isfinite(out))), "non-finite output"
    print("KERNEL_OK")
</pallas_src>

<mosaic_0001>
module attributes {stable_mosaic.version = 11 : i64} {
  func.func @_conv_tap_kernel(%arg0: i32, %arg1: i32, %arg2: memref<1x1158x8xbf16, #tpu.memory_space<vmem>>, %arg3: memref<9x8x64xbf16, #tpu.memory_space<vmem>>, %arg4: memref<1x64xf32, #tpu.memory_space<vmem>>, %arg5: memref<1x1088x64xf32, #tpu.memory_space<vmem>>) attributes {dimension_semantics = [#tpu.dimension_semantics<parallel>, #tpu.dimension_semantics<parallel>], iteration_bounds = array<i64: 2, 1>, scalar_prefetch = 0 : i64, scratch_operands = 0 : i64, tpu.core_type = #tpu.core_type<tc>, window_params = [{transform_indices = @transform_0, window_bounds = array<i64: 1, 1158, 8>}, {transform_indices = @transform_1, window_bounds = array<i64: 9, 8, 64>}, {transform_indices = @transform_2, window_bounds = array<i64: 1, 64>}, {transform_indices = @transform_3, window_bounds = array<i64: 1, 1088, 64>}]} {
    %c0 = arith.constant 0 : index
    %c0_0 = arith.constant 0 : index
    %c0_1 = arith.constant 0 : index
    %0 = vector.load %arg2[%c0, %c0_0, %c0_1] : memref<1x1158x8xbf16, #tpu.memory_space<vmem>>, vector<1x1088x8xbf16>
    %1 = vector.shape_cast %0 : vector<1x1088x8xbf16> to vector<1088x8xbf16>
    %c0_2 = arith.constant 0 : index
    %c0_3 = arith.constant 0 : index
    %c0_4 = arith.constant 0 : index
    %2 = vector.load %arg3[%c0_2, %c0_3, %c0_4] : memref<9x8x64xbf16, #tpu.memory_space<vmem>>, vector<1x8x64xbf16>
    %3 = vector.shape_cast %2 : vector<1x8x64xbf16> to vector<8x64xbf16>
    %cst = arith.constant dense<0.000000e+00> : vector<1088x64xf32>
    %4 = tpu.matmul %1, %3, %cst {dimension_numbers = #tpu.dot_dimension_numbers<[1], [0], [0], [1], [0, 0, 1, 1], [], []>} : vector<1088x8xbf16>, vector<8x64xbf16>, vector<1088x64xf32> -> vector<1088x64xf32>
    %c0_5 = arith.constant 0 : index
    %c1 = arith.constant 1 : index
    %c0_6 = arith.constant 0 : index
    %5 = vector.load %arg2[%c0_5, %c1, %c0_6] : memref<1x1158x8xbf16, #tpu.memory_space<vmem>>, vector<1x1088x8xbf16>
    %6 = vector.shape_cast %5 : vector<1x1088x8xbf16> to vector<1088x8xbf16>
    %c1_7 = arith.constant 1 : index
    %c0_8 = arith.constant 0 : index
    %c0_9 = arith.constant 0 : index
    %7 = vector.load %arg3[%c1_7, %c0_8, %c0_9] : memref<9x8x64xbf16, #tpu.memory_space<vmem>>, vector<1x8x64xbf16>
    %8 = vector.shape_cast %7 : vector<1x8x64xbf16> to vector<8x64xbf16>
    %cst_10 = arith.constant dense<0.000000e+00> : vector<1088x64xf32>
    %9 = tpu.matmul %6, %8, %cst_10 {dimension_numbers = #tpu.dot_dimension_numbers<[1], [0], [0], [1], [0, 0, 1, 1], [], []>} : vector<1088x8xbf16>, vector<8x64xbf16>, vector<1088x64xf32> -> vector<1088x64xf32>
    %10 = arith.addf %4, %9 : vector<1088x64xf32>
    %c0_11 = arith.constant 0 : index
    %c2 = arith.constant 2 : index
    %c0_12 = arith.constant 0 : index
    %11 = vector.load %arg2[%c0_11, %c2, %c0_12] : memref<1x1158x8xbf16, #tpu.memory_space<vmem>>, vector<1x1088x8xbf16>
    %12 = vector.shape_cast %11 : vector<1x1088x8xbf16> to vector<1088x8xbf16>
    %c2_13 = arith.constant 2 : index
    %c0_14 = arith.constant 0 : index
    %c0_15 = arith.constant 0 : index
    %13 = vector.load %arg3[%c2_13, %c0_14, %c0_15] : memref<9x8x64xbf16, #tpu.memory_space<vmem>>, vector<1x8x64xbf16>
    %14 = vector.shape_cast %13 : vector<1x8x64xbf16> to vector<8x64xbf16>
    %cst_16 = arith.constant dense<0.000000e+00> : vector<1088x64xf32>
    %15 = tpu.matmul %12, %14, %cst_16 {dimension_numbers = #tpu.dot_dimension_numbers<[1], [0], [0], [1], [0, 0, 1, 1], [], []>} : vector<1088x8xbf16>, vector<8x64xbf16>, vector<1088x64xf32> -> vector<1088x64xf32>
    %16 = arith.addf %10, %15 : vector<1088x64xf32>
    %c0_17 = arith.constant 0 : index
    %c34 = arith.constant 34 : index
    %c0_18 = arith.constant 0 : index
    %17 = vector.load %arg2[%c0_17, %c34, %c0_18] : memref<1x1158x8xbf16, #tpu.memory_space<vmem>>, vector<1x1088x8xbf16>
    %18 = vector.shape_cast %17 : vector<1x1088x8xbf16> to vector<1088x8xbf16>
    %c3 = arith.constant 3 : index
    %c0_19 = arith.constant 0 : index
    %c0_20 = arith.constant 0 : index
    %19 = vector.load %arg3[%c3, %c0_19, %c0_20] : memref<9x8x64xbf16, #tpu.memory_space<vmem>>, vector<1x8x64xbf16>
    %20 = vector.shape_cast %19 : vector<1x8x64xbf16> to vector<8x64xbf16>
    %cst_21 = arith.constant dense<0.000000e+00> : vector<1088x64xf32>
    %21 = tpu.matmul %18, %20, %cst_21 {dimension_numbers = #tpu.dot_dimension_numbers<[1], [0], [0], [1], [0, 0, 1, 1], [], []>} : vector<1088x8xbf16>, vector<8x64xbf16>, vector<1088x64xf32> -> vector<1088x64xf32>
    %22 = arith.addf %16, %21 : vector<1088x64xf32>
    %c0_22 = arith.constant 0 : index
    %c35 = arith.constant 35 : index
    %c0_23 = arith.constant 0 : index
    %23 = vector.load %arg2[%c0_22, %c35, %c0_23] : memref<1x1158x8xbf16, #tpu.memory_space<vmem>>, vector<1x1088x8xbf16>
    %24 = vector.shape_cast %23 : vector<1x1088x8xbf16> to vector<1088x8xbf16>
    %c4 = arith.constant 4 : index
    %c0_24 = arith.constant 0 : index
    %c0_25 = arith.constant 0 : index
    %25 = vector.load %arg3[%c4, %c0_24, %c0_25] : memref<9x8x64xbf16, #tpu.memory_space<vmem>>, vector<1x8x64xbf16>
    %26 = vector.shape_cast %25 : vector<1x8x64xbf16> to vector<8x64xbf16>
    %cst_26 = arith.constant dense<0.000000e+00> : vector<1088x64xf32>
    %27 = tpu.matmul %24, %26, %cst_26 {dimension_numbers = #tpu.dot_dimension_numbers<[1], [0], [0], [1], [0, 0, 1, 1], [], []>} : vector<1088x8xbf16>, vector<8x64xbf16>, vector<1088x64xf32> -> vector<1088x64xf32>
    %28 = arith.addf %22, %27 : vector<1088x64xf32>
    %c0_27 = arith.constant 0 : index
    %c36 = arith.constant 36 : index
    %c0_28 = arith.constant 0 : index
    %29 = vector.load %arg2[%c0_27, %c36, %c0_28] : memref<1x1158x8xbf16, #tpu.memory_space<vmem>>, vector<1x1088x8xbf16>
    %30 = vector.shape_cast %29 : vector<1x1088x8xbf16> to vector<1088x8xbf16>
    %c5 = arith.constant 5 : index
    %c0_29 = arith.constant 0 : index
    %c0_30 = arith.constant 0 : index
    %31 = vector.load %arg3[%c5, %c0_29, %c0_30] : memref<9x8x64xbf16, #tpu.memory_space<vmem>>, vector<1x8x64xbf16>
    %32 = vector.shape_cast %31 : vector<1x8x64xbf16> to vector<8x64xbf16>
    %cst_31 = arith.constant dense<0.000000e+00> : vector<1088x64xf32>
    %33 = tpu.matmul %30, %32, %cst_31 {dimension_numbers = #tpu.dot_dimension_numbers<[1], [0], [0], [1], [0, 0, 1, 1], [], []>} : vector<1088x8xbf16>, vector<8x64xbf16>, vector<1088x64xf32> -> vector<1088x64xf32>
    %34 = arith.addf %28, %33 : vector<1088x64xf32>
    %c0_32 = arith.constant 0 : index
    %c68 = arith.constant 68 : index
    %c0_33 = arith.constant 0 : index
    %35 = vector.load %arg2[%c0_32, %c68, %c0_33] : memref<1x1158x8xbf16, #tpu.memory_space<vmem>>, vector<1x1088x8xbf16>
    %36 = vector.shape_cast %35 : vector<1x1088x8xbf16> to vector<1088x8xbf16>
    %c6 = arith.constant 6 : index
    %c0_34 = arith.constant 0 : index
    %c0_35 = arith.constant 0 : index
    %37 = vector.load %arg3[%c6, %c0_34, %c0_35] : memref<9x8x64xbf16, #tpu.memory_space<vmem>>, vector<1x8x64xbf16>
    %38 = vector.shape_cast %37 : vector<1x8x64xbf16> to vector<8x64xbf16>
    %cst_36 = arith.constant dense<0.000000e+00> : vector<1088x64xf32>
    %39 = tpu.matmul %36, %38, %cst_36 {dimension_numbers = #tpu.dot_dimension_numbers<[1], [0], [0], [1], [0, 0, 1, 1], [], []>} : vector<1088x8xbf16>, vector<8x64xbf16>, vector<1088x64xf32> -> vector<1088x64xf32>
    %40 = arith.addf %34, %39 : vector<1088x64xf32>
    %c0_37 = arith.constant 0 : index
    %c69 = arith.constant 69 : index
    %c0_38 = arith.constant 0 : index
    %41 = vector.load %arg2[%c0_37, %c69, %c0_38] : memref<1x1158x8xbf16, #tpu.memory_space<vmem>>, vector<1x1088x8xbf16>
    %42 = vector.shape_cast %41 : vector<1x1088x8xbf16> to vector<1088x8xbf16>
    %c7 = arith.constant 7 : index
    %c0_39 = arith.constant 0 : index
    %c0_40 = arith.constant 0 : index
    %43 = vector.load %arg3[%c7, %c0_39, %c0_40] : memref<9x8x64xbf16, #tpu.memory_space<vmem>>, vector<1x8x64xbf16>
    %44 = vector.shape_cast %43 : vector<1x8x64xbf16> to vector<8x64xbf16>
    %cst_41 = arith.constant dense<0.000000e+00> : vector<1088x64xf32>
    %45 = tpu.matmul %42, %44, %cst_41 {dimension_numbers = #tpu.dot_dimension_numbers<[1], [0], [0], [1], [0, 0, 1, 1], [], []>} : vector<1088x8xbf16>, vector<8x64xbf16>, vector<1088x64xf32> -> vector<1088x64xf32>
    %46 = arith.addf %40, %45 : vector<1088x64xf32>
    %c0_42 = arith.constant 0 : index
    %c70 = arith.constant 70 : index
    %c0_43 = arith.constant 0 : index
    %47 = vector.load %arg2[%c0_42, %c70, %c0_43] : memref<1x1158x8xbf16, #tpu.memory_space<vmem>>, vector<1x1088x8xbf16>
    %48 = vector.shape_cast %47 : vector<1x1088x8xbf16> to vector<1088x8xbf16>
    %c8 = arith.constant 8 : index
    %c0_44 = arith.constant 0 : index
    %c0_45 = arith.constant 0 : index
    %49 = vector.load %arg3[%c8, %c0_44, %c0_45] : memref<9x8x64xbf16, #tpu.memory_space<vmem>>, vector<1x8x64xbf16>
    %50 = vector.shape_cast %49 : vector<1x8x64xbf16> to vector<8x64xbf16>
    %cst_46 = arith.constant dense<0.000000e+00> : vector<1088x64xf32>
    %51 = tpu.matmul %48, %50, %cst_46 {dimension_numbers = #tpu.dot_dimension_numbers<[1], [0], [0], [1], [0, 0, 1, 1], [], []>} : vector<1088x8xbf16>, vector<8x64xbf16>, vector<1088x64xf32> -> vector<1088x64xf32>
    %52 = arith.addf %46, %51 : vector<1088x64xf32>
    %c0_47 = arith.constant 0 : index
    %c0_48 = arith.constant 0 : index
    %53 = vector.load %arg4[%c0_47, %c0_48] : memref<1x64xf32, #tpu.memory_space<vmem>>, vector<1x64xf32>
    %54 = vector.broadcast %53 : vector<1x64xf32> to vector<1088x64xf32>
    %55 = arith.addf %52, %54 : vector<1088x64xf32>
    %cst_49 = arith.constant 0.000000e+00 : f32
    %56 = vector.broadcast %cst_49 : f32 to vector<1088x64xf32>
    %57 = arith.maximumf %55, %56 : vector<1088x64xf32>
    %c0_50 = arith.constant 0 : index
    %c0_51 = arith.constant 0 : index
    %c0_52 = arith.constant 0 : index
    %58 = vector.load %arg5[%c0_50, %c0_51, %c0_52] : memref<1x1088x64xf32, #tpu.memory_space<vmem>>, vector<1x1088x64xf32>
    %59 = vector.shape_cast %58 : vector<1x1088x64xf32> to vector<1088x64xf32>
    %60 = vector.shape_cast %57 : vector<1088x64xf32> to vector<1x1088x64xf32>
    tpu.vector_store %arg5[%c0_50, %c0_51, %c0_52], %60 {strides = array<i32>} : memref<1x1088x64xf32, #tpu.memory_space<vmem>>, vector<1x1088x64xf32>,
    return
  }
  func.func @transform_0(%arg0: i32, %arg1: i32) -> (i32, i32, i32) {
    %c0_i32 = arith.constant 0 : i32
    %c0_i32_0 = arith.constant 0 : i32
    %c0_i32_1 = arith.constant 0 : i32
    return %arg0, %c0_i32, %c0_i32_0 : i32, i32, i32
  }
  func.func @transform_1(%arg0: i32, %arg1: i32) -> (i32, i32, i32) {
    %c0_i32 = arith.constant 0 : i32
    %c0_i32_0 = arith.constant 0 : i32
    %c0_i32_1 = arith.constant 0 : i32
    return %c0_i32, %c0_i32_0, %arg1 : i32, i32, i32
  }
  func.func @transform_2(%arg0: i32, %arg1: i32) -> (i32, i32) {
    %c0_i32 = arith.constant 0 : i32
    %c0_i32_0 = arith.constant 0 : i32
    return %c0_i32, %arg1 : i32, i32
  }
  func.func @transform_3(%arg0: i32, %arg1: i32) -> (i32, i32, i32) {
    %c0_i32 = arith.constant 0 : i32
    %c0_i32_0 = arith.constant 0 : i32
    return %arg0, %c0_i32, %arg1 : i32, i32, i32
  }
}

</mosaic_0001>

<llo_original>
// kernel: conv2d.1
$region0: #{conv2d.1}
  #allocation0 [shape = 'u32[]', space=smem, size = 0x4, offset = 0x4, fixed_abs, tag = 'smem constant byte address 0x4 - core index']
  #allocation1 [shape = 'u32[72,128]{1,0:T(1,128)}', space=vmem, size = 0x9000, scoped, tag = 'internal scratch']
  %s0 = inlined_call_operand.vmem [shape: bf16[2,1158,8], index: 0, kind: input, shape index: {}]
  %s1 = inlined_call_operand.vmem [shape: bf16[9,8,64], index: 1, kind: input, shape index: {}]
  %s2 = inlined_call_operand.vmem [shape: f32[1,64], index: 2, kind: input, shape index: {}]
  %s3 = inlined_call_operand.vmem [shape: f32[2,1088,64], index: 3, kind: output, shape index: {}]
  %s4 = sld [smem:[#allocation0]]
  $region45: #{conv2d.1} parent=0
    _
  %s6 = ssub.s32 1, %s4
  %s7 = scalar_select 0, %s6, %s4
  loop: start=0, step=1, limit=4
  $region2: #{conv2d.1} parent=0 // loop_pre_header
    _
  $region3: #{conv2d.1} parent=0 // loop_header
    %s9 = sphi 0, %s13
    %p10 = scmp.ge.s32.totalorder %s9, 4
    %s16 = sphi 0, %s28
    %s17 = sphi 0, %s24
    %s18 = sphi 0, %s16
    %s19 = sphi 0, %s17
    %s20 = sphi 0, %s18
    %s21 = sphi 0, %s19
    %s31 = sphi 0, %s33
    %s34 = sphi 0, %s31
    %s35 = sphi 0, %s34
    %s51 = sphi 0, %s35
    %s57 = sphi 0, %s59
    %s60 = sphi 0, %s57
    %s61 = sphi 0, %s60
    %s77 = sphi 0, %s61
    %s83 = sphi 0, %s85
    %s86 = sphi 0, %s83
    %s87 = sphi 0, %s86
    %s103 = sphi 0, %s87
    %s111 = sphi 0, %s113
    %s114 = sphi 0, %s111
    %s115 = sphi 0, %s114
    %s131 = sphi 0, %s115
  $region4: #{conv2d.1} parent=0 // loop_header_branch
    %12 = sbr.rel (%p10) target = $region8
  $region5: #{conv2d.1} parent=0 // loop_body
    %s14 = ssub.s32 %s9, 1
    %s15 = ssub.s32 %s9, 2
    %s22 = sadd.s32 1, %s17
    %p23 = scmp.ge.s32.totalorder %s22, 1
    %s24 = scalar_select %p23, 0, %s22
    %s25 = sadd.s32 1, %s16
    %s26 = scalar_select %p23, %s25, %s16
    %p27 = scmp.ge.s32.totalorder %s26, 2
    %s28 = scalar_select %p27, 0, %s26
    %s29 = ssub.s32 %s16, %s28
    %p30 = scmp.eq.s32.totalorder %s29, 0
    %s32 = sadd.s32 %s31, 1
    %s33 = scalar_select %p30, %s31, %s32
    %p36 = pneg %p30
    %p37 = scmp.eq.s32.totalorder %s9, 1
    %p38 = por %p36, %p37
    %p39 = scmp.ne.s32.totalorder %s31, %s34
    %p40 = scmp.eq.s32.totalorder %s9, 0
    %p41 = por %p39, %p40
    %p42 = scmp.ne.s32.totalorder %s31, %s34
    %p43 = scmp.eq.s32.totalorder %s14, 1
    %p44 = por %p42, %p43
    %p45 = scmp.ne.s32.totalorder %s34, %s35
    %p46 = scmp.eq.s32.totalorder %s14, 0
    %p47 = por %p45, %p46
    %p48 = scmp.ne.s32.totalorder %s34, %s35
    %p49 = scmp.eq.s32.totalorder %s15, 1
    %p50 = por %p48, %p49
    %p52 = scmp.ne.s32.totalorder %s35, %s51
    %p53 = scmp.eq.s32.totalorder %s15, 0
    %p54 = por %p52, %p53
    %s55 = ssub.s32 %s17, %s24
    %p56 = scmp.eq.s32.totalorder %s55, 0
    %s58 = sadd.s32 %s57, 1
    %s59 = scalar_select %p56, %s57, %s58
    %p62 = pneg %p56
    %p63 = scmp.eq.s32.totalorder %s9, 1
    %p64 = por %p62, %p63
    %p65 = scmp.ne.s32.totalorder %s57, %s60
    %p66 = scmp.eq.s32.totalorder %s9, 0
    %p67 = por %p65, %p66
    %p68 = scmp.ne.s32.totalorder %s57, %s60
    %p69 = scmp.eq.s32.totalorder %s14, 1
    %p70 = por %p68, %p69
    %p71 = scmp.ne.s32.totalorder %s60, %s61
    %p72 = scmp.eq.s32.totalorder %s14, 0
    %p73 = por %p71, %p72
    %p74 = scmp.ne.s32.totalorder %s60, %s61
    %p75 = scmp.eq.s32.totalorder %s15, 1
    %p76 = por %p74, %p75
    %p78 = scmp.ne.s32.totalorder %s61, %s77
    %p79 = scmp.eq.s32.totalorder %s15, 0
    %p80 = por %p78, %p79
    %s81 = ssub.s32 %s17, %s24
    %p82 = scmp.eq.s32.totalorder %s81, 0
    %s84 = sadd.s32 %s83, 1
    %s85 = scalar_select %p82, %s83, %s84
    %p88 = pneg %p82
    %p89 = scmp.eq.s32.totalorder %s9, 1
    %p90 = por %p88, %p89
    %p91 = scmp.ne.s32.totalorder %s83, %s86
    %p92 = scmp.eq.s32.totalorder %s9, 0
    %p93 = por %p91, %p92
    %p94 = scmp.ne.s32.totalorder %s83, %s86
    %p95 = scmp.eq.s32.totalorder %s14, 1
    %p96 = por %p94, %p95
    %p97 = scmp.ne.s32.totalorder %s86, %s87
    %p98 = scmp.eq.s32.totalorder %s14, 0
    %p99 = por %p97, %p98
    %p100 = scmp.ne.s32.totalorder %s86, %s87
    %p101 = scmp.eq.s32.totalorder %s15, 1
    %p102 = por %p100, %p101
    %p104 = scmp.ne.s32.totalorder %s87, %s103
    %p105 = scmp.eq.s32.totalorder %s15, 0
    %p106 = por %p104, %p105
    %s107 = ssub.s32 %s16, %s28
    %s108 = ssub.s32 %s17, %s24
    %s109 = sor.u32 %s107, %s108
    %p110 = scmp.eq.s32.totalorder %s109, 0
    %s112 = sadd.s32 %s111, 1
    %s113 = scalar_select %p110, %s111, %s112
    %p116 = pneg %p110
    %p117 = scmp.eq.s32.totalorder %s9, 1
    %p118 = por %p116, %p117
    %p119 = scmp.ne.s32.totalorder %s111, %s114
    %p120 = scmp.eq.s32.totalorder %s9, 0
    %p121 = por %p119, %p120
    %p122 = scmp.ne.s32.totalorder %s111, %s114
    %p123 = scmp.eq.s32.totalorder %s14, 1
    %p124 = por %p122, %p123
    %p125 = scmp.ne.s32.totalorder %s114, %s115
    %p126 = scmp.eq.s32.totalorder %s14, 0
    %p127 = por %p125, %p126
    %p128 = scmp.ne.s32.totalorder %s114, %s115
    %p129 = scmp.eq.s32.totalorder %s15, 1
    %p130 = por %p128, %p129
    %p132 = scmp.ne.s32.totalorder %s115, %s131
    %p133 = scmp.eq.s32.totalorder %s15, 0
    %p134 = por %p132, %p133
    %p135 = scmp.le.s32.totalorder 1, %s9
    %p136 = scmp.lt.s32.totalorder %s9, 3
    %p137 = pnand %p135, %p136
    %p138 = pneg %p137
    // Predicated region
    $region9: #{conv2d.1} parent=5 // pred_check
      _
    $region10: #{conv2d.1} parent=5 // pred_check_branch
      %140 = sbr.rel (%p137) target = $region12
    $region11: #{conv2d.1} parent=5 // pred_region
      %s141 = ssub.s32 %s9, 1
      // Predicated region
      $region13: #{conv2d.1} parent=11 // pred_check
        %p142 = pneg %p73
      $region14: #{conv2d.1} parent=11 // pred_check_branch
        %144 = sbr.rel (%p142) target = $region16
      $region15: #{conv2d.1} parent=11 // pred_region
        %p145 = scmp.lt.s32.totalorder %s19, 0
        %s146 = scalar_select %p145, %s19, 0
        %s147 = smul.addr %s146, 4
        %s148 = scalar_lea.vmem %s1, %s147
      $region16: #{conv2d.1} parent=11 // pred_fallthru
        _
      // Predicated region
      $region17: #{conv2d.1} parent=11 // pred_check
        %p149 = pneg %p99
      $region18: #{conv2d.1} parent=11 // pred_check_branch
        %151 = sbr.rel (%p149) target = $region20
      $region19: #{conv2d.1} parent=11 // pred_region
        %p152 = scmp.lt.s32.totalorder %s19, 0
        %s153 = scalar_select %p152, %s19, 0
        %s154 = scalar_lea.vmem %s2, %s153
      $region20: #{conv2d.1} parent=11 // pred_fallthru
        _
    $region12: #{conv2d.1} parent=5 // pred_fallthru
      _
    %p155 = scmp.lt.s32.totalorder %s9, 2
    // Predicated region
    $region21: #{conv2d.1} parent=5 // pred_check
      %p156 = pneg %p155
    $region22: #{conv2d.1} parent=5 // pred_check_branch
      %158 = sbr.rel (%p156) target = $region24
    $region23: #{conv2d.1} parent=5 // pred_region
      // Predicated region
      $region25: #{conv2d.1} parent=23 // pred_check
        %p159 = pneg %p41
      $region26: #{conv2d.1} parent=23 // pred_check_branch
        %161 = sbr.rel (%p159) target = $region28
      $region27: #{conv2d.1} parent=23 // pred_region
        %p162 = scmp.lt.s32.totalorder %s16, 1
        %s163 = scalar_select %p162, %s16, 1
        %s164 = smul.addr %s163, 145
        %s165 = smul.addr %s164, 4
        %s166 = scalar_lea.vmem %s0, %s165
      $region28: #{conv2d.1} parent=23 // pred_fallthru
        _
    $region24: #{conv2d.1} parent=5 // pred_fallthru
      _
    %p167 = scmp.le.s32.totalorder 1, %s9
    %p168 = scmp.lt.s32.totalorder %s9, 3
    %p169 = pnand %p167, %p168
    %p170 = pneg %p169
    // Predicated region
    $region29: #{conv2d.1} parent=5 // pred_check
      _
    $region30: #{conv2d.1} parent=5 // pred_check_branch
      %172 = sbr.rel (%p169) target = $region32
    $region31: #{conv2d.1} parent=5 // pred_region
      %s173 = ssub.s32 %s9, 1
      %p174 = scmp.lt.s32.totalorder %s18, 1
      %s175 = scalar_select %p174, %s18, 1
      %s176 = smul.addr %s175, 145
      %s177 = smul.addr %s176, 4
      %s178 = scalar_lea.vmem %s0, %s177
      %p179 = pneg %p47
      %p180 = pneg %p44
      %p181 = scmp.lt.s32.totalorder %s19, 0
      %s182 = scalar_select %p181, %s19, 0
      %s183 = smul.addr %s182, 4
      %s184 = scalar_lea.vmem %s1, %s183
      %p185 = pneg %p73
      %p186 = pneg %p70
      %p187 = scmp.lt.s32.totalorder %s19, 0
      %s188 = scalar_select %p187, %s19, 0
      %s189 = scalar_lea.vmem %s2, %s188
      %p190 = pneg %p99
      %p191 = pneg %p96
      %p192 = pneg %p127
      %p193 = pneg %p124
      %p194 = scmp.lt.s32.totalorder %s18, 1
      %s195 = scalar_select %p194, %s18, 1
      %p196 = scmp.lt.s32.totalorder %s19, 0
      %s197 = scalar_select %p196, %s19, 0
      %s198 = smul.addr %s195, 136
      %s199 = sadd.s32 %s197, %s198
      %s200 = smul.addr %s199, 8
      %s201 = scalar_lea.vmem %s3, %s200
      %p202 = scmp.lt.s32.totalorder %s18, 1
      %s203 = scalar_select %p202, %s18, 1
      %s204 = smul.addr %s203, 145
      %s205 = smul.addr %s204, 4
      %s206 = scalar_lea.vmem %s0, %s205
      %p207 = scmp.lt.s32.totalorder %s19, 0
      %s208 = scalar_select %p207, %s19, 0
      %s209 = smul.addr %s208, 4
      %s210 = scalar_lea.vmem %s1, %s209
      %p211 = scmp.lt.s32.totalorder %s19, 0
      %s212 = scalar_select %p211, %s19, 0
      %s213 = scalar_lea.vmem %s2, %s212
      %p214 = scmp.lt.s32.totalorder %s18, 1
      %s215 = scalar_select %p214, %s18, 1
      %p216 = scmp.lt.s32.totalorder %s19, 0
      %s217 = scalar_select %p216, %s19, 0
      %s218 = smul.addr %s215, 136
      %s219 = sadd.s32 %s217, %s218
      %s220 = smul.addr %s219, 8
      %s221 = scalar_lea.vmem %s3, %s220
      %v223 = vld [vmem:[%s206] sm:$0xf]
      %v224 = vld [vmem:[%s206 + $0x4] sm:$0xf]
      %v225 = vld [vmem:[%s206 + $0x8] sm:$0xf]
      %v226 = vld [vmem:[%s206 + $0xc] sm:$0xf]
      %v227 = vld [vmem:[%s206 + $0x10] sm:$0xf]
      %v228 = vld [vmem:[%s206 + $0x14] sm:$0xf]
      %v229 = vld [vmem:[%s206 + $0x18] sm:$0xf]
      %v230 = vld [vmem:[%s206 + $0x1c] sm:$0xf]
      %v231 = vld [vmem:[%s206 + $0x20] sm:$0xf]
      %v232 = vld [vmem:[%s206 + $0x24] sm:$0xf]
      %v233 = vld [vmem:[%s206 + $0x28] sm:$0xf]
      %v234 = vld [vmem:[%s206 + $0x2c] sm:$0xf]
      %v235 = vld [vmem:[%s206 + $0x30] sm:$0xf]
      %v236 = vld [vmem:[%s206 + $0x34] sm:$0xf]
      %v237 = vld [vmem:[%s206 + $0x38] sm:$0xf]
      %v238 = vld [vmem:[%s206 + $0x3c] sm:$0xf]
      %v239 = vld [vmem:[%s206 + $0x40] sm:$0xf]
      %v240 = vld [vmem:[%s206 + $0x44] sm:$0xf]
      %v241 = vld [vmem:[%s206 + $0x48] sm:$0xf]
      %v242 = vld [vmem:[%s206 + $0x4c] sm:$0xf]
      %v243 = vld [vmem:[%s206 + $0x50] sm:$0xf]
      %v244 = vld [vmem:[%s206 + $0x54] sm:$0xf]
      %v245 = vld [vmem:[%s206 + $0x58] sm:$0xf]
      %v246 = vld [vmem:[%s206 + $0x5c] sm:$0xf]
      %v247 = vld [vmem:[%s206 + $0x60] sm:$0xf]
      %v248 = vld [vmem:[%s206 + $0x64] sm:$0xf]
      %v249 = vld [vmem:[%s206 + $0x68] sm:$0xf]
      %v250 = vld [vmem:[%s206 + $0x6c] sm:$0xf]
      %v251 = vld [vmem:[%s206 + $0x70] sm:$0xf]
      %v252 = vld [vmem:[%s206 + $0x74] sm:$0xf]
      %v253 = vld [vmem:[%s206 + $0x78] sm:$0xf]
      %v254 = vld [vmem:[%s206 + $0x7c] sm:$0xf]
      %v255 = vld [vmem:[%s206 + $0x80] sm:$0xf]
      %v256 = vld [vmem:[%s206 + $0x84] sm:$0xf]
      %v257 = vld [vmem:[%s206 + $0x88] sm:$0xf]
      %v258 = vld [vmem:[%s206 + $0x8c] sm:$0xf]
      %v259 = vld [vmem:[%s206 + $0x90] sm:$0xf]
      %v260 = vld [vmem:[%s206 + $0x94] sm:$0xf]
      %v261 = vld [vmem:[%s206 + $0x98] sm:$0xf]
      %v262 = vld [vmem:[%s206 + $0x9c] sm:$0xf]
      %v263 = vld [vmem:[%s206 + $0xa0] sm:$0xf]
      %v264 = vld [vmem:[%s206 + $0xa4] sm:$0xf]
      %v265 = vld [vmem:[%s206 + $0xa8] sm:$0xf]
      %v266 = vld [vmem:[%s206 + $0xac] sm:$0xf]
      %v267 = vld [vmem:[%s206 + $0xb0] sm:$0xf]
      %v268 = vld [vmem:[%s206 + $0xb4] sm:$0xf]
      %v269 = vld [vmem:[%s206 + $0xb8] sm:$0xf]
      %v270 = vld [vmem:[%s206 + $0xbc] sm:$0xf]
      %v271 = vld [vmem:[%s206 + $0xc0] sm:$0xf]
      %v272 = vld [vmem:[%s206 + $0xc4] sm:$0xf]
      %v273 = vld [vmem:[%s206 + $0xc8] sm:$0xf]
      %v274 = vld [vmem:[%s206 + $0xcc] sm:$0xf]
      %v275 = vld [vmem:[%s206 + $0xd0] sm:$0xf]
      %v276 = vld [vmem:[%s206 + $0xd4] sm:$0xf]
      %v277 = vld [vmem:[%s206 + $0xd8] sm:$0xf]
      %v278 = vld [vmem:[%s206 + $0xdc] sm:$0xf]
      %v279 = vld [vmem:[%s206 + $0xe0] sm:$0xf]
      %v280 = vld [vmem:[%s206 + $0xe4] sm:$0xf]
      %v281 = vld [vmem:[%s206 + $0xe8] sm:$0xf]
      %v282 = vld [vmem:[%s206 + $0xec] sm:$0xf]
      %v283 = vld [vmem:[%s206 + $0xf0] sm:$0xf]
      %v284 = vld [vmem:[%s206 + $0xf4] sm:$0xf]
      %v285 = vld [vmem:[%s206 + $0xf8] sm:$0xf]
      %v286 = vld [vmem:[%s206 + $0xfc] sm:$0xf]
      %v287 = vld [vmem:[%s206 + $0x100] sm:$0xf]
      %v288 = vld [vmem:[%s206 + $0x104] sm:$0xf]
      %v289 = vld [vmem:[%s206 + $0x108] sm:$0xf]
      %v290 = vld [vmem:[%s206 + $0x10c] sm:$0xf]
      %v291 = vld [vmem:[%s206 + $0x110] sm:$0xf]
      %v292 = vld [vmem:[%s206 + $0x114] sm:$0xf]
      %v293 = vld [vmem:[%s206 + $0x118] sm:$0xf]
      %v294 = vld [vmem:[%s206 + $0x11c] sm:$0xf]
      %v295 = vld [vmem:[%s206 + $0x120] sm:$0xf]
      %v296 = vld [vmem:[%s206 + $0x124] sm:$0xf]
      %v297 = vld [vmem:[%s206 + $0x128] sm:$0xf]
      %v298 = vld [vmem:[%s206 + $0x12c] sm:$0xf]
      %v299 = vld [vmem:[%s206 + $0x130] sm:$0xf]
      %v300 = vld [vmem:[%s206 + $0x134] sm:$0xf]
      %v301 = vld [vmem:[%s206 + $0x138] sm:$0xf]
      %v302 = vld [vmem:[%s206 + $0x13c] sm:$0xf]
      %v303 = vld [vmem:[%s206 + $0x140] sm:$0xf]
      %v304 = vld [vmem:[%s206 + $0x144] sm:$0xf]
      %v305 = vld [vmem:[%s206 + $0x148] sm:$0xf]
      %v306 = vld [vmem:[%s206 + $0x14c] sm:$0xf]
      %v307 = vld [vmem:[%s206 + $0x150] sm:$0xf]
      %v308 = vld [vmem:[%s206 + $0x154] sm:$0xf]
      %v309 = vld [vmem:[%s206 + $0x158] sm:$0xf]
      %v310 = vld [vmem:[%s206 + $0x15c] sm:$0xf]
      %v311 = vld [vmem:[%s206 + $0x160] sm:$0xf]
      %v312 = vld [vmem:[%s206 + $0x164] sm:$0xf]
      %v313 = vld [vmem:[%s206 + $0x168] sm:$0xf]
      %v314 = vld [vmem:[%s206 + $0x16c] sm:$0xf]
      %v315 = vld [vmem:[%s206 + $0x170] sm:$0xf]
      %v316 = vld [vmem:[%s206 + $0x174] sm:$0xf]
      %v317 = vld [vmem:[%s206 + $0x178] sm:$0xf]
      %v318 = vld [vmem:[%s206 + $0x17c] sm:$0xf]
      %v319 = vld [vmem:[%s206 + $0x180] sm:$0xf]
      %v320 = vld [vmem:[%s206 + $0x184] sm:$0xf]
      %v321 = vld [vmem:[%s206 + $0x188] sm:$0xf]
      %v322 = vld [vmem:[%s206 + $0x18c] sm:$0xf]
      %v323 = vld [vmem:[%s206 + $0x190] sm:$0xf]
      %v324 = vld [vmem:[%s206 + $0x194] sm:$0xf]
      %v325 = vld [vmem:[%s206 + $0x198] sm:$0xf]
      %v326 = vld [vmem:[%s206 + $0x19c] sm:$0xf]
      %v327 = vld [vmem:[%s206 + $0x1a0] sm:$0xf]
      %v328 = vld [vmem:[%s206 + $0x1a4] sm:$0xf]
      %v329 = vld [vmem:[%s206 + $0x1a8] sm:$0xf]
      %v330 = vld [vmem:[%s206 + $0x1ac] sm:$0xf]
      %v331 = vld [vmem:[%s206 + $0x1b0] sm:$0xf]
      %v332 = vld [vmem:[%s206 + $0x1b4] sm:$0xf]
      %v333 = vld [vmem:[%s206 + $0x1b8] sm:$0xf]
      %v334 = vld [vmem:[%s206 + $0x1bc] sm:$0xf]
      %v335 = vld [vmem:[%s206 + $0x1c0] sm:$0xf]
      %v336 = vld [vmem:[%s206 + $0x1c4] sm:$0xf]
      %v337 = vld [vmem:[%s206 + $0x1c8] sm:$0xf]
      %v338 = vld [vmem:[%s206 + $0x1cc] sm:$0xf]
      %v339 = vld [vmem:[%s206 + $0x1d0] sm:$0xf]
      %v340 = vld [vmem:[%s206 + $0x1d4] sm:$0xf]
      %v341 = vld [vmem:[%s206 + $0x1d8] sm:$0xf]
      %v342 = vld [vmem:[%s206 + $0x1dc] sm:$0xf]
      %v343 = vld [vmem:[%s206 + $0x1e0] sm:$0xf]
      %v344 = vld [vmem:[%s206 + $0x1e4] sm:$0xf]
      %v345 = vld [vmem:[%s206 + $0x1e8] sm:$0xf]
      %v346 = vld [vmem:[%s206 + $0x1ec] sm:$0xf]
      %v347 = vld [vmem:[%s206 + $0x1f0] sm:$0xf]
      %v348 = vld [vmem:[%s206 + $0x1f4] sm:$0xf]
      %v349 = vld [vmem:[%s206 + $0x1f8] sm:$0xf]
      %v350 = vld [vmem:[%s206 + $0x1fc] sm:$0xf]
      %v351 = vld [vmem:[%s206 + $0x200] sm:$0xf]
      %v352 = vld [vmem:[%s206 + $0x204] sm:$0xf]
      %v353 = vld [vmem:[%s206 + $0x208] sm:$0xf]
      %v354 = vld [vmem:[%s206 + $0x20c] sm:$0xf]
      %v355 = vld [vmem:[%s206 + $0x210] sm:$0xf]
      %v356 = vld [vmem:[%s206 + $0x214] sm:$0xf]
      %v357 = vld [vmem:[%s206 + $0x218] sm:$0xf]
      %v358 = vld [vmem:[%s206 + $0x21c] sm:$0xf]
      %v359 = vld [vmem:[%s210] sm:$0xf]
      %v360 = vld [vmem:[%s206 + $0x220] sm:$0x1]
      %s361 = scalar_lea.vmem %s210, 4
      %v362 = vld [vmem:[%s361] sm:$0xf]
      %v500 = vunpack.c.l.b16 %v223
      %v501 = vunpack.c.l.b16 %v224
      %v502 = vunpack.c.l.b16 %v225
      %v503 = vunpack.c.l.b16 %v226
      %v504 = vunpack.c.l.b16 %v227
      %v505 = vunpack.c.l.b16 %v228
      %v506 = vunpack.c.l.b16 %v229
      %v507 = vunpack.c.l.b16 %v230
      %v508 = vunpack.c.l.b16 %v231
      %v509 = vunpack.c.l.b16 %v232
      %v510 = vunpack.c.l.b16 %v233
      %v511 = vunpack.c.l.b16 %v234
      %v512 = vunpack.c.l.b16 %v235
      %v513 = vunpack.c.l.b16 %v236
      %v514 = vunpack.c.l.b16 %v237
      %v515 = vunpack.c.l.b16 %v238
      %v516 = vunpack.c.l.b16 %v239
      %v517 = vunpack.c.l.b16 %v240
      %v518 = vunpack.c.l.b16 %v241
      %v519 = vunpack.c.l.b16 %v242
      %v520 = vunpack.c.l.b16 %v243
      %v521 = vunpack.c.l.b16 %v244
      %v522 = vunpack.c.l.b16 %v245
      %v523 = vunpack.c.l.b16 %v246
      %v524 = vunpack.c.l.b16 %v247
      %v525 = vunpack.c.l.b16 %v248
      %v526 = vunpack.c.l.b16 %v249
      %v527 = vunpack.c.l.b16 %v250
      %v528 = vunpack.c.l.b16 %v251
      %v529 = vunpack.c.l.b16 %v252
      %v530 = vunpack.c.l.b16 %v253
      %v531 = vunpack.c.l.b16 %v254
      %v532 = vunpack.c.l.b16 %v255
      %v533 = vunpack.c.l.b16 %v256
      %v534 = vunpack.c.l.b16 %v257
      %v535 = vunpack.c.l.b16 %v258
      %v536 = vunpack.c.l.b16 %v259
      %v537 = vunpack.c.l.b16 %v260
      %v538 = vunpack.c.l.b16 %v261
      %v539 = vunpack.c.l.b16 %v262
      %v540 = vunpack.c.l.b16 %v263
      %v541 = vunpack.c.l.b16 %v264
      %v542 = vunpack.c.l.b16 %v265
      %v543 = vunpack.c.l.b16 %v266
      %v544 = vunpack.c.l.b16 %v267
      %v545 = vunpack.c.l.b16 %v268
      %v546 = vunpack.c.l.b16 %v269
      %v547 = vunpack.c.l.b16 %v270
      %v548 = vunpack.c.l.b16 %v271
      %v549 = vunpack.c.l.b16 %v272
      %v550 = vunpack.c.l.b16 %v273
      %v551 = vunpack.c.l.b16 %v274
      %v552 = vunpack.c.l.b16 %v275
      %v553 = vunpack.c.l.b16 %v276
      %v554 = vunpack.c.l.b16 %v277
      %v555 = vunpack.c.l.b16 %v278
      %v556 = vunpack.c.l.b16 %v279
      %v557 = vunpack.c.l.b16 %v280
      %v558 = vunpack.c.l.b16 %v281
      %v559 = vunpack.c.l.b16 %v282
      %v560 = vunpack.c.l.b16 %v283
      %v561 = vunpack.c.l.b16 %v284
      %v562 = vunpack.c.l.b16 %v285
      %v563 = vunpack.c.l.b16 %v286
      %v564 = vunpack.c.l.b16 %v287
      %v565 = vunpack.c.l.b16 %v288
      %v566 = vunpack.c.l.b16 %v289
      %v567 = vunpack.c.l.b16 %v290
      %v568 = vunpack.c.l.b16 %v291
      %v569 = vunpack.c.l.b16 %v292
      %v570 = vunpack.c.l.b16 %v293
      %v571 = vunpack.c.l.b16 %v294
      %v572 = vunpack.c.l.b16 %v295
      %v573 = vunpack.c.l.b16 %v296
      %v574 = vunpack.c.l.b16 %v297
      %v575 = vunpack.c.l.b16 %v298
      %v576 = vunpack.c.l.b16 %v299
      %v577 = vunpack.c.l.b16 %v300
      %v578 = vunpack.c.l.b16 %v301
      %v579 = vunpack.c.l.b16 %v302
      %v580 = vunpack.c.l.b16 %v303
      %v581 = vunpack.c.l.b16 %v304
      %v582 = vunpack.c.l.b16 %v305
      %v583 = vunpack.c.l.b16 %v306
      %v584 = vunpack.c.l.b16 %v307
      %v585 = vunpack.c.l.b16 %v308
      %v586 = vunpack.c.l.b16 %v309
      %v587 = vunpack.c.l.b16 %v310
      %v588 = vunpack.c.l.b16 %v311
      %v589 = vunpack.c.l.b16 %v312
      %v590 = vunpack.c.l.b16 %v313
      %v591 = vunpack.c.l.b16 %v314
      %v592 = vunpack.c.l.b16 %v315
      %v593 = vunpack.c.l.b16 %v316
      %v594 = vunpack.c.l.b16 %v317
      %v595 = vunpack.c.l.b16 %v318
      %v596 = vunpack.c.l.b16 %v319
      %v597 = vunpack.c.l.b16 %v320
      %v598 = vunpack.c.l.b16 %v321
      %v599 = vunpack.c.l.b16 %v322
      %v600 = vunpack.c.l.b16 %v323
      %v601 = vunpack.c.l.b16 %v324
      %v602 = vunpack.c.l.b16 %v325
      %v603 = vunpack.c.l.b16 %v326
      %v604 = vunpack.c.l.b16 %v327
      %v605 = vunpack.c.l.b16 %v328
      %v606 = vunpack.c.l.b16 %v329
      %v607 = vunpack.c.l.b16 %v330
      %v608 = vunpack.c.l.b16 %v331
      %v609 = vunpack.c.l.b16 %v332
      %v610 = vunpack.c.l.b16 %v333
      %v611 = vunpack.c.l.b16 %v334
      %v612 = vunpack.c.l.b16 %v335
      %v613 = vunpack.c.l.b16 %v336
      %v614 = vunpack.c.l.b16 %v337
      %v615 = vunpack.c.l.b16 %v338
      %v616 = vunpack.c.l.b16 %v339
      %v617 = vunpack.c.l.b16 %v340
      %v618 = vunpack.c.l.b16 %v341
      %v619 = vunpack.c.l.b16 %v342
      %v620 = vunpack.c.l.b16 %v343
      %v621 = vunpack.c.l.b16 %v344
      %v622 = vunpack.c.l.b16 %v345
      %v623 = vunpack.c.l.b16 %v346
      %v624 = vunpack.c.l.b16 %v347
      %v625 = vunpack.c.l.b16 %v348
      %v626 = vunpack.c.l.b16 %v349
      %v627 = vunpack.c.l.b16 %v350
      %v628 = vunpack.c.l.b16 %v351
      %v629 = vunpack.c.l.b16 %v352
      %v630 = vunpack.c.l.b16 %v353
      %v631 = vunpack.c.l.b16 %v354
      %v632 = vunpack.c.l.b16 %v355
      %v633 = vunpack.c.l.b16 %v356
      %v634 = vunpack.c.l.b16 %v357
      %v635 = vunpack.c.l.b16 %v358
      %v636 = vunpack.c.l.b16 %v360
      %v637 = vpack.c.b16 %v501, %v500
      %v638 = vpack.c.b16 %v503, %v502
      %v639 = vpack.c.b16 %v505, %v504
      %v640 = vpack.c.b16 %v507, %v506
      %v641 = vpack.c.b16 %v509, %v508
      %v642 = vpack.c.b16 %v511, %v510
      %v643 = vpack.c.b16 %v513, %v512
      %v644 = vpack.c.b16 %v515, %v514
      %v645 = vpack.c.b16 %v517, %v516
      %v646 = vpack.c.b16 %v519, %v518
      %v647 = vpack.c.b16 %v521, %v520
      %v648 = vpack.c.b16 %v523, %v522
      %v649 = vpack.c.b16 %v525, %v524
      %v650 = vpack.c.b16 %v527, %v526
      %v651 = vpack.c.b16 %v529, %v528
      %v652 = vpack.c.b16 %v531, %v530
      %v653 = vpack.c.b16 %v533, %v532
      %v654 = vpack.c.b16 %v535, %v534
      %v655 = vpack.c.b16 %v537, %v536
      %v656 = vpack.c.b16 %v539, %v538
      %v657 = vpack.c.b16 %v541, %v540
      %v658 = vpack.c.b16 %v543, %v542
      %v659 = vpack.c.b16 %v545, %v544
      %v660 = vpack.c.b16 %v547, %v546
      %v661 = vpack.c.b16 %v549, %v548
      %v662 = vpack.c.b16 %v551, %v550
      %v663 = vpack.c.b16 %v553, %v552
      %v664 = vpack.c.b16 %v555, %v554
      %v665 = vpack.c.b16 %v557, %v556
      %v666 = vpack.c.b16 %v559, %v558
      %v667 = vpack.c.b16 %v561, %v560
      %v668 = vpack.c.b16 %v563, %v562
      %v669 = vpack.c.b16 %v565, %v564
      %v670 = vpack.c.b16 %v567, %v566
      %v671 = vpack.c.b16 %v569, %v568
      %v672 = vpack.c.b16 %v571, %v570
      %v673 = vpack.c.b16 %v573, %v572
      %v674 = vpack.c.b16 %v575, %v574
      %v675 = vpack.c.b16 %v577, %v576
      %v676 = vpack.c.b16 %v579, %v578
      %v677 = vpack.c.b16 %v581, %v580
      %v678 = vpack.c.b16 %v583, %v582
      %v679 = vpack.c.b16 %v585, %v584
      %v680 = vpack.c.b16 %v587, %v586
      %v681 = vpack.c.b16 %v589, %v588
      %v682 = vpack.c.b16 %v591, %v590
      %v683 = vpack.c.b16 %v593, %v592
      %v684 = vpack.c.b16 %v595, %v594
      %v685 = vpack.c.b16 %v597, %v596
      %v686 = vpack.c.b16 %v599, %v598
      %v687 = vpack.c.b16 %v601, %v600
      %v688 = vpack.c.b16 %v603, %v602
      %v689 = vpack.c.b16 %v605, %v604
      %v690 = vpack.c.b16 %v607, %v606
      %v691 = vpack.c.b16 %v609, %v608
      %v692 = vpack.c.b16 %v611, %v610
      %v693 = vpack.c.b16 %v613, %v612
      %v694 = vpack.c.b16 %v615, %v614
      %v695 = vpack.c.b16 %v617, %v616
      %v696 = vpack.c.b16 %v619, %v618
      %v697 = vpack.c.b16 %v621, %v620
      %v698 = vpack.c.b16 %v623, %v622
      %v699 = vpack.c.b16 %v625, %v624
      %v700 = vpack.c.b16 %v627, %v626
      %v701 = vpack.c.b16 %v629, %v628
      %v702 = vpack.c.b16 %v631, %v630
      %v703 = vpack.c.b16 %v633, %v632
      %v704 = vpack.c.b16 %v635, %v634
      %v705 = vpack.c.b16 %v636, %v636
      %vm706 = vsmask.f32 7424
      %v708 = vshrl.u32 %v637, 16
      %v710 = vshll.u32 %v637, 16
      %v712 = vrot.slane %v710, 1
      %v713 = vor.u32 %v708, %v712
      %v715 = vshll.u32 %v638, 16
      %v717 = vrot.slane %v715, 1
      %v718 = vsel %vm706, %v713, %v717
      %v719 = vshrl.u32 %v638, 16
      %v721 = vor.u32 %v719, %v717
      %v723 = vshll.u32 %v639, 16
      %v725 = vrot.slane %v723, 1
      %v726 = vsel %vm706, %v721, %v725
      %v727 = vshrl.u32 %v639, 16
      %v729 = vor.u32 %v727, %v725
      %v731 = vshll.u32 %v640, 16
      %v733 = vrot.slane %v731, 1
      %v734 = vsel %vm706, %v729, %v733
      %v735 = vshrl.u32 %v640, 16
      %v737 = vor.u32 %v735, %v733
      %v739 = vshll.u32 %v641, 16
      %v741 = vrot.slane %v739, 1
      %v742 = vsel %vm706, %v737, %v741
      %v743 = vshrl.u32 %v641, 16
      %v745 = vor.u32 %v743, %v741
      %v747 = vshll.u32 %v642, 16
      %v749 = vrot.slane %v747, 1
      %v750 = vsel %vm706, %v745, %v749
      %v751 = vshrl.u32 %v642, 16
      %v753 = vor.u32 %v751, %v749
      %v755 = vshll.u32 %v643, 16
      %v757 = vrot.slane %v755, 1
      %v758 = vsel %vm706, %v753, %v757
      %v759 = vshrl.u32 %v643, 16
      %v761 = vor.u32 %v759, %v757
      %v763 = vshll.u32 %v644, 16
      %v765 = vrot.slane %v763, 1
      %v766 = vsel %vm706, %v761, %v765
      %v767 = vshrl.u32 %v644, 16
      %v769 = vor.u32 %v767, %v765
      %v771 = vshll.u32 %v645, 16
      %v773 = vrot.slane %v771, 1
      %v774 = vsel %vm706, %v769, %v773
      %v775 = vshrl.u32 %v645, 16
      %v777 = vor.u32 %v775, %v773
      %v779 = vshll.u32 %v646, 16
      %v781 = vrot.slane %v779, 1
      %v782 = vsel %vm706, %v777, %v781
      %v783 = vshrl.u32 %v646, 16
      %v785 = vor.u32 %v783, %v781
      %v787 = vshll.u32 %v647, 16
      %v789 = vrot.slane %v787, 1
      %v790 = vsel %vm706, %v785, %v789
      %v791 = vshrl.u32 %v647, 16
      %v793 = vor.u32 %v791, %v789
      %v795 = vshll.u32 %v648, 16
      %v797 = vrot.slane %v795, 1
      %v798 = vsel %vm706, %v793, %v797
      %v799 = vshrl.u32 %v648, 16
      %v801 = vor.u32 %v799, %v797
      %v803 = vshll.u32 %v649, 16
      %v805 = vrot.slane %v803, 1
      %v806 = vsel %vm706, %v801, %v805
      %v807 = vshrl.u32 %v649, 16
      %v809 = vor.u32 %v807, %v805
      %v811 = vshll.u32 %v650, 16
      %v813 = vrot.slane %v811, 1
      %v814 = vsel %vm706, %v809, %v813
      %v815 = vshrl.u32 %v650, 16
      %v817 = vor.u32 %v815, %v813
      %v819 = vshll.u32 %v651, 16
      %v821 = vrot.slane %v819, 1
      %v822 = vsel %vm706, %v817, %v821
      %v823 = vshrl.u32 %v651, 16
      %v825 = vor.u32 %v823, %v821
      %v827 = vshll.u32 %v652, 16
      %v829 = vrot.slane %v827, 1
      %v830 = vsel %vm706, %v825, %v829
      %v831 = vshrl.u32 %v652, 16
      %v833 = vor.u32 %v831, %v829
      %v835 = vshll.u32 %v653, 16
      %v837 = vrot.slane %v835, 1
      %v838 = vsel %vm706, %v833, %v837
      %v839 = vshrl.u32 %v653, 16
      %v841 = vor.u32 %v839, %v837
      %v843 = vshll.u32 %v654, 16
      %v845 = vrot.slane %v843, 1
      %v846 = vsel %vm706, %v841, %v845
      %v847 = vshrl.u32 %v654, 16
      %v849 = vor.u32 %v847, %v845
      %v851 = vshll.u32 %v655, 16
      %v853 = vrot.slane %v851, 1
      %v854 = vsel %vm706, %v849, %v853
      %v855 = vshrl.u32 %v655, 16
      %v857 = vor.u32 %v855, %v853
      %v859 = vshll.u32 %v656, 16
      %v861 = vrot.slane %v859, 1
      %v862 = vsel %vm706, %v857, %v861
      %v863 = vshrl.u32 %v656, 16
      %v865 = vor.u32 %v863, %v861
      %v867 = vshll.u32 %v657, 16
      %v869 = vrot.slane %v867, 1
      %v870 = vsel %vm706, %v865, %v869
      %v871 = vshrl.u32 %v657, 16
      %v873 = vor.u32 %v871, %v869
      %v875 = vshll.u32 %v658, 16
      %v877 = vrot.slane %v875, 1
      %v878 = vsel %vm706, %v873, %v877
      %v879 = vshrl.u32 %v658, 16
      %v881 = vor.u32 %v879, %v877
      %v883 = vshll.u32 %v659, 16
      %v885 = vrot.slane %v883, 1
      %v886 = vsel %vm706, %v881, %v885
      %v887 = vshrl.u32 %v659, 16
      %v889 = vor.u32 %v887, %v885
      %v891 = vshll.u32 %v660, 16
      %v893 = vrot.slane %v891, 1
      %v894 = vsel %vm706, %v889, %v893
      %v895 = vshrl.u32 %v660, 16
      %v897 = vor.u32 %v895, %v893
      %v899 = vshll.u32 %v661, 16
      %v901 = vrot.slane %v899, 1
      %v902 = vsel %vm706, %v897, %v901
      %v903 = vshrl.u32 %v661, 16
      %v905 = vor.u32 %v903, %v901
      %v907 = vshll.u32 %v662, 16
      %v909 = vrot.slane %v907, 1
      %v910 = vsel %vm706, %v905, %v909
      %v911 = vshrl.u32 %v662, 16
      %v913 = vor.u32 %v911, %v909
      %v915 = vshll.u32 %v663, 16
      %v917 = vrot.slane %v915, 1
      %v918 = vsel %vm706, %v913, %v917
      %v919 = vshrl.u32 %v663, 16
      %v921 = vor.u32 %v919, %v917
      %v923 = vshll.u32 %v664, 16
      %v925 = vrot.slane %v923, 1
      %v926 = vsel %vm706, %v921, %v925
      %v927 = vshrl.u32 %v664, 16
      %v929 = vor.u32 %v927, %v925
      %v931 = vshll.u32 %v665, 16
      %v933 = vrot.slane %v931, 1
      %v934 = vsel %vm706, %v929, %v933
      %v935 = vshrl.u32 %v665, 16
      %v937 = vor.u32 %v935, %v933
      %v939 = vshll.u32 %v666, 16
      %v941 = vrot.slane %v939, 1
      %v942 = vsel %vm706, %v937, %v941
      %v943 = vshrl.u32 %v666, 16
      %v945 = vor.u32 %v943, %v941
      %v947 = vshll.u32 %v667, 16
      %v949 = vrot.slane %v947, 1
      %v950 = vsel %vm706, %v945, %v949
      %v951 = vshrl.u32 %v667, 16
      %v953 = vor.u32 %v951, %v949
      %v955 = vshll.u32 %v668, 16
      %v957 = vrot.slane %v955, 1
      %v958 = vsel %vm706, %v953, %v957
      %v959 = vshrl.u32 %v668, 16
      %v961 = vor.u32 %v959, %v957
      %v963 = vshll.u32 %v669, 16
      %v965 = vrot.slane %v963, 1
      %v966 = vsel %vm706, %v961, %v965
      %v967 = vshrl.u32 %v669, 16
      %v969 = vor.u32 %v967, %v965
      %v971 = vshll.u32 %v670, 16
      %v973 = vrot.slane %v971, 1
      %v974 = vsel %vm706, %v969, %v973
      %v975 = vshrl.u32 %v670, 16
      %v977 = vor.u32 %v975, %v973
      %v979 = vshll.u32 %v671, 16
      %v981 = vrot.slane %v979, 1
      %v982 = vsel %vm706, %v977, %v981
      %v983 = vshrl.u32 %v671, 16
      %v985 = vor.u32 %v983, %v981
      %v987 = vshll.u32 %v672, 16
      %v989 = vrot.slane %v987, 1
      %v990 = vsel %vm706, %v985, %v989
      %v991 = vshrl.u32 %v672, 16
      %v993 = vor.u32 %v991, %v989
      %v995 = vshll.u32 %v673, 16
      %v997 = vrot.slane %v995, 1
      %v998 = vsel %vm706, %v993, %v997
      %v999 = vshrl.u32 %v673, 16
      %v1001 = vor.u32 %v999, %v997
      %v1003 = vshll.u32 %v674, 16
      %v1005 = vrot.slane %v1003, 1
      %v1006 = vsel %vm706, %v1001, %v1005
      %v1007 = vshrl.u32 %v674, 16
      %v1009 = vor.u32 %v1007, %v1005
      %v1011 = vshll.u32 %v675, 16
      %v1013 = vrot.slane %v1011, 1
      %v1014 = vsel %vm706, %v1009, %v1013
      %v1015 = vshrl.u32 %v675, 16
      %v1017 = vor.u32 %v1015, %v1013
      %v1019 = vshll.u32 %v676, 16
      %v1021 = vrot.slane %v1019, 1
      %v1022 = vsel %vm706, %v1017, %v1021
      %v1023 = vshrl.u32 %v676, 16
      %v1025 = vor.u32 %v1023, %v1021
      %v1027 = vshll.u32 %v677, 16
      %v1029 = vrot.slane %v1027, 1
      %v1030 = vsel %vm706, %v1025, %v1029
      %v1031 = vshrl.u32 %v677, 16
      %v1033 = vor.u32 %v1031, %v1029
      %v1035 = vshll.u32 %v678, 16
      %v1037 = vrot.slane %v1035, 1
      %v1038 = vsel %vm706, %v1033, %v1037
      %v1039 = vshrl.u32 %v678, 16
      %v1041 = vor.u32 %v1039, %v1037
      %v1043 = vshll.u32 %v679, 16
      %v1045 = vrot.slane %v1043, 1
      %v1046 = vsel %vm706, %v1041, %v1045
      %v1047 = vshrl.u32 %v679, 16
      %v1049 = vor.u32 %v1047, %v1045
      %v1051 = vshll.u32 %v680, 16
      %v1053 = vrot.slane %v1051, 1
      %v1054 = vsel %vm706, %v1049, %v1053
      %v1055 = vshrl.u32 %v680, 16
      %v1057 = vor.u32 %v1055, %v1053
      %v1059 = vshll.u32 %v681, 16
      %v1061 = vrot.slane %v1059, 1
      %v1062 = vsel %vm706, %v1057, %v1061
      %v1063 = vshrl.u32 %v681, 16
      %v1065 = vor.u32 %v1063, %v1061
      %v1067 = vshll.u32 %v682, 16
      %v1069 = vrot.slane %v1067, 1
      %v1070 = vsel %vm706, %v1065, %v1069
      %v1071 = vshrl.u32 %v682, 16
      %v1073 = vor.u32 %v1071, %v1069
      %v1075 = vshll.u32 %v683, 16
      %v1077 = vrot.slane %v1075, 1
      %v1078 = vsel %vm706, %v1073, %v1077
      %v1079 = vshrl.u32 %v683, 16
      %v1081 = vor.u32 %v1079, %v1077
      %v1083 = vshll.u32 %v684, 16
      %v1085 = vrot.slane %v1083, 1
      %v1086 = vsel %vm706, %v1081, %v1085
      %v1087 = vshrl.u32 %v684, 16
      %v1089 = vor.u32 %v1087, %v1085
      %v1091 = vshll.u32 %v685, 16
      %v1093 = vrot.slane %v1091, 1
      %v1094 = vsel %vm706, %v1089, %v1093
      %v1095 = vshrl.u32 %v685, 16
      %v1097 = vor.u32 %v1095, %v1093
      %v1099 = vshll.u32 %v686, 16
      %v1101 = vrot.slane %v1099, 1
      %v1102 = vsel %vm706, %v1097, %v1101
      %v1103 = vshrl.u32 %v686, 16
      %v1105 = vor.u32 %v1103, %v1101
      %v1107 = vshll.u32 %v687, 16
      %v1109 = vrot.slane %v1107, 1
      %v1110 = vsel %vm706, %v1105, %v1109
      %v1111 = vshrl.u32 %v687, 16
      %v1113 = vor.u32 %v1111, %v1109
      %v1115 = vshll.u32 %v688, 16
      %v1117 = vrot.slane %v1115, 1
      %v1118 = vsel %vm706, %v1113, %v1117
      %v1119 = vshrl.u32 %v688, 16
      %v1121 = vor.u32 %v1119, %v1117
      %v1123 = vshll.u32 %v689, 16
      %v1125 = vrot.slane %v1123, 1
      %v1126 = vsel %vm706, %v1121, %v1125
      %v1127 = vshrl.u32 %v689, 16
      %v1129 = vor.u32 %v1127, %v1125
      %v1131 = vshll.u32 %v690, 16
      %v1133 = vrot.slane %v1131, 1
      %v1134 = vsel %vm706, %v1129, %v1133
      %v1135 = vshrl.u32 %v690, 16
      %v1137 = vor.u32 %v1135, %v1133
      %v1139 = vshll.u32 %v691, 16
      %v1141 = vrot.slane %v1139, 1
      %v1142 = vsel %vm706, %v1137, %v1141
      %v1143 = vshrl.u32 %v691, 16
      %v1145 = vor.u32 %v1143, %v1141
      %v1147 = vshll.u32 %v692, 16
      %v1149 = vrot.slane %v1147, 1
      %v1150 = vsel %vm706, %v1145, %v1149
      %v1151 = vshrl.u32 %v692, 16
      %v1153 = vor.u32 %v1151, %v1149
      %v1155 = vshll.u32 %v693, 16
      %v1157 = vrot.slane %v1155, 1
      %v1158 = vsel %vm706, %v1153, %v1157
      %v1159 = vshrl.u32 %v693, 16
      %v1161 = vor.u32 %v1159, %v1157
      %v1163 = vshll.u32 %v694, 16
      %v1165 = vrot.slane %v1163, 1
      %v1166 = vsel %vm706, %v1161, %v1165
      %v1167 = vshrl.u32 %v694, 16
      %v1169 = vor.u32 %v1167, %v1165
      %v1171 = vshll.u32 %v695, 16
      %v1173 = vrot.slane %v1171, 1
      %v1174 = vsel %vm706, %v1169, %v1173
      %v1175 = vshrl.u32 %v695, 16
      %v1177 = vor.u32 %v1175, %v1173
      %v1179 = vshll.u32 %v696, 16
      %v1181 = vrot.slane %v1179, 1
      %v1182 = vsel %vm706, %v1177, %v1181
      %v1183 = vshrl.u32 %v696, 16
      %v1185 = vor.u32 %v1183, %v1181
      %v1187 = vshll.u32 %v697, 16
      %v1189 = vrot.slane %v1187, 1
      %v1190 = vsel %vm706, %v1185, %v1189
      %v1191 = vshrl.u32 %v697, 16
      %v1193 = vor.u32 %v1191, %v1189
      %v1195 = vshll.u32 %v698, 16
      %v1197 = vrot.slane %v1195, 1
      %v1198 = vsel %vm706, %v1193, %v1197
      %v1199 = vshrl.u32 %v698, 16
      %v1201 = vor.u32 %v1199, %v1197
      %v1203 = vshll.u32 %v699, 16
      %v1205 = vrot.slane %v1203, 1
      %v1206 = vsel %vm706, %v1201, %v1205
      %v1207 = vshrl.u32 %v699, 16
      %v1209 = vor.u32 %v1207, %v1205
      %v1211 = vshll.u32 %v700, 16
      %v1213 = vrot.slane %v1211, 1
      %v1214 = vsel %vm706, %v1209, %v1213
      %v1215 = vshrl.u32 %v700, 16
      %v1217 = vor.u32 %v1215, %v1213
      %v1219 = vshll.u32 %v701, 16
      %v1221 = vrot.slane %v1219, 1
      %v1222 = vsel %vm706, %v1217, %v1221
      %v1223 = vshrl.u32 %v701, 16
      %v1225 = vor.u32 %v1223, %v1221
      %v1227 = vshll.u32 %v702, 16
      %v1229 = vrot.slane %v1227, 1
      %v1230 = vsel %vm706, %v1225, %v1229
      %v1231 = vshrl.u32 %v702, 16
      %v1233 = vor.u32 %v1231, %v1229
      %v1235 = vshll.u32 %v703, 16
      %v1237 = vrot.slane %v1235, 1
      %v1238 = vsel %vm706, %v1233, %v1237
      %v1239 = vshrl.u32 %v703, 16
      %v1241 = vor.u32 %v1239, %v1237
      %v1243 = vshll.u32 %v704, 16
      %v1245 = vrot.slane %v1243, 1
      %v1246 = vsel %vm706, %v1241, %v1245
      %v1247 = vshrl.u32 %v704, 16
      %v1249 = vor.u32 %v1247, %v1245
      %v1251 = vshll.u32 %v705, 16
      %v1253 = vrot.slane %v1251, 1
      %v1254 = vsel %vm706, %v1249, %v1253
      %vm1255 = vcmask 64512
      %v1257 = vsel %vm1255, %v718, 0
      %v1260 = vsel %vm1255, %v726, 0
      %v1263 = vsel %vm1255, %v734, 0
      %v1266 = vsel %vm1255, %v742, 0
      %v1269 = vsel %vm1255, %v750, 0
      %v1272 = vsel %vm1255, %v758, 0
      %v1275 = vsel %vm1255, %v766, 0
      %v1278 = vsel %vm1255, %v774, 0
      %v1281 = vsel %vm1255, %v782, 0
      %v1284 = vsel %vm1255, %v790, 0
      %v1287 = vsel %vm1255, %v798, 0
      %v1290 = vsel %vm1255, %v806, 0
      %v1293 = vsel %vm1255, %v814, 0
      %v1296 = vsel %vm1255, %v822, 0
      %v1299 = vsel %vm1255, %v830, 0
      %v1302 = vsel %vm1255, %v838, 0
      %v1305 = vsel %vm1255, %v846, 0
      %v1308 = vsel %vm1255, %v854, 0
      %v1311 = vsel %vm1255, %v862, 0
      %v1314 = vsel %vm1255, %v870, 0
      %v1317 = vsel %vm1255, %v878, 0
      %v1320 = vsel %vm1255, %v886, 0
      %v1323 = vsel %vm1255, %v894, 0
      %v1326 = vsel %vm1255, %v902, 0
      %v1329 = vsel %vm1255, %v910, 0
      %v1332 = vsel %vm1255, %v918, 0
      %v1335 = vsel %vm1255, %v926, 0
      %v1338 = vsel %vm1255, %v934, 0
      %v1341 = vsel %vm1255, %v942, 0
      %v1344 = vsel %vm1255, %v950, 0
      %v1347 = vsel %vm1255, %v958, 0
      %v1350 = vsel %vm1255, %v966, 0
      %v1353 = vsel %vm1255, %v974, 0
      %v1356 = vsel %vm1255, %v982, 0
      %v1359 = vsel %vm1255, %v990, 0
      %v1362 = vsel %vm1255, %v998, 0
      %v1365 = vsel %vm1255, %v1006, 0
      %v1368 = vsel %vm1255, %v1014, 0
      %v1371 = vsel %vm1255, %v1022, 0
      %v1374 = vsel %vm1255, %v1030, 0
      %v1377 = vsel %vm1255, %v1038, 0
      %v1380 = vsel %vm1255, %v1046, 0
      %v1383 = vsel %vm1255, %v1054, 0
      %v1386 = vsel %vm1255, %v1062, 0
      %v1389 = vsel %vm1255, %v1070, 0
      %v1392 = vsel %vm1255, %v1078, 0
      %v1395 = vsel %vm1255, %v1086, 0
      %v1398 = vsel %vm1255, %v1094, 0
      %v1401 = vsel %vm1255, %v1102, 0
      %v1404 = vsel %vm1255, %v1110, 0
      %v1407 = vsel %vm1255, %v1118, 0
      %v1410 = vsel %vm1255, %v1126, 0
      %v1413 = vsel %vm1255, %v1134, 0
      %v1416 = vsel %vm1255, %v1142, 0
      %v1419 = vsel %vm1255, %v1150, 0
      %v1422 = vsel %vm1255, %v1158, 0
      %v1425 = vsel %vm1255, %v1166, 0
      %v1428 = vsel %vm1255, %v1174, 0
      %v1431 = vsel %vm1255, %v1182, 0
      %v1434 = vsel %vm1255, %v1190, 0
      %v1437 = vsel %vm1255, %v1198, 0
      %v1440 = vsel %vm1255, %v1206, 0
      %v1443 = vsel %vm1255, %v1214, 0
      %v1446 = vsel %vm1255, %v1222, 0
      %v1449 = vsel %vm1255, %v1230, 0
      %v1452 = vsel %vm1255, %v1238, 0
      %v1455 = vsel %vm1255, %v1246, 0
      %v1458 = vsel %vm1255, %v1254, 0
      %vm1460 = vcmask 1043456
      %v1462 = vsel %vm1460, %v362, 0
      %1464 = vmatpush.bf16.msra.mxu0 0
      %1465 = vmatpush.bf16.msra.mxu0 0
      %1466 = vmatpush.bf16.msra.mxu0 0
      %1467 = vmatpush.bf16.msra.mxu0 0
      %1468 = vmatpush.bf16.msra.mxu0 0
      %1469 = vmatpush.bf16.msra.mxu0 0
      %1470 = vmatpush.bf16.msra.mxu0 0
      %1471 = vmatpush.bf16.msra.mxu0 %v1462
      %1472 = vmatmul.bf16.gmra.mxu0 %v1257
      %v1473 = vpop.f32.mrf.mxu0
      %v1474 = vadd.f32 0.0, %v1473
      %v1475 = vpop.f32.mrf.mxu0
      %v1476 = vadd.f32 0.0, %v1475
      %1477 = vmatmul.bf16.gmra.mxu0 %v1260
      %v1478 = vpop.f32.mrf.mxu0
      %v1479 = vadd.f32 0.0, %v1478
      %v1480 = vpop.f32.mrf.mxu0
      %v1481 = vadd.f32 0.0, %v1480
      %1482 = vmatmul.bf16.gmra.mxu0 %v1263
      %v1483 = vpop.f32.mrf.mxu0
      %v1484 = vadd.f32 0.0, %v1483
      %v1485 = vpop.f32.mrf.mxu0
      %v1486 = vadd.f32 0.0, %v1485
      %1487 = vmatmul.bf16.gmra.mxu0 %v1266
      %v1488 = vpop.f32.mrf.mxu0
      %v1489 = vadd.f32 0.0, %v1488
      %v1490 = vpop.f32.mrf.mxu0
      %v1491 = vadd.f32 0.0, %v1490
      %1492 = vmatmul.bf16.gmra.mxu0 %v1269
      %v1493 = vpop.f32.mrf.mxu0
      %v1494 = vadd.f32 0.0, %v1493
      %v1495 = vpop.f32.mrf.mxu0
      %v1496 = vadd.f32 0.0, %v1495
      %1497 = vmatmul.bf16.gmra.mxu0 %v1272
      %v1498 = vpop.f32.mrf.mxu0
      %v1499 = vadd.f32 0.0, %v1498
      %v1500 = vpop.f32.mrf.mxu0
      %v1501 = vadd.f32 0.0, %v1500
      %1502 = vmatmul.bf16.gmra.mxu0 %v1275
      %v1503 = vpop.f32.mrf.mxu0
      %v1504 = vadd.f32 0.0, %v1503
      %v1505 = vpop.f32.mrf.mxu0
      %v1506 = vadd.f32 0.0, %v1505
      %1507 = vmatmul.bf16.gmra.mxu0 %v1278
      %v1508 = vpop.f32.mrf.mxu0
      %v1509 = vadd.f32 0.0, %v1508
      %v1510 = vpop.f32.mrf.mxu0
      %v1511 = vadd.f32 0.0, %v1510
      %1512 = vmatmul.bf16.gmra.mxu0 %v1281
      %v1513 = vpop.f32.mrf.mxu0
      %v1514 = vadd.f32 0.0, %v1513
      %v1515 = vpop.f32.mrf.mxu0
      %v1516 = vadd.f32 0.0, %v1515
      %1517 = vmatmul.bf16.gmra.mxu0 %v1284
      %v1518 = vpop.f32.mrf.mxu0
      %v1519 = vadd.f32 0.0, %v1518
      %v1520 = vpop.f32.mrf.mxu0
      %v1521 = vadd.f32 0.0, %v1520
      %1522 = vmatmul.bf16.gmra.mxu0 %v1287
      %v1523 = vpop.f32.mrf.mxu0
      %v1524 = vadd.f32 0.0, %v1523
      %v1525 = vpop.f32.mrf.mxu0
      %v1526 = vadd.f32 0.0, %v1525
      %1527 = vmatmul.bf16.gmra.mxu0 %v1290
      %v1528 = vpop.f32.mrf.mxu0
      %v1529 = vadd.f32 0.0, %v1528
      %v1530 = vpop.f32.mrf.mxu0
      %v1531 = vadd.f32 0.0, %v1530
      %1532 = vmatmul.bf16.gmra.mxu0 %v1293
      %v1533 = vpop.f32.mrf.mxu0
      %v1534 = vadd.f32 0.0, %v1533
      %v1535 = vpop.f32.mrf.mxu0
      %v1536 = vadd.f32 0.0, %v1535
      %1537 = vmatmul.bf16.gmra.mxu0 %v1296
      %v1538 = vpop.f32.mrf.mxu0
      %v1539 = vadd.f32 0.0, %v1538
      %v1540 = vpop.f32.mrf.mxu0
      %v1541 = vadd.f32 0.0, %v1540
      %1542 = vmatmul.bf16.gmra.mxu0 %v1299
      %v1543 = vpop.f32.mrf.mxu0
      %v1544 = vadd.f32 0.0, %v1543
      %v1545 = vpop.f32.mrf.mxu0
      %v1546 = vadd.f32 0.0, %v1545
      %1547 = vmatmul.bf16.gmra.mxu0 %v1302
      %v1548 = vpop.f32.mrf.mxu0
      %v1549 = vadd.f32 0.0, %v1548
      %v1550 = vpop.f32.mrf.mxu0
      %v1551 = vadd.f32 0.0, %v1550
      %1552 = vmatmul.bf16.gmra.mxu0 %v1305
      %v1553 = vpop.f32.mrf.mxu0
      %v1554 = vadd.f32 0.0, %v1553
      %v1555 = vpop.f32.mrf.mxu0
      %v1556 = vadd.f32 0.0, %v1555
      %1557 = vmatmul.bf16.gmra.mxu0 %v1308
      %v1558 = vpop.f32.mrf.mxu0
      %v1559 = vadd.f32 0.0, %v1558
      %v1560 = vpop.f32.mrf.mxu0
      %v1561 = vadd.f32 0.0, %v1560
      %1562 = vmatmul.bf16.gmra.mxu0 %v1311
      %v1563 = vpop.f32.mrf.mxu0
      %v1564 = vadd.f32 0.0, %v1563
      %v1565 = vpop.f32.mrf.mxu0
      %v1566 = vadd.f32 0.0, %v1565
      %1567 = vmatmul.bf16.gmra.mxu0 %v1314
      %v1568 = vpop.f32.mrf.mxu0
      %v1569 = vadd.f32 0.0, %v1568
      %v1570 = vpop.f32.mrf.mxu0
      %v1571 = vadd.f32 0.0, %v1570
      %1572 = vmatmul.bf16.gmra.mxu0 %v1317
      %v1573 = vpop.f32.mrf.mxu0
      %v1574 = vadd.f32 0.0, %v1573
      %v1575 = vpop.f32.mrf.mxu0
      %v1576 = vadd.f32 0.0, %v1575
      %1577 = vmatmul.bf16.gmra.mxu0 %v1320
      %v1578 = vpop.f32.mrf.mxu0
      %v1579 = vadd.f32 0.0, %v1578
      %v1580 = vpop.f32.mrf.mxu0
      %v1581 = vadd.f32 0.0, %v1580
      %1582 = vmatmul.bf16.gmra.mxu0 %v1323
      %v1583 = vpop.f32.mrf.mxu0
      %v1584 = vadd.f32 0.0, %v1583
      %v1585 = vpop.f32.mrf.mxu0
      %v1586 = vadd.f32 0.0, %v1585
      %1587 = vmatmul.bf16.gmra.mxu0 %v1326
      %v1588 = vpop.f32.mrf.mxu0
      %v1589 = vadd.f32 0.0, %v1588
      %v1590 = vpop.f32.mrf.mxu0
      %v1591 = vadd.f32 0.0, %v1590
      %1592 = vmatmul.bf16.gmra.mxu0 %v1329
      %v1593 = vpop.f32.mrf.mxu0
      %v1594 = vadd.f32 0.0, %v1593
      %v1595 = vpop.f32.mrf.mxu0
      %v1596 = vadd.f32 0.0, %v1595
      %1597 = vmatmul.bf16.gmra.mxu0 %v1332
      %v1598 = vpop.f32.mrf.mxu0
      %v1599 = vadd.f32 0.0, %v1598
      %v1600 = vpop.f32.mrf.mxu0
      %v1601 = vadd.f32 0.0, %v1600
      %1602 = vmatmul.bf16.gmra.mxu0 %v1335
      %v1603 = vpop.f32.mrf.mxu0
      %v1604 = vadd.f32 0.0, %v1603
      %v1605 = vpop.f32.mrf.mxu0
      %v1606 = vadd.f32 0.0, %v1605
      %1607 = vmatmul.bf16.gmra.mxu0 %v1338
      %v1608 = vpop.f32.mrf.mxu0
      %v1609 = vadd.f32 0.0, %v1608
      %v1610 = vpop.f32.mrf.mxu0
      %v1611 = vadd.f32 0.0, %v1610
      %1612 = vmatmul.bf16.gmra.mxu0 %v1341
      %v1613 = vpop.f32.mrf.mxu0
      %v1614 = vadd.f32 0.0, %v1613
      %v1615 = vpop.f32.mrf.mxu0
      %v1616 = vadd.f32 0.0, %v1615
      %1617 = vmatmul.bf16.gmra.mxu0 %v1344
      %v1618 = vpop.f32.mrf.mxu0
      %v1619 = vadd.f32 0.0, %v1618
      %v1620 = vpop.f32.mrf.mxu0
      %v1621 = vadd.f32 0.0, %v1620
      %1622 = vmatmul.bf16.gmra.mxu0 %v1347
      %v1623 = vpop.f32.mrf.mxu0
      %v1624 = vadd.f32 0.0, %v1623
      %v1625 = vpop.f32.mrf.mxu0
      %v1626 = vadd.f32 0.0, %v1625
      %1627 = vmatmul.bf16.gmra.mxu0 %v1350
      %v1628 = vpop.f32.mrf.mxu0
      %v1629 = vadd.f32 0.0, %v1628
      %v1630 = vpop.f32.mrf.mxu0
      %v1631 = vadd.f32 0.0, %v1630
      %1632 = vmatmul.bf16.gmra.mxu0 %v1353
      %v1633 = vpop.f32.mrf.mxu0
      %v1634 = vadd.f32 0.0, %v1633
      %v1635 = vpop.f32.mrf.mxu0
      %v1636 = vadd.f32 0.0, %v1635
      %1637 = vmatmul.bf16.gmra.mxu0 %v1356
      %v1638 = vpop.f32.mrf.mxu0
      %v1639 = vadd.f32 0.0, %v1638
      %v1640 = vpop.f32.mrf.mxu0
      %v1641 = vadd.f32 0.0, %v1640
      %1642 = vmatmul.bf16.gmra.mxu0 %v1359
      %v1643 = vpop.f32.mrf.mxu0
      %v1644 = vadd.f32 0.0, %v1643
      %v1645 = vpop.f32.mrf.mxu0
      %v1646 = vadd.f32 0.0, %v1645
      %1647 = vmatmul.bf16.gmra.mxu0 %v1362
      %v1648 = vpop.f32.mrf.mxu0
      %v1649 = vadd.f32 0.0, %v1648
      %v1650 = vpop.f32.mrf.mxu0
      %v1651 = vadd.f32 0.0, %v1650
      %1652 = vmatmul.bf16.gmra.mxu0 %v1365
      %v1653 = vpop.f32.mrf.mxu0
      %v1654 = vadd.f32 0.0, %v1653
      %v1655 = vpop.f32.mrf.mxu0
      %v1656 = vadd.f32 0.0, %v1655
      %1657 = vmatmul.bf16.gmra.mxu0 %v1368
      %v1658 = vpop.f32.mrf.mxu0
      %v1659 = vadd.f32 0.0, %v1658
      %v1660 = vpop.f32.mrf.mxu0
      %v1661 = vadd.f32 0.0, %v1660
      %1662 = vmatmul.bf16.gmra.mxu0 %v1371
      %v1663 = vpop.f32.mrf.mxu0
      %v1664 = vadd.f32 0.0, %v1663
      %v1665 = vpop.f32.mrf.mxu0
      %v1666 = vadd.f32 0.0, %v1665
      %1667 = vmatmul.bf16.gmra.mxu0 %v1374
      %v1668 = vpop.f32.mrf.mxu0
      %v1669 = vadd.f32 0.0, %v1668
      %v1670 = vpop.f32.mrf.mxu0
      %v1671 = vadd.f32 0.0, %v1670
      %1672 = vmatmul.bf16.gmra.mxu0 %v1377
      %v1673 = vpop.f32.mrf.mxu0
      %v1674 = vadd.f32 0.0, %v1673
      %v1675 = vpop.f32.mrf.mxu0
      %v1676 = vadd.f32 0.0, %v1675
      %1677 = vmatmul.bf16.gmra.mxu0 %v1380
      %v1678 = vpop.f32.mrf.mxu0
      %v1679 = vadd.f32 0.0, %v1678
      %v1680 = vpop.f32.mrf.mxu0
      %v1681 = vadd.f32 0.0, %v1680
      %1682 = vmatmul.bf16.gmra.mxu0 %v1383
      %v1683 = vpop.f32.mrf.mxu0
      %v1684 = vadd.f32 0.0, %v1683
      %v1685 = vpop.f32.mrf.mxu0
      %v1686 = vadd.f32 0.0, %v1685
      %1687 = vmatmul.bf16.gmra.mxu0 %v1386
      %v1688 = vpop.f32.mrf.mxu0
      %v1689 = vadd.f32 0.0, %v1688
      %v1690 = vpop.f32.mrf.mxu0
      %v1691 = vadd.f32 0.0, %v1690
      %1692 = vmatmul.bf16.gmra.mxu0 %v1389
      %v1693 = vpop.f32.mrf.mxu0
      %v1694 = vadd.f32 0.0, %v1693
      %v1695 = vpop.f32.mrf.mxu0
      %v1696 = vadd.f32 0.0, %v1695
      %1697 = vmatmul.bf16.gmra.mxu0 %v1392
      %v1698 = vpop.f32.mrf.mxu0
      %v1699 = vadd.f32 0.0, %v1698
      %v1700 = vpop.f32.mrf.mxu0
      %v1701 = vadd.f32 0.0, %v1700
      %1702 = vmatmul.bf16.gmra.mxu0 %v1395
      %v1703 = vpop.f32.mrf.mxu0
      %v1704 = vadd.f32 0.0, %v1703
      %v1705 = vpop.f32.mrf.mxu0
      %v1706 = vadd.f32 0.0, %v1705
      %1707 = vmatmul.bf16.gmra.mxu0 %v1398
      %v1708 = vpop.f32.mrf.mxu0
      %v1709 = vadd.f32 0.0, %v1708
      %v1710 = vpop.f32.mrf.mxu0
      %v1711 = vadd.f32 0.0, %v1710
      %1712 = vmatmul.bf16.gmra.mxu0 %v1401
      %v1713 = vpop.f32.mrf.mxu0
      %v1714 = vadd.f32 0.0, %v1713
      %v1715 = vpop.f32.mrf.mxu0
      %v1716 = vadd.f32 0.0, %v1715
      %1717 = vmatmul.bf16.gmra.mxu0 %v1404
      %v1718 = vpop.f32.mrf.mxu0
      %v1719 = vadd.f32 0.0, %v1718
      %v1720 = vpop.f32.mrf.mxu0
      %v1721 = vadd.f32 0.0, %v1720
      %1722 = vmatmul.bf16.gmra.mxu0 %v1407
      %v1723 = vpop.f32.mrf.mxu0
      %v1724 = vadd.f32 0.0, %v1723
      %v1725 = vpop.f32.mrf.mxu0
      %v1726 = vadd.f32 0.0, %v1725
      %1727 = vmatmul.bf16.gmra.mxu0 %v1410
      %v1728 = vpop.f32.mrf.mxu0
      %v1729 = vadd.f32 0.0, %v1728
      %v1730 = vpop.f32.mrf.mxu0
      %v1731 = vadd.f32 0.0, %v1730
      %1732 = vmatmul.bf16.gmra.mxu0 %v1413
      %v1733 = vpop.f32.mrf.mxu0
      %v1734 = vadd.f32 0.0, %v1733
      %v1735 = vpop.f32.mrf.mxu0
      %v1736 = vadd.f32 0.0, %v1735
      %1737 = vmatmul.bf16.gmra.mxu0 %v1416
      %v1738 = vpop.f32.mrf.mxu0
      %v1739 = vadd.f32 0.0, %v1738
      %v1740 = vpop.f32.mrf.mxu0
      %v1741 = vadd.f32 0.0, %v1740
      %1742 = vmatmul.bf16.gmra.mxu0 %v1419
      %v1743 = vpop.f32.mrf.mxu0
      %v1744 = vadd.f32 0.0, %v1743
      %v1745 = vpop.f32.mrf.mxu0
      %v1746 = vadd.f32 0.0, %v1745
      %1747 = vmatmul.bf16.gmra.mxu0 %v1422
      %v1748 = vpop.f32.mrf.mxu0
      %v1749 = vadd.f32 0.0, %v1748
      %v1750 = vpop.f32.mrf.mxu0
      %v1751 = vadd.f32 0.0, %v1750
      %1752 = vmatmul.bf16.gmra.mxu0 %v1425
      %v1753 = vpop.f32.mrf.mxu0
      %v1754 = vadd.f32 0.0, %v1753
      %v1755 = vpop.f32.mrf.mxu0
      %v1756 = vadd.f32 0.0, %v1755
      %1757 = vmatmul.bf16.gmra.mxu0 %v1428
      %v1758 = vpop.f32.mrf.mxu0
      %v1759 = vadd.f32 0.0, %v1758
      %v1760 = vpop.f32.mrf.mxu0
      %v1761 = vadd.f32 0.0, %v1760
      %1762 = vmatmul.bf16.gmra.mxu0 %v1431
      %v1763 = vpop.f32.mrf.mxu0
      %v1764 = vadd.f32 0.0, %v1763
      %v1765 = vpop.f32.mrf.mxu0
      %v1766 = vadd.f32 0.0, %v1765
      %1767 = vmatmul.bf16.gmra.mxu0 %v1434
      %v1768 = vpop.f32.mrf.mxu0
      %v1769 = vadd.f32 0.0, %v1768
      %v1770 = vpop.f32.mrf.mxu0
      %v1771 = vadd.f32 0.0, %v1770
      %1772 = vmatmul.bf16.gmra.mxu0 %v1437
      %v1773 = vpop.f32.mrf.mxu0
      %v1774 = vadd.f32 0.0, %v1773
      %v1775 = vpop.f32.mrf.mxu0
      %v1776 = vadd.f32 0.0, %v1775
      %1777 = vmatmul.bf16.gmra.mxu0 %v1440
      %v1778 = vpop.f32.mrf.mxu0
      %v1779 = vadd.f32 0.0, %v1778
      %v1780 = vpop.f32.mrf.mxu0
      %v1781 = vadd.f32 0.0, %v1780
      %1782 = vmatmul.bf16.gmra.mxu0 %v1443
      %v1783 = vpop.f32.mrf.mxu0
      %v1784 = vadd.f32 0.0, %v1783
      %v1785 = vpop.f32.mrf.mxu0
      %v1786 = vadd.f32 0.0, %v1785
      %1787 = vmatmul.bf16.gmra.mxu0 %v1446
      %v1788 = vpop.f32.mrf.mxu0
      %v1789 = vadd.f32 0.0, %v1788
      %v1790 = vpop.f32.mrf.mxu0
      %v1791 = vadd.f32 0.0, %v1790
      %1792 = vmatmul.bf16.gmra.mxu0 %v1449
      %v1793 = vpop.f32.mrf.mxu0
      %v1794 = vadd.f32 0.0, %v1793
      %v1795 = vpop.f32.mrf.mxu0
      %v1796 = vadd.f32 0.0, %v1795
      %1797 = vmatmul.bf16.gmra.mxu0 %v1452
      %v1798 = vpop.f32.mrf.mxu0
      %v1799 = vadd.f32 0.0, %v1798
      %v1800 = vpop.f32.mrf.mxu0
      %v1801 = vadd.f32 0.0, %v1800
      %1802 = vmatmul.bf16.gmra.mxu0 %v1455
      %v1803 = vpop.f32.mrf.mxu0
      %v1804 = vadd.f32 0.0, %v1803
      %v1805 = vpop.f32.mrf.mxu0
      %v1806 = vadd.f32 0.0, %v1805
      %1807 = vmatmul.bf16.gmra.mxu0 %v1458
      %v1808 = vpop.f32.mrf.mxu0
      %v1809 = vadd.f32 0.0, %v1808
      %v1810 = vpop.f32.mrf.mxu0
      %v1811 = vadd.f32 0.0, %v1810
      %1812 = vdwg.mxu0
      %v1813 = vsel %vm1255, %v637, 0
      %v1815 = vsel %vm1255, %v638, 0
      %v1817 = vsel %vm1255, %v639, 0
      %v1819 = vsel %vm1255, %v640, 0
      %v1821 = vsel %vm1255, %v641, 0
      %v1823 = vsel %vm1255, %v642, 0
      %v1825 = vsel %vm1255, %v643, 0
      %v1827 = vsel %vm1255, %v644, 0
      %v1829 = vsel %vm1255, %v645, 0
      %v1831 = vsel %vm1255, %v646, 0
      %v1833 = vsel %vm1255, %v647, 0
      %v1835 = vsel %vm1255, %v648, 0
      %v1837 = vsel %vm1255, %v649, 0
      %v1839 = vsel %vm1255, %v650, 0
      %v1841 = vsel %vm1255, %v651, 0
      %v1843 = vsel %vm1255, %v652, 0
      %v1845 = vsel %vm1255, %v653, 0
      %v1847 = vsel %vm1255, %v654, 0
      %v1849 = vsel %vm1255, %v655, 0
      %v1851 = vsel %vm1255, %v656, 0
      %v1853 = vsel %vm1255, %v657, 0
      %v1855 = vsel %vm1255, %v658, 0
      %v1857 = vsel %vm1255, %v659, 0
      %v1859 = vsel %vm1255, %v660, 0
      %v1861 = vsel %vm1255, %v661, 0
      %v1863 = vsel %vm1255, %v662, 0
      %v1865 = vsel %vm1255, %v663, 0
      %v1867 = vsel %vm1255, %v664, 0
      %v1869 = vsel %vm1255, %v665, 0
      %v1871 = vsel %vm1255, %v666, 0
      %v1873 = vsel %vm1255, %v667, 0
      %v1875 = vsel %vm1255, %v668, 0
      %v1877 = vsel %vm1255, %v669, 0
      %v1879 = vsel %vm1255, %v670, 0
      %v1881 = vsel %vm1255, %v671, 0
      %v1883 = vsel %vm1255, %v672, 0
      %v1885 = vsel %vm1255, %v673, 0
      %v1887 = vsel %vm1255, %v674, 0
      %v1889 = vsel %vm1255, %v675, 0
      %v1891 = vsel %vm1255, %v676, 0
      %v1893 = vsel %vm1255, %v677, 0
      %v1895 = vsel %vm1255, %v678, 0
      %v1897 = vsel %vm1255, %v679, 0
      %v1899 = vsel %vm1255, %v680, 0
      %v1901 = vsel %vm1255, %v681, 0
      %v1903 = vsel %vm1255, %v682, 0
      %v1905 = vsel %vm1255, %v683, 0
      %v1907 = vsel %vm1255, %v684, 0
      %v1909 = vsel %vm1255, %v685, 0
      %v1911 = vsel %vm1255, %v686, 0
      %v1913 = vsel %vm1255, %v687, 0
      %v1915 = vsel %vm1255, %v688, 0
      %v1917 = vsel %vm1255, %v689, 0
      %v1919 = vsel %vm1255, %v690, 0
      %v1921 = vsel %vm1255, %v691, 0
      %v1923 = vsel %vm1255, %v692, 0
      %v1925 = vsel %vm1255, %v693, 0
      %v1927 = vsel %vm1255, %v694, 0
      %v1929 = vsel %vm1255, %v695, 0
      %v1931 = vsel %vm1255, %v696, 0
      %v1933 = vsel %vm1255, %v697, 0
      %v1935 = vsel %vm1255, %v698, 0
      %v1937 = vsel %vm1255, %v699, 0
      %v1939 = vsel %vm1255, %v700, 0
      %v1941 = vsel %vm1255, %v701, 0
      %v1943 = vsel %vm1255, %v702, 0
      %v1945 = vsel %vm1255, %v703, 0
      %v1947 = vsel %vm1255, %v704, 0
      %v1950 = vsel %vm1460, %v359, 0
      %1952 = vmatpush.bf16.msra.mxu0 0
      %1953 = vmatpush.bf16.msra.mxu0 0
      %1954 = vmatpush.bf16.msra.mxu0 0
      %1955 = vmatpush.bf16.msra.mxu0 0
      %1956 = vmatpush.bf16.msra.mxu0 0
      %1957 = vmatpush.bf16.msra.mxu0 0
      %1958 = vmatpush.bf16.msra.mxu0 0
      %1959 = vmatpush.bf16.msra.mxu0 %v1950
      %1960 = vmatmul.bf16.gmra.mxu0 %v1813
      %v1961 = vpop.f32.mrf.mxu0
      %v1962 = vadd.f32 %v1474, %v1961
      %v1963 = vpop.f32.mrf.mxu0
      %v1964 = vadd.f32 %v1476, %v1963
      %1965 = vmatmul.bf16.gmra.mxu0 %v1815
      %v1966 = vpop.f32.mrf.mxu0
      %v1967 = vadd.f32 %v1479, %v1966
      %v1968 = vpop.f32.mrf.mxu0
      %v1969 = vadd.f32 %v1481, %v1968
      %1970 = vmatmul.bf16.gmra.mxu0 %v1817
      %v1971 = vpop.f32.mrf.mxu0
      %v1972 = vadd.f32 %v1484, %v1971
      %v1973 = vpop.f32.mrf.mxu0
      %v1974 = vadd.f32 %v1486, %v1973
      %1975 = vmatmul.bf16.gmra.mxu0 %v1819
      %v1976 = vpop.f32.mrf.mxu0
      %v1977 = vadd.f32 %v1489, %v1976
      %v1978 = vpop.f32.mrf.mxu0
      %v1979 = vadd.f32 %v1491, %v1978
      %1980 = vmatmul.bf16.gmra.mxu0 %v1821
      %v1981 = vpop.f32.mrf.mxu0
      %v1982 = vadd.f32 %v1494, %v1981
      %v1983 = vpop.f32.mrf.mxu0
      %v1984 = vadd.f32 %v1496, %v1983
      %1985 = vmatmul.bf16.gmra.mxu0 %v1823
      %v1986 = vpop.f32.mrf.mxu0
      %v1987 = vadd.f32 %v1499, %v1986
      %v1988 = vpop.f32.mrf.mxu0
      %v1989 = vadd.f32 %v1501, %v1988
      %1990 = vmatmul.bf16.gmra.mxu0 %v1825
      %v1991 = vpop.f32.mrf.mxu0
      %v1992 = vadd.f32 %v1504, %v1991
      %v1993 = vpop.f32.mrf.mxu0
      %v1994 = vadd.f32 %v1506, %v1993
      %1995 = vmatmul.bf16.gmra.mxu0 %v1827
      %v1996 = vpop.f32.mrf.mxu0
      %v1997 = vadd.f32 %v1509, %v1996
      %v1998 = vpop.f32.mrf.mxu0
      %v1999 = vadd.f32 %v1511, %v1998
      %2000 = vmatmul.bf16.gmra.mxu0 %v1829
      %v2001 = vpop.f32.mrf.mxu0
      %v2002 = vadd.f32 %v1514, %v2001
      %v2003 = vpop.f32.mrf.mxu0
      %v2004 = vadd.f32 %v1516, %v2003
      %2005 = vmatmul.bf16.gmra.mxu0 %v1831
      %v2006 = vpop.f32.mrf.mxu0
      %v2007 = vadd.f32 %v1519, %v2006
      %v2008 = vpop.f32.mrf.mxu0
      %v2009 = vadd.f32 %v1521, %v2008
      %2010 = vmatmul.bf16.gmra.mxu0 %v1833
      %v2011 = vpop.f32.mrf.mxu0
      %v2012 = vadd.f32 %v1524, %v2011
      %v2013 = vpop.f32.mrf.mxu0
      %v2014 = vadd.f32 %v1526, %v2013
      %2015 = vmatmul.bf16.gmra.mxu0 %v1835
      %v2016 = vpop.f32.mrf.mxu0
      %v2017 = vadd.f32 %v1529, %v2016
      %v2018 = vpop.f32.mrf.mxu0
      %v2019 = vadd.f32 %v1531, %v2018
      %2020 = vmatmul.bf16.gmra.mxu0 %v1837
      %v2021 = vpop.f32.mrf.mxu0
      %v2022 = vadd.f32 %v1534, %v2021
      %v2023 = vpop.f32.mrf.mxu0
      %v2024 = vadd.f32 %v1536, %v2023
      %2025 = vmatmul.bf16.gmra.mxu0 %v1839
      %v2026 = vpop.f32.mrf.mxu0
      %v2027 = vadd.f32 %v1539, %v2026
      %v2028 = vpop.f32.mrf.mxu0
      %v2029 = vadd.f32 %v1541, %v2028
      %2030 = vmatmul.bf16.gmra.mxu0 %v1841
      %v2031 = vpop.f32.mrf.mxu0
      %v2032 = vadd.f32 %v1544, %v2031
      %v2033 = vpop.f32.mrf.mxu0
      %v2034 = vadd.f32 %v1546, %v2033
      %2035 = vmatmul.bf16.gmra.mxu0 %v1843
      %v2036 = vpop.f32.mrf.mxu0
      %v2037 = vadd.f32 %v1549, %v2036
      %v2038 = vpop.f32.mrf.mxu0
      %v2039 = vadd.f32 %v1551, %v2038
      %2040 = vmatmul.bf16.gmra.mxu0 %v1845
      %v2041 = vpop.f32.mrf.mxu0
      %v2042 = vadd.f32 %v1554, %v2041
      %v2043 = vpop.f32.mrf.mxu0
      %v2044 = vadd.f32 %v1556, %v2043
      %2045 = vmatmul.bf16.gmra.mxu0 %v1847
      %v2046 = vpop.f32.mrf.mxu0
      %v2047 = vadd.f32 %v1559, %v2046
      %v2048 = vpop.f32.mrf.mxu0
      %v2049 = vadd.f32 %v1561, %v2048
      %2050 = vmatmul.bf16.gmra.mxu0 %v1849
      %v2051 = vpop.f32.mrf.mxu0
      %v2052 = vadd.f32 %v1564, %v2051
      %v2053 = vpop.f32.mrf.mxu0
      %v2054 = vadd.f32 %v1566, %v2053
      %2055 = vmatmul.bf16.gmra.mxu0 %v1851
      %v2056 = vpop.f32.mrf.mxu0
      %v2057 = vadd.f32 %v1569, %v2056
      %v2058 = vpop.f32.mrf.mxu0
      %v2059 = vadd.f32 %v1571, %v2058
      %2060 = vmatmul.bf16.gmra.mxu0 %v1853
      %v2061 = vpop.f32.mrf.mxu0
      %v2062 = vadd.f32 %v1574, %v2061
      %v2063 = vpop.f32.mrf.mxu0
      %v2064 = vadd.f32 %v1576, %v2063
      %2065 = vmatmul.bf16.gmra.mxu0 %v1855
      %v2066 = vpop.f32.mrf.mxu0
      %v2067 = vadd.f32 %v1579, %v2066
      %v2068 = vpop.f32.mrf.mxu0
      %v2069 = vadd.f32 %v1581, %v2068
      %2070 = vmatmul.bf16.gmra.mxu0 %v1857
      %v2071 = vpop.f32.mrf.mxu0
      %v2072 = vadd.f32 %v1584, %v2071
      %v2073 = vpop.f32.mrf.mxu0
      %v2074 = vadd.f32 %v1586, %v2073
      %2075 = vmatmul.bf16.gmra.mxu0 %v1859
      %v2076 = vpop.f32.mrf.mxu0
      %v2077 = vadd.f32 %v1589, %v2076
      %v2078 = vpop.f32.mrf.mxu0
      %v2079 = vadd.f32 %v1591, %v2078
      %2080 = vmatmul.bf16.gmra.mxu0 %v1861
      %v2081 = vpop.f32.mrf.mxu0
      %v2082 = vadd.f32 %v1594, %v2081
      %v2083 = vpop.f32.mrf.mxu0
      %v2084 = vadd.f32 %v1596, %v2083
      %2085 = vmatmul.bf16.gmra.mxu0 %v1863
      %v2086 = vpop.f32.mrf.mxu0
      %v2087 = vadd.f32 %v1599, %v2086
      %v2088 = vpop.f32.mrf.mxu0
      %v2089 = vadd.f32 %v1601, %v2088
      %2090 = vmatmul.bf16.gmra.mxu0 %v1865
      %v2091 = vpop.f32.mrf.mxu0
      %v2092 = vadd.f32 %v1604, %v2091
      %v2093 = vpop.f32.mrf.mxu0
      %v2094 = vadd.f32 %v1606, %v2093
      %2095 = vmatmul.bf16.gmra.mxu0 %v1867
      %v2096 = vpop.f32.mrf.mxu0
      %v2097 = vadd.f32 %v1609, %v2096
      %v2098 = vpop.f32.mrf.mxu0
      %v2099 = vadd.f32 %v1611, %v2098
      %2100 = vmatmul.bf16.gmra.mxu0 %v1869
      %v2101 = vpop.f32.mrf.mxu0
      %v2102 = vadd.f32 %v1614, %v2101
      %v2103 = vpop.f32.mrf.mxu0
      %v2104 = vadd.f32 %v1616, %v2103
      %2105 = vmatmul.bf16.gmra.mxu0 %v1871
      %v2106 = vpop.f32.mrf.mxu0
      %v2107 = vadd.f32 %v1619, %v2106
      %v2108 = vpop.f32.mrf.mxu0
      %v2109 = vadd.f32 %v1621, %v2108
      %2110 = vmatmul.bf16.gmra.mxu0 %v1873
      %v2111 = vpop.f32.mrf.mxu0
      %v2112 = vadd.f32 %v1624, %v2111
      %v2113 = vpop.f32.mrf.mxu0
      %v2114 = vadd.f32 %v1626, %v2113
      %2115 = vmatmul.bf16.gmra.mxu0 %v1875
      %v2116 = vpop.f32.mrf.mxu0
      %v2117 = vadd.f32 %v1629, %v2116
      %v2118 = vpop.f32.mrf.mxu0
      %v2119 = vadd.f32 %v1631, %v2118
      %2120 = vmatmul.bf16.gmra.mxu0 %v1877
      %v2121 = vpop.f32.mrf.mxu0
      %v2122 = vadd.f32 %v1634, %v2121
      %v2123 = vpop.f32.mrf.mxu0
      %v2124 = vadd.f32 %v1636, %v2123
      %2125 = vmatmul.bf16.gmra.mxu0 %v1879
      %v2126 = vpop.f32.mrf.mxu0
      %v2127 = vadd.f32 %v1639, %v2126
      %v2128 = vpop.f32.mrf.mxu0
      %v2129 = vadd.f32 %v1641, %v2128
      %2130 = vmatmul.bf16.gmra.mxu0 %v1881
      %v2131 = vpop.f32.mrf.mxu0
      %v2132 = vadd.f32 %v1644, %v2131
      %v2133 = vpop.f32.mrf.mxu0
      %v2134 = vadd.f32 %v1646, %v2133
      %2135 = vmatmul.bf16.gmra.mxu0 %v1883
      %v2136 = vpop.f32.mrf.mxu0
      %v2137 = vadd.f32 %v1649, %v2136
      %v2138 = vpop.f32.mrf.mxu0
      %v2139 = vadd.f32 %v1651, %v2138
      %2140 = vmatmul.bf16.gmra.mxu0 %v1885
      %v2141 = vpop.f32.mrf.mxu0
      %v2142 = vadd.f32 %v1654, %v2141
      %v2143 = vpop.f32.mrf.mxu0
      %v2144 = vadd.f32 %v1656, %v2143
      %2145 = vmatmul.bf16.gmra.mxu0 %v1887
      %v2146 = vpop.f32.mrf.mxu0
      %v2147 = vadd.f32 %v1659, %v2146
      %v2148 = vpop.f32.mrf.mxu0
      %v2149 = vadd.f32 %v1661, %v2148
      %2150 = vmatmul.bf16.gmra.mxu0 %v1889
      %v2151 = vpop.f32.mrf.mxu0
      %v2152 = vadd.f32 %v1664, %v2151
      %v2153 = vpop.f32.mrf.mxu0
      %v2154 = vadd.f32 %v1666, %v2153
      %2155 = vmatmul.bf16.gmra.mxu0 %v1891
      %v2156 = vpop.f32.mrf.mxu0
      %v2157 = vadd.f32 %v1669, %v2156
      %v2158 = vpop.f32.mrf.mxu0
      %v2159 = vadd.f32 %v1671, %v2158
      %2160 = vmatmul.bf16.gmra.mxu0 %v1893
      %v2161 = vpop.f32.mrf.mxu0
      %v2162 = vadd.f32 %v1674, %v2161
      %v2163 = vpop.f32.mrf.mxu0
      %v2164 = vadd.f32 %v1676, %v2163
      %2165 = vmatmul.bf16.gmra.mxu0 %v1895
      %v2166 = vpop.f32.mrf.mxu0
      %v2167 = vadd.f32 %v1679, %v2166
      %v2168 = vpop.f32.mrf.mxu0
      %v2169 = vadd.f32 %v1681, %v2168
      %2170 = vmatmul.bf16.gmra.mxu0 %v1897
      %v2171 = vpop.f32.mrf.mxu0
      %v2172 = vadd.f32 %v1684, %v2171
      %v2173 = vpop.f32.mrf.mxu0
      %v2174 = vadd.f32 %v1686, %v2173
      %2175 = vmatmul.bf16.gmra.mxu0 %v1899
      %v2176 = vpop.f32.mrf.mxu0
      %v2177 = vadd.f32 %v1689, %v2176
      %v2178 = vpop.f32.mrf.mxu0
      %v2179 = vadd.f32 %v1691, %v2178
      %2180 = vmatmul.bf16.gmra.mxu0 %v1901
      %v2181 = vpop.f32.mrf.mxu0
      %v2182 = vadd.f32 %v1694, %v2181
      %v2183 = vpop.f32.mrf.mxu0
      %v2184 = vadd.f32 %v1696, %v2183
      %2185 = vmatmul.bf16.gmra.mxu0 %v1903
      %v2186 = vpop.f32.mrf.mxu0
      %v2187 = vadd.f32 %v1699, %v2186
      %v2188 = vpop.f32.mrf.mxu0
      %v2189 = vadd.f32 %v1701, %v2188
      %2190 = vmatmul.bf16.gmra.mxu0 %v1905
      %v2191 = vpop.f32.mrf.mxu0
      %v2192 = vadd.f32 %v1704, %v2191
      %v2193 = vpop.f32.mrf.mxu0
      %v2194 = vadd.f32 %v1706, %v2193
      %2195 = vmatmul.bf16.gmra.mxu0 %v1907
      %v2196 = vpop.f32.mrf.mxu0
      %v2197 = vadd.f32 %v1709, %v2196
      %v2198 = vpop.f32.mrf.mxu0
      %v2199 = vadd.f32 %v1711, %v2198
      %2200 = vmatmul.bf16.gmra.mxu0 %v1909
      %v2201 = vpop.f32.mrf.mxu0
      %v2202 = vadd.f32 %v1714, %v2201
      %v2203 = vpop.f32.mrf.mxu0
      %v2204 = vadd.f32 %v1716, %v2203
      %2205 = vmatmul.bf16.gmra.mxu0 %v1911
      %v2206 = vpop.f32.mrf.mxu0
      %v2207 = vadd.f32 %v1719, %v2206
      %v2208 = vpop.f32.mrf.mxu0
      %v2209 = vadd.f32 %v1721, %v2208
      %2210 = vmatmul.bf16.gmra.mxu0 %v1913
      %v2211 = vpop.f32.mrf.mxu0
      %v2212 = vadd.f32 %v1724, %v2211
      %v2213 = vpop.f32.mrf.mxu0
      %v2214 = vadd.f32 %v1726, %v2213
      %2215 = vmatmul.bf16.gmra.mxu0 %v1915
      %v2216 = vpop.f32.mrf.mxu0
      %v2217 = vadd.f32 %v1729, %v2216
      %v2218 = vpop.f32.mrf.mxu0
      %v2219 = vadd.f32 %v1731, %v2218
      %2220 = vmatmul.bf16.gmra.mxu0 %v1917
      %v2221 = vpop.f32.mrf.mxu0
      %v2222 = vadd.f32 %v1734, %v2221
      %v2223 = vpop.f32.mrf.mxu0
      %v2224 = vadd.f32 %v1736, %v2223
      %2225 = vmatmul.bf16.gmra.mxu0 %v1919
      %v2226 = vpop.f32.mrf.mxu0
      %v2227 = vadd.f32 %v1739, %v2226
      %v2228 = vpop.f32.mrf.mxu0
      %v2229 = vadd.f32 %v1741, %v2228
      %2230 = vmatmul.bf16.gmra.mxu0 %v1921
      %v2231 = vpop.f32.mrf.mxu0
      %v2232 = vadd.f32 %v1744, %v2231
      %v2233 = vpop.f32.mrf.mxu0
      %v2234 = vadd.f32 %v1746, %v2233
      %2235 = vmatmul.bf16.gmra.mxu0 %v1923
      %v2236 = vpop.f32.mrf.mxu0
      %v2237 = vadd.f32 %v1749, %v2236
      %v2238 = vpop.f32.mrf.mxu0
      %v2239 = vadd.f32 %v1751, %v2238
      %2240 = vmatmul.bf16.gmra.mxu0 %v1925
      %v2241 = vpop.f32.mrf.mxu0
      %v2242 = vadd.f32 %v1754, %v2241
      %v2243 = vpop.f32.mrf.mxu0
      %v2244 = vadd.f32 %v1756, %v2243
      %2245 = vmatmul.bf16.gmra.mxu0 %v1927
      %v2246 = vpop.f32.mrf.mxu0
      %v2247 = vadd.f32 %v1759, %v2246
      %v2248 = vpop.f32.mrf.mxu0
      %v2249 = vadd.f32 %v1761, %v2248
      %2250 = vmatmul.bf16.gmra.mxu0 %v1929
      %v2251 = vpop.f32.mrf.mxu0
      %v2252 = vadd.f32 %v1764, %v2251
      %v2253 = vpop.f32.mrf.mxu0
      %v2254 = vadd.f32 %v1766, %v2253
      %2255 = vmatmul.bf16.gmra.mxu0 %v1931
      %v2256 = vpop.f32.mrf.mxu0
      %v2257 = vadd.f32 %v1769, %v2256
      %v2258 = vpop.f32.mrf.mxu0
      %v2259 = vadd.f32 %v1771, %v2258
      %2260 = vmatmul.bf16.gmra.mxu0 %v1933
      %v2261 = vpop.f32.mrf.mxu0
      %v2262 = vadd.f32 %v1774, %v2261
      %v2263 = vpop.f32.mrf.mxu0
      %v2264 = vadd.f32 %v1776, %v2263
      %2265 = vmatmul.bf16.gmra.mxu0 %v1935
      %v2266 = vpop.f32.mrf.mxu0
      %v2267 = vadd.f32 %v1779, %v2266
      %v2268 = vpop.f32.mrf.mxu0
      %v2269 = vadd.f32 %v1781, %v2268
      %2270 = vmatmul.bf16.gmra.mxu0 %v1937
      %v2271 = vpop.f32.mrf.mxu0
      %v2272 = vadd.f32 %v1784, %v2271
      %v2273 = vpop.f32.mrf.mxu0
      %v2274 = vadd.f32 %v1786, %v2273
      %2275 = vmatmul.bf16.gmra.mxu0 %v1939
      %v2276 = vpop.f32.mrf.mxu0
      %v2277 = vadd.f32 %v1789, %v2276
      %v2278 = vpop.f32.mrf.mxu0
      %v2279 = vadd.f32 %v1791, %v2278
      %2280 = vmatmul.bf16.gmra.mxu0 %v1941
      %v2281 = vpop.f32.mrf.mxu0
      %v2282 = vadd.f32 %v1794, %v2281
      %v2283 = vpop.f32.mrf.mxu0
      %v2284 = vadd.f32 %v1796, %v2283
      %2285 = vmatmul.bf16.gmra.mxu0 %v1943
      %v2286 = vpop.f32.mrf.mxu0
      %v2287 = vadd.f32 %v1799, %v2286
      %v2288 = vpop.f32.mrf.mxu0
      %v2289 = vadd.f32 %v1801, %v2288
      %2290 = vmatmul.bf16.gmra.mxu0 %v1945
      %v2291 = vpop.f32.mrf.mxu0
      %v2292 = vadd.f32 %v1804, %v2291
      %v2293 = vpop.f32.mrf.mxu0
      %v2294 = vadd.f32 %v1806, %v2293
      %2295 = vmatmul.bf16.gmra.mxu0 %v1947
      %v2296 = vpop.f32.mrf.mxu0
      %v2297 = vadd.f32 %v1809, %v2296
      %v2298 = vpop.f32.mrf.mxu0
      %v2299 = vadd.f32 %v1811, %v2298
      %2300 = vdwg.mxu0
      %v2301 = vld [vmem:[%s206] sm:$0xe]
      %s2302 = scalar_lea.vmem %s210, 8
      %v2303 = vld [vmem:[%s2302] sm:$0xf]
      %v2305 = vunpack.c.l.b16 %v2301
      %v2306 = vpack.c.b16 %v501, %v2305
      %vm2307 = vcmask 1046528
      %v2308 = vrot.slane %v2306, 1
      %v2309 = vrot.slane %v638, 1
      %v2310 = vsel %vm2307, %v2308, %v2309
      %v2311 = vrot.slane %v639, 1
      %v2312 = vsel %vm2307, %v2309, %v2311
      %v2313 = vrot.slane %v640, 1
      %v2314 = vsel %vm2307, %v2311, %v2313
      %v2315 = vrot.slane %v641, 1
      %v2316 = vsel %vm2307, %v2313, %v2315
      %v2317 = vrot.slane %v642, 1
      %v2318 = vsel %vm2307, %v2315, %v2317
      %v2319 = vrot.slane %v643, 1
      %v2320 = vsel %vm2307, %v2317, %v2319
      %v2321 = vrot.slane %v644, 1
      %v2322 = vsel %vm2307, %v2319, %v2321
      %v2323 = vrot.slane %v645, 1
      %v2324 = vsel %vm2307, %v2321, %v2323
      %v2325 = vrot.slane %v646, 1
      %v2326 = vsel %vm2307, %v2323, %v2325
      %v2327 = vrot.slane %v647, 1
      %v2328 = vsel %vm2307, %v2325, %v2327
      %v2329 = vrot.slane %v648, 1
      %v2330 = vsel %vm2307, %v2327, %v2329
      %v2331 = vrot.slane %v649, 1
      %v2332 = vsel %vm2307, %v2329, %v2331
      %v2333 = vrot.slane %v650, 1
      %v2334 = vsel %vm2307, %v2331, %v2333
      %v2335 = vrot.slane %v651, 1
      %v2336 = vsel %vm2307, %v2333, %v2335
      %v2337 = vrot.slane %v652, 1
      %v2338 = vsel %vm2307, %v2335, %v2337
      %v2339 = vrot.slane %v653, 1
      %v2340 = vsel %vm2307, %v2337, %v2339
      %v2341 = vrot.slane %v654, 1
      %v2342 = vsel %vm2307, %v2339, %v2341
      %v2343 = vrot.slane %v655, 1
      %v2344 = vsel %vm2307, %v2341, %v2343
      %v2345 = vrot.slane %v656, 1
      %v2346 = vsel %vm2307, %v2343, %v2345
      %v2347 = vrot.slane %v657, 1
      %v2348 = vsel %vm2307, %v2345, %v2347
      %v2349 = vrot.slane %v658, 1
      %v2350 = vsel %vm2307, %v2347, %v2349
      %v2351 = vrot.slane %v659, 1
      %v2352 = vsel %vm2307, %v2349, %v2351
      %v2353 = vrot.slane %v660, 1
      %v2354 = vsel %vm2307, %v2351, %v2353
      %v2355 = vrot.slane %v661, 1
      %v2356 = vsel %vm2307, %v2353, %v2355
      %v2357 = vrot.slane %v662, 1
      %v2358 = vsel %vm2307, %v2355, %v2357
      %v2359 = vrot.slane %v663, 1
      %v2360 = vsel %vm2307, %v2357, %v2359
      %v2361 = vrot.slane %v664, 1
      %v2362 = vsel %vm2307, %v2359, %v2361
      %v2363 = vrot.slane %v665, 1
      %v2364 = vsel %vm2307, %v2361, %v2363
      %v2365 = vrot.slane %v666, 1
      %v2366 = vsel %vm2307, %v2363, %v2365
      %v2367 = vrot.slane %v667, 1
      %v2368 = vsel %vm2307, %v2365, %v2367
      %v2369 = vrot.slane %v668, 1
      %v2370 = vsel %vm2307, %v2367, %v2369
      %v2371 = vrot.slane %v669, 1
      %v2372 = vsel %vm2307, %v2369, %v2371
      %v2373 = vrot.slane %v670, 1
      %v2374 = vsel %vm2307, %v2371, %v2373
      %v2375 = vrot.slane %v671, 1
      %v2376 = vsel %vm2307, %v2373, %v2375
      %v2377 = vrot.slane %v672, 1
      %v2378 = vsel %vm2307, %v2375, %v2377
      %v2379 = vrot.slane %v673, 1
      %v2380 = vsel %vm2307, %v2377, %v2379
      %v2381 = vrot.slane %v674, 1
      %v2382 = vsel %vm2307, %v2379, %v2381
      %v2383 = vrot.slane %v675, 1
      %v2384 = vsel %vm2307, %v2381, %v2383
      %v2385 = vrot.slane %v676, 1
      %v2386 = vsel %vm2307, %v2383, %v2385
      %v2387 = vrot.slane %v677, 1
      %v2388 = vsel %vm2307, %v2385, %v2387
      %v2389 = vrot.slane %v678, 1
      %v2390 = vsel %vm2307, %v2387, %v2389
      %v2391 = vrot.slane %v679, 1
      %v2392 = vsel %vm2307, %v2389, %v2391
      %v2393 = vrot.slane %v680, 1
      %v2394 = vsel %vm2307, %v2391, %v2393
      %v2395 = vrot.slane %v681, 1
      %v2396 = vsel %vm2307, %v2393, %v2395
      %v2397 = vrot.slane %v682, 1
      %v2398 = vsel %vm2307, %v2395, %v2397
      %v2399 = vrot.slane %v683, 1
      %v2400 = vsel %vm2307, %v2397, %v2399
      %v2401 = vrot.slane %v684, 1
      %v2402 = vsel %vm2307, %v2399, %v2401
      %v2403 = vrot.slane %v685, 1
      %v2404 = vsel %vm2307, %v2401, %v2403
      %v2405 = vrot.slane %v686, 1
      %v2406 = vsel %vm2307, %v2403, %v2405
      %v2407 = vrot.slane %v687, 1
      %v2408 = vsel %vm2307, %v2405, %v2407
      %v2409 = vrot.slane %v688, 1
      %v2410 = vsel %vm2307, %v2407, %v2409
      %v2411 = vrot.slane %v689, 1
      %v2412 = vsel %vm2307, %v2409, %v2411
      %v2413 = vrot.slane %v690, 1
      %v2414 = vsel %vm2307, %v2411, %v2413
      %v2415 = vrot.slane %v691, 1
      %v2416 = vsel %vm2307, %v2413, %v2415
      %v2417 = vrot.slane %v692, 1
      %v2418 = vsel %vm2307, %v2415, %v2417
      %v2419 = vrot.slane %v693, 1
      %v2420 = vsel %vm2307, %v2417, %v2419
      %v2421 = vrot.slane %v694, 1
      %v2422 = vsel %vm2307, %v2419, %v2421
      %v2423 = vrot.slane %v695, 1
      %v2424 = vsel %vm2307, %v2421, %v2423
      %v2425 = vrot.slane %v696, 1
      %v2426 = vsel %vm2307, %v2423, %v2425
      %v2427 = vrot.slane %v697, 1
      %v2428 = vsel %vm2307, %v2425, %v2427
      %v2429 = vrot.slane %v698, 1
      %v2430 = vsel %vm2307, %v2427, %v2429
      %v2431 = vrot.slane %v699, 1
      %v2432 = vsel %vm2307, %v2429, %v2431
      %v2433 = vrot.slane %v700, 1
      %v2434 = vsel %vm2307, %v2431, %v2433
      %v2435 = vrot.slane %v701, 1
      %v2436 = vsel %vm2307, %v2433, %v2435
      %v2437 = vrot.slane %v702, 1
      %v2438 = vsel %vm2307, %v2435, %v2437
      %v2439 = vrot.slane %v703, 1
      %v2440 = vsel %vm2307, %v2437, %v2439
      %v2441 = vrot.slane %v704, 1
      %v2442 = vsel %vm2307, %v2439, %v2441
      %v2443 = vrot.slane %v705, 1
      %v2444 = vsel %vm2307, %v2441, %v2443
      %v2446 = vsel %vm1255, %v2310, 0
      %v2449 = vsel %vm1255, %v2312, 0
      %v2452 = vsel %vm1255, %v2314, 0
      %v2455 = vsel %vm1255, %v2316, 0
      %v2458 = vsel %vm1255, %v2318, 0
      %v2461 = vsel %vm1255, %v2320, 0
      %v2464 = vsel %vm1255, %v2322, 0
      %v2467 = vsel %vm1255, %v2324, 0
      %v2470 = vsel %vm1255, %v2326, 0
      %v2473 = vsel %vm1255, %v2328, 0
      %v2476 = vsel %vm1255, %v2330, 0
      %v2479 = vsel %vm1255, %v2332, 0
      %v2482 = vsel %vm1255, %v2334, 0
      %v2485 = vsel %vm1255, %v2336, 0
      %v2488 = vsel %vm1255, %v2338, 0
      %v2491 = vsel %vm1255, %v2340, 0
      %v2494 = vsel %vm1255, %v2342, 0
      %v2497 = vsel %vm1255, %v2344, 0
      %v2500 = vsel %vm1255, %v2346, 0
      %v2503 = vsel %vm1255, %v2348, 0
      %v2506 = vsel %vm1255, %v2350, 0
      %v2509 = vsel %vm1255, %v2352, 0
      %v2512 = vsel %vm1255, %v2354, 0
      %v2515 = vsel %vm1255, %v2356, 0
      %v2518 = vsel %vm1255, %v2358, 0
      %v2521 = vsel %vm1255, %v2360, 0
      %v2524 = vsel %vm1255, %v2362, 0
      %v2527 = vsel %vm1255, %v2364, 0
      %v2530 = vsel %vm1255, %v2366, 0
      %v2533 = vsel %vm1255, %v2368, 0
      %v2536 = vsel %vm1255, %v2370, 0
      %v2539 = vsel %vm1255, %v2372, 0
      %v2542 = vsel %vm1255, %v2374, 0
      %v2545 = vsel %vm1255, %v2376, 0
      %v2548 = vsel %vm1255, %v2378, 0
      %v2551 = vsel %vm1255, %v2380, 0
      %v2554 = vsel %vm1255, %v2382, 0
      %v2557 = vsel %vm1255, %v2384, 0
      %v2560 = vsel %vm1255, %v2386, 0
      %v2563 = vsel %vm1255, %v2388, 0
      %v2566 = vsel %vm1255, %v2390, 0
      %v2569 = vsel %vm1255, %v2392, 0
      %v2572 = vsel %vm1255, %v2394, 0
      %v2575 = vsel %vm1255, %v2396, 0
      %v2578 = vsel %vm1255, %v2398, 0
      %v2581 = vsel %vm1255, %v2400, 0
      %v2584 = vsel %vm1255, %v2402, 0
      %v2587 = vsel %vm1255, %v2404, 0
      %v2590 = vsel %vm1255, %v2406, 0
      %v2593 = vsel %vm1255, %v2408, 0
      %v2596 = vsel %vm1255, %v2410, 0
      %v2599 = vsel %vm1255, %v2412, 0
      %v2602 = vsel %vm1255, %v2414, 0
      %v2605 = vsel %vm1255, %v2416, 0
      %v2608 = vsel %vm1255, %v2418, 0
      %v2611 = vsel %vm1255, %v2420, 0
      %v2614 = vsel %vm1255, %v2422, 0
      %v2617 = vsel %vm1255, %v2424, 0
      %v2620 = vsel %vm1255, %v2426, 0
      %v2623 = vsel %vm1255, %v2428, 0
      %v2626 = vsel %vm1255, %v2430, 0
      %v2629 = vsel %vm1255, %v2432, 0
      %v2632 = vsel %vm1255, %v2434, 0
      %v2635 = vsel %vm1255, %v2436, 0
      %v2638 = vsel %vm1255, %v2438, 0
      %v2641 = vsel %vm1255, %v2440, 0
      %v2644 = vsel %vm1255, %v2442, 0
      %v2647 = vsel %vm1255, %v2444, 0
      %v2650 = vsel %vm1460, %v2303, 0
      %2652 = vmatpush.bf16.msra.mxu0 0
      %2653 = vmatpush.bf16.msra.mxu0 0
      %2654 = vmatpush.bf16.msra.mxu0 0
      %2655 = vmatpush.bf16.msra.mxu0 0
      %2656 = vmatpush.bf16.msra.mxu0 0
      %2657 = vmatpush.bf16.msra.mxu0 0
      %2658 = vmatpush.bf16.msra.mxu0 0
      %2659 = vmatpush.bf16.msra.mxu0 %v2650
      %2660 = vmatmul.bf16.gmra.mxu0 %v2446
      %v2661 = vpop.f32.mrf.mxu0
      %v2662 = vadd.f32 0.0, %v2661
      %v2663 = vpop.f32.mrf.mxu0
      %v2664 = vadd.f32 0.0, %v2663
      %2665 = vmatmul.bf16.gmra.mxu0 %v2449
      %v2666 = vpop.f32.mrf.mxu0
      %v2667 = vadd.f32 0.0, %v2666
      %v2668 = vpop.f32.mrf.mxu0
      %v2669 = vadd.f32 0.0, %v2668
      %2670 = vmatmul.bf16.gmra.mxu0 %v2452
      %v2671 = vpop.f32.mrf.mxu0
      %v2672 = vadd.f32 0.0, %v2671
      %v2673 = vpop.f32.mrf.mxu0
      %v2674 = vadd.f32 0.0, %v2673
      %2675 = vmatmul.bf16.gmra.mxu0 %v2455
      %v2676 = vpop.f32.mrf.mxu0
      %v2677 = vadd.f32 0.0, %v2676
      %v2678 = vpop.f32.mrf.mxu0
      %v2679 = vadd.f32 0.0, %v2678
      %2680 = vmatmul.bf16.gmra.mxu0 %v2458
      %v2681 = vpop.f32.mrf.mxu0
      %v2682 = vadd.f32 0.0, %v2681
      %v2683 = vpop.f32.mrf.mxu0
      %v2684 = vadd.f32 0.0, %v2683
      %2685 = vmatmul.bf16.gmra.mxu0 %v2461
      %v2686 = vpop.f32.mrf.mxu0
      %v2687 = vadd.f32 0.0, %v2686
      %v2688 = vpop.f32.mrf.mxu0
      %v2689 = vadd.f32 0.0, %v2688
      %2690 = vmatmul.bf16.gmra.mxu0 %v2464
      %v2691 = vpop.f32.mrf.mxu0
      %v2692 = vadd.f32 0.0, %v2691
      %v2693 = vpop.f32.mrf.mxu0
      %v2694 = vadd.f32 0.0, %v2693
      %2695 = vmatmul.bf16.gmra.mxu0 %v2467
      %v2696 = vpop.f32.mrf.mxu0
      %v2697 = vadd.f32 0.0, %v2696
      %v2698 = vpop.f32.mrf.mxu0
      %v2699 = vadd.f32 0.0, %v2698
      %2700 = vmatmul.bf16.gmra.mxu0 %v2470
      %v2701 = vpop.f32.mrf.mxu0
      %v2702 = vadd.f32 0.0, %v2701
      %v2703 = vpop.f32.mrf.mxu0
      %v2704 = vadd.f32 0.0, %v2703
      %2705 = vmatmul.bf16.gmra.mxu0 %v2473
      %v2706 = vpop.f32.mrf.mxu0
      %v2707 = vadd.f32 0.0, %v2706
      %v2708 = vpop.f32.mrf.mxu0
      %v2709 = vadd.f32 0.0, %v2708
      %2710 = vmatmul.bf16.gmra.mxu0 %v2476
      %v2711 = vpop.f32.mrf.mxu0
      %v2712 = vadd.f32 0.0, %v2711
      %v2713 = vpop.f32.mrf.mxu0
      %v2714 = vadd.f32 0.0, %v2713
      %2715 = vmatmul.bf16.gmra.mxu0 %v2479
      %v2716 = vpop.f32.mrf.mxu0
      %v2717 = vadd.f32 0.0, %v2716
      %v2718 = vpop.f32.mrf.mxu0
      %v2719 = vadd.f32 0.0, %v2718
      %2720 = vmatmul.bf16.gmra.mxu0 %v2482
      %v2721 = vpop.f32.mrf.mxu0
      %v2722 = vadd.f32 0.0, %v2721
      %v2723 = vpop.f32.mrf.mxu0
      %v2724 = vadd.f32 0.0, %v2723
      %2725 = vmatmul.bf16.gmra.mxu0 %v2485
      %v2726 = vpop.f32.mrf.mxu0
      %v2727 = vadd.f32 0.0, %v2726
      %v2728 = vpop.f32.mrf.mxu0
      %v2729 = vadd.f32 0.0, %v2728
      %2730 = vmatmul.bf16.gmra.mxu0 %v2488
      %v2731 = vpop.f32.mrf.mxu0
      %v2732 = vadd.f32 0.0, %v2731
      %v2733 = vpop.f32.mrf.mxu0
      %v2734 = vadd.f32 0.0, %v2733
      %2735 = vmatmul.bf16.gmra.mxu0 %v2491
      %v2736 = vpop.f32.mrf.mxu0
      %v2737 = vadd.f32 0.0, %v2736
      %v2738 = vpop.f32.mrf.mxu0
      %v2739 = vadd.f32 0.0, %v2738
      %2740 = vmatmul.bf16.gmra.mxu0 %v2494
      %v2741 = vpop.f32.mrf.mxu0
      %v2742 = vadd.f32 0.0, %v2741
      %v2743 = vpop.f32.mrf.mxu0
      %v2744 = vadd.f32 0.0, %v2743
      %2745 = vmatmul.bf16.gmra.mxu0 %v2497
      %v2746 = vpop.f32.mrf.mxu0
      %v2747 = vadd.f32 0.0, %v2746
      %v2748 = vpop.f32.mrf.mxu0
      %v2749 = vadd.f32 0.0, %v2748
      %2750 = vmatmul.bf16.gmra.mxu0 %v2500
      %v2751 = vpop.f32.mrf.mxu0
      %v2752 = vadd.f32 0.0, %v2751
      %v2753 = vpop.f32.mrf.mxu0
      %v2754 = vadd.f32 0.0, %v2753
      %2755 = vmatmul.bf16.gmra.mxu0 %v2503
      %v2756 = vpop.f32.mrf.mxu0
      %v2757 = vadd.f32 0.0, %v2756
      %v2758 = vpop.f32.mrf.mxu0
      %v2759 = vadd.f32 0.0, %v2758
      %2760 = vmatmul.bf16.gmra.mxu0 %v2506
      %v2761 = vpop.f32.mrf.mxu0
      %v2762 = vadd.f32 0.0, %v2761
      %v2763 = vpop.f32.mrf.mxu0
      %v2764 = vadd.f32 0.0, %v2763
      %2765 = vmatmul.bf16.gmra.mxu0 %v2509
      %v2766 = vpop.f32.mrf.mxu0
      %v2767 = vadd.f32 0.0, %v2766
      %v2768 = vpop.f32.mrf.mxu0
      %v2769 = vadd.f32 0.0, %v2768
      %2770 = vmatmul.bf16.gmra.mxu0 %v2512
      %v2771 = vpop.f32.mrf.mxu0
      %v2772 = vadd.f32 0.0, %v2771
      %v2773 = vpop.f32.mrf.mxu0
      %v2774 = vadd.f32 0.0, %v2773
      %2775 = vmatmul.bf16.gmra.mxu0 %v2515
      %v2776 = vpop.f32.mrf.mxu0
      %v2777 = vadd.f32 0.0, %v2776
      %v2778 = vpop.f32.mrf.mxu0
      %v2779 = vadd.f32 0.0, %v2778
      %2780 = vmatmul.bf16.gmra.mxu0 %v2518
      %v2781 = vpop.f32.mrf.mxu0
      %v2782 = vadd.f32 0.0, %v2781
      %v2783 = vpop.f32.mrf.mxu0
      %v2784 = vadd.f32 0.0, %v2783
      %2785 = vmatmul.bf16.gmra.mxu0 %v2521
      %v2786 = vpop.f32.mrf.mxu0
      %v2787 = vadd.f32 0.0, %v2786
      %v2788 = vpop.f32.mrf.mxu0
      %v2789 = vadd.f32 0.0, %v2788
      %2790 = vmatmul.bf16.gmra.mxu0 %v2524
      %v2791 = vpop.f32.mrf.mxu0
      %v2792 = vadd.f32 0.0, %v2791
      %v2793 = vpop.f32.mrf.mxu0
      %v2794 = vadd.f32 0.0, %v2793
      %2795 = vmatmul.bf16.gmra.mxu0 %v2527
      %v2796 = vpop.f32.mrf.mxu0
      %v2797 = vadd.f32 0.0, %v2796
      %v2798 = vpop.f32.mrf.mxu0
      %v2799 = vadd.f32 0.0, %v2798
      %2800 = vmatmul.bf16.gmra.mxu0 %v2530
      %v2801 = vpop.f32.mrf.mxu0
      %v2802 = vadd.f32 0.0, %v2801
      %v2803 = vpop.f32.mrf.mxu0
      %v2804 = vadd.f32 0.0, %v2803
      %2805 = vmatmul.bf16.gmra.mxu0 %v2533
      %v2806 = vpop.f32.mrf.mxu0
      %v2807 = vadd.f32 0.0, %v2806
      %v2808 = vpop.f32.mrf.mxu0
      %v2809 = vadd.f32 0.0, %v2808
      %2810 = vmatmul.bf16.gmra.mxu0 %v2536
      %v2811 = vpop.f32.mrf.mxu0
      %v2812 = vadd.f32 0.0, %v2811
      %v2813 = vpop.f32.mrf.mxu0
      %v2814 = vadd.f32 0.0, %v2813
      %2815 = vmatmul.bf16.gmra.mxu0 %v2539
      %v2816 = vpop.f32.mrf.mxu0
      %v2817 = vadd.f32 0.0, %v2816
      %v2818 = vpop.f32.mrf.mxu0
      %v2819 = vadd.f32 0.0, %v2818
      %2820 = vmatmul.bf16.gmra.mxu0 %v2542
      %v2821 = vpop.f32.mrf.mxu0
      %v2822 = vadd.f32 0.0, %v2821
      %v2823 = vpop.f32.mrf.mxu0
      %v2824 = vadd.f32 0.0, %v2823
      %2825 = vmatmul.bf16.gmra.mxu0 %v2545
      %v2826 = vpop.f32.mrf.mxu0
      %v2827 = vadd.f32 0.0, %v2826
      %v2828 = vpop.f32.mrf.mxu0
      %v2829 = vadd.f32 0.0, %v2828
      %2830 = vmatmul.bf16.gmra.mxu0 %v2548
      %v2831 = vpop.f32.mrf.mxu0
      %v2832 = vadd.f32 0.0, %v2831
      %v2833 = vpop.f32.mrf.mxu0
      %v2834 = vadd.f32 0.0, %v2833
      %2835 = vmatmul.bf16.gmra.mxu0 %v2551
      %v2836 = vpop.f32.mrf.mxu0
      %v2837 = vadd.f32 0.0, %v2836
      %v2838 = vpop.f32.mrf.mxu0
      %v2839 = vadd.f32 0.0, %v2838
      %2840 = vmatmul.bf16.gmra.mxu0 %v2554
      %v2841 = vpop.f32.mrf.mxu0
      %v2842 = vadd.f32 0.0, %v2841
      %v2843 = vpop.f32.mrf.mxu0
      %v2844 = vadd.f32 0.0, %v2843
      %2845 = vmatmul.bf16.gmra.mxu0 %v2557
      %v2846 = vpop.f32.mrf.mxu0
      %v2847 = vadd.f32 0.0, %v2846
      %v2848 = vpop.f32.mrf.mxu0
      %v2849 = vadd.f32 0.0, %v2848
      %2850 = vmatmul.bf16.gmra.mxu0 %v2560
      %v2851 = vpop.f32.mrf.mxu0
      %v2852 = vadd.f32 0.0, %v2851
      %v2853 = vpop.f32.mrf.mxu0
      %v2854 = vadd.f32 0.0, %v2853
      %2855 = vmatmul.bf16.gmra.mxu0 %v2563
      %v2856 = vpop.f32.mrf.mxu0
      %v2857 = vadd.f32 0.0, %v2856
      %v2858 = vpop.f32.mrf.mxu0
      %v2859 = vadd.f32 0.0, %v2858
      %2860 = vmatmul.bf16.gmra.mxu0 %v2566
      %v2861 = vpop.f32.mrf.mxu0
      %v2862 = vadd.f32 0.0, %v2861
      %v2863 = vpop.f32.mrf.mxu0
      %v2864 = vadd.f32 0.0, %v2863
      %2865 = vmatmul.bf16.gmra.mxu0 %v2569
      %v2866 = vpop.f32.mrf.mxu0
      %v2867 = vadd.f32 0.0, %v2866
      %v2868 = vpop.f32.mrf.mxu0
      %v2869 = vadd.f32 0.0, %v2868
      %2870 = vmatmul.bf16.gmra.mxu0 %v2572
      %v2871 = vpop.f32.mrf.mxu0
      %v2872 = vadd.f32 0.0, %v2871
      %v2873 = vpop.f32.mrf.mxu0
      %v2874 = vadd.f32 0.0, %v2873
      %2875 = vmatmul.bf16.gmra.mxu0 %v2575
      %v2876 = vpop.f32.mrf.mxu0
      %v2877 = vadd.f32 0.0, %v2876
      %v2878 = vpop.f32.mrf.mxu0
      %v2879 = vadd.f32 0.0, %v2878
      %2880 = vmatmul.bf16.gmra.mxu0 %v2578
      %v2881 = vpop.f32.mrf.mxu0
      %v2882 = vadd.f32 0.0, %v2881
      %v2883 = vpop.f32.mrf.mxu0
      %v2884 = vadd.f32 0.0, %v2883
      %2885 = vmatmul.bf16.gmra.mxu0 %v2581
      %v2886 = vpop.f32.mrf.mxu0
      %v2887 = vadd.f32 0.0, %v2886
      %v2888 = vpop.f32.mrf.mxu0
      %v2889 = vadd.f32 0.0, %v2888
      %2890 = vmatmul.bf16.gmra.mxu0 %v2584
      %v2891 = vpop.f32.mrf.mxu0
      %v2892 = vadd.f32 0.0, %v2891
      %v2893 = vpop.f32.mrf.mxu0
      %v2894 = vadd.f32 0.0, %v2893
      %2895 = vmatmul.bf16.gmra.mxu0 %v2587
      %v2896 = vpop.f32.mrf.mxu0
      %v2897 = vadd.f32 0.0, %v2896
      %v2898 = vpop.f32.mrf.mxu0
      %v2899 = vadd.f32 0.0, %v2898
      %2900 = vmatmul.bf16.gmra.mxu0 %v2590
      %v2901 = vpop.f32.mrf.mxu0
      %v2902 = vadd.f32 0.0, %v2901
      %v2903 = vpop.f32.mrf.mxu0
      %v2904 = vadd.f32 0.0, %v2903
      %2905 = vmatmul.bf16.gmra.mxu0 %v2593
      %v2906 = vpop.f32.mrf.mxu0
      %v2907 = vadd.f32 0.0, %v2906
      %v2908 = vpop.f32.mrf.mxu0
      %v2909 = vadd.f32 0.0, %v2908
      %2910 = vmatmul.bf16.gmra.mxu0 %v2596
      %v2911 = vpop.f32.mrf.mxu0
      %v2912 = vadd.f32 0.0, %v2911
      %v2913 = vpop.f32.mrf.mxu0
      %v2914 = vadd.f32 0.0, %v2913
      %2915 = vmatmul.bf16.gmra.mxu0 %v2599
      %v2916 = vpop.f32.mrf.mxu0
      %v2917 = vadd.f32 0.0, %v2916
      %v2918 = vpop.f32.mrf.mxu0
      %v2919 = vadd.f32 0.0, %v2918
      %2920 = vmatmul.bf16.gmra.mxu0 %v2602
      %v2921 = vpop.f32.mrf.mxu0
      %v2922 = vadd.f32 0.0, %v2921
      %v2923 = vpop.f32.mrf.mxu0
      %v2924 = vadd.f32 0.0, %v2923
      %2925 = vmatmul.bf16.gmra.mxu0 %v2605
      %v2926 = vpop.f32.mrf.mxu0
      %v2927 = vadd.f32 0.0, %v2926
      %v2928 = vpop.f32.mrf.mxu0
      %v2929 = vadd.f32 0.0, %v2928
      %2930 = vmatmul.bf16.gmra.mxu0 %v2608
      %v2931 = vpop.f32.mrf.mxu0
      %v2932 = vadd.f32 0.0, %v2931
      %v2933 = vpop.f32.mrf.mxu0
      %v2934 = vadd.f32 0.0, %v2933
      %2935 = vmatmul.bf16.gmra.mxu0 %v2611
      %v2936 = vpop.f32.mrf.mxu0
      %v2937 = vadd.f32 0.0, %v2936
      %v2938 = vpop.f32.mrf.mxu0
      %v2939 = vadd.f32 0.0, %v2938
      %2940 = vmatmul.bf16.gmra.mxu0 %v2614
      %v2941 = vpop.f32.mrf.mxu0
      %v2942 = vadd.f32 0.0, %v2941
      %v2943 = vpop.f32.mrf.mxu0
      %v2944 = vadd.f32 0.0, %v2943
      %2945 = vmatmul.bf16.gmra.mxu0 %v2617
      %v2946 = vpop.f32.mrf.mxu0
      %v2947 = vadd.f32 0.0, %v2946
      %v2948 = vpop.f32.mrf.mxu0
      %v2949 = vadd.f32 0.0, %v2948
      %2950 = vmatmul.bf16.gmra.mxu0 %v2620
      %v2951 = vpop.f32.mrf.mxu0
      %v2952 = vadd.f32 0.0, %v2951
      %v2953 = vpop.f32.mrf.mxu0
      %v2954 = vadd.f32 0.0, %v2953
      %2955 = vmatmul.bf16.gmra.mxu0 %v2623
      %v2956 = vpop.f32.mrf.mxu0
      %v2957 = vadd.f32 0.0, %v2956
      %v2958 = vpop.f32.mrf.mxu0
      %v2959 = vadd.f32 0.0, %v2958
      %2960 = vmatmul.bf16.gmra.mxu0 %v2626
      %v2961 = vpop.f32.mrf.mxu0
      %v2962 = vadd.f32 0.0, %v2961
      %v2963 = vpop.f32.mrf.mxu0
      %v2964 = vadd.f32 0.0, %v2963
      %2965 = vmatmul.bf16.gmra.mxu0 %v2629
      %v2966 = vpop.f32.mrf.mxu0
      %v2967 = vadd.f32 0.0, %v2966
      %v2968 = vpop.f32.mrf.mxu0
      %v2969 = vadd.f32 0.0, %v2968
      %2970 = vmatmul.bf16.gmra.mxu0 %v2632
      %v2971 = vpop.f32.mrf.mxu0
      %v2972 = vadd.f32 0.0, %v2971
      %v2973 = vpop.f32.mrf.mxu0
      %v2974 = vadd.f32 0.0, %v2973
      %2975 = vmatmul.bf16.gmra.mxu0 %v2635
      %v2976 = vpop.f32.mrf.mxu0
      %v2977 = vadd.f32 0.0, %v2976
      %v2978 = vpop.f32.mrf.mxu0
      %v2979 = vadd.f32 0.0, %v2978
      %2980 = vmatmul.bf16.gmra.mxu0 %v2638
      %v2981 = vpop.f32.mrf.mxu0
      %v2982 = vadd.f32 0.0, %v2981
      %v2983 = vpop.f32.mrf.mxu0
      %v2984 = vadd.f32 0.0, %v2983
      %2985 = vmatmul.bf16.gmra.mxu0 %v2641
      %v2986 = vpop.f32.mrf.mxu0
      %v2987 = vadd.f32 0.0, %v2986
      %v2988 = vpop.f32.mrf.mxu0
      %v2989 = vadd.f32 0.0, %v2988
      %2990 = vmatmul.bf16.gmra.mxu0 %v2644
      %v2991 = vpop.f32.mrf.mxu0
      %v2992 = vadd.f32 0.0, %v2991
      %v2993 = vpop.f32.mrf.mxu0
      %v2994 = vadd.f32 0.0, %v2993
      %2995 = vmatmul.bf16.gmra.mxu0 %v2647
      %v2996 = vpop.f32.mrf.mxu0
      %v2997 = vadd.f32 0.0, %v2996
      %v2998 = vpop.f32.mrf.mxu0
      %v2999 = vadd.f32 0.0, %v2998
      %3000 = vdwg.mxu0
      %v3001 = vadd.f32 %v1962, %v2662
      %v3002 = vadd.f32 %v1964, %v2664
      %v3003 = vadd.f32 %v1967, %v2667
      %v3004 = vadd.f32 %v1969, %v2669
      %v3005 = vadd.f32 %v1972, %v2672
      %v3006 = vadd.f32 %v1974, %v2674
      %v3007 = vadd.f32 %v1977, %v2677
      %v3008 = vadd.f32 %v1979, %v2679
      %v3009 = vadd.f32 %v1982, %v2682
      %v3010 = vadd.f32 %v1984, %v2684
      %v3011 = vadd.f32 %v1987, %v2687
      %v3012 = vadd.f32 %v1989, %v2689
      %v3013 = vadd.f32 %v1992, %v2692
      %v3014 = vadd.f32 %v1994, %v2694
      %v3015 = vadd.f32 %v1997, %v2697
      %v3016 = vadd.f32 %v1999, %v2699
      %v3017 = vadd.f32 %v2002, %v2702
      %v3018 = vadd.f32 %v2004, %v2704
      %v3019 = vadd.f32 %v2007, %v2707
      %v3020 = vadd.f32 %v2009, %v2709
      %v3021 = vadd.f32 %v2012, %v2712
      %v3022 = vadd.f32 %v2014, %v2714
      %v3023 = vadd.f32 %v2017, %v2717
      %v3024 = vadd.f32 %v2019, %v2719
      %v3025 = vadd.f32 %v2022, %v2722
      %v3026 = vadd.f32 %v2024, %v2724
      %v3027 = vadd.f32 %v2027, %v2727
      %v3028 = vadd.f32 %v2029, %v2729
      %v3029 = vadd.f32 %v2032, %v2732
      %v3030 = vadd.f32 %v2034, %v2734
      %v3031 = vadd.f32 %v2037, %v2737
      %v3032 = vadd.f32 %v2039, %v2739
      %v3033 = vadd.f32 %v2042, %v2742
      %v3034 = vadd.f32 %v2044, %v2744
      %v3035 = vadd.f32 %v2047, %v2747
      %v3036 = vadd.f32 %v2049, %v2749
      %v3037 = vadd.f32 %v2052, %v2752
      %v3038 = vadd.f32 %v2054, %v2754
      %v3039 = vadd.f32 %v2057, %v2757
      %v3040 = vadd.f32 %v2059, %v2759
      %v3041 = vadd.f32 %v2062, %v2762
      %v3042 = vadd.f32 %v2064, %v2764
      %v3043 = vadd.f32 %v2067, %v2767
      %v3044 = vadd.f32 %v2069, %v2769
      %v3045 = vadd.f32 %v2072, %v2772
      %v3046 = vadd.f32 %v2074, %v2774
      %v3047 = vadd.f32 %v2077, %v2777
      %v3048 = vadd.f32 %v2079, %v2779
      %v3049 = vadd.f32 %v2082, %v2782
      %v3050 = vadd.f32 %v2084, %v2784
      %v3051 = vadd.f32 %v2087, %v2787
      %v3052 = vadd.f32 %v2089, %v2789
      %v3053 = vadd.f32 %v2092, %v2792
      %v3054 = vadd.f32 %v2094, %v2794
      %v3055 = vadd.f32 %v2097, %v2797
      %v3056 = vadd.f32 %v2099, %v2799
      %v3057 = vadd.f32 %v2102, %v2802
      %v3058 = vadd.f32 %v2104, %v2804
      %v3059 = vadd.f32 %v2107, %v2807
      %v3060 = vadd.f32 %v2109, %v2809
      %v3061 = vadd.f32 %v2112, %v2812
      %v3062 = vadd.f32 %v2114, %v2814
      %v3063 = vadd.f32 %v2117, %v2817
      %v3064 = vadd.f32 %v2119, %v2819
      %v3065 = vadd.f32 %v2122, %v2822
      %v3066 = vadd.f32 %v2124, %v2824
      %v3067 = vadd.f32 %v2127, %v2827
      %v3068 = vadd.f32 %v2129, %v2829
      %v3069 = vadd.f32 %v2132, %v2832
      %v3070 = vadd.f32 %v2134, %v2834
      %v3071 = vadd.f32 %v2137, %v2837
      %v3072 = vadd.f32 %v2139, %v2839
      %v3073 = vadd.f32 %v2142, %v2842
      %v3074 = vadd.f32 %v2144, %v2844
      %v3075 = vadd.f32 %v2147, %v2847
      %v3076 = vadd.f32 %v2149, %v2849
      %v3077 = vadd.f32 %v2152, %v2852
      %v3078 = vadd.f32 %v2154, %v2854
      %v3079 = vadd.f32 %v2157, %v2857
      %v3080 = vadd.f32 %v2159, %v2859
      %v3081 = vadd.f32 %v2162, %v2862
      %v3082 = vadd.f32 %v2164, %v2864
      %v3083 = vadd.f32 %v2167, %v2867
      %v3084 = vadd.f32 %v2169, %v2869
      %v3085 = vadd.f32 %v2172, %v2872
      %v3086 = vadd.f32 %v2174, %v2874
      %v3087 = vadd.f32 %v2177, %v2877
      %v3088 = vadd.f32 %v2179, %v2879
      %v3089 = vadd.f32 %v2182, %v2882
      %v3090 = vadd.f32 %v2184, %v2884
      %v3091 = vadd.f32 %v2187, %v2887
      %v3092 = vadd.f32 %v2189, %v2889
      %v3093 = vadd.f32 %v2192, %v2892
      %v3094 = vadd.f32 %v2194, %v2894
      %v3095 = vadd.f32 %v2197, %v2897
      %v3096 = vadd.f32 %v2199, %v2899
      %v3097 = vadd.f32 %v2202, %v2902
      %v3098 = vadd.f32 %v2204, %v2904
      %v3099 = vadd.f32 %v2207, %v2907
      %v3100 = vadd.f32 %v2209, %v2909
      %v3101 = vadd.f32 %v2212, %v2912
      %v3102 = vadd.f32 %v2214, %v2914
      %v3103 = vadd.f32 %v2217, %v2917
      %v3104 = vadd.f32 %v2219, %v2919
      %v3105 = vadd.f32 %v2222, %v2922
      %v3106 = vadd.f32 %v2224, %v2924
      %v3107 = vadd.f32 %v2227, %v2927
      %v3108 = vadd.f32 %v2229, %v2929
      %v3109 = vadd.f32 %v2232, %v2932
      %v3110 = vadd.f32 %v2234, %v2934
      %v3111 = vadd.f32 %v2237, %v2937
      %v3112 = vadd.f32 %v2239, %v2939
      %v3113 = vadd.f32 %v2242, %v2942
      %v3114 = vadd.f32 %v2244, %v2944
      %v3115 = vadd.f32 %v2247, %v2947
      %v3116 = vadd.f32 %v2249, %v2949
      %v3117 = vadd.f32 %v2252, %v2952
      %v3118 = vadd.f32 %v2254, %v2954
      %v3119 = vadd.f32 %v2257, %v2957
      %v3120 = vadd.f32 %v2259, %v2959
      %v3121 = vadd.f32 %v2262, %v2962
      %v3122 = vadd.f32 %v2264, %v2964
      %v3123 = vadd.f32 %v2267, %v2967
      %v3124 = vadd.f32 %v2269, %v2969
      %v3125 = vadd.f32 %v2272, %v2972
      %v3126 = vadd.f32 %v2274, %v2974
      %v3127 = vadd.f32 %v2277, %v2977
      %v3128 = vadd.f32 %v2279, %v2979
      %v3129 = vadd.f32 %v2282, %v2982
      %v3130 = vadd.f32 %v2284, %v2984
      %v3131 = vadd.f32 %v2287, %v2987
      %v3132 = vadd.f32 %v2289, %v2989
      %v3133 = vadd.f32 %v2292, %v2992
      %v3134 = vadd.f32 %v2294, %v2994
      %v3135 = vadd.f32 %v2297, %v2997
      %v3136 = vadd.f32 %v2299, %v2999
      %v3137 = vld [vmem:[%s206 + $0x10] sm:$0xe]
      %v3138 = vld [vmem:[%s206 + $0x14] sm:$0xf]
      %v3139 = vld [vmem:[%s206 + $0x18] sm:$0xf]
      %v3140 = vld [vmem:[%s206 + $0x1c] sm:$0xf]
      %v3141 = vld [vmem:[%s206 + $0x20] sm:$0xf]
      %v3142 = vld [vmem:[%s206 + $0x24] sm:$0xf]
      %v3143 = vld [vmem:[%s206 + $0x28] sm:$0xf]
      %v3144 = vld [vmem:[%s206 + $0x2c] sm:$0xf]
      %v3145 = vld [vmem:[%s206 + $0x30] sm:$0xf]
      %v3146 = vld [vmem:[%s206 + $0x34] sm:$0xf]
      %v3147 = vld [vmem:[%s206 + $0x38] sm:$0xf]
      %v3148 = vld [vmem:[%s206 + $0x3c] sm:$0xf]
      %v3149 = vld [vmem:[%s206 + $0x40] sm:$0xf]
      %v3150 = vld [vmem:[%s206 + $0x44] sm:$0xf]
      %v3151 = vld [vmem:[%s206 + $0x48] sm:$0xf]
      %v3152 = vld [vmem:[%s206 + $0x4c] sm:$0xf]
      %v3153 = vld [vmem:[%s206 + $0x50] sm:$0xf]
      %v3154 = vld [vmem:[%s206 + $0x54] sm:$0xf]
      %v3155 = vld [vmem:[%s206 + $0x58] sm:$0xf]
      %v3156 = vld [vmem:[%s206 + $0x5c] sm:$0xf]
      %v3157 = vld [vmem:[%s206 + $0x60] sm:$0xf]
      %v3158 = vld [vmem:[%s206 + $0x64] sm:$0xf]
      %v3159 = vld [vmem:[%s206 + $0x68] sm:$0xf]
      %v3160 = vld [vmem:[%s206 + $0x6c] sm:$0xf]
      %v3161 = vld [vmem:[%s206 + $0x70] sm:$0xf]
      %v3162 = vld [vmem:[%s206 + $0x74] sm:$0xf]
      %v3163 = vld [vmem:[%s206 + $0x78] sm:$0xf]
      %v3164 = vld [vmem:[%s206 + $0x7c] sm:$0xf]
      %v3165 = vld [vmem:[%s206 + $0x80] sm:$0xf]
      %v3166 = vld [vmem:[%s206 + $0x84] sm:$0xf]
      %v3167 = vld [vmem:[%s206 + $0x88] sm:$0xf]
      %v3168 = vld [vmem:[%s206 + $0x8c] sm:$0xf]
      %v3169 = vld [vmem:[%s206 + $0x90] sm:$0xf]
      %v3170 = vld [vmem:[%s206 + $0x94] sm:$0xf]
      %v3171 = vld [vmem:[%s206 + $0x98] sm:$0xf]
      %v3172 = vld [vmem:[%s206 + $0x9c] sm:$0xf]
      %v3173 = vld [vmem:[%s206 + $0xa0] sm:$0xf]
      %v3174 = vld [vmem:[%s206 + $0xa4] sm:$0xf]
      %v3175 = vld [vmem:[%s206 + $0xa8] sm:$0xf]
      %v3176 = vld [vmem:[%s206 + $0xac] sm:$0xf]
      %v3177 = vld [vmem:[%s206 + $0xb0] sm:$0xf]
      %v3178 = vld [vmem:[%s206 + $0xb4] sm:$0xf]
      %v3179 = vld [vmem:[%s206 + $0xb8] sm:$0xf]
      %v3180 = vld [vmem:[%s206 + $0xbc] sm:$0xf]
      %v3181 = vld [vmem:[%s206 + $0xc0] sm:$0xf]
      %v3182 = vld [vmem:[%s206 + $0xc4] sm:$0xf]
      %v3183 = vld [vmem:[%s206 + $0xc8] sm:$0xf]
      %v3184 = vld [vmem:[%s206 + $0xcc] sm:$0xf]
      %v3185 = vld [vmem:[%s206 + $0xd0] sm:$0xf]
      %v3186 = vld [vmem:[%s206 + $0xd4] sm:$0xf]
      %v3187 = vld [vmem:[%s206 + $0xd8] sm:$0xf]
      %v3188 = vld [vmem:[%s206 + $0xdc] sm:$0xf]
      %v3189 = vld [vmem:[%s206 + $0xe0] sm:$0xf]
      %v3190 = vld [vmem:[%s206 + $0xe4] sm:$0xf]
      %v3191 = vld [vmem:[%s206 + $0xe8] sm:$0xf]
      %v3192 = vld [vmem:[%s206 + $0xec] sm:$0xf]
      %v3193 = vld [vmem:[%s206 + $0xf0] sm:$0xf]
      %v3194 = vld [vmem:[%s206 + $0xf4] sm:$0xf]
      %v3195 = vld [vmem:[%s206 + $0xf8] sm:$0xf]
      %v3196 = vld [vmem:[%s206 + $0xfc] sm:$0xf]
      %v3197 = vld [vmem:[%s206 + $0x100] sm:$0xf]
      %v3198 = vld [vmem:[%s206 + $0x104] sm:$0xf]
      %v3199 = vld [vmem:[%s206 + $0x108] sm:$0xf]
      %v3200 = vld [vmem:[%s206 + $0x10c] sm:$0xf]
      %v3201 = vld [vmem:[%s206 + $0x110] sm:$0xf]
      %v3202 = vld [vmem:[%s206 + $0x114] sm:$0xf]
      %v3203 = vld [vmem:[%s206 + $0x118] sm:$0xf]
      %v3204 = vld [vmem:[%s206 + $0x11c] sm:$0xf]
      %v3205 = vld [vmem:[%s206 + $0x120] sm:$0xf]
      %v3206 = vld [vmem:[%s206 + $0x124] sm:$0xf]
      %v3207 = vld [vmem:[%s206 + $0x128] sm:$0xf]
      %v3208 = vld [vmem:[%s206 + $0x12c] sm:$0xf]
      %v3209 = vld [vmem:[%s206 + $0x130] sm:$0xf]
      %v3210 = vld [vmem:[%s206 + $0x134] sm:$0xf]
      %v3211 = vld [vmem:[%s206 + $0x138] sm:$0xf]
      %v3212 = vld [vmem:[%s206 + $0x13c] sm:$0xf]
      %v3213 = vld [vmem:[%s206 + $0x140] sm:$0xf]
      %v3214 = vld [vmem:[%s206 + $0x144] sm:$0xf]
      %v3215 = vld [vmem:[%s206 + $0x148] sm:$0xf]
      %v3216 = vld [vmem:[%s206 + $0x14c] sm:$0xf]
      %v3217 = vld [vmem:[%s206 + $0x150] sm:$0xf]
      %v3218 = vld [vmem:[%s206 + $0x154] sm:$0xf]
      %v3219 = vld [vmem:[%s206 + $0x158] sm:$0xf]
      %v3220 = vld [vmem:[%s206 + $0x15c] sm:$0xf]
      %v3221 = vld [vmem:[%s206 + $0x160] sm:$0xf]
      %v3222 = vld [vmem:[%s206 + $0x164] sm:$0xf]
      %v3223 = vld [vmem:[%s206 + $0x168] sm:$0xf]
      %v3224 = vld [vmem:[%s206 + $0x16c] sm:$0xf]
      %v3225 = vld [vmem:[%s206 + $0x170] sm:$0xf]
      %v3226 = vld [vmem:[%s206 + $0x174] sm:$0xf]
      %v3227 = vld [vmem:[%s206 + $0x178] sm:$0xf]
      %v3228 = vld [vmem:[%s206 + $0x17c] sm:$0xf]
      %v3229 = vld [vmem:[%s206 + $0x180] sm:$0xf]
      %v3230 = vld [vmem:[%s206 + $0x184] sm:$0xf]
      %v3231 = vld [vmem:[%s206 + $0x188] sm:$0xf]
      %v3232 = vld [vmem:[%s206 + $0x18c] sm:$0xf]
      %v3233 = vld [vmem:[%s206 + $0x190] sm:$0xf]
      %v3234 = vld [vmem:[%s206 + $0x194] sm:$0xf]
      %v3235 = vld [vmem:[%s206 + $0x198] sm:$0xf]
      %v3236 = vld [vmem:[%s206 + $0x19c] sm:$0xf]
      %v3237 = vld [vmem:[%s206 + $0x1a0] sm:$0xf]
      %v3238 = vld [vmem:[%s206 + $0x1a4] sm:$0xf]
      %v3239 = vld [vmem:[%s206 + $0x1a8] sm:$0xf]
      %v3240 = vld [vmem:[%s206 + $0x1ac] sm:$0xf]
      %v3241 = vld [vmem:[%s206 + $0x1b0] sm:$0xf]
      %v3242 = vld [vmem:[%s206 + $0x1b4] sm:$0xf]
      %v3243 = vld [vmem:[%s206 + $0x1b8] sm:$0xf]
      %v3244 = vld [vmem:[%s206 + $0x1bc] sm:$0xf]
      %v3245 = vld [vmem:[%s206 + $0x1c0] sm:$0xf]
      %v3246 = vld [vmem:[%s206 + $0x1c4] sm:$0xf]
      %v3247 = vld [vmem:[%s206 + $0x1c8] sm:$0xf]
      %v3248 = vld [vmem:[%s206 + $0x1cc] sm:$0xf]
      %v3249 = vld [vmem:[%s206 + $0x1d0] sm:$0xf]
      %v3250 = vld [vmem:[%s206 + $0x1d4] sm:$0xf]
      %v3251 = vld [vmem:[%s206 + $0x1d8] sm:$0xf]
      %v3252 = vld [vmem:[%s206 + $0x1dc] sm:$0xf]
      %v3253 = vld [vmem:[%s206 + $0x1e0] sm:$0xf]
      %v3254 = vld [vmem:[%s206 + $0x1e4] sm:$0xf]
      %v3255 = vld [vmem:[%s206 + $0x1e8] sm:$0xf]
      %v3256 = vld [vmem:[%s206 + $0x1ec] sm:$0xf]
      %v3257 = vld [vmem:[%s206 + $0x1f0] sm:$0xf]
      %v3258 = vld [vmem:[%s206 + $0x1f4] sm:$0xf]
      %v3259 = vld [vmem:[%s206 + $0x1f8] sm:$0xf]
      %v3260 = vld [vmem:[%s206 + $0x1fc] sm:$0xf]
      %v3261 = vld [vmem:[%s206 + $0x200] sm:$0xf]
      %v3262 = vld [vmem:[%s206 + $0x204] sm:$0xf]
      %v3263 = vld [vmem:[%s206 + $0x208] sm:$0xf]
      %v3264 = vld [vmem:[%s206 + $0x20c] sm:$0xf]
      %v3265 = vld [vmem:[%s206 + $0x210] sm:$0xf]
      %v3266 = vld [vmem:[%s206 + $0x214] sm:$0xf]
      %v3267 = vld [vmem:[%s206 + $0x218] sm:$0xf]
      %v3268 = vld [vmem:[%s206 + $0x21c] sm:$0xf]
      %v3269 = vld [vmem:[%s206 + $0x220] sm:$0xf]
      %v3270 = vld [vmem:[%s206 + $0x224] sm:$0xf]
      %v3271 = vld [vmem:[%s206 + $0x228] sm:$0xf]
      %v3272 = vld [vmem:[%s206 + $0x22c] sm:$0xf]
      %v3273 = vld [vmem:[%s206 + $0x230] sm:$0x1]
      %s3274 = scalar_lea.vmem %s210, 12
      %v3275 = vld [vmem:[%s3274] sm:$0xf]
      %v3413 = vunpack.c.l.b16 %v3137
      %v3414 = vunpack.c.l.b16 %v3138
      %v3415 = vunpack.c.l.b16 %v3139
      %v3416 = vunpack.c.l.b16 %v3140
      %v3417 = vunpack.c.l.b16 %v3141
      %v3418 = vunpack.c.l.b16 %v3142
      %v3419 = vunpack.c.l.b16 %v3143
      %v3420 = vunpack.c.l.b16 %v3144
      %v3421 = vunpack.c.l.b16 %v3145
      %v3422 = vunpack.c.l.b16 %v3146
      %v3423 = vunpack.c.l.b16 %v3147
      %v3424 = vunpack.c.l.b16 %v3148
      %v3425 = vunpack.c.l.b16 %v3149
      %v3426 = vunpack.c.l.b16 %v3150
      %v3427 = vunpack.c.l.b16 %v3151
      %v3428 = vunpack.c.l.b16 %v3152
      %v3429 = vunpack.c.l.b16 %v3153
      %v3430 = vunpack.c.l.b16 %v3154
      %v3431 = vunpack.c.l.b16 %v3155
      %v3432 = vunpack.c.l.b16 %v3156
      %v3433 = vunpack.c.l.b16 %v3157
      %v3434 = vunpack.c.l.b16 %v3158
      %v3435 = vunpack.c.l.b16 %v3159
      %v3436 = vunpack.c.l.b16 %v3160
      %v3437 = vunpack.c.l.b16 %v3161
      %v3438 = vunpack.c.l.b16 %v3162
      %v3439 = vunpack.c.l.b16 %v3163
      %v3440 = vunpack.c.l.b16 %v3164
      %v3441 = vunpack.c.l.b16 %v3165
      %v3442 = vunpack.c.l.b16 %v3166
      %v3443 = vunpack.c.l.b16 %v3167
      %v3444 = vunpack.c.l.b16 %v3168
      %v3445 = vunpack.c.l.b16 %v3169
      %v3446 = vunpack.c.l.b16 %v3170
      %v3447 = vunpack.c.l.b16 %v3171
      %v3448 = vunpack.c.l.b16 %v3172
      %v3449 = vunpack.c.l.b16 %v3173
      %v3450 = vunpack.c.l.b16 %v3174
      %v3451 = vunpack.c.l.b16 %v3175
      %v3452 = vunpack.c.l.b16 %v3176
      %v3453 = vunpack.c.l.b16 %v3177
      %v3454 = vunpack.c.l.b16 %v3178
      %v3455 = vunpack.c.l.b16 %v3179
      %v3456 = vunpack.c.l.b16 %v3180
      %v3457 = vunpack.c.l.b16 %v3181
      %v3458 = vunpack.c.l.b16 %v3182
      %v3459 = vunpack.c.l.b16 %v3183
      %v3460 = vunpack.c.l.b16 %v3184
      %v3461 = vunpack.c.l.b16 %v3185
      %v3462 = vunpack.c.l.b16 %v3186
      %v3463 = vunpack.c.l.b16 %v3187
      %v3464 = vunpack.c.l.b16 %v3188
      %v3465 = vunpack.c.l.b16 %v3189
      %v3466 = vunpack.c.l.b16 %v3190
      %v3467 = vunpack.c.l.b16 %v3191
      %v3468 = vunpack.c.l.b16 %v3192
      %v3469 = vunpack.c.l.b16 %v3193
      %v3470 = vunpack.c.l.b16 %v3194
      %v3471 = vunpack.c.l.b16 %v3195
      %v3472 = vunpack.c.l.b16 %v3196
      %v3473 = vunpack.c.l.b16 %v3197
      %v3474 = vunpack.c.l.b16 %v3198
      %v3475 = vunpack.c.l.b16 %v3199
      %v3476 = vunpack.c.l.b16 %v3200
      %v3477 = vunpack.c.l.b16 %v3201
      %v3478 = vunpack.c.l.b16 %v3202
      %v3479 = vunpack.c.l.b16 %v3203
      %v3480 = vunpack.c.l.b16 %v3204
      %v3481 = vunpack.c.l.b16 %v3205
      %v3482 = vunpack.c.l.b16 %v3206
      %v3483 = vunpack.c.l.b16 %v3207
      %v3484 = vunpack.c.l.b16 %v3208
      %v3485 = vunpack.c.l.b16 %v3209
      %v3486 = vunpack.c.l.b16 %v3210
      %v3487 = vunpack.c.l.b16 %v3211
      %v3488 = vunpack.c.l.b16 %v3212
      %v3489 = vunpack.c.l.b16 %v3213
      %v3490 = vunpack.c.l.b16 %v3214
      %v3491 = vunpack.c.l.b16 %v3215
      %v3492 = vunpack.c.l.b16 %v3216
      %v3493 = vunpack.c.l.b16 %v3217
      %v3494 = vunpack.c.l.b16 %v3218
      %v3495 = vunpack.c.l.b16 %v3219
      %v3496 = vunpack.c.l.b16 %v3220
      %v3497 = vunpack.c.l.b16 %v3221
      %v3498 = vunpack.c.l.b16 %v3222
      %v3499 = vunpack.c.l.b16 %v3223
      %v3500 = vunpack.c.l.b16 %v3224
      %v3501 = vunpack.c.l.b16 %v3225
      %v3502 = vunpack.c.l.b16 %v3226
      %v3503 = vunpack.c.l.b16 %v3227
      %v3504 = vunpack.c.l.b16 %v3228
      %v3505 = vunpack.c.l.b16 %v3229
      %v3506 = vunpack.c.l.b16 %v3230
      %v3507 = vunpack.c.l.b16 %v3231
      %v3508 = vunpack.c.l.b16 %v3232
      %v3509 = vunpack.c.l.b16 %v3233
      %v3510 = vunpack.c.l.b16 %v3234
      %v3511 = vunpack.c.l.b16 %v3235
      %v3512 = vunpack.c.l.b16 %v3236
      %v3513 = vunpack.c.l.b16 %v3237
      %v3514 = vunpack.c.l.b16 %v3238
      %v3515 = vunpack.c.l.b16 %v3239
      %v3516 = vunpack.c.l.b16 %v3240
      %v3517 = vunpack.c.l.b16 %v3241
      %v3518 = vunpack.c.l.b16 %v3242
      %v3519 = vunpack.c.l.b16 %v3243
      %v3520 = vunpack.c.l.b16 %v3244
      %v3521 = vunpack.c.l.b16 %v3245
      %v3522 = vunpack.c.l.b16 %v3246
      %v3523 = vunpack.c.l.b16 %v3247
      %v3524 = vunpack.c.l.b16 %v3248
      %v3525 = vunpack.c.l.b16 %v3249
      %v3526 = vunpack.c.l.b16 %v3250
      %v3527 = vunpack.c.l.b16 %v3251
      %v3528 = vunpack.c.l.b16 %v3252
      %v3529 = vunpack.c.l.b16 %v3253
      %v3530 = vunpack.c.l.b16 %v3254
      %v3531 = vunpack.c.l.b16 %v3255
      %v3532 = vunpack.c.l.b16 %v3256
      %v3533 = vunpack.c.l.b16 %v3257
      %v3534 = vunpack.c.l.b16 %v3258
      %v3535 = vunpack.c.l.b16 %v3259
      %v3536 = vunpack.c.l.b16 %v3260
      %v3537 = vunpack.c.l.b16 %v3261
      %v3538 = vunpack.c.l.b16 %v3262
      %v3539 = vunpack.c.l.b16 %v3263
      %v3540 = vunpack.c.l.b16 %v3264
      %v3541 = vunpack.c.l.b16 %v3265
      %v3542 = vunpack.c.l.b16 %v3266
      %v3543 = vunpack.c.l.b16 %v3267
      %v3544 = vunpack.c.l.b16 %v3268
      %v3545 = vunpack.c.l.b16 %v3269
      %v3546 = vunpack.c.l.b16 %v3270
      %v3547 = vunpack.c.l.b16 %v3271
      %v3548 = vunpack.c.l.b16 %v3272
      %v3549 = vunpack.c.l.b16 %v3273
      %v3550 = vpack.c.b16 %v3414, %v3413
      %v3551 = vpack.c.b16 %v3416, %v3415
      %v3552 = vpack.c.b16 %v3418, %v3417
      %v3553 = vpack.c.b16 %v3420, %v3419
      %v3554 = vpack.c.b16 %v3422, %v3421
      %v3555 = vpack.c.b16 %v3424, %v3423
      %v3556 = vpack.c.b16 %v3426, %v3425
      %v3557 = vpack.c.b16 %v3428, %v3427
      %v3558 = vpack.c.b16 %v3430, %v3429
      %v3559 = vpack.c.b16 %v3432, %v3431
      %v3560 = vpack.c.b16 %v3434, %v3433
      %v3561 = vpack.c.b16 %v3436, %v3435
      %v3562 = vpack.c.b16 %v3438, %v3437
      %v3563 = vpack.c.b16 %v3440, %v3439
      %v3564 = vpack.c.b16 %v3442, %v3441
      %v3565 = vpack.c.b16 %v3444, %v3443
      %v3566 = vpack.c.b16 %v3446, %v3445
      %v3567 = vpack.c.b16 %v3448, %v3447
      %v3568 = vpack.c.b16 %v3450, %v3449
      %v3569 = vpack.c.b16 %v3452, %v3451
      %v3570 = vpack.c.b16 %v3454, %v3453
      %v3571 = vpack.c.b16 %v3456, %v3455
      %v3572 = vpack.c.b16 %v3458, %v3457
      %v3573 = vpack.c.b16 %v3460, %v3459
      %v3574 = vpack.c.b16 %v3462, %v3461
      %v3575 = vpack.c.b16 %v3464, %v3463
      %v3576 = vpack.c.b16 %v3466, %v3465
      %v3577 = vpack.c.b16 %v3468, %v3467
      %v3578 = vpack.c.b16 %v3470, %v3469
      %v3579 = vpack.c.b16 %v3472, %v3471
      %v3580 = vpack.c.b16 %v3474, %v3473
      %v3581 = vpack.c.b16 %v3476, %v3475
      %v3582 = vpack.c.b16 %v3478, %v3477
      %v3583 = vpack.c.b16 %v3480, %v3479
      %v3584 = vpack.c.b16 %v3482, %v3481
      %v3585 = vpack.c.b16 %v3484, %v3483
      %v3586 = vpack.c.b16 %v3486, %v3485
      %v3587 = vpack.c.b16 %v3488, %v3487
      %v3588 = vpack.c.b16 %v3490, %v3489
      %v3589 = vpack.c.b16 %v3492, %v3491
      %v3590 = vpack.c.b16 %v3494, %v3493
      %v3591 = vpack.c.b16 %v3496, %v3495
      %v3592 = vpack.c.b16 %v3498, %v3497
      %v3593 = vpack.c.b16 %v3500, %v3499
      %v3594 = vpack.c.b16 %v3502, %v3501
      %v3595 = vpack.c.b16 %v3504, %v3503
      %v3596 = vpack.c.b16 %v3506, %v3505
      %v3597 = vpack.c.b16 %v3508, %v3507
      %v3598 = vpack.c.b16 %v3510, %v3509
      %v3599 = vpack.c.b16 %v3512, %v3511
      %v3600 = vpack.c.b16 %v3514, %v3513
      %v3601 = vpack.c.b16 %v3516, %v3515
      %v3602 = vpack.c.b16 %v3518, %v3517
      %v3603 = vpack.c.b16 %v3520, %v3519
      %v3604 = vpack.c.b16 %v3522, %v3521
      %v3605 = vpack.c.b16 %v3524, %v3523
      %v3606 = vpack.c.b16 %v3526, %v3525
      %v3607 = vpack.c.b16 %v3528, %v3527
      %v3608 = vpack.c.b16 %v3530, %v3529
      %v3609 = vpack.c.b16 %v3532, %v3531
      %v3610 = vpack.c.b16 %v3534, %v3533
      %v3611 = vpack.c.b16 %v3536, %v3535
      %v3612 = vpack.c.b16 %v3538, %v3537
      %v3613 = vpack.c.b16 %v3540, %v3539
      %v3614 = vpack.c.b16 %v3542, %v3541
      %v3615 = vpack.c.b16 %v3544, %v3543
      %v3616 = vpack.c.b16 %v3546, %v3545
      %v3617 = vpack.c.b16 %v3548, %v3547
      %v3618 = vpack.c.b16 %v3549, %v3549
      %v3619 = vrot.slane %v3550, 1
      %v3620 = vrot.slane %v3551, 1
      %v3621 = vsel %vm2307, %v3619, %v3620
      %v3622 = vrot.slane %v3552, 1
      %v3623 = vsel %vm2307, %v3620, %v3622
      %v3624 = vrot.slane %v3553, 1
      %v3625 = vsel %vm2307, %v3622, %v3624
      %v3626 = vrot.slane %v3554, 1
      %v3627 = vsel %vm2307, %v3624, %v3626
      %v3628 = vrot.slane %v3555, 1
      %v3629 = vsel %vm2307, %v3626, %v3628
      %v3630 = vrot.slane %v3556, 1
      %v3631 = vsel %vm2307, %v3628, %v3630
      %v3632 = vrot.slane %v3557, 1
      %v3633 = vsel %vm2307, %v3630, %v3632
      %v3634 = vrot.slane %v3558, 1
      %v3635 = vsel %vm2307, %v3632, %v3634
      %v3636 = vrot.slane %v3559, 1
      %v3637 = vsel %vm2307, %v3634, %v3636
      %v3638 = vrot.slane %v3560, 1
      %v3639 = vsel %vm2307, %v3636, %v3638
      %v3640 = vrot.slane %v3561, 1
      %v3641 = vsel %vm2307, %v3638, %v3640
      %v3642 = vrot.slane %v3562, 1
      %v3643 = vsel %vm2307, %v3640, %v3642
      %v3644 = vrot.slane %v3563, 1
      %v3645 = vsel %vm2307, %v3642, %v3644
      %v3646 = vrot.slane %v3564, 1
      %v3647 = vsel %vm2307, %v3644, %v3646
      %v3648 = vrot.slane %v3565, 1
      %v3649 = vsel %vm2307, %v3646, %v3648
      %v3650 = vrot.slane %v3566, 1
      %v3651 = vsel %vm2307, %v3648, %v3650
      %v3652 = vrot.slane %v3567, 1
      %v3653 = vsel %vm2307, %v3650, %v3652
      %v3654 = vrot.slane %v3568, 1
      %v3655 = vsel %vm2307, %v3652, %v3654
      %v3656 = vrot.slane %v3569, 1
      %v3657 = vsel %vm2307, %v3654, %v3656
      %v3658 = vrot.slane %v3570, 1
      %v3659 = vsel %vm2307, %v3656, %v3658
      %v3660 = vrot.slane %v3571, 1
      %v3661 = vsel %vm2307, %v3658, %v3660
      %v3662 = vrot.slane %v3572, 1
      %v3663 = vsel %vm2307, %v3660, %v3662
      %v3664 = vrot.slane %v3573, 1
      %v3665 = vsel %vm2307, %v3662, %v3664
      %v3666 = vrot.slane %v3574, 1
      %v3667 = vsel %vm2307, %v3664, %v3666
      %v3668 = vrot.slane %v3575, 1
      %v3669 = vsel %vm2307, %v3666, %v3668
      %v3670 = vrot.slane %v3576, 1
      %v3671 = vsel %vm2307, %v3668, %v3670
      %v3672 = vrot.slane %v3577, 1
      %v3673 = vsel %vm2307, %v3670, %v3672
      %v3674 = vrot.slane %v3578, 1
      %v3675 = vsel %vm2307, %v3672, %v3674
      %v3676 = vrot.slane %v3579, 1
      %v3677 = vsel %vm2307, %v3674, %v3676
      %v3678 = vrot.slane %v3580, 1
      %v3679 = vsel %vm2307, %v3676, %v3678
      %v3680 = vrot.slane %v3581, 1
      %v3681 = vsel %vm2307, %v3678, %v3680
      %v3682 = vrot.slane %v3582, 1
      %v3683 = vsel %vm2307, %v3680, %v3682
      %v3684 = vrot.slane %v3583, 1
      %v3685 = vsel %vm2307, %v3682, %v3684
      %v3686 = vrot.slane %v3584, 1
      %v3687 = vsel %vm2307, %v3684, %v3686
      %v3688 = vrot.slane %v3585, 1
      %v3689 = vsel %vm2307, %v3686, %v3688
      %v3690 = vrot.slane %v3586, 1
      %v3691 = vsel %vm2307, %v3688, %v3690
      %v3692 = vrot.slane %v3587, 1
      %v3693 = vsel %vm2307, %v3690, %v3692
      %v3694 = vrot.slane %v3588, 1
      %v3695 = vsel %vm2307, %v3692, %v3694
      %v3696 = vrot.slane %v3589, 1
      %v3697 = vsel %vm2307, %v3694, %v3696
      %v3698 = vrot.slane %v3590, 1
      %v3699 = vsel %vm2307, %v3696, %v3698
      %v3700 = vrot.slane %v3591, 1
      %v3701 = vsel %vm2307, %v3698, %v3700
      %v3702 = vrot.slane %v3592, 1
      %v3703 = vsel %vm2307, %v3700, %v3702
      %v3704 = vrot.slane %v3593, 1
      %v3705 = vsel %vm2307, %v3702, %v3704
      %v3706 = vrot.slane %v3594, 1
      %v3707 = vsel %vm2307, %v3704, %v3706
      %v3708 = vrot.slane %v3595, 1
      %v3709 = vsel %vm2307, %v3706, %v3708
      %v3710 = vrot.slane %v3596, 1
      %v3711 = vsel %vm2307, %v3708, %v3710
      %v3712 = vrot.slane %v3597, 1
      %v3713 = vsel %vm2307, %v3710, %v3712
      %v3714 = vrot.slane %v3598, 1
      %v3715 = vsel %vm2307, %v3712, %v3714
      %v3716 = vrot.slane %v3599, 1
      %v3717 = vsel %vm2307, %v3714, %v3716
      %v3718 = vrot.slane %v3600, 1
      %v3719 = vsel %vm2307, %v3716, %v3718
      %v3720 = vrot.slane %v3601, 1
      %v3721 = vsel %vm2307, %v3718, %v3720
      %v3722 = vrot.slane %v3602, 1
      %v3723 = vsel %vm2307, %v3720, %v3722
      %v3724 = vrot.slane %v3603, 1
      %v3725 = vsel %vm2307, %v3722, %v3724
      %v3726 = vrot.slane %v3604, 1
      %v3727 = vsel %vm2307, %v3724, %v3726
      %v3728 = vrot.slane %v3605, 1
      %v3729 = vsel %vm2307, %v3726, %v3728
      %v3730 = vrot.slane %v3606, 1
      %v3731 = vsel %vm2307, %v3728, %v3730
      %v3732 = vrot.slane %v3607, 1
      %v3733 = vsel %vm2307, %v3730, %v3732
      %v3734 = vrot.slane %v3608, 1
      %v3735 = vsel %vm2307, %v3732, %v3734
      %v3736 = vrot.slane %v3609, 1
      %v3737 = vsel %vm2307, %v3734, %v3736
      %v3738 = vrot.slane %v3610, 1
      %v3739 = vsel %vm2307, %v3736, %v3738
      %v3740 = vrot.slane %v3611, 1
      %v3741 = vsel %vm2307, %v3738, %v3740
      %v3742 = vrot.slane %v3612, 1
      %v3743 = vsel %vm2307, %v3740, %v3742
      %v3744 = vrot.slane %v3613, 1
      %v3745 = vsel %vm2307, %v3742, %v3744
      %v3746 = vrot.slane %v3614, 1
      %v3747 = vsel %vm2307, %v3744, %v3746
      %v3748 = vrot.slane %v3615, 1
      %v3749 = vsel %vm2307, %v3746, %v3748
      %v3750 = vrot.slane %v3616, 1
      %v3751 = vsel %vm2307, %v3748, %v3750
      %v3752 = vrot.slane %v3617, 1
      %v3753 = vsel %vm2307, %v3750, %v3752
      %v3754 = vrot.slane %v3618, 1
      %v3755 = vsel %vm2307, %v3752, %v3754
      %v3757 = vsel %vm1255, %v3621, 0
      %v3760 = vsel %vm1255, %v3623, 0
      %v3763 = vsel %vm1255, %v3625, 0
      %v3766 = vsel %vm1255, %v3627, 0
      %v3769 = vsel %vm1255, %v3629, 0
      %v3772 = vsel %vm1255, %v3631, 0
      %v3775 = vsel %vm1255, %v3633, 0
      %v3778 = vsel %vm1255, %v3635, 0
      %v3781 = vsel %vm1255, %v3637, 0
      %v3784 = vsel %vm1255, %v3639, 0
      %v3787 = vsel %vm1255, %v3641, 0
      %v3790 = vsel %vm1255, %v3643, 0
      %v3793 = vsel %vm1255, %v3645, 0
      %v3796 = vsel %vm1255, %v3647, 0
      %v3799 = vsel %vm1255, %v3649, 0
      %v3802 = vsel %vm1255, %v3651, 0
      %v3805 = vsel %vm1255, %v3653, 0
      %v3808 = vsel %vm1255, %v3655, 0
      %v3811 = vsel %vm1255, %v3657, 0
      %v3814 = vsel %vm1255, %v3659, 0
      %v3817 = vsel %vm1255, %v3661, 0
      %v3820 = vsel %vm1255, %v3663, 0
      %v3823 = vsel %vm1255, %v3665, 0
      %v3826 = vsel %vm1255, %v3667, 0
      %v3829 = vsel %vm1255, %v3669, 0
      %v3832 = vsel %vm1255, %v3671, 0
      %v3835 = vsel %vm1255, %v3673, 0
      %v3838 = vsel %vm1255, %v3675, 0
      %v3841 = vsel %vm1255, %v3677, 0
      %v3844 = vsel %vm1255, %v3679, 0
      %v3847 = vsel %vm1255, %v3681, 0
      %v3850 = vsel %vm1255, %v3683, 0
      %v3853 = vsel %vm1255, %v3685, 0
      %v3856 = vsel %vm1255, %v3687, 0
      %v3859 = vsel %vm1255, %v3689, 0
      %v3862 = vsel %vm1255, %v3691, 0
      %v3865 = vsel %vm1255, %v3693, 0
      %v3868 = vsel %vm1255, %v3695, 0
      %v3871 = vsel %vm1255, %v3697, 0
      %v3874 = vsel %vm1255, %v3699, 0
      %v3877 = vsel %vm1255, %v3701, 0
      %v3880 = vsel %vm1255, %v3703, 0
      %v3883 = vsel %vm1255, %v3705, 0
      %v3886 = vsel %vm1255, %v3707, 0
      %v3889 = vsel %vm1255, %v3709, 0
      %v3892 = vsel %vm1255, %v3711, 0
      %v3895 = vsel %vm1255, %v3713, 0
      %v3898 = vsel %vm1255, %v3715, 0
      %v3901 = vsel %vm1255, %v3717, 0
      %v3904 = vsel %vm1255, %v3719, 0
      %v3907 = vsel %vm1255, %v3721, 0
      %v3910 = vsel %vm1255, %v3723, 0
      %v3913 = vsel %vm1255, %v3725, 0
      %v3916 = vsel %vm1255, %v3727, 0
      %v3919 = vsel %vm1255, %v3729, 0
      %v3922 = vsel %vm1255, %v3731, 0
      %v3925 = vsel %vm1255, %v3733, 0
      %v3928 = vsel %vm1255, %v3735, 0
      %v3931 = vsel %vm1255, %v3737, 0
      %v3934 = vsel %vm1255, %v3739, 0
      %v3937 = vsel %vm1255, %v3741, 0
      %v3940 = vsel %vm1255, %v3743, 0
      %v3943 = vsel %vm1255, %v3745, 0
      %v3946 = vsel %vm1255, %v3747, 0
      %v3949 = vsel %vm1255, %v3749, 0
      %v3952 = vsel %vm1255, %v3751, 0
      %v3955 = vsel %vm1255, %v3753, 0
      %v3958 = vsel %vm1255, %v3755, 0
      %v3961 = vsel %vm1460, %v3275, 0
      %3963 = vmatpush.bf16.msra.mxu0 0
      %3964 = vmatpush.bf16.msra.mxu0 0
      %3965 = vmatpush.bf16.msra.mxu0 0
      %3966 = vmatpush.bf16.msra.mxu0 0
      %3967 = vmatpush.bf16.msra.mxu0 0
      %3968 = vmatpush.bf16.msra.mxu0 0
      %3969 = vmatpush.bf16.msra.mxu0 0
      %3970 = vmatpush.bf16.msra.mxu0 %v3961
      %3971 = vmatmul.bf16.gmra.mxu0 %v3757
      %v3972 = vpop.f32.mrf.mxu0
      %v3973 = vadd.f32 0.0, %v3972
      %v3974 = vpop.f32.mrf.mxu0
      %v3975 = vadd.f32 0.0, %v3974
      %3976 = vmatmul.bf16.gmra.mxu0 %v3760
      %v3977 = vpop.f32.mrf.mxu0
      %v3978 = vadd.f32 0.0, %v3977
      %v3979 = vpop.f32.mrf.mxu0
      %v3980 = vadd.f32 0.0, %v3979
      %3981 = vmatmul.bf16.gmra.mxu0 %v3763
      %v3982 = vpop.f32.mrf.mxu0
      %v3983 = vadd.f32 0.0, %v3982
      %v3984 = vpop.f32.mrf.mxu0
      %v3985 = vadd.f32 0.0, %v3984
      %3986 = vmatmul.bf16.gmra.mxu0 %v3766
      %v3987 = vpop.f32.mrf.mxu0
      %v3988 = vadd.f32 0.0, %v3987
      %v3989 = vpop.f32.mrf.mxu0
      %v3990 = vadd.f32 0.0, %v3989
      %3991 = vmatmul.bf16.gmra.mxu0 %v3769
      %v3992 = vpop.f32.mrf.mxu0
      %v3993 = vadd.f32 0.0, %v3992
      %v3994 = vpop.f32.mrf.mxu0
      %v3995 = vadd.f32 0.0, %v3994
      %3996 = vmatmul.bf16.gmra.mxu0 %v3772
      %v3997 = vpop.f32.mrf.mxu0
      %v3998 = vadd.f32 0.0, %v3997
      %v3999 = vpop.f32.mrf.mxu0
      %v4000 = vadd.f32 0.0, %v3999
      %4001 = vmatmul.bf16.gmra.mxu0 %v3775
      %v4002 = vpop.f32.mrf.mxu0
      %v4003 = vadd.f32 0.0, %v4002
      %v4004 = vpop.f32.mrf.mxu0
      %v4005 = vadd.f32 0.0, %v4004
      %4006 = vmatmul.bf16.gmra.mxu0 %v3778
      %v4007 = vpop.f32.mrf.mxu0
      %v4008 = vadd.f32 0.0, %v4007
      %v4009 = vpop.f32.mrf.mxu0
      %v4010 = vadd.f32 0.0, %v4009
      %4011 = vmatmul.bf16.gmra.mxu0 %v3781
      %v4012 = vpop.f32.mrf.mxu0
      %v4013 = vadd.f32 0.0, %v4012
      %v4014 = vpop.f32.mrf.mxu0
      %v4015 = vadd.f32 0.0, %v4014
      %4016 = vmatmul.bf16.gmra.mxu0 %v3784
      %v4017 = vpop.f32.mrf.mxu0
      %v4018 = vadd.f32 0.0, %v4017
      %v4019 = vpop.f32.mrf.mxu0
      %v4020 = vadd.f32 0.0, %v4019
      %4021 = vmatmul.bf16.gmra.mxu0 %v3787
      %v4022 = vpop.f32.mrf.mxu0
      %v4023 = vadd.f32 0.0, %v4022
      %v4024 = vpop.f32.mrf.mxu0
      %v4025 = vadd.f32 0.0, %v4024
      %4026 = vmatmul.bf16.gmra.mxu0 %v3790
      %v4027 = vpop.f32.mrf.mxu0
      %v4028 = vadd.f32 0.0, %v4027
      %v4029 = vpop.f32.mrf.mxu0
      %v4030 = vadd.f32 0.0, %v4029
      %4031 = vmatmul.bf16.gmra.mxu0 %v3793
      %v4032 = vpop.f32.mrf.mxu0
      %v4033 = vadd.f32 0.0, %v4032
      %v4034 = vpop.f32.mrf.mxu0
      %v4035 = vadd.f32 0.0, %v4034
      %4036 = vmatmul.bf16.gmra.mxu0 %v3796
      %v4037 = vpop.f32.mrf.mxu0
      %v4038 = vadd.f32 0.0, %v4037
      %v4039 = vpop.f32.mrf.mxu0
      %v4040 = vadd.f32 0.0, %v4039
      %4041 = vmatmul.bf16.gmra.mxu0 %v3799
      %v4042 = vpop.f32.mrf.mxu0
      %v4043 = vadd.f32 0.0, %v4042
      %v4044 = vpop.f32.mrf.mxu0
      %v4045 = vadd.f32 0.0, %v4044
      %4046 = vmatmul.bf16.gmra.mxu0 %v3802
      %v4047 = vpop.f32.mrf.mxu0
      %v4048 = vadd.f32 0.0, %v4047
      %v4049 = vpop.f32.mrf.mxu0
      %v4050 = vadd.f32 0.0, %v4049
      %4051 = vmatmul.bf16.gmra.mxu0 %v3805
      %v4052 = vpop.f32.mrf.mxu0
      %v4053 = vadd.f32 0.0, %v4052
      %v4054 = vpop.f32.mrf.mxu0
      %v4055 = vadd.f32 0.0, %v4054
      %4056 = vmatmul.bf16.gmra.mxu0 %v3808
      %v4057 = vpop.f32.mrf.mxu0
      %v4058 = vadd.f32 0.0, %v4057
      %v4059 = vpop.f32.mrf.mxu0
      %v4060 = vadd.f32 0.0, %v4059
      %4061 = vmatmul.bf16.gmra.mxu0 %v3811
      %v4062 = vpop.f32.mrf.mxu0
      %v4063 = vadd.f32 0.0, %v4062
      %v4064 = vpop.f32.mrf.mxu0
      %v4065 = vadd.f32 0.0, %v4064
      %4066 = vmatmul.bf16.gmra.mxu0 %v3814
      %v4067 = vpop.f32.mrf.mxu0
      %v4068 = vadd.f32 0.0, %v4067
      %v4069 = vpop.f32.mrf.mxu0
      %v4070 = vadd.f32 0.0, %v4069
      %4071 = vmatmul.bf16.gmra.mxu0 %v3817
      %v4072 = vpop.f32.mrf.mxu0
      %v4073 = vadd.f32 0.0, %v4072
      %v4074 = vpop.f32.mrf.mxu0
      %v4075 = vadd.f32 0.0, %v4074
      %4076 = vmatmul.bf16.gmra.mxu0 %v3820
      %v4077 = vpop.f32.mrf.mxu0
      %v4078 = vadd.f32 0.0, %v4077
      %v4079 = vpop.f32.mrf.mxu0
      %v4080 = vadd.f32 0.0, %v4079
      %4081 = vmatmul.bf16.gmra.mxu0 %v3823
      %v4082 = vpop.f32.mrf.mxu0
      %v4083 = vadd.f32 0.0, %v4082
      %v4084 = vpop.f32.mrf.mxu0
      %v4085 = vadd.f32 0.0, %v4084
      %4086 = vmatmul.bf16.gmra.mxu0 %v3826
      %v4087 = vpop.f32.mrf.mxu0
      %v4088 = vadd.f32 0.0, %v4087
      %v4089 = vpop.f32.mrf.mxu0
      %v4090 = vadd.f32 0.0, %v4089
      %4091 = vmatmul.bf16.gmra.mxu0 %v3829
      %v4092 = vpop.f32.mrf.mxu0
      %v4093 = vadd.f32 0.0, %v4092
      %v4094 = vpop.f32.mrf.mxu0
      %v4095 = vadd.f32 0.0, %v4094
      %4096 = vmatmul.bf16.gmra.mxu0 %v3832
      %v4097 = vpop.f32.mrf.mxu0
      %v4098 = vadd.f32 0.0, %v4097
      %v4099 = vpop.f32.mrf.mxu0
      %v4100 = vadd.f32 0.0, %v4099
      %4101 = vmatmul.bf16.gmra.mxu0 %v3835
      %v4102 = vpop.f32.mrf.mxu0
      %v4103 = vadd.f32 0.0, %v4102
      %v4104 = vpop.f32.mrf.mxu0
      %v4105 = vadd.f32 0.0, %v4104
      %4106 = vmatmul.bf16.gmra.mxu0 %v3838
      %v4107 = vpop.f32.mrf.mxu0
      %v4108 = vadd.f32 0.0, %v4107
      %v4109 = vpop.f32.mrf.mxu0
      %v4110 = vadd.f32 0.0, %v4109
      %4111 = vmatmul.bf16.gmra.mxu0 %v3841
      %v4112 = vpop.f32.mrf.mxu0
      %v4113 = vadd.f32 0.0, %v4112
      %v4114 = vpop.f32.mrf.mxu0
      %v4115 = vadd.f32 0.0, %v4114
      %4116 = vmatmul.bf16.gmra.mxu0 %v3844
      %v4117 = vpop.f32.mrf.mxu0
      %v4118 = vadd.f32 0.0, %v4117
      %v4119 = vpop.f32.mrf.mxu0
      %v4120 = vadd.f32 0.0, %v4119
      %4121 = vmatmul.bf16.gmra.mxu0 %v3847
      %v4122 = vpop.f32.mrf.mxu0
      %v4123 = vadd.f32 0.0, %v4122
      %v4124 = vpop.f32.mrf.mxu0
      %v4125 = vadd.f32 0.0, %v4124
      %4126 = vmatmul.bf16.gmra.mxu0 %v3850
      %v4127 = vpop.f32.mrf.mxu0
      %v4128 = vadd.f32 0.0, %v4127
      %v4129 = vpop.f32.mrf.mxu0
      %v4130 = vadd.f32 0.0, %v4129
      %4131 = vmatmul.bf16.gmra.mxu0 %v3853
      %v4132 = vpop.f32.mrf.mxu0
      %v4133 = vadd.f32 0.0, %v4132
      %v4134 = vpop.f32.mrf.mxu0
      %v4135 = vadd.f32 0.0, %v4134
      %4136 = vmatmul.bf16.gmra.mxu0 %v3856
      %v4137 = vpop.f32.mrf.mxu0
      %v4138 = vadd.f32 0.0, %v4137
      %v4139 = vpop.f32.mrf.mxu0
      %v4140 = vadd.f32 0.0, %v4139
      %4141 = vmatmul.bf16.gmra.mxu0 %v3859
      %v4142 = vpop.f32.mrf.mxu0
      %v4143 = vadd.f32 0.0, %v4142
      %v4144 = vpop.f32.mrf.mxu0
      %v4145 = vadd.f32 0.0, %v4144
      %4146 = vmatmul.bf16.gmra.mxu0 %v3862
      %v4147 = vpop.f32.mrf.mxu0
      %v4148 = vadd.f32 0.0, %v4147
      %v4149 = vpop.f32.mrf.mxu0
      %v4150 = vadd.f32 0.0, %v4149
      %4151 = vmatmul.bf16.gmra.mxu0 %v3865
      %v4152 = vpop.f32.mrf.mxu0
      %v4153 = vadd.f32 0.0, %v4152
      %v4154 = vpop.f32.mrf.mxu0
      %v4155 = vadd.f32 0.0, %v4154
      %4156 = vmatmul.bf16.gmra.mxu0 %v3868
      %v4157 = vpop.f32.mrf.mxu0
      %v4158 = vadd.f32 0.0, %v4157
      %v4159 = vpop.f32.mrf.mxu0
      %v4160 = vadd.f32 0.0, %v4159
      %4161 = vmatmul.bf16.gmra.mxu0 %v3871
      %v4162 = vpop.f32.mrf.mxu0
      %v4163 = vadd.f32 0.0, %v4162
      %v4164 = vpop.f32.mrf.mxu0
      %v4165 = vadd.f32 0.0, %v4164
      %4166 = vmatmul.bf16.gmra.mxu0 %v3874
      %v4167 = vpop.f32.mrf.mxu0
      %v4168 = vadd.f32 0.0, %v4167
      %v4169 = vpop.f32.mrf.mxu0
      %v4170 = vadd.f32 0.0, %v4169
      %4171 = vmatmul.bf16.gmra.mxu0 %v3877
      %v4172 = vpop.f32.mrf.mxu0
      %v4173 = vadd.f32 0.0, %v4172
      %v4174 = vpop.f32.mrf.mxu0
      %v4175 = vadd.f32 0.0, %v4174
      %4176 = vmatmul.bf16.gmra.mxu0 %v3880
      %v4177 = vpop.f32.mrf.mxu0
      %v4178 = vadd.f32 0.0, %v4177
      %v4179 = vpop.f32.mrf.mxu0
      %v4180 = vadd.f32 0.0, %v4179
      %4181 = vmatmul.bf16.gmra.mxu0 %v3883
      %v4182 = vpop.f32.mrf.mxu0
      %v4183 = vadd.f32 0.0, %v4182
      %v4184 = vpop.f32.mrf.mxu0
      %v4185 = vadd.f32 0.0, %v4184
      %4186 = vmatmul.bf16.gmra.mxu0 %v3886
      %v4187 = vpop.f32.mrf.mxu0
      %v4188 = vadd.f32 0.0, %v4187
      %v4189 = vpop.f32.mrf.mxu0
      %v4190 = vadd.f32 0.0, %v4189
      %4191 = vmatmul.bf16.gmra.mxu0 %v3889
      %v4192 = vpop.f32.mrf.mxu0
      %v4193 = vadd.f32 0.0, %v4192
      %v4194 = vpop.f32.mrf.mxu0
      %v4195 = vadd.f32 0.0, %v4194
      %4196 = vmatmul.bf16.gmra.mxu0 %v3892
      %v4197 = vpop.f32.mrf.mxu0
      %v4198 = vadd.f32 0.0, %v4197
      %v4199 = vpop.f32.mrf.mxu0
      %v4200 = vadd.f32 0.0, %v4199
      %4201 = vmatmul.bf16.gmra.mxu0 %v3895
      %v4202 = vpop.f32.mrf.mxu0
      %v4203 = vadd.f32 0.0, %v4202
      %v4204 = vpop.f32.mrf.mxu0
      %v4205 = vadd.f32 0.0, %v4204
      %4206 = vmatmul.bf16.gmra.mxu0 %v3898
      %v4207 = vpop.f32.mrf.mxu0
      %v4208 = vadd.f32 0.0, %v4207
      %v4209 = vpop.f32.mrf.mxu0
      %v4210 = vadd.f32 0.0, %v4209
      %4211 = vmatmul.bf16.gmra.mxu0 %v3901
      %v4212 = vpop.f32.mrf.mxu0
      %v4213 = vadd.f32 0.0, %v4212
      %v4214 = vpop.f32.mrf.mxu0
      %v4215 = vadd.f32 0.0, %v4214
      %4216 = vmatmul.bf16.gmra.mxu0 %v3904
      %v4217 = vpop.f32.mrf.mxu0
      %v4218 = vadd.f32 0.0, %v4217
      %v4219 = vpop.f32.mrf.mxu0
      %v4220 = vadd.f32 0.0, %v4219
      %4221 = vmatmul.bf16.gmra.mxu0 %v3907
      %v4222 = vpop.f32.mrf.mxu0
      %v4223 = vadd.f32 0.0, %v4222
      %v4224 = vpop.f32.mrf.mxu0
      %v4225 = vadd.f32 0.0, %v4224
      %4226 = vmatmul.bf16.gmra.mxu0 %v3910
      %v4227 = vpop.f32.mrf.mxu0
      %v4228 = vadd.f32 0.0, %v4227
      %v4229 = vpop.f32.mrf.mxu0
      %v4230 = vadd.f32 0.0, %v4229
      %4231 = vmatmul.bf16.gmra.mxu0 %v3913
      %v4232 = vpop.f32.mrf.mxu0
      %v4233 = vadd.f32 0.0, %v4232
      %v4234 = vpop.f32.mrf.mxu0
      %v4235 = vadd.f32 0.0, %v4234
      %4236 = vmatmul.bf16.gmra.mxu0 %v3916
      %v4237 = vpop.f32.mrf.mxu0
      %v4238 = vadd.f32 0.0, %v4237
      %v4239 = vpop.f32.mrf.mxu0
      %v4240 = vadd.f32 0.0, %v4239
      %4241 = vmatmul.bf16.gmra.mxu0 %v3919
      %v4242 = vpop.f32.mrf.mxu0
      %v4243 = vadd.f32 0.0, %v4242
      %v4244 = vpop.f32.mrf.mxu0
      %v4245 = vadd.f32 0.0, %v4244
      %4246 = vmatmul.bf16.gmra.mxu0 %v3922
      %v4247 = vpop.f32.mrf.mxu0
      %v4248 = vadd.f32 0.0, %v4247
      %v4249 = vpop.f32.mrf.mxu0
      %v4250 = vadd.f32 0.0, %v4249
      %4251 = vmatmul.bf16.gmra.mxu0 %v3925
      %v4252 = vpop.f32.mrf.mxu0
      %v4253 = vadd.f32 0.0, %v4252
      %v4254 = vpop.f32.mrf.mxu0
      %v4255 = vadd.f32 0.0, %v4254
      %4256 = vmatmul.bf16.gmra.mxu0 %v3928
      %v4257 = vpop.f32.mrf.mxu0
      %v4258 = vadd.f32 0.0, %v4257
      %v4259 = vpop.f32.mrf.mxu0
      %v4260 = vadd.f32 0.0, %v4259
      %4261 = vmatmul.bf16.gmra.mxu0 %v3931
      %v4262 = vpop.f32.mrf.mxu0
      %v4263 = vadd.f32 0.0, %v4262
      %v4264 = vpop.f32.mrf.mxu0
      %v4265 = vadd.f32 0.0, %v4264
      %4266 = vmatmul.bf16.gmra.mxu0 %v3934
      %v4267 = vpop.f32.mrf.mxu0
      %v4268 = vadd.f32 0.0, %v4267
      %v4269 = vpop.f32.mrf.mxu0
      %v4270 = vadd.f32 0.0, %v4269
      %4271 = vmatmul.bf16.gmra.mxu0 %v3937
      %v4272 = vpop.f32.mrf.mxu0
      %v4273 = vadd.f32 0.0, %v4272
      %v4274 = vpop.f32.mrf.mxu0
      %v4275 = vadd.f32 0.0, %v4274
      %4276 = vmatmul.bf16.gmra.mxu0 %v3940
      %v4277 = vpop.f32.mrf.mxu0
      %v4278 = vadd.f32 0.0, %v4277
      %v4279 = vpop.f32.mrf.mxu0
      %v4280 = vadd.f32 0.0, %v4279
      %4281 = vmatmul.bf16.gmra.mxu0 %v3943
      %v4282 = vpop.f32.mrf.mxu0
      %v4283 = vadd.f32 0.0, %v4282
      %v4284 = vpop.f32.mrf.mxu0
      %v4285 = vadd.f32 0.0, %v4284
      %4286 = vmatmul.bf16.gmra.mxu0 %v3946
      %v4287 = vpop.f32.mrf.mxu0
      %v4288 = vadd.f32 0.0, %v4287
      %v4289 = vpop.f32.mrf.mxu0
      %v4290 = vadd.f32 0.0, %v4289
      %4291 = vmatmul.bf16.gmra.mxu0 %v3949
      %v4292 = vpop.f32.mrf.mxu0
      %v4293 = vadd.f32 0.0, %v4292
      %v4294 = vpop.f32.mrf.mxu0
      %v4295 = vadd.f32 0.0, %v4294
      %4296 = vmatmul.bf16.gmra.mxu0 %v3952
      %v4297 = vpop.f32.mrf.mxu0
      %v4298 = vadd.f32 0.0, %v4297
      %v4299 = vpop.f32.mrf.mxu0
      %v4300 = vadd.f32 0.0, %v4299
      %4301 = vmatmul.bf16.gmra.mxu0 %v3955
      %v4302 = vpop.f32.mrf.mxu0
      %v4303 = vadd.f32 0.0, %v4302
      %v4304 = vpop.f32.mrf.mxu0
      %v4305 = vadd.f32 0.0, %v4304
      %4306 = vmatmul.bf16.gmra.mxu0 %v3958
      %v4307 = vpop.f32.mrf.mxu0
      %v4308 = vadd.f32 0.0, %v4307
      %v4309 = vpop.f32.mrf.mxu0
      %v4310 = vadd.f32 0.0, %v4309
      %4311 = vdwg.mxu0
      %v4312 = vadd.f32 %v3001, %v3973
      %v4313 = vadd.f32 %v3002, %v3975
      %v4314 = vadd.f32 %v3003, %v3978
      %v4315 = vadd.f32 %v3004, %v3980
      %v4316 = vadd.f32 %v3005, %v3983
      %v4317 = vadd.f32 %v3006, %v3985
      %v4318 = vadd.f32 %v3007, %v3988
      %v4319 = vadd.f32 %v3008, %v3990
      %v4320 = vadd.f32 %v3009, %v3993
      %v4321 = vadd.f32 %v3010, %v3995
      %v4322 = vadd.f32 %v3011, %v3998
      %v4323 = vadd.f32 %v3012, %v4000
      %v4324 = vadd.f32 %v3013, %v4003
      %v4325 = vadd.f32 %v3014, %v4005
      %v4326 = vadd.f32 %v3015, %v4008
      %v4327 = vadd.f32 %v3016, %v4010
      %v4328 = vadd.f32 %v3017, %v4013
      %v4329 = vadd.f32 %v3018, %v4015
      %v4330 = vadd.f32 %v3019, %v4018
      %v4331 = vadd.f32 %v3020, %v4020
      %v4332 = vadd.f32 %v3021, %v4023
      %v4333 = vadd.f32 %v3022, %v4025
      %v4334 = vadd.f32 %v3023, %v4028
      %v4335 = vadd.f32 %v3024, %v4030
      %v4336 = vadd.f32 %v3025, %v4033
      %v4337 = vadd.f32 %v3026, %v4035
      %v4338 = vadd.f32 %v3027, %v4038
      %v4339 = vadd.f32 %v3028, %v4040
      %v4340 = vadd.f32 %v3029, %v4043
      %v4341 = vadd.f32 %v3030, %v4045
      %v4342 = vadd.f32 %v3031, %v4048
      %v4343 = vadd.f32 %v3032, %v4050
      %v4344 = vadd.f32 %v3033, %v4053
      %v4345 = vadd.f32 %v3034, %v4055
      %v4346 = vadd.f32 %v3035, %v4058
      %v4347 = vadd.f32 %v3036, %v4060
      %v4348 = vadd.f32 %v3037, %v4063
      %v4349 = vadd.f32 %v3038, %v4065
      %v4350 = vadd.f32 %v3039, %v4068
      %v4351 = vadd.f32 %v3040, %v4070
      %v4352 = vadd.f32 %v3041, %v4073
      %v4353 = vadd.f32 %v3042, %v4075
      %v4354 = vadd.f32 %v3043, %v4078
      %v4355 = vadd.f32 %v3044, %v4080
      %v4356 = vadd.f32 %v3045, %v4083
      %v4357 = vadd.f32 %v3046, %v4085
      %v4358 = vadd.f32 %v3047, %v4088
      %v4359 = vadd.f32 %v3048, %v4090
      %v4360 = vadd.f32 %v3049, %v4093
      %v4361 = vadd.f32 %v3050, %v4095
      %v4362 = vadd.f32 %v3051, %v4098
      %v4363 = vadd.f32 %v3052, %v4100
      %v4364 = vadd.f32 %v3053, %v4103
      %v4365 = vadd.f32 %v3054, %v4105
      %v4366 = vadd.f32 %v3055, %v4108
      %v4367 = vadd.f32 %v3056, %v4110
      %v4368 = vadd.f32 %v3057, %v4113
      %v4369 = vadd.f32 %v3058, %v4115
      %v4370 = vadd.f32 %v3059, %v4118
      %v4371 = vadd.f32 %v3060, %v4120
      %v4372 = vadd.f32 %v3061, %v4123
      %v4373 = vadd.f32 %v3062, %v4125
      %v4374 = vadd.f32 %v3063, %v4128
      %v4375 = vadd.f32 %v3064, %v4130
      %v4376 = vadd.f32 %v3065, %v4133
      %v4377 = vadd.f32 %v3066, %v4135
      %v4378 = vadd.f32 %v3067, %v4138
      %v4379 = vadd.f32 %v3068, %v4140
      %v4380 = vadd.f32 %v3069, %v4143
      %v4381 = vadd.f32 %v3070, %v4145
      %v4382 = vadd.f32 %v3071, %v4148
      %v4383 = vadd.f32 %v3072, %v4150
      %v4384 = vadd.f32 %v3073, %v4153
      %v4385 = vadd.f32 %v3074, %v4155
      %v4386 = vadd.f32 %v3075, %v4158
      %v4387 = vadd.f32 %v3076, %v4160
      %v4388 = vadd.f32 %v3077, %v4163
      %v4389 = vadd.f32 %v3078, %v4165
      %v4390 = vadd.f32 %v3079, %v4168
      %v4391 = vadd.f32 %v3080, %v4170
      %v4392 = vadd.f32 %v3081, %v4173
      %v4393 = vadd.f32 %v3082, %v4175
      %v4394 = vadd.f32 %v3083, %v4178
      %v4395 = vadd.f32 %v3084, %v4180
      %v4396 = vadd.f32 %v3085, %v4183
      %v4397 = vadd.f32 %v3086, %v4185
      %v4398 = vadd.f32 %v3087, %v4188
      %v4399 = vadd.f32 %v3088, %v4190
      %v4400 = vadd.f32 %v3089, %v4193
      %v4401 = vadd.f32 %v3090, %v4195
      %v4402 = vadd.f32 %v3091, %v4198
      %v4403 = vadd.f32 %v3092, %v4200
      %v4404 = vadd.f32 %v3093, %v4203
      %v4405 = vadd.f32 %v3094, %v4205
      %v4406 = vadd.f32 %v3095, %v4208
      %v4407 = vadd.f32 %v3096, %v4210
      %v4408 = vadd.f32 %v3097, %v4213
      %v4409 = vadd.f32 %v3098, %v4215
      %v4410 = vadd.f32 %v3099, %v4218
      %v4411 = vadd.f32 %v3100, %v4220
      %v4412 = vadd.f32 %v3101, %v4223
      %v4413 = vadd.f32 %v3102, %v4225
      %v4414 = vadd.f32 %v3103, %v4228
      %v4415 = vadd.f32 %v3104, %v4230
      %v4416 = vadd.f32 %v3105, %v4233
      %v4417 = vadd.f32 %v3106, %v4235
      %v4418 = vadd.f32 %v3107, %v4238
      %v4419 = vadd.f32 %v3108, %v4240
      %v4420 = vadd.f32 %v3109, %v4243
      %v4421 = vadd.f32 %v3110, %v4245
      %v4422 = vadd.f32 %v3111, %v4248
      %v4423 = vadd.f32 %v3112, %v4250
      %v4424 = vadd.f32 %v3113, %v4253
      %v4425 = vadd.f32 %v3114, %v4255
      %v4426 = vadd.f32 %v3115, %v4258
      %v4427 = vadd.f32 %v3116, %v4260
      %v4428 = vadd.f32 %v3117, %v4263
      %v4429 = vadd.f32 %v3118, %v4265
      %v4430 = vadd.f32 %v3119, %v4268
      %v4431 = vadd.f32 %v3120, %v4270
      %v4432 = vadd.f32 %v3121, %v4273
      %v4433 = vadd.f32 %v3122, %v4275
      %v4434 = vadd.f32 %v3123, %v4278
      %v4435 = vadd.f32 %v3124, %v4280
      %v4436 = vadd.f32 %v3125, %v4283
      %v4437 = vadd.f32 %v3126, %v4285
      %v4438 = vadd.f32 %v3127, %v4288
      %v4439 = vadd.f32 %v3128, %v4290
      %v4440 = vadd.f32 %v3129, %v4293
      %v4441 = vadd.f32 %v3130, %v4295
      %v4442 = vadd.f32 %v3131, %v4298
      %v4443 = vadd.f32 %v3132, %v4300
      %v4444 = vadd.f32 %v3133, %v4303
      %v4445 = vadd.f32 %v3134, %v4305
      %v4446 = vadd.f32 %v3135, %v4308
      %v4447 = vadd.f32 %v3136, %v4310
      %v4448 = vld [vmem:[%s206 + $0x230] sm:$0x3]
      %s4449 = scalar_lea.vmem %s210, 16
      %v4450 = vld [vmem:[%s4449] sm:$0xf]
      %v4452 = vunpack.c.l.b16 %v4448
      %v4453 = vpack.c.b16 %v4452, %v4452
      %vm4454 = vsmask.f32 6400
      %v4456 = vshrl.u32 %v3550, 16
      %v4458 = vrot.slane %v4456, 1
      %v4459 = vshll.u32 %v3550, 16
      %v4461 = vrot.slane %v4459, 2
      %v4462 = vor.u32 %v4458, %v4461
      %v4464 = vshrl.u32 %v3551, 16
      %v4466 = vrot.slane %v4464, 1
      %v4467 = vshll.u32 %v3551, 16
      %v4469 = vrot.slane %v4467, 2
      %v4470 = vor.u32 %v4466, %v4469
      %v4471 = vsel %vm4454, %v4462, %v4470
      %v4473 = vshrl.u32 %v3552, 16
      %v4475 = vrot.slane %v4473, 1
      %v4476 = vshll.u32 %v3552, 16
      %v4478 = vrot.slane %v4476, 2
      %v4479 = vor.u32 %v4475, %v4478
      %v4480 = vsel %vm4454, %v4470, %v4479
      %v4482 = vshrl.u32 %v3553, 16
      %v4484 = vrot.slane %v4482, 1
      %v4485 = vshll.u32 %v3553, 16
      %v4487 = vrot.slane %v4485, 2
      %v4488 = vor.u32 %v4484, %v4487
      %v4489 = vsel %vm4454, %v4479, %v4488
      %v4491 = vshrl.u32 %v3554, 16
      %v4493 = vrot.slane %v4491, 1
      %v4494 = vshll.u32 %v3554, 16
      %v4496 = vrot.slane %v4494, 2
      %v4497 = vor.u32 %v4493, %v4496
      %v4498 = vsel %vm4454, %v4488, %v4497
      %v4500 = vshrl.u32 %v3555, 16
      %v4502 = vrot.slane %v4500, 1
      %v4503 = vshll.u32 %v3555, 16
      %v4505 = vrot.slane %v4503, 2
      %v4506 = vor.u32 %v4502, %v4505
      %v4507 = vsel %vm4454, %v4497, %v4506
      %v4509 = vshrl.u32 %v3556, 16
      %v4511 = vrot.slane %v4509, 1
      %v4512 = vshll.u32 %v3556, 16
      %v4514 = vrot.slane %v4512, 2
      %v4515 = vor.u32 %v4511, %v4514
      %v4516 = vsel %vm4454, %v4506, %v4515
      %v4518 = vshrl.u32 %v3557, 16
      %v4520 = vrot.slane %v4518, 1
      %v4521 = vshll.u32 %v3557, 16
      %v4523 = vrot.slane %v4521, 2
      %v4524 = vor.u32 %v4520, %v4523
      %v4525 = vsel %vm4454, %v4515, %v4524
      %v4527 = vshrl.u32 %v3558, 16
      %v4529 = vrot.slane %v4527, 1
      %v4530 = vshll.u32 %v3558, 16
      %v4532 = vrot.slane %v4530, 2
      %v4533 = vor.u32 %v4529, %v4532
      %v4534 = vsel %vm4454, %v4524, %v4533
      %v4536 = vshrl.u32 %v3559, 16
      %v4538 = vrot.slane %v4536, 1
      %v4539 = vshll.u32 %v3559, 16
      %v4541 = vrot.slane %v4539, 2
      %v4542 = vor.u32 %v4538, %v4541
      %v4543 = vsel %vm4454, %v4533, %v4542
      %v4545 = vshrl.u32 %v3560, 16
      %v4547 = vrot.slane %v4545, 1
      %v4548 = vshll.u32 %v3560, 16
      %v4550 = vrot.slane %v4548, 2
      %v4551 = vor.u32 %v4547, %v4550
      %v4552 = vsel %vm4454, %v4542, %v4551
      %v4554 = vshrl.u32 %v3561, 16
      %v4556 = vrot.slane %v4554, 1
      %v4557 = vshll.u32 %v3561, 16
      %v4559 = vrot.slane %v4557, 2
      %v4560 = vor.u32 %v4556, %v4559
      %v4561 = vsel %vm4454, %v4551, %v4560
      %v4563 = vshrl.u32 %v3562, 16
      %v4565 = vrot.slane %v4563, 1
      %v4566 = vshll.u32 %v3562, 16
      %v4568 = vrot.slane %v4566, 2
      %v4569 = vor.u32 %v4565, %v4568
      %v4570 = vsel %vm4454, %v4560, %v4569
      %v4572 = vshrl.u32 %v3563, 16
      %v4574 = vrot.slane %v4572, 1
      %v4575 = vshll.u32 %v3563, 16
      %v4577 = vrot.slane %v4575, 2
      %v4578 = vor.u32 %v4574, %v4577
      %v4579 = vsel %vm4454, %v4569, %v4578
      %v4581 = vshrl.u32 %v3564, 16
      %v4583 = vrot.slane %v4581, 1
      %v4584 = vshll.u32 %v3564, 16
      %v4586 = vrot.slane %v4584, 2
      %v4587 = vor.u32 %v4583, %v4586
      %v4588 = vsel %vm4454, %v4578, %v4587
      %v4590 = vshrl.u32 %v3565, 16
      %v4592 = vrot.slane %v4590, 1
      %v4593 = vshll.u32 %v3565, 16
      %v4595 = vrot.slane %v4593, 2
      %v4596 = vor.u32 %v4592, %v4595
      %v4597 = vsel %vm4454, %v4587, %v4596
      %v4599 = vshrl.u32 %v3566, 16
      %v4601 = vrot.slane %v4599, 1
      %v4602 = vshll.u32 %v3566, 16
      %v4604 = vrot.slane %v4602, 2
      %v4605 = vor.u32 %v4601, %v4604
      %v4606 = vsel %vm4454, %v4596, %v4605
      %v4608 = vshrl.u32 %v3567, 16
      %v4610 = vrot.slane %v4608, 1
      %v4611 = vshll.u32 %v3567, 16
      %v4613 = vrot.slane %v4611, 2
      %v4614 = vor.u32 %v4610, %v4613
      %v4615 = vsel %vm4454, %v4605, %v4614
      %v4617 = vshrl.u32 %v3568, 16
      %v4619 = vrot.slane %v4617, 1
      %v4620 = vshll.u32 %v3568, 16
      %v4622 = vrot.slane %v4620, 2
      %v4623 = vor.u32 %v4619, %v4622
      %v4624 = vsel %vm4454, %v4614, %v4623
      %v4626 = vshrl.u32 %v3569, 16
      %v4628 = vrot.slane %v4626, 1
      %v4629 = vshll.u32 %v3569, 16
      %v4631 = vrot.slane %v4629, 2
      %v4632 = vor.u32 %v4628, %v4631
      %v4633 = vsel %vm4454, %v4623, %v4632
      %v4635 = vshrl.u32 %v3570, 16
      %v4637 = vrot.slane %v4635, 1
      %v4638 = vshll.u32 %v3570, 16
      %v4640 = vrot.slane %v4638, 2
      %v4641 = vor.u32 %v4637, %v4640
      %v4642 = vsel %vm4454, %v4632, %v4641
      %v4644 = vshrl.u32 %v3571, 16
      %v4646 = vrot.slane %v4644, 1
      %v4647 = vshll.u32 %v3571, 16
      %v4649 = vrot.slane %v4647, 2
      %v4650 = vor.u32 %v4646, %v4649
      %v4651 = vsel %vm4454, %v4641, %v4650
      %v4653 = vshrl.u32 %v3572, 16
      %v4655 = vrot.slane %v4653, 1
      %v4656 = vshll.u32 %v3572, 16
      %v4658 = vrot.slane %v4656, 2
      %v4659 = vor.u32 %v4655, %v4658
      %v4660 = vsel %vm4454, %v4650, %v4659
      %v4662 = vshrl.u32 %v3573, 16
      %v4664 = vrot.slane %v4662, 1
      %v4665 = vshll.u32 %v3573, 16
      %v4667 = vrot.slane %v4665, 2
      %v4668 = vor.u32 %v4664, %v4667
      %v4669 = vsel %vm4454, %v4659, %v4668
      %v4671 = vshrl.u32 %v3574, 16
      %v4673 = vrot.slane %v4671, 1
      %v4674 = vshll.u32 %v3574, 16
      %v4676 = vrot.slane %v4674, 2
      %v4677 = vor.u32 %v4673, %v4676
      %v4678 = vsel %vm4454, %v4668, %v4677
      %v4680 = vshrl.u32 %v3575, 16
      %v4682 = vrot.slane %v4680, 1
      %v4683 = vshll.u32 %v3575, 16
      %v4685 = vrot.slane %v4683, 2
      %v4686 = vor.u32 %v4682, %v4685
      %v4687 = vsel %vm4454, %v4677, %v4686
      %v4689 = vshrl.u32 %v3576, 16
      %v4691 = vrot.slane %v4689, 1
      %v4692 = vshll.u32 %v3576, 16
      %v4694 = vrot.slane %v4692, 2
      %v4695 = vor.u32 %v4691, %v4694
      %v4696 = vsel %vm4454, %v4686, %v4695
      %v4698 = vshrl.u32 %v3577, 16
      %v4700 = vrot.slane %v4698, 1
      %v4701 = vshll.u32 %v3577, 16
      %v4703 = vrot.slane %v4701, 2
      %v4704 = vor.u32 %v4700, %v4703
      %v4705 = vsel %vm4454, %v4695, %v4704
      %v4707 = vshrl.u32 %v3578, 16
      %v4709 = vrot.slane %v4707, 1
      %v4710 = vshll.u32 %v3578, 16
      %v4712 = vrot.slane %v4710, 2
      %v4713 = vor.u32 %v4709, %v4712
      %v4714 = vsel %vm4454, %v4704, %v4713
      %v4716 = vshrl.u32 %v3579, 16
      %v4718 = vrot.slane %v4716, 1
      %v4719 = vshll.u32 %v3579, 16
      %v4721 = vrot.slane %v4719, 2
      %v4722 = vor.u32 %v4718, %v4721
      %v4723 = vsel %vm4454, %v4713, %v4722
      %v4725 = vshrl.u32 %v3580, 16
      %v4727 = vrot.slane %v4725, 1
      %v4728 = vshll.u32 %v3580, 16
      %v4730 = vrot.slane %v4728, 2
      %v4731 = vor.u32 %v4727, %v4730
      %v4732 = vsel %vm4454, %v4722, %v4731
      %v4734 = vshrl.u32 %v3581, 16
      %v4736 = vrot.slane %v4734, 1
      %v4737 = vshll.u32 %v3581, 16
      %v4739 = vrot.slane %v4737, 2
      %v4740 = vor.u32 %v4736, %v4739
      %v4741 = vsel %vm4454, %v4731, %v4740
      %v4743 = vshrl.u32 %v3582, 16
      %v4745 = vrot.slane %v4743, 1
      %v4746 = vshll.u32 %v3582, 16
      %v4748 = vrot.slane %v4746, 2
      %v4749 = vor.u32 %v4745, %v4748
      %v4750 = vsel %vm4454, %v4740, %v4749
      %v4752 = vshrl.u32 %v3583, 16
      %v4754 = vrot.slane %v4752, 1
      %v4755 = vshll.u32 %v3583, 16
      %v4757 = vrot.slane %v4755, 2
      %v4758 = vor.u32 %v4754, %v4757
      %v4759 = vsel %vm4454, %v4749, %v4758
      %v4761 = vshrl.u32 %v3584, 16
      %v4763 = vrot.slane %v4761, 1
      %v4764 = vshll.u32 %v3584, 16
      %v4766 = vrot.slane %v4764, 2
      %v4767 = vor.u32 %v4763, %v4766
      %v4768 = vsel %vm4454, %v4758, %v4767
      %v4770 = vshrl.u32 %v3585, 16
      %v4772 = vrot.slane %v4770, 1
      %v4773 = vshll.u32 %v3585, 16
      %v4775 = vrot.slane %v4773, 2
      %v4776 = vor.u32 %v4772, %v4775
      %v4777 = vsel %vm4454, %v4767, %v4776
      %v4779 = vshrl.u32 %v3586, 16
      %v4781 = vrot.slane %v4779, 1
      %v4782 = vshll.u32 %v3586, 16
      %v4784 = vrot.slane %v4782, 2
      %v4785 = vor.u32 %v4781, %v4784
      %v4786 = vsel %vm4454, %v4776, %v4785
      %v4788 = vshrl.u32 %v3587, 16
      %v4790 = vrot.slane %v4788, 1
      %v4791 = vshll.u32 %v3587, 16
      %v4793 = vrot.slane %v4791, 2
      %v4794 = vor.u32 %v4790, %v4793
      %v4795 = vsel %vm4454, %v4785, %v4794
      %v4797 = vshrl.u32 %v3588, 16
      %v4799 = vrot.slane %v4797, 1
      %v4800 = vshll.u32 %v3588, 16
      %v4802 = vrot.slane %v4800, 2
      %v4803 = vor.u32 %v4799, %v4802
      %v4804 = vsel %vm4454, %v4794, %v4803
      %v4806 = vshrl.u32 %v3589, 16
      %v4808 = vrot.slane %v4806, 1
      %v4809 = vshll.u32 %v3589, 16
      %v4811 = vrot.slane %v4809, 2
      %v4812 = vor.u32 %v4808, %v4811
      %v4813 = vsel %vm4454, %v4803, %v4812
      %v4815 = vshrl.u32 %v3590, 16
      %v4817 = vrot.slane %v4815, 1
      %v4818 = vshll.u32 %v3590, 16
      %v4820 = vrot.slane %v4818, 2
      %v4821 = vor.u32 %v4817, %v4820
      %v4822 = vsel %vm4454, %v4812, %v4821
      %v4824 = vshrl.u32 %v3591, 16
      %v4826 = vrot.slane %v4824, 1
      %v4827 = vshll.u32 %v3591, 16
      %v4829 = vrot.slane %v4827, 2
      %v4830 = vor.u32 %v4826, %v4829
      %v4831 = vsel %vm4454, %v4821, %v4830
      %v4833 = vshrl.u32 %v3592, 16
      %v4835 = vrot.slane %v4833, 1
      %v4836 = vshll.u32 %v3592, 16
      %v4838 = vrot.slane %v4836, 2
      %v4839 = vor.u32 %v4835, %v4838
      %v4840 = vsel %vm4454, %v4830, %v4839
      %v4842 = vshrl.u32 %v3593, 16
      %v4844 = vrot.slane %v4842, 1
      %v4845 = vshll.u32 %v3593, 16
      %v4847 = vrot.slane %v4845, 2
      %v4848 = vor.u32 %v4844, %v4847
      %v4849 = vsel %vm4454, %v4839, %v4848
      %v4851 = vshrl.u32 %v3594, 16
      %v4853 = vrot.slane %v4851, 1
      %v4854 = vshll.u32 %v3594, 16
      %v4856 = vrot.slane %v4854, 2
      %v4857 = vor.u32 %v4853, %v4856
      %v4858 = vsel %vm4454, %v4848, %v4857
      %v4860 = vshrl.u32 %v3595, 16
      %v4862 = vrot.slane %v4860, 1
      %v4863 = vshll.u32 %v3595, 16
      %v4865 = vrot.slane %v4863, 2
      %v4866 = vor.u32 %v4862, %v4865
      %v4867 = vsel %vm4454, %v4857, %v4866
      %v4869 = vshrl.u32 %v3596, 16
      %v4871 = vrot.slane %v4869, 1
      %v4872 = vshll.u32 %v3596, 16
      %v4874 = vrot.slane %v4872, 2
      %v4875 = vor.u32 %v4871, %v4874
      %v4876 = vsel %vm4454, %v4866, %v4875
      %v4878 = vshrl.u32 %v3597, 16
      %v4880 = vrot.slane %v4878, 1
      %v4881 = vshll.u32 %v3597, 16
      %v4883 = vrot.slane %v4881, 2
      %v4884 = vor.u32 %v4880, %v4883
      %v4885 = vsel %vm4454, %v4875, %v4884
      %v4887 = vshrl.u32 %v3598, 16
      %v4889 = vrot.slane %v4887, 1
      %v4890 = vshll.u32 %v3598, 16
      %v4892 = vrot.slane %v4890, 2
      %v4893 = vor.u32 %v4889, %v4892
      %v4894 = vsel %vm4454, %v4884, %v4893
      %v4896 = vshrl.u32 %v3599, 16
      %v4898 = vrot.slane %v4896, 1
      %v4899 = vshll.u32 %v3599, 16
      %v4901 = vrot.slane %v4899, 2
      %v4902 = vor.u32 %v4898, %v4901
      %v4903 = vsel %vm4454, %v4893, %v4902
      %v4905 = vshrl.u32 %v3600, 16
      %v4907 = vrot.slane %v4905, 1
      %v4908 = vshll.u32 %v3600, 16
      %v4910 = vrot.slane %v4908, 2
      %v4911 = vor.u32 %v4907, %v4910
      %v4912 = vsel %vm4454, %v4902, %v4911
      %v4914 = vshrl.u32 %v3601, 16
      %v4916 = vrot.slane %v4914, 1
      %v4917 = vshll.u32 %v3601, 16
      %v4919 = vrot.slane %v4917, 2
      %v4920 = vor.u32 %v4916, %v4919
      %v4921 = vsel %vm4454, %v4911, %v4920
      %v4923 = vshrl.u32 %v3602, 16
      %v4925 = vrot.slane %v4923, 1
      %v4926 = vshll.u32 %v3602, 16
      %v4928 = vrot.slane %v4926, 2
      %v4929 = vor.u32 %v4925, %v4928
      %v4930 = vsel %vm4454, %v4920, %v4929
      %v4932 = vshrl.u32 %v3603, 16
      %v4934 = vrot.slane %v4932, 1
      %v4935 = vshll.u32 %v3603, 16
      %v4937 = vrot.slane %v4935, 2
      %v4938 = vor.u32 %v4934, %v4937
      %v4939 = vsel %vm4454, %v4929, %v4938
      %v4941 = vshrl.u32 %v3604, 16
      %v4943 = vrot.slane %v4941, 1
      %v4944 = vshll.u32 %v3604, 16
      %v4946 = vrot.slane %v4944, 2
      %v4947 = vor.u32 %v4943, %v4946
      %v4948 = vsel %vm4454, %v4938, %v4947
      %v4950 = vshrl.u32 %v3605, 16
      %v4952 = vrot.slane %v4950, 1
      %v4953 = vshll.u32 %v3605, 16
      %v4955 = vrot.slane %v4953, 2
      %v4956 = vor.u32 %v4952, %v4955
      %v4957 = vsel %vm4454, %v4947, %v4956
      %v4959 = vshrl.u32 %v3606, 16
      %v4961 = vrot.slane %v4959, 1
      %v4962 = vshll.u32 %v3606, 16
      %v4964 = vrot.slane %v4962, 2
      %v4965 = vor.u32 %v4961, %v4964
      %v4966 = vsel %vm4454, %v4956, %v4965
      %v4968 = vshrl.u32 %v3607, 16
      %v4970 = vrot.slane %v4968, 1
      %v4971 = vshll.u32 %v3607, 16
      %v4973 = vrot.slane %v4971, 2
      %v4974 = vor.u32 %v4970, %v4973
      %v4975 = vsel %vm4454, %v4965, %v4974
      %v4977 = vshrl.u32 %v3608, 16
      %v4979 = vrot.slane %v4977, 1
      %v4980 = vshll.u32 %v3608, 16
      %v4982 = vrot.slane %v4980, 2
      %v4983 = vor.u32 %v4979, %v4982
      %v4984 = vsel %vm4454, %v4974, %v4983
      %v4986 = vshrl.u32 %v3609, 16
      %v4988 = vrot.slane %v4986, 1
      %v4989 = vshll.u32 %v3609, 16
      %v4991 = vrot.slane %v4989, 2
      %v4992 = vor.u32 %v4988, %v4991
      %v4993 = vsel %vm4454, %v4983, %v4992
      %v4995 = vshrl.u32 %v3610, 16
      %v4997 = vrot.slane %v4995, 1
      %v4998 = vshll.u32 %v3610, 16
      %v5000 = vrot.slane %v4998, 2
      %v5001 = vor.u32 %v4997, %v5000
      %v5002 = vsel %vm4454, %v4992, %v5001
      %v5004 = vshrl.u32 %v3611, 16
      %v5006 = vrot.slane %v5004, 1
      %v5007 = vshll.u32 %v3611, 16
      %v5009 = vrot.slane %v5007, 2
      %v5010 = vor.u32 %v5006, %v5009
      %v5011 = vsel %vm4454, %v5001, %v5010
      %v5013 = vshrl.u32 %v3612, 16
      %v5015 = vrot.slane %v5013, 1
      %v5016 = vshll.u32 %v3612, 16
      %v5018 = vrot.slane %v5016, 2
      %v5019 = vor.u32 %v5015, %v5018
      %v5020 = vsel %vm4454, %v5010, %v5019
      %v5022 = vshrl.u32 %v3613, 16
      %v5024 = vrot.slane %v5022, 1
      %v5025 = vshll.u32 %v3613, 16
      %v5027 = vrot.slane %v5025, 2
      %v5028 = vor.u32 %v5024, %v5027
      %v5029 = vsel %vm4454, %v5019, %v5028
      %v5031 = vshrl.u32 %v3614, 16
      %v5033 = vrot.slane %v5031, 1
      %v5034 = vshll.u32 %v3614, 16
      %v5036 = vrot.slane %v5034, 2
      %v5037 = vor.u32 %v5033, %v5036
      %v5038 = vsel %vm4454, %v5028, %v5037
      %v5040 = vshrl.u32 %v3615, 16
      %v5042 = vrot.slane %v5040, 1
      %v5043 = vshll.u32 %v3615, 16
      %v5045 = vrot.slane %v5043, 2
      %v5046 = vor.u32 %v5042, %v5045
      %v5047 = vsel %vm4454, %v5037, %v5046
      %v5049 = vshrl.u32 %v3616, 16
      %v5051 = vrot.slane %v5049, 1
      %v5052 = vshll.u32 %v3616, 16
      %v5054 = vrot.slane %v5052, 2
      %v5055 = vor.u32 %v5051, %v5054
      %v5056 = vsel %vm4454, %v5046, %v5055
      %v5058 = vshrl.u32 %v3617, 16
      %v5060 = vrot.slane %v5058, 1
      %v5061 = vshll.u32 %v3617, 16
      %v5063 = vrot.slane %v5061, 2
      %v5064 = vor.u32 %v5060, %v5063
      %v5065 = vsel %vm4454, %v5055, %v5064
      %v5067 = vshrl.u32 %v4453, 16
      %v5069 = vrot.slane %v5067, 1
      %v5070 = vshll.u32 %v4453, 16
      %v5072 = vrot.slane %v5070, 2
      %v5073 = vor.u32 %v5069, %v5072
      %v5074 = vsel %vm4454, %v5064, %v5073
      %v5076 = vsel %vm1255, %v4471, 0
      %v5079 = vsel %vm1255, %v4480, 0
      %v5082 = vsel %vm1255, %v4489, 0
      %v5085 = vsel %vm1255, %v4498, 0
      %v5088 = vsel %vm1255, %v4507, 0
      %v5091 = vsel %vm1255, %v4516, 0
      %v5094 = vsel %vm1255, %v4525, 0
      %v5097 = vsel %vm1255, %v4534, 0
      %v5100 = vsel %vm1255, %v4543, 0
      %v5103 = vsel %vm1255, %v4552, 0
      %v5106 = vsel %vm1255, %v4561, 0
      %v5109 = vsel %vm1255, %v4570, 0
      %v5112 = vsel %vm1255, %v4579, 0
      %v5115 = vsel %vm1255, %v4588, 0
      %v5118 = vsel %vm1255, %v4597, 0
      %v5121 = vsel %vm1255, %v4606, 0
      %v5124 = vsel %vm1255, %v4615, 0
      %v5127 = vsel %vm1255, %v4624, 0
      %v5130 = vsel %vm1255, %v4633, 0
      %v5133 = vsel %vm1255, %v4642, 0
      %v5136 = vsel %vm1255, %v4651, 0
      %v5139 = vsel %vm1255, %v4660, 0
      %v5142 = vsel %vm1255, %v4669, 0
      %v5145 = vsel %vm1255, %v4678, 0
      %v5148 = vsel %vm1255, %v4687, 0
      %v5151 = vsel %vm1255, %v4696, 0
      %v5154 = vsel %vm1255, %v4705, 0
      %v5157 = vsel %vm1255, %v4714, 0
      %v5160 = vsel %vm1255, %v4723, 0
      %v5163 = vsel %vm1255, %v4732, 0
      %v5166 = vsel %vm1255, %v4741, 0
      %v5169 = vsel %vm1255, %v4750, 0
      %v5172 = vsel %vm1255, %v4759, 0
      %v5175 = vsel %vm1255, %v4768, 0
      %v5178 = vsel %vm1255, %v4777, 0
      %v5181 = vsel %vm1255, %v4786, 0
      %v5184 = vsel %vm1255, %v4795, 0
      %v5187 = vsel %vm1255, %v4804, 0
      %v5190 = vsel %vm1255, %v4813, 0
      %v5193 = vsel %vm1255, %v4822, 0
      %v5196 = vsel %vm1255, %v4831, 0
      %v5199 = vsel %vm1255, %v4840, 0
      %v5202 = vsel %vm1255, %v4849, 0
      %v5205 = vsel %vm1255, %v4858, 0
      %v5208 = vsel %vm1255, %v4867, 0
      %v5211 = vsel %vm1255, %v4876, 0
      %v5214 = vsel %vm1255, %v4885, 0
      %v5217 = vsel %vm1255, %v4894, 0
      %v5220 = vsel %vm1255, %v4903, 0
      %v5223 = vsel %vm1255, %v4912, 0
      %v5226 = vsel %vm1255, %v4921, 0
      %v5229 = vsel %vm1255, %v4930, 0
      %v5232 = vsel %vm1255, %v4939, 0
      %v5235 = vsel %vm1255, %v4948, 0
      %v5238 = vsel %vm1255, %v4957, 0
      %v5241 = vsel %vm1255, %v4966, 0
      %v5244 = vsel %vm1255, %v4975, 0
      %v5247 = vsel %vm1255, %v4984, 0
      %v5250 = vsel %vm1255, %v4993, 0
      %v5253 = vsel %vm1255, %v5002, 0
      %v5256 = vsel %vm1255, %v5011, 0
      %v5259 = vsel %vm1255, %v5020, 0
      %v5262 = vsel %vm1255, %v5029, 0
      %v5265 = vsel %vm1255, %v5038, 0
      %v5268 = vsel %vm1255, %v5047, 0
      %v5271 = vsel %vm1255, %v5056, 0
      %v5274 = vsel %vm1255, %v5065, 0
      %v5277 = vsel %vm1255, %v5074, 0
      %v5280 = vsel %vm1460, %v4450, 0
      %5282 = vmatpush.bf16.msra.mxu0 0
      %5283 = vmatpush.bf16.msra.mxu0 0
      %5284 = vmatpush.bf16.msra.mxu0 0
      %5285 = vmatpush.bf16.msra.mxu0 0
      %5286 = vmatpush.bf16.msra.mxu0 0
      %5287 = vmatpush.bf16.msra.mxu0 0
      %5288 = vmatpush.bf16.msra.mxu0 0
      %5289 = vmatpush.bf16.msra.mxu0 %v5280
      %5290 = vmatmul.bf16.gmra.mxu0 %v5076
      %v5291 = vpop.f32.mrf.mxu0
      %v5292 = vadd.f32 0.0, %v5291
      %v5293 = vpop.f32.mrf.mxu0
      %v5294 = vadd.f32 0.0, %v5293
      %5295 = vmatmul.bf16.gmra.mxu0 %v5079
      %v5296 = vpop.f32.mrf.mxu0
      %v5297 = vadd.f32 0.0, %v5296
      %v5298 = vpop.f32.mrf.mxu0
      %v5299 = vadd.f32 0.0, %v5298
      %5300 = vmatmul.bf16.gmra.mxu0 %v5082
      %v5301 = vpop.f32.mrf.mxu0
      %v5302 = vadd.f32 0.0, %v5301
      %v5303 = vpop.f32.mrf.mxu0
      %v5304 = vadd.f32 0.0, %v5303
      %5305 = vmatmul.bf16.gmra.mxu0 %v5085
      %v5306 = vpop.f32.mrf.mxu0
      %v5307 = vadd.f32 0.0, %v5306
      %v5308 = vpop.f32.mrf.mxu0
      %v5309 = vadd.f32 0.0, %v5308
      %5310 = vmatmul.bf16.gmra.mxu0 %v5088
      %v5311 = vpop.f32.mrf.mxu0
      %v5312 = vadd.f32 0.0, %v5311
      %v5313 = vpop.f32.mrf.mxu0
      %v5314 = vadd.f32 0.0, %v5313
      %5315 = vmatmul.bf16.gmra.mxu0 %v5091
      %v5316 = vpop.f32.mrf.mxu0
      %v5317 = vadd.f32 0.0, %v5316
      %v5318 = vpop.f32.mrf.mxu0
      %v5319 = vadd.f32 0.0, %v5318
      %5320 = vmatmul.bf16.gmra.mxu0 %v5094
      %v5321 = vpop.f32.mrf.mxu0
      %v5322 = vadd.f32 0.0, %v5321
      %v5323 = vpop.f32.mrf.mxu0
      %v5324 = vadd.f32 0.0, %v5323
      %5325 = vmatmul.bf16.gmra.mxu0 %v5097
      %v5326 = vpop.f32.mrf.mxu0
      %v5327 = vadd.f32 0.0, %v5326
      %v5328 = vpop.f32.mrf.mxu0
      %v5329 = vadd.f32 0.0, %v5328
      %5330 = vmatmul.bf16.gmra.mxu0 %v5100
      %v5331 = vpop.f32.mrf.mxu0
      %v5332 = vadd.f32 0.0, %v5331
      %v5333 = vpop.f32.mrf.mxu0
      %v5334 = vadd.f32 0.0, %v5333
      %5335 = vmatmul.bf16.gmra.mxu0 %v5103
      %v5336 = vpop.f32.mrf.mxu0
      %v5337 = vadd.f32 0.0, %v5336
      %v5338 = vpop.f32.mrf.mxu0
      %v5339 = vadd.f32 0.0, %v5338
      %5340 = vmatmul.bf16.gmra.mxu0 %v5106
      %v5341 = vpop.f32.mrf.mxu0
      %v5342 = vadd.f32 0.0, %v5341
      %v5343 = vpop.f32.mrf.mxu0
      %v5344 = vadd.f32 0.0, %v5343
      %5345 = vmatmul.bf16.gmra.mxu0 %v5109
      %v5346 = vpop.f32.mrf.mxu0
      %v5347 = vadd.f32 0.0, %v5346
      %v5348 = vpop.f32.mrf.mxu0
      %v5349 = vadd.f32 0.0, %v5348
      %5350 = vmatmul.bf16.gmra.mxu0 %v5112
      %v5351 = vpop.f32.mrf.mxu0
      %v5352 = vadd.f32 0.0, %v5351
      %v5353 = vpop.f32.mrf.mxu0
      %v5354 = vadd.f32 0.0, %v5353
      %5355 = vmatmul.bf16.gmra.mxu0 %v5115
      %v5356 = vpop.f32.mrf.mxu0
      %v5357 = vadd.f32 0.0, %v5356
      %v5358 = vpop.f32.mrf.mxu0
      %v5359 = vadd.f32 0.0, %v5358
      %5360 = vmatmul.bf16.gmra.mxu0 %v5118
      %v5361 = vpop.f32.mrf.mxu0
      %v5362 = vadd.f32 0.0, %v5361
      %v5363 = vpop.f32.mrf.mxu0
      %v5364 = vadd.f32 0.0, %v5363
      %5365 = vmatmul.bf16.gmra.mxu0 %v5121
      %v5366 = vpop.f32.mrf.mxu0
      %v5367 = vadd.f32 0.0, %v5366
      %v5368 = vpop.f32.mrf.mxu0
      %v5369 = vadd.f32 0.0, %v5368
      %5370 = vmatmul.bf16.gmra.mxu0 %v5124
      %v5371 = vpop.f32.mrf.mxu0
      %v5372 = vadd.f32 0.0, %v5371
      %v5373 = vpop.f32.mrf.mxu0
      %v5374 = vadd.f32 0.0, %v5373
      %5375 = vmatmul.bf16.gmra.mxu0 %v5127
      %v5376 = vpop.f32.mrf.mxu0
      %v5377 = vadd.f32 0.0, %v5376
      %v5378 = vpop.f32.mrf.mxu0
      %v5379 = vadd.f32 0.0, %v5378
      %5380 = vmatmul.bf16.gmra.mxu0 %v5130
      %v5381 = vpop.f32.mrf.mxu0
      %v5382 = vadd.f32 0.0, %v5381
      %v5383 = vpop.f32.mrf.mxu0
      %v5384 = vadd.f32 0.0, %v5383
      %5385 = vmatmul.bf16.gmra.mxu0 %v5133
      %v5386 = vpop.f32.mrf.mxu0
      %v5387 = vadd.f32 0.0, %v5386
      %v5388 = vpop.f32.mrf.mxu0
      %v5389 = vadd.f32 0.0, %v5388
      %5390 = vmatmul.bf16.gmra.mxu0 %v5136
      %v5391 = vpop.f32.mrf.mxu0
      %v5392 = vadd.f32 0.0, %v5391
      %v5393 = vpop.f32.mrf.mxu0
      %v5394 = vadd.f32 0.0, %v5393
      %5395 = vmatmul.bf16.gmra.mxu0 %v5139
      %v5396 = vpop.f32.mrf.mxu0
      %v5397 = vadd.f32 0.0, %v5396
      %v5398 = vpop.f32.mrf.mxu0
      %v5399 = vadd.f32 0.0, %v5398
      %5400 = vmatmul.bf16.gmra.mxu0 %v5142
      %v5401 = vpop.f32.mrf.mxu0
      %v5402 = vadd.f32 0.0, %v5401
      %v5403 = vpop.f32.mrf.mxu0
      %v5404 = vadd.f32 0.0, %v5403
      %5405 = vmatmul.bf16.gmra.mxu0 %v5145
      %v5406 = vpop.f32.mrf.mxu0
      %v5407 = vadd.f32 0.0, %v5406
      %v5408 = vpop.f32.mrf.mxu0
      %v5409 = vadd.f32 0.0, %v5408
      %5410 = vmatmul.bf16.gmra.mxu0 %v5148
      %v5411 = vpop.f32.mrf.mxu0
      %v5412 = vadd.f32 0.0, %v5411
      %v5413 = vpop.f32.mrf.mxu0
      %v5414 = vadd.f32 0.0, %v5413
      %5415 = vmatmul.bf16.gmra.mxu0 %v5151
      %v5416 = vpop.f32.mrf.mxu0
      %v5417 = vadd.f32 0.0, %v5416
      %v5418 = vpop.f32.mrf.mxu0
      %v5419 = vadd.f32 0.0, %v5418
      %5420 = vmatmul.bf16.gmra.mxu0 %v5154
      %v5421 = vpop.f32.mrf.mxu0
      %v5422 = vadd.f32 0.0, %v5421
      %v5423 = vpop.f32.mrf.mxu0
      %v5424 = vadd.f32 0.0, %v5423
      %5425 = vmatmul.bf16.gmra.mxu0 %v5157
      %v5426 = vpop.f32.mrf.mxu0
      %v5427 = vadd.f32 0.0, %v5426
      %v5428 = vpop.f32.mrf.mxu0
      %v5429 = vadd.f32 0.0, %v5428
      %5430 = vmatmul.bf16.gmra.mxu0 %v5160
      %v5431 = vpop.f32.mrf.mxu0
      %v5432 = vadd.f32 0.0, %v5431
      %v5433 = vpop.f32.mrf.mxu0
      %v5434 = vadd.f32 0.0, %v5433
      %5435 = vmatmul.bf16.gmra.mxu0 %v5163
      %v5436 = vpop.f32.mrf.mxu0
      %v5437 = vadd.f32 0.0, %v5436
      %v5438 = vpop.f32.mrf.mxu0
      %v5439 = vadd.f32 0.0, %v5438
      %5440 = vmatmul.bf16.gmra.mxu0 %v5166
      %v5441 = vpop.f32.mrf.mxu0
      %v5442 = vadd.f32 0.0, %v5441
      %v5443 = vpop.f32.mrf.mxu0
      %v5444 = vadd.f32 0.0, %v5443
      %5445 = vmatmul.bf16.gmra.mxu0 %v5169
      %v5446 = vpop.f32.mrf.mxu0
      %v5447 = vadd.f32 0.0, %v5446
      %v5448 = vpop.f32.mrf.mxu0
      %v5449 = vadd.f32 0.0, %v5448
      %5450 = vmatmul.bf16.gmra.mxu0 %v5172
      %v5451 = vpop.f32.mrf.mxu0
      %v5452 = vadd.f32 0.0, %v5451
      %v5453 = vpop.f32.mrf.mxu0
      %v5454 = vadd.f32 0.0, %v5453
      %5455 = vmatmul.bf16.gmra.mxu0 %v5175
      %v5456 = vpop.f32.mrf.mxu0
      %v5457 = vadd.f32 0.0, %v5456
      %v5458 = vpop.f32.mrf.mxu0
      %v5459 = vadd.f32 0.0, %v5458
      %5460 = vmatmul.bf16.gmra.mxu0 %v5178
      %v5461 = vpop.f32.mrf.mxu0
      %v5462 = vadd.f32 0.0, %v5461
      %v5463 = vpop.f32.mrf.mxu0
      %v5464 = vadd.f32 0.0, %v5463
      %5465 = vmatmul.bf16.gmra.mxu0 %v5181
      %v5466 = vpop.f32.mrf.mxu0
      %v5467 = vadd.f32 0.0, %v5466
      %v5468 = vpop.f32.mrf.mxu0
      %v5469 = vadd.f32 0.0, %v5468
      %5470 = vmatmul.bf16.gmra.mxu0 %v5184
      %v5471 = vpop.f32.mrf.mxu0
      %v5472 = vadd.f32 0.0, %v5471
      %v5473 = vpop.f32.mrf.mxu0
      %v5474 = vadd.f32 0.0, %v5473
      %5475 = vmatmul.bf16.gmra.mxu0 %v5187
      %v5476 = vpop.f32.mrf.mxu0
      %v5477 = vadd.f32 0.0, %v5476
      %v5478 = vpop.f32.mrf.mxu0
      %v5479 = vadd.f32 0.0, %v5478
      %5480 = vmatmul.bf16.gmra.mxu0 %v5190
      %v5481 = vpop.f32.mrf.mxu0
      %v5482 = vadd.f32 0.0, %v5481
      %v5483 = vpop.f32.mrf.mxu0
      %v5484 = vadd.f32 0.0, %v5483
      %5485 = vmatmul.bf16.gmra.mxu0 %v5193
      %v5486 = vpop.f32.mrf.mxu0
      %v5487 = vadd.f32 0.0, %v5486
      %v5488 = vpop.f32.mrf.mxu0
      %v5489 = vadd.f32 0.0, %v5488
      %5490 = vmatmul.bf16.gmra.mxu0 %v5196
      %v5491 = vpop.f32.mrf.mxu0
      %v5492 = vadd.f32 0.0, %v5491
      %v5493 = vpop.f32.mrf.mxu0
      %v5494 = vadd.f32 0.0, %v5493
      %5495 = vmatmul.bf16.gmra.mxu0 %v5199
      %v5496 = vpop.f32.mrf.mxu0
      %v5497 = vadd.f32 0.0, %v5496
      %v5498 = vpop.f32.mrf.mxu0
      %v5499 = vadd.f32 0.0, %v5498
      %5500 = vmatmul.bf16.gmra.mxu0 %v5202
      %v5501 = vpop.f32.mrf.mxu0
      %v5502 = vadd.f32 0.0, %v5501
      %v5503 = vpop.f32.mrf.mxu0
      %v5504 = vadd.f32 0.0, %v5503
      %5505 = vmatmul.bf16.gmra.mxu0 %v5205
      %v5506 = vpop.f32.mrf.mxu0
      %v5507 = vadd.f32 0.0, %v5506
      %v5508 = vpop.f32.mrf.mxu0
      %v5509 = vadd.f32 0.0, %v5508
      %5510 = vmatmul.bf16.gmra.mxu0 %v5208
      %v5511 = vpop.f32.mrf.mxu0
      %v5512 = vadd.f32 0.0, %v5511
      %v5513 = vpop.f32.mrf.mxu0
      %v5514 = vadd.f32 0.0, %v5513
      %5515 = vmatmul.bf16.gmra.mxu0 %v5211
      %v5516 = vpop.f32.mrf.mxu0
      %v5517 = vadd.f32 0.0, %v5516
      %v5518 = vpop.f32.mrf.mxu0
      %v5519 = vadd.f32 0.0, %v5518
      %5520 = vmatmul.bf16.gmra.mxu0 %v5214
      %v5521 = vpop.f32.mrf.mxu0
      %v5522 = vadd.f32 0.0, %v5521
      %v5523 = vpop.f32.mrf.mxu0
      %v5524 = vadd.f32 0.0, %v5523
      %5525 = vmatmul.bf16.gmra.mxu0 %v5217
      %v5526 = vpop.f32.mrf.mxu0
      %v5527 = vadd.f32 0.0, %v5526
      %v5528 = vpop.f32.mrf.mxu0
      %v5529 = vadd.f32 0.0, %v5528
      %5530 = vmatmul.bf16.gmra.mxu0 %v5220
      %v5531 = vpop.f32.mrf.mxu0
      %v5532 = vadd.f32 0.0, %v5531
      %v5533 = vpop.f32.mrf.mxu0
      %v5534 = vadd.f32 0.0, %v5533
      %5535 = vmatmul.bf16.gmra.mxu0 %v5223
      %v5536 = vpop.f32.mrf.mxu0
      %v5537 = vadd.f32 0.0, %v5536
      %v5538 = vpop.f32.mrf.mxu0
      %v5539 = vadd.f32 0.0, %v5538
      %5540 = vmatmul.bf16.gmra.mxu0 %v5226
      %v5541 = vpop.f32.mrf.mxu0
      %v5542 = vadd.f32 0.0, %v5541
      %v5543 = vpop.f32.mrf.mxu0
      %v5544 = vadd.f32 0.0, %v5543
      %5545 = vmatmul.bf16.gmra.mxu0 %v5229
      %v5546 = vpop.f32.mrf.mxu0
      %v5547 = vadd.f32 0.0, %v5546
      %v5548 = vpop.f32.mrf.mxu0
      %v5549 = vadd.f32 0.0, %v5548
      %5550 = vmatmul.bf16.gmra.mxu0 %v5232
      %v5551 = vpop.f32.mrf.mxu0
      %v5552 = vadd.f32 0.0, %v5551
      %v5553 = vpop.f32.mrf.mxu0
      %v5554 = vadd.f32 0.0, %v5553
      %5555 = vmatmul.bf16.gmra.mxu0 %v5235
      %v5556 = vpop.f32.mrf.mxu0
      %v5557 = vadd.f32 0.0, %v5556
      %v5558 = vpop.f32.mrf.mxu0
      %v5559 = vadd.f32 0.0, %v5558
      %5560 = vmatmul.bf16.gmra.mxu0 %v5238
      %v5561 = vpop.f32.mrf.mxu0
      %v5562 = vadd.f32 0.0, %v5561
      %v5563 = vpop.f32.mrf.mxu0
      %v5564 = vadd.f32 0.0, %v5563
      %5565 = vmatmul.bf16.gmra.mxu0 %v5241
      %v5566 = vpop.f32.mrf.mxu0
      %v5567 = vadd.f32 0.0, %v5566
      %v5568 = vpop.f32.mrf.mxu0
      %v5569 = vadd.f32 0.0, %v5568
      %5570 = vmatmul.bf16.gmra.mxu0 %v5244
      %v5571 = vpop.f32.mrf.mxu0
      %v5572 = vadd.f32 0.0, %v5571
      %v5573 = vpop.f32.mrf.mxu0
      %v5574 = vadd.f32 0.0, %v5573
      %5575 = vmatmul.bf16.gmra.mxu0 %v5247
      %v5576 = vpop.f32.mrf.mxu0
      %v5577 = vadd.f32 0.0, %v5576
      %v5578 = vpop.f32.mrf.mxu0
      %v5579 = vadd.f32 0.0, %v5578
      %5580 = vmatmul.bf16.gmra.mxu0 %v5250
      %v5581 = vpop.f32.mrf.mxu0
      %v5582 = vadd.f32 0.0, %v5581
      %v5583 = vpop.f32.mrf.mxu0
      %v5584 = vadd.f32 0.0, %v5583
      %5585 = vmatmul.bf16.gmra.mxu0 %v5253
      %v5586 = vpop.f32.mrf.mxu0
      %v5587 = vadd.f32 0.0, %v5586
      %v5588 = vpop.f32.mrf.mxu0
      %v5589 = vadd.f32 0.0, %v5588
      %5590 = vmatmul.bf16.gmra.mxu0 %v5256
      %v5591 = vpop.f32.mrf.mxu0
      %v5592 = vadd.f32 0.0, %v5591
      %v5593 = vpop.f32.mrf.mxu0
      %v5594 = vadd.f32 0.0, %v5593
      %5595 = vmatmul.bf16.gmra.mxu0 %v5259
      %v5596 = vpop.f32.mrf.mxu0
      %v5597 = vadd.f32 0.0, %v5596
      %v5598 = vpop.f32.mrf.mxu0
      %v5599 = vadd.f32 0.0, %v5598
      %5600 = vmatmul.bf16.gmra.mxu0 %v5262
      %v5601 = vpop.f32.mrf.mxu0
      %v5602 = vadd.f32 0.0, %v5601
      %v5603 = vpop.f32.mrf.mxu0
      %v5604 = vadd.f32 0.0, %v5603
      %5605 = vmatmul.bf16.gmra.mxu0 %v5265
      %v5606 = vpop.f32.mrf.mxu0
      %v5607 = vadd.f32 0.0, %v5606
      %v5608 = vpop.f32.mrf.mxu0
      %v5609 = vadd.f32 0.0, %v5608
      %5610 = vmatmul.bf16.gmra.mxu0 %v5268
      %v5611 = vpop.f32.mrf.mxu0
      %v5612 = vadd.f32 0.0, %v5611
      %v5613 = vpop.f32.mrf.mxu0
      %v5614 = vadd.f32 0.0, %v5613
      %5615 = vmatmul.bf16.gmra.mxu0 %v5271
      %v5616 = vpop.f32.mrf.mxu0
      %v5617 = vadd.f32 0.0, %v5616
      %v5618 = vpop.f32.mrf.mxu0
      %v5619 = vadd.f32 0.0, %v5618
      %5620 = vmatmul.bf16.gmra.mxu0 %v5274
      %v5621 = vpop.f32.mrf.mxu0
      %v5622 = vadd.f32 0.0, %v5621
      %v5623 = vpop.f32.mrf.mxu0
      %v5624 = vadd.f32 0.0, %v5623
      %5625 = vmatmul.bf16.gmra.mxu0 %v5277
      %v5626 = vpop.f32.mrf.mxu0
      %v5627 = vadd.f32 0.0, %v5626
      %v5628 = vpop.f32.mrf.mxu0
      %v5629 = vadd.f32 0.0, %v5628
      %5630 = vdwg.mxu0
      %v5631 = vadd.f32 %v4312, %v5292
      %v5632 = vadd.f32 %v4313, %v5294
      %v5633 = vadd.f32 %v4314, %v5297
      %v5634 = vadd.f32 %v4315, %v5299
      %v5635 = vadd.f32 %v4316, %v5302
      %v5636 = vadd.f32 %v4317, %v5304
      %v5637 = vadd.f32 %v4318, %v5307
      %v5638 = vadd.f32 %v4319, %v5309
      %v5639 = vadd.f32 %v4320, %v5312
      %v5640 = vadd.f32 %v4321, %v5314
      %v5641 = vadd.f32 %v4322, %v5317
      %v5642 = vadd.f32 %v4323, %v5319
      %v5643 = vadd.f32 %v4324, %v5322
      %v5644 = vadd.f32 %v4325, %v5324
      %v5645 = vadd.f32 %v4326, %v5327
      %v5646 = vadd.f32 %v4327, %v5329
      %v5647 = vadd.f32 %v4328, %v5332
      %v5648 = vadd.f32 %v4329, %v5334
      %v5649 = vadd.f32 %v4330, %v5337
      %v5650 = vadd.f32 %v4331, %v5339
      %v5651 = vadd.f32 %v4332, %v5342
      %v5652 = vadd.f32 %v4333, %v5344
      %v5653 = vadd.f32 %v4334, %v5347
      %v5654 = vadd.f32 %v4335, %v5349
      %v5655 = vadd.f32 %v4336, %v5352
      %v5656 = vadd.f32 %v4337, %v5354
      %v5657 = vadd.f32 %v4338, %v5357
      %v5658 = vadd.f32 %v4339, %v5359
      %v5659 = vadd.f32 %v4340, %v5362
      %v5660 = vadd.f32 %v4341, %v5364
      %v5661 = vadd.f32 %v4342, %v5367
      %v5662 = vadd.f32 %v4343, %v5369
      %v5663 = vadd.f32 %v4344, %v5372
      %v5664 = vadd.f32 %v4345, %v5374
      %v5665 = vadd.f32 %v4346, %v5377
      %v5666 = vadd.f32 %v4347, %v5379
      %v5667 = vadd.f32 %v4348, %v5382
      %v5668 = vadd.f32 %v4349, %v5384
      %v5669 = vadd.f32 %v4350, %v5387
      %v5670 = vadd.f32 %v4351, %v5389
      %v5671 = vadd.f32 %v4352, %v5392
      %v5672 = vadd.f32 %v4353, %v5394
      %v5673 = vadd.f32 %v4354, %v5397
      %v5674 = vadd.f32 %v4355, %v5399
      %v5675 = vadd.f32 %v4356, %v5402
      %v5676 = vadd.f32 %v4357, %v5404
      %v5677 = vadd.f32 %v4358, %v5407
      %v5678 = vadd.f32 %v4359, %v5409
      %v5679 = vadd.f32 %v4360, %v5412
      %v5680 = vadd.f32 %v4361, %v5414
      %v5681 = vadd.f32 %v4362, %v5417
      %v5682 = vadd.f32 %v4363, %v5419
      %v5683 = vadd.f32 %v4364, %v5422
      %v5684 = vadd.f32 %v4365, %v5424
      %v5685 = vadd.f32 %v4366, %v5427
      %v5686 = vadd.f32 %v4367, %v5429
      %v5687 = vadd.f32 %v4368, %v5432
      %v5688 = vadd.f32 %v4369, %v5434
      %v5689 = vadd.f32 %v4370, %v5437
      %v5690 = vadd.f32 %v4371, %v5439
      %v5691 = vadd.f32 %v4372, %v5442
      %v5692 = vadd.f32 %v4373, %v5444
      %v5693 = vadd.f32 %v4374, %v5447
      %v5694 = vadd.f32 %v4375, %v5449
      %v5695 = vadd.f32 %v4376, %v5452
      %v5696 = vadd.f32 %v4377, %v5454
      %v5697 = vadd.f32 %v4378, %v5457
      %v5698 = vadd.f32 %v4379, %v5459
      %v5699 = vadd.f32 %v4380, %v5462
      %v5700 = vadd.f32 %v4381, %v5464
      %v5701 = vadd.f32 %v4382, %v5467
      %v5702 = vadd.f32 %v4383, %v5469
      %v5703 = vadd.f32 %v4384, %v5472
      %v5704 = vadd.f32 %v4385, %v5474
      %v5705 = vadd.f32 %v4386, %v5477
      %v5706 = vadd.f32 %v4387, %v5479
      %v5707 = vadd.f32 %v4388, %v5482
      %v5708 = vadd.f32 %v4389, %v5484
      %v5709 = vadd.f32 %v4390, %v5487
      %v5710 = vadd.f32 %v4391, %v5489
      %v5711 = vadd.f32 %v4392, %v5492
      %v5712 = vadd.f32 %v4393, %v5494
      %v5713 = vadd.f32 %v4394, %v5497
      %v5714 = vadd.f32 %v4395, %v5499
      %v5715 = vadd.f32 %v4396, %v5502
      %v5716 = vadd.f32 %v4397, %v5504
      %v5717 = vadd.f32 %v4398, %v5507
      %v5718 = vadd.f32 %v4399, %v5509
      %v5719 = vadd.f32 %v4400, %v5512
      %v5720 = vadd.f32 %v4401, %v5514
      %v5721 = vadd.f32 %v4402, %v5517
      %v5722 = vadd.f32 %v4403, %v5519
      %v5723 = vadd.f32 %v4404, %v5522
      %v5724 = vadd.f32 %v4405, %v5524
      %v5725 = vadd.f32 %v4406, %v5527
      %v5726 = vadd.f32 %v4407, %v5529
      %v5727 = vadd.f32 %v4408, %v5532
      %v5728 = vadd.f32 %v4409, %v5534
      %v5729 = vadd.f32 %v4410, %v5537
      %v5730 = vadd.f32 %v4411, %v5539
      %v5731 = vadd.f32 %v4412, %v5542
      %v5732 = vadd.f32 %v4413, %v5544
      %v5733 = vadd.f32 %v4414, %v5547
      %v5734 = vadd.f32 %v4415, %v5549
      %v5735 = vadd.f32 %v4416, %v5552
      %v5736 = vadd.f32 %v4417, %v5554
      %v5737 = vadd.f32 %v4418, %v5557
      %v5738 = vadd.f32 %v4419, %v5559
      %v5739 = vadd.f32 %v4420, %v5562
      %v5740 = vadd.f32 %v4421, %v5564
      %v5741 = vadd.f32 %v4422, %v5567
      %v5742 = vadd.f32 %v4423, %v5569
      %v5743 = vadd.f32 %v4424, %v5572
      %v5744 = vadd.f32 %v4425, %v5574
      %v5745 = vadd.f32 %v4426, %v5577
      %v5746 = vadd.f32 %v4427, %v5579
      %v5747 = vadd.f32 %v4428, %v5582
      %v5748 = vadd.f32 %v4429, %v5584
      %v5749 = vadd.f32 %v4430, %v5587
      %v5750 = vadd.f32 %v4431, %v5589
      %v5751 = vadd.f32 %v4432, %v5592
      %v5752 = vadd.f32 %v4433, %v5594
      %v5753 = vadd.f32 %v4434, %v5597
      %v5754 = vadd.f32 %v4435, %v5599
      %v5755 = vadd.f32 %v4436, %v5602
      %v5756 = vadd.f32 %v4437, %v5604
      %v5757 = vadd.f32 %v4438, %v5607
      %v5758 = vadd.f32 %v4439, %v5609
      %v5759 = vadd.f32 %v4440, %v5612
      %v5760 = vadd.f32 %v4441, %v5614
      %v5761 = vadd.f32 %v4442, %v5617
      %v5762 = vadd.f32 %v4443, %v5619
      %v5763 = vadd.f32 %v4444, %v5622
      %v5764 = vadd.f32 %v4445, %v5624
      %v5765 = vadd.f32 %v4446, %v5627
      %v5766 = vadd.f32 %v4447, %v5629
      %v5767 = vld [vmem:[%s206 + $0x10] sm:$0xc]
      %s5768 = scalar_lea.vmem %s210, 20
      %v5769 = vld [vmem:[%s5768] sm:$0xf]
      %v5771 = vunpack.c.l.b16 %v5767
      %v5772 = vpack.c.b16 %v3414, %v5771
      %vm5773 = vcmask 1045504
      %v5774 = vrot.slane %v5772, 2
      %v5775 = vrot.slane %v3551, 2
      %v5776 = vsel %vm5773, %v5774, %v5775
      %v5777 = vrot.slane %v3552, 2
      %v5778 = vsel %vm5773, %v5775, %v5777
      %v5779 = vrot.slane %v3553, 2
      %v5780 = vsel %vm5773, %v5777, %v5779
      %v5781 = vrot.slane %v3554, 2
      %v5782 = vsel %vm5773, %v5779, %v5781
      %v5783 = vrot.slane %v3555, 2
      %v5784 = vsel %vm5773, %v5781, %v5783
      %v5785 = vrot.slane %v3556, 2
      %v5786 = vsel %vm5773, %v5783, %v5785
      %v5787 = vrot.slane %v3557, 2
      %v5788 = vsel %vm5773, %v5785, %v5787
      %v5789 = vrot.slane %v3558, 2
      %v5790 = vsel %vm5773, %v5787, %v5789
      %v5791 = vrot.slane %v3559, 2
      %v5792 = vsel %vm5773, %v5789, %v5791
      %v5793 = vrot.slane %v3560, 2
      %v5794 = vsel %vm5773, %v5791, %v5793
      %v5795 = vrot.slane %v3561, 2
      %v5796 = vsel %vm5773, %v5793, %v5795
      %v5797 = vrot.slane %v3562, 2
      %v5798 = vsel %vm5773, %v5795, %v5797
      %v5799 = vrot.slane %v3563, 2
      %v5800 = vsel %vm5773, %v5797, %v5799
      %v5801 = vrot.slane %v3564, 2
      %v5802 = vsel %vm5773, %v5799, %v5801
      %v5803 = vrot.slane %v3565, 2
      %v5804 = vsel %vm5773, %v5801, %v5803
      %v5805 = vrot.slane %v3566, 2
      %v5806 = vsel %vm5773, %v5803, %v5805
      %v5807 = vrot.slane %v3567, 2
      %v5808 = vsel %vm5773, %v5805, %v5807
      %v5809 = vrot.slane %v3568, 2
      %v5810 = vsel %vm5773, %v5807, %v5809
      %v5811 = vrot.slane %v3569, 2
      %v5812 = vsel %vm5773, %v5809, %v5811
      %v5813 = vrot.slane %v3570, 2
      %v5814 = vsel %vm5773, %v5811, %v5813
      %v5815 = vrot.slane %v3571, 2
      %v5816 = vsel %vm5773, %v5813, %v5815
      %v5817 = vrot.slane %v3572, 2
      %v5818 = vsel %vm5773, %v5815, %v5817
      %v5819 = vrot.slane %v3573, 2
      %v5820 = vsel %vm5773, %v5817, %v5819
      %v5821 = vrot.slane %v3574, 2
      %v5822 = vsel %vm5773, %v5819, %v5821
      %v5823 = vrot.slane %v3575, 2
      %v5824 = vsel %vm5773, %v5821, %v5823
      %v5825 = vrot.slane %v3576, 2
      %v5826 = vsel %vm5773, %v5823, %v5825
      %v5827 = vrot.slane %v3577, 2
      %v5828 = vsel %vm5773, %v5825, %v5827
      %v5829 = vrot.slane %v3578, 2
      %v5830 = vsel %vm5773, %v5827, %v5829
      %v5831 = vrot.slane %v3579, 2
      %v5832 = vsel %vm5773, %v5829, %v5831
      %v5833 = vrot.slane %v3580, 2
      %v5834 = vsel %vm5773, %v5831, %v5833
      %v5835 = vrot.slane %v3581, 2
      %v5836 = vsel %vm5773, %v5833, %v5835
      %v5837 = vrot.slane %v3582, 2
      %v5838 = vsel %vm5773, %v5835, %v5837
      %v5839 = vrot.slane %v3583, 2
      %v5840 = vsel %vm5773, %v5837, %v5839
      %v5841 = vrot.slane %v3584, 2
      %v5842 = vsel %vm5773, %v5839, %v5841
      %v5843 = vrot.slane %v3585, 2
      %v5844 = vsel %vm5773, %v5841, %v5843
      %v5845 = vrot.slane %v3586, 2
      %v5846 = vsel %vm5773, %v5843, %v5845
      %v5847 = vrot.slane %v3587, 2
      %v5848 = vsel %vm5773, %v5845, %v5847
      %v5849 = vrot.slane %v3588, 2
      %v5850 = vsel %vm5773, %v5847, %v5849
      %v5851 = vrot.slane %v3589, 2
      %v5852 = vsel %vm5773, %v5849, %v5851
      %v5853 = vrot.slane %v3590, 2
      %v5854 = vsel %vm5773, %v5851, %v5853
      %v5855 = vrot.slane %v3591, 2
      %v5856 = vsel %vm5773, %v5853, %v5855
      %v5857 = vrot.slane %v3592, 2
      %v5858 = vsel %vm5773, %v5855, %v5857
      %v5859 = vrot.slane %v3593, 2
      %v5860 = vsel %vm5773, %v5857, %v5859
      %v5861 = vrot.slane %v3594, 2
      %v5862 = vsel %vm5773, %v5859, %v5861
      %v5863 = vrot.slane %v3595, 2
      %v5864 = vsel %vm5773, %v5861, %v5863
      %v5865 = vrot.slane %v3596, 2
      %v5866 = vsel %vm5773, %v5863, %v5865
      %v5867 = vrot.slane %v3597, 2
      %v5868 = vsel %vm5773, %v5865, %v5867
      %v5869 = vrot.slane %v3598, 2
      %v5870 = vsel %vm5773, %v5867, %v5869
      %v5871 = vrot.slane %v3599, 2
      %v5872 = vsel %vm5773, %v5869, %v5871
      %v5873 = vrot.slane %v3600, 2
      %v5874 = vsel %vm5773, %v5871, %v5873
      %v5875 = vrot.slane %v3601, 2
      %v5876 = vsel %vm5773, %v5873, %v5875
      %v5877 = vrot.slane %v3602, 2
      %v5878 = vsel %vm5773, %v5875, %v5877
      %v5879 = vrot.slane %v3603, 2
      %v5880 = vsel %vm5773, %v5877, %v5879
      %v5881 = vrot.slane %v3604, 2
      %v5882 = vsel %vm5773, %v5879, %v5881
      %v5883 = vrot.slane %v3605, 2
      %v5884 = vsel %vm5773, %v5881, %v5883
      %v5885 = vrot.slane %v3606, 2
      %v5886 = vsel %vm5773, %v5883, %v5885
      %v5887 = vrot.slane %v3607, 2
      %v5888 = vsel %vm5773, %v5885, %v5887
      %v5889 = vrot.slane %v3608, 2
      %v5890 = vsel %vm5773, %v5887, %v5889
      %v5891 = vrot.slane %v3609, 2
      %v5892 = vsel %vm5773, %v5889, %v5891
      %v5893 = vrot.slane %v3610, 2
      %v5894 = vsel %vm5773, %v5891, %v5893
      %v5895 = vrot.slane %v3611, 2
      %v5896 = vsel %vm5773, %v5893, %v5895
      %v5897 = vrot.slane %v3612, 2
      %v5898 = vsel %vm5773, %v5895, %v5897
      %v5899 = vrot.slane %v3613, 2
      %v5900 = vsel %vm5773, %v5897, %v5899
      %v5901 = vrot.slane %v3614, 2
      %v5902 = vsel %vm5773, %v5899, %v5901
      %v5903 = vrot.slane %v3615, 2
      %v5904 = vsel %vm5773, %v5901, %v5903
      %v5905 = vrot.slane %v3616, 2
      %v5906 = vsel %vm5773, %v5903, %v5905
      %v5907 = vrot.slane %v3617, 2
      %v5908 = vsel %vm5773, %v5905, %v5907
      %v5909 = vrot.slane %v4453, 2
      %v5910 = vsel %vm5773, %v5907, %v5909
      %v5912 = vsel %vm1255, %v5776, 0
      %v5915 = vsel %vm1255, %v5778, 0
      %v5918 = vsel %vm1255, %v5780, 0
      %v5921 = vsel %vm1255, %v5782, 0
      %v5924 = vsel %vm1255, %v5784, 0
      %v5927 = vsel %vm1255, %v5786, 0
      %v5930 = vsel %vm1255, %v5788, 0
      %v5933 = vsel %vm1255, %v5790, 0
      %v5936 = vsel %vm1255, %v5792, 0
      %v5939 = vsel %vm1255, %v5794, 0
      %v5942 = vsel %vm1255, %v5796, 0
      %v5945 = vsel %vm1255, %v5798, 0
      %v5948 = vsel %vm1255, %v5800, 0
      %v5951 = vsel %vm1255, %v5802, 0
      %v5954 = vsel %vm1255, %v5804, 0
      %v5957 = vsel %vm1255, %v5806, 0
      %v5960 = vsel %vm1255, %v5808, 0
      %v5963 = vsel %vm1255, %v5810, 0
      %v5966 = vsel %vm1255, %v5812, 0
      %v5969 = vsel %vm1255, %v5814, 0
      %v5972 = vsel %vm1255, %v5816, 0
      %v5975 = vsel %vm1255, %v5818, 0
      %v5978 = vsel %vm1255, %v5820, 0
      %v5981 = vsel %vm1255, %v5822, 0
      %v5984 = vsel %vm1255, %v5824, 0
      %v5987 = vsel %vm1255, %v5826, 0
      %v5990 = vsel %vm1255, %v5828, 0
      %v5993 = vsel %vm1255, %v5830, 0
      %v5996 = vsel %vm1255, %v5832, 0
      %v5999 = vsel %vm1255, %v5834, 0
      %v6002 = vsel %vm1255, %v5836, 0
      %v6005 = vsel %vm1255, %v5838, 0
      %v6008 = vsel %vm1255, %v5840, 0
      %v6011 = vsel %vm1255, %v5842, 0
      %v6014 = vsel %vm1255, %v5844, 0
      %v6017 = vsel %vm1255, %v5846, 0
      %v6020 = vsel %vm1255, %v5848, 0
      %v6023 = vsel %vm1255, %v5850, 0
      %v6026 = vsel %vm1255, %v5852, 0
      %v6029 = vsel %vm1255, %v5854, 0
      %v6032 = vsel %vm1255, %v5856, 0
      %v6035 = vsel %vm1255, %v5858, 0
      %v6038 = vsel %vm1255, %v5860, 0
      %v6041 = vsel %vm1255, %v5862, 0
      %v6044 = vsel %vm1255, %v5864, 0
      %v6047 = vsel %vm1255, %v5866, 0
      %v6050 = vsel %vm1255, %v5868, 0
      %v6053 = vsel %vm1255, %v5870, 0
      %v6056 = vsel %vm1255, %v5872, 0
      %v6059 = vsel %vm1255, %v5874, 0
      %v6062 = vsel %vm1255, %v5876, 0
      %v6065 = vsel %vm1255, %v5878, 0
      %v6068 = vsel %vm1255, %v5880, 0
      %v6071 = vsel %vm1255, %v5882, 0
      %v6074 = vsel %vm1255, %v5884, 0
      %v6077 = vsel %vm1255, %v5886, 0
      %v6080 = vsel %vm1255, %v5888, 0
      %v6083 = vsel %vm1255, %v5890, 0
      %v6086 = vsel %vm1255, %v5892, 0
      %v6089 = vsel %vm1255, %v5894, 0
      %v6092 = vsel %vm1255, %v5896, 0
      %v6095 = vsel %vm1255, %v5898, 0
      %v6098 = vsel %vm1255, %v5900, 0
      %v6101 = vsel %vm1255, %v5902, 0
      %v6104 = vsel %vm1255, %v5904, 0
      %v6107 = vsel %vm1255, %v5906, 0
      %v6110 = vsel %vm1255, %v5908, 0
      %v6113 = vsel %vm1255, %v5910, 0
      %v6116 = vsel %vm1460, %v5769, 0
      %6118 = vmatpush.bf16.msra.mxu0 0
      %6119 = vmatpush.bf16.msra.mxu0 0
      %6120 = vmatpush.bf16.msra.mxu0 0
      %6121 = vmatpush.bf16.msra.mxu0 0
      %6122 = vmatpush.bf16.msra.mxu0 0
      %6123 = vmatpush.bf16.msra.mxu0 0
      %6124 = vmatpush.bf16.msra.mxu0 0
      %6125 = vmatpush.bf16.msra.mxu0 %v6116
      %6126 = vmatmul.bf16.gmra.mxu0 %v5912
      %v6127 = vpop.f32.mrf.mxu0
      %v6128 = vadd.f32 0.0, %v6127
      %v6129 = vpop.f32.mrf.mxu0
      %v6130 = vadd.f32 0.0, %v6129
      %6131 = vmatmul.bf16.gmra.mxu0 %v5915
      %v6132 = vpop.f32.mrf.mxu0
      %v6133 = vadd.f32 0.0, %v6132
      %v6134 = vpop.f32.mrf.mxu0
      %v6135 = vadd.f32 0.0, %v6134
      %6136 = vmatmul.bf16.gmra.mxu0 %v5918
      %v6137 = vpop.f32.mrf.mxu0
      %v6138 = vadd.f32 0.0, %v6137
      %v6139 = vpop.f32.mrf.mxu0
      %v6140 = vadd.f32 0.0, %v6139
      %6141 = vmatmul.bf16.gmra.mxu0 %v5921
      %v6142 = vpop.f32.mrf.mxu0
      %v6143 = vadd.f32 0.0, %v6142
      %v6144 = vpop.f32.mrf.mxu0
      %v6145 = vadd.f32 0.0, %v6144
      %6146 = vmatmul.bf16.gmra.mxu0 %v5924
      %v6147 = vpop.f32.mrf.mxu0
      %v6148 = vadd.f32 0.0, %v6147
      %v6149 = vpop.f32.mrf.mxu0
      %v6150 = vadd.f32 0.0, %v6149
      %6151 = vmatmul.bf16.gmra.mxu0 %v5927
      %v6152 = vpop.f32.mrf.mxu0
      %v6153 = vadd.f32 0.0, %v6152
      %v6154 = vpop.f32.mrf.mxu0
      %v6155 = vadd.f32 0.0, %v6154
      %6156 = vmatmul.bf16.gmra.mxu0 %v5930
      %v6157 = vpop.f32.mrf.mxu0
      %v6158 = vadd.f32 0.0, %v6157
      %v6159 = vpop.f32.mrf.mxu0
      %v6160 = vadd.f32 0.0, %v6159
      %6161 = vmatmul.bf16.gmra.mxu0 %v5933
      %v6162 = vpop.f32.mrf.mxu0
      %v6163 = vadd.f32 0.0, %v6162
      %v6164 = vpop.f32.mrf.mxu0
      %v6165 = vadd.f32 0.0, %v6164
      %6166 = vmatmul.bf16.gmra.mxu0 %v5936
      %v6167 = vpop.f32.mrf.mxu0
      %v6168 = vadd.f32 0.0, %v6167
      %v6169 = vpop.f32.mrf.mxu0
      %v6170 = vadd.f32 0.0, %v6169
      %6171 = vmatmul.bf16.gmra.mxu0 %v5939
      %v6172 = vpop.f32.mrf.mxu0
      %v6173 = vadd.f32 0.0, %v6172
      %v6174 = vpop.f32.mrf.mxu0
      %v6175 = vadd.f32 0.0, %v6174
      %6176 = vmatmul.bf16.gmra.mxu0 %v5942
      %v6177 = vpop.f32.mrf.mxu0
      %v6178 = vadd.f32 0.0, %v6177
      %v6179 = vpop.f32.mrf.mxu0
      %v6180 = vadd.f32 0.0, %v6179
      %6181 = vmatmul.bf16.gmra.mxu0 %v5945
      %v6182 = vpop.f32.mrf.mxu0
      %v6183 = vadd.f32 0.0, %v6182
      %v6184 = vpop.f32.mrf.mxu0
      %v6185 = vadd.f32 0.0, %v6184
      %6186 = vmatmul.bf16.gmra.mxu0 %v5948
      %v6187 = vpop.f32.mrf.mxu0
      %v6188 = vadd.f32 0.0, %v6187
      %v6189 = vpop.f32.mrf.mxu0
      %v6190 = vadd.f32 0.0, %v6189
      %6191 = vmatmul.bf16.gmra.mxu0 %v5951
      %v6192 = vpop.f32.mrf.mxu0
      %v6193 = vadd.f32 0.0, %v6192
      %v6194 = vpop.f32.mrf.mxu0
      %v6195 = vadd.f32 0.0, %v6194
      %6196 = vmatmul.bf16.gmra.mxu0 %v5954
      %v6197 = vpop.f32.mrf.mxu0
      %v6198 = vadd.f32 0.0, %v6197
      %v6199 = vpop.f32.mrf.mxu0
      %v6200 = vadd.f32 0.0, %v6199
      %6201 = vmatmul.bf16.gmra.mxu0 %v5957
      %v6202 = vpop.f32.mrf.mxu0
      %v6203 = vadd.f32 0.0, %v6202
      %v6204 = vpop.f32.mrf.mxu0
      %v6205 = vadd.f32 0.0, %v6204
      %6206 = vmatmul.bf16.gmra.mxu0 %v5960
      %v6207 = vpop.f32.mrf.mxu0
      %v6208 = vadd.f32 0.0, %v6207
      %v6209 = vpop.f32.mrf.mxu0
      %v6210 = vadd.f32 0.0, %v6209
      %6211 = vmatmul.bf16.gmra.mxu0 %v5963
      %v6212 = vpop.f32.mrf.mxu0
      %v6213 = vadd.f32 0.0, %v6212
      %v6214 = vpop.f32.mrf.mxu0
      %v6215 = vadd.f32 0.0, %v6214
      %6216 = vmatmul.bf16.gmra.mxu0 %v5966
      %v6217 = vpop.f32.mrf.mxu0
      %v6218 = vadd.f32 0.0, %v6217
      %v6219 = vpop.f32.mrf.mxu0
      %v6220 = vadd.f32 0.0, %v6219
      %6221 = vmatmul.bf16.gmra.mxu0 %v5969
      %v6222 = vpop.f32.mrf.mxu0
      %v6223 = vadd.f32 0.0, %v6222
      %v6224 = vpop.f32.mrf.mxu0
      %v6225 = vadd.f32 0.0, %v6224
      %6226 = vmatmul.bf16.gmra.mxu0 %v5972
      %v6227 = vpop.f32.mrf.mxu0
      %v6228 = vadd.f32 0.0, %v6227
      %v6229 = vpop.f32.mrf.mxu0
      %v6230 = vadd.f32 0.0, %v6229
      %6231 = vmatmul.bf16.gmra.mxu0 %v5975
      %v6232 = vpop.f32.mrf.mxu0
      %v6233 = vadd.f32 0.0, %v6232
      %v6234 = vpop.f32.mrf.mxu0
      %v6235 = vadd.f32 0.0, %v6234
      %6236 = vmatmul.bf16.gmra.mxu0 %v5978
      %v6237 = vpop.f32.mrf.mxu0
      %v6238 = vadd.f32 0.0, %v6237
      %v6239 = vpop.f32.mrf.mxu0
      %v6240 = vadd.f32 0.0, %v6239
      %6241 = vmatmul.bf16.gmra.mxu0 %v5981
      %v6242 = vpop.f32.mrf.mxu0
      %v6243 = vadd.f32 0.0, %v6242
      %v6244 = vpop.f32.mrf.mxu0
      %v6245 = vadd.f32 0.0, %v6244
      %6246 = vmatmul.bf16.gmra.mxu0 %v5984
      %v6247 = vpop.f32.mrf.mxu0
      %v6248 = vadd.f32 0.0, %v6247
      %v6249 = vpop.f32.mrf.mxu0
      %v6250 = vadd.f32 0.0, %v6249
      %6251 = vmatmul.bf16.gmra.mxu0 %v5987
      %v6252 = vpop.f32.mrf.mxu0
      %v6253 = vadd.f32 0.0, %v6252
      %v6254 = vpop.f32.mrf.mxu0
      %v6255 = vadd.f32 0.0, %v6254
      %6256 = vmatmul.bf16.gmra.mxu0 %v5990
      %v6257 = vpop.f32.mrf.mxu0
      %v6258 = vadd.f32 0.0, %v6257
      %v6259 = vpop.f32.mrf.mxu0
      %v6260 = vadd.f32 0.0, %v6259
      %6261 = vmatmul.bf16.gmra.mxu0 %v5993
      %v6262 = vpop.f32.mrf.mxu0
      %v6263 = vadd.f32 0.0, %v6262
      %v6264 = vpop.f32.mrf.mxu0
      %v6265 = vadd.f32 0.0, %v6264
      %6266 = vmatmul.bf16.gmra.mxu0 %v5996
      %v6267 = vpop.f32.mrf.mxu0
      %v6268 = vadd.f32 0.0, %v6267
      %v6269 = vpop.f32.mrf.mxu0
      %v6270 = vadd.f32 0.0, %v6269
      %6271 = vmatmul.bf16.gmra.mxu0 %v5999
      %v6272 = vpop.f32.mrf.mxu0
      %v6273 = vadd.f32 0.0, %v6272
      %v6274 = vpop.f32.mrf.mxu0
      %v6275 = vadd.f32 0.0, %v6274
      %6276 = vmatmul.bf16.gmra.mxu0 %v6002
      %v6277 = vpop.f32.mrf.mxu0
      %v6278 = vadd.f32 0.0, %v6277
      %v6279 = vpop.f32.mrf.mxu0
      %v6280 = vadd.f32 0.0, %v6279
      %6281 = vmatmul.bf16.gmra.mxu0 %v6005
      %v6282 = vpop.f32.mrf.mxu0
      %v6283 = vadd.f32 0.0, %v6282
      %v6284 = vpop.f32.mrf.mxu0
      %v6285 = vadd.f32 0.0, %v6284
      %6286 = vmatmul.bf16.gmra.mxu0 %v6008
      %v6287 = vpop.f32.mrf.mxu0
      %v6288 = vadd.f32 0.0, %v6287
      %v6289 = vpop.f32.mrf.mxu0
      %v6290 = vadd.f32 0.0, %v6289
      %6291 = vmatmul.bf16.gmra.mxu0 %v6011
      %v6292 = vpop.f32.mrf.mxu0
      %v6293 = vadd.f32 0.0, %v6292
      %v6294 = vpop.f32.mrf.mxu0
      %v6295 = vadd.f32 0.0, %v6294
      %6296 = vmatmul.bf16.gmra.mxu0 %v6014
      %v6297 = vpop.f32.mrf.mxu0
      %v6298 = vadd.f32 0.0, %v6297
      %v6299 = vpop.f32.mrf.mxu0
      %v6300 = vadd.f32 0.0, %v6299
      %6301 = vmatmul.bf16.gmra.mxu0 %v6017
      %v6302 = vpop.f32.mrf.mxu0
      %v6303 = vadd.f32 0.0, %v6302
      %v6304 = vpop.f32.mrf.mxu0
      %v6305 = vadd.f32 0.0, %v6304
      %6306 = vmatmul.bf16.gmra.mxu0 %v6020
      %v6307 = vpop.f32.mrf.mxu0
      %v6308 = vadd.f32 0.0, %v6307
      %v6309 = vpop.f32.mrf.mxu0
      %v6310 = vadd.f32 0.0, %v6309
      %6311 = vmatmul.bf16.gmra.mxu0 %v6023
      %v6312 = vpop.f32.mrf.mxu0
      %v6313 = vadd.f32 0.0, %v6312
      %v6314 = vpop.f32.mrf.mxu0
      %v6315 = vadd.f32 0.0, %v6314
      %6316 = vmatmul.bf16.gmra.mxu0 %v6026
      %v6317 = vpop.f32.mrf.mxu0
      %v6318 = vadd.f32 0.0, %v6317
      %v6319 = vpop.f32.mrf.mxu0
      %v6320 = vadd.f32 0.0, %v6319
      %6321 = vmatmul.bf16.gmra.mxu0 %v6029
      %v6322 = vpop.f32.mrf.mxu0
      %v6323 = vadd.f32 0.0, %v6322
      %v6324 = vpop.f32.mrf.mxu0
      %v6325 = vadd.f32 0.0, %v6324
      %6326 = vmatmul.bf16.gmra.mxu0 %v6032
      %v6327 = vpop.f32.mrf.mxu0
      %v6328 = vadd.f32 0.0, %v6327
      %v6329 = vpop.f32.mrf.mxu0
      %v6330 = vadd.f32 0.0, %v6329
      %6331 = vmatmul.bf16.gmra.mxu0 %v6035
      %v6332 = vpop.f32.mrf.mxu0
      %v6333 = vadd.f32 0.0, %v6332
      %v6334 = vpop.f32.mrf.mxu0
      %v6335 = vadd.f32 0.0, %v6334
      %6336 = vmatmul.bf16.gmra.mxu0 %v6038
      %v6337 = vpop.f32.mrf.mxu0
      %v6338 = vadd.f32 0.0, %v6337
      %v6339 = vpop.f32.mrf.mxu0
      %v6340 = vadd.f32 0.0, %v6339
      %6341 = vmatmul.bf16.gmra.mxu0 %v6041
      %v6342 = vpop.f32.mrf.mxu0
      %v6343 = vadd.f32 0.0, %v6342
      %v6344 = vpop.f32.mrf.mxu0
      %v6345 = vadd.f32 0.0, %v6344
      %6346 = vmatmul.bf16.gmra.mxu0 %v6044
      %v6347 = vpop.f32.mrf.mxu0
      %v6348 = vadd.f32 0.0, %v6347
      %v6349 = vpop.f32.mrf.mxu0
      %v6350 = vadd.f32 0.0, %v6349
      %6351 = vmatmul.bf16.gmra.mxu0 %v6047
      %v6352 = vpop.f32.mrf.mxu0
      %v6353 = vadd.f32 0.0, %v6352
      %v6354 = vpop.f32.mrf.mxu0
      %v6355 = vadd.f32 0.0, %v6354
      %6356 = vmatmul.bf16.gmra.mxu0 %v6050
      %v6357 = vpop.f32.mrf.mxu0
      %v6358 = vadd.f32 0.0, %v6357
      %v6359 = vpop.f32.mrf.mxu0
      %v6360 = vadd.f32 0.0, %v6359
      %6361 = vmatmul.bf16.gmra.mxu0 %v6053
      %v6362 = vpop.f32.mrf.mxu0
      %v6363 = vadd.f32 0.0, %v6362
      %v6364 = vpop.f32.mrf.mxu0
      %v6365 = vadd.f32 0.0, %v6364
      %6366 = vmatmul.bf16.gmra.mxu0 %v6056
      %v6367 = vpop.f32.mrf.mxu0
      %v6368 = vadd.f32 0.0, %v6367
      %v6369 = vpop.f32.mrf.mxu0
      %v6370 = vadd.f32 0.0, %v6369
      %6371 = vmatmul.bf16.gmra.mxu0 %v6059
      %v6372 = vpop.f32.mrf.mxu0
      %v6373 = vadd.f32 0.0, %v6372
      %v6374 = vpop.f32.mrf.mxu0
      %v6375 = vadd.f32 0.0, %v6374
      %6376 = vmatmul.bf16.gmra.mxu0 %v6062
      %v6377 = vpop.f32.mrf.mxu0
      %v6378 = vadd.f32 0.0, %v6377
      %v6379 = vpop.f32.mrf.mxu0
      %v6380 = vadd.f32 0.0, %v6379
      %6381 = vmatmul.bf16.gmra.mxu0 %v6065
      %v6382 = vpop.f32.mrf.mxu0
      %v6383 = vadd.f32 0.0, %v6382
      %v6384 = vpop.f32.mrf.mxu0
      %v6385 = vadd.f32 0.0, %v6384
      %6386 = vmatmul.bf16.gmra.mxu0 %v6068
      %v6387 = vpop.f32.mrf.mxu0
      %v6388 = vadd.f32 0.0, %v6387
      %v6389 = vpop.f32.mrf.mxu0
      %v6390 = vadd.f32 0.0, %v6389
      %6391 = vmatmul.bf16.gmra.mxu0 %v6071
      %v6392 = vpop.f32.mrf.mxu0
      %v6393 = vadd.f32 0.0, %v6392
      %v6394 = vpop.f32.mrf.mxu0
      %v6395 = vadd.f32 0.0, %v6394
      %6396 = vmatmul.bf16.gmra.mxu0 %v6074
      %v6397 = vpop.f32.mrf.mxu0
      %v6398 = vadd.f32 0.0, %v6397
      %v6399 = vpop.f32.mrf.mxu0
      %v6400 = vadd.f32 0.0, %v6399
      %6401 = vmatmul.bf16.gmra.mxu0 %v6077
      %v6402 = vpop.f32.mrf.mxu0
      %v6403 = vadd.f32 0.0, %v6402
      %v6404 = vpop.f32.mrf.mxu0
      %v6405 = vadd.f32 0.0, %v6404
      %6406 = vmatmul.bf16.gmra.mxu0 %v6080
      %v6407 = vpop.f32.mrf.mxu0
      %v6408 = vadd.f32 0.0, %v6407
      %v6409 = vpop.f32.mrf.mxu0
      %v6410 = vadd.f32 0.0, %v6409
      %6411 = vmatmul.bf16.gmra.mxu0 %v6083
      %v6412 = vpop.f32.mrf.mxu0
      %v6413 = vadd.f32 0.0, %v6412
      %v6414 = vpop.f32.mrf.mxu0
      %v6415 = vadd.f32 0.0, %v6414
      %6416 = vmatmul.bf16.gmra.mxu0 %v6086
      %v6417 = vpop.f32.mrf.mxu0
      %v6418 = vadd.f32 0.0, %v6417
      %v6419 = vpop.f32.mrf.mxu0
      %v6420 = vadd.f32 0.0, %v6419
      %6421 = vmatmul.bf16.gmra.mxu0 %v6089
      %v6422 = vpop.f32.mrf.mxu0
      %v6423 = vadd.f32 0.0, %v6422
      %v6424 = vpop.f32.mrf.mxu0
      %v6425 = vadd.f32 0.0, %v6424
      %6426 = vmatmul.bf16.gmra.mxu0 %v6092
      %v6427 = vpop.f32.mrf.mxu0
      %v6428 = vadd.f32 0.0, %v6427
      %v6429 = vpop.f32.mrf.mxu0
      %v6430 = vadd.f32 0.0, %v6429
      %6431 = vmatmul.bf16.gmra.mxu0 %v6095
      %v6432 = vpop.f32.mrf.mxu0
      %v6433 = vadd.f32 0.0, %v6432
      %v6434 = vpop.f32.mrf.mxu0
      %v6435 = vadd.f32 0.0, %v6434
      %6436 = vmatmul.bf16.gmra.mxu0 %v6098
      %v6437 = vpop.f32.mrf.mxu0
      %v6438 = vadd.f32 0.0, %v6437
      %v6439 = vpop.f32.mrf.mxu0
      %v6440 = vadd.f32 0.0, %v6439
      %6441 = vmatmul.bf16.gmra.mxu0 %v6101
      %v6442 = vpop.f32.mrf.mxu0
      %v6443 = vadd.f32 0.0, %v6442
      %v6444 = vpop.f32.mrf.mxu0
      %v6445 = vadd.f32 0.0, %v6444
      %6446 = vmatmul.bf16.gmra.mxu0 %v6104
      %v6447 = vpop.f32.mrf.mxu0
      %v6448 = vadd.f32 0.0, %v6447
      %v6449 = vpop.f32.mrf.mxu0
      %v6450 = vadd.f32 0.0, %v6449
      %6451 = vmatmul.bf16.gmra.mxu0 %v6107
      %v6452 = vpop.f32.mrf.mxu0
      %v6453 = vadd.f32 0.0, %v6452
      %v6454 = vpop.f32.mrf.mxu0
      %v6455 = vadd.f32 0.0, %v6454
      %6456 = vmatmul.bf16.gmra.mxu0 %v6110
      %v6457 = vpop.f32.mrf.mxu0
      %v6458 = vadd.f32 0.0, %v6457
      %v6459 = vpop.f32.mrf.mxu0
      %v6460 = vadd.f32 0.0, %v6459
      %6461 = vmatmul.bf16.gmra.mxu0 %v6113
      %v6462 = vpop.f32.mrf.mxu0
      %v6463 = vadd.f32 0.0, %v6462
      %v6464 = vpop.f32.mrf.mxu0
      %v6465 = vadd.f32 0.0, %v6464
      %6466 = vdwg.mxu0
      %v6467 = vadd.f32 %v5631, %v6128
      %v6468 = vadd.f32 %v5632, %v6130
      %v6469 = vadd.f32 %v5633, %v6133
      %v6470 = vadd.f32 %v5634, %v6135
      %v6471 = vadd.f32 %v5635, %v6138
      %v6472 = vadd.f32 %v5636, %v6140
      %v6473 = vadd.f32 %v5637, %v6143
      %v6474 = vadd.f32 %v5638, %v6145
      %v6475 = vadd.f32 %v5639, %v6148
      %v6476 = vadd.f32 %v5640, %v6150
      %v6477 = vadd.f32 %v5641, %v6153
      %v6478 = vadd.f32 %v5642, %v6155
      %v6479 = vadd.f32 %v5643, %v6158
      %v6480 = vadd.f32 %v5644, %v6160
      %v6481 = vadd.f32 %v5645, %v6163
      %v6482 = vadd.f32 %v5646, %v6165
      %v6483 = vadd.f32 %v5647, %v6168
      %v6484 = vadd.f32 %v5648, %v6170
      %v6485 = vadd.f32 %v5649, %v6173
      %v6486 = vadd.f32 %v5650, %v6175
      %v6487 = vadd.f32 %v5651, %v6178
      %v6488 = vadd.f32 %v5652, %v6180
      %v6489 = vadd.f32 %v5653, %v6183
      %v6490 = vadd.f32 %v5654, %v6185
      %v6491 = vadd.f32 %v5655, %v6188
      %v6492 = vadd.f32 %v5656, %v6190
      %v6493 = vadd.f32 %v5657, %v6193
      %v6494 = vadd.f32 %v5658, %v6195
      %v6495 = vadd.f32 %v5659, %v6198
      %v6496 = vadd.f32 %v5660, %v6200
      %v6497 = vadd.f32 %v5661, %v6203
      %v6498 = vadd.f32 %v5662, %v6205
      %v6499 = vadd.f32 %v5663, %v6208
      %v6500 = vadd.f32 %v5664, %v6210
      %v6501 = vadd.f32 %v5665, %v6213
      %v6502 = vadd.f32 %v5666, %v6215
      %v6503 = vadd.f32 %v5667, %v6218
      %v6504 = vadd.f32 %v5668, %v6220
      %v6505 = vadd.f32 %v5669, %v6223
      %v6506 = vadd.f32 %v5670, %v6225
      %v6507 = vadd.f32 %v5671, %v6228
      %v6508 = vadd.f32 %v5672, %v6230
      %v6509 = vadd.f32 %v5673, %v6233
      %v6510 = vadd.f32 %v5674, %v6235
      %v6511 = vadd.f32 %v5675, %v6238
      %v6512 = vadd.f32 %v5676, %v6240
      %v6513 = vadd.f32 %v5677, %v6243
      %v6514 = vadd.f32 %v5678, %v6245
      %v6515 = vadd.f32 %v5679, %v6248
      %v6516 = vadd.f32 %v5680, %v6250
      %v6517 = vadd.f32 %v5681, %v6253
      %v6518 = vadd.f32 %v5682, %v6255
      %v6519 = vadd.f32 %v5683, %v6258
      %v6520 = vadd.f32 %v5684, %v6260
      %v6521 = vadd.f32 %v5685, %v6263
      %v6522 = vadd.f32 %v5686, %v6265
      %v6523 = vadd.f32 %v5687, %v6268
      %v6524 = vadd.f32 %v5688, %v6270
      %v6525 = vadd.f32 %v5689, %v6273
      %v6526 = vadd.f32 %v5690, %v6275
      %v6527 = vadd.f32 %v5691, %v6278
      %v6528 = vadd.f32 %v5692, %v6280
      %v6529 = vadd.f32 %v5693, %v6283
      %v6530 = vadd.f32 %v5694, %v6285
      %v6531 = vadd.f32 %v5695, %v6288
      %v6532 = vadd.f32 %v5696, %v6290
      %v6533 = vadd.f32 %v5697, %v6293
      %v6534 = vadd.f32 %v5698, %v6295
      %v6535 = vadd.f32 %v5699, %v6298
      %v6536 = vadd.f32 %v5700, %v6300
      %v6537 = vadd.f32 %v5701, %v6303
      %v6538 = vadd.f32 %v5702, %v6305
      %v6539 = vadd.f32 %v5703, %v6308
      %v6540 = vadd.f32 %v5704, %v6310
      %v6541 = vadd.f32 %v5705, %v6313
      %v6542 = vadd.f32 %v5706, %v6315
      %v6543 = vadd.f32 %v5707, %v6318
      %v6544 = vadd.f32 %v5708, %v6320
      %v6545 = vadd.f32 %v5709, %v6323
      %v6546 = vadd.f32 %v5710, %v6325
      %v6547 = vadd.f32 %v5711, %v6328
      %v6548 = vadd.f32 %v5712, %v6330
      %v6549 = vadd.f32 %v5713, %v6333
      %v6550 = vadd.f32 %v5714, %v6335
      %v6551 = vadd.f32 %v5715, %v6338
      %v6552 = vadd.f32 %v5716, %v6340
      %v6553 = vadd.f32 %v5717, %v6343
      %v6554 = vadd.f32 %v5718, %v6345
      %v6555 = vadd.f32 %v5719, %v6348
      %v6556 = vadd.f32 %v5720, %v6350
      %v6557 = vadd.f32 %v5721, %v6353
      %v6558 = vadd.f32 %v5722, %v6355
      %v6559 = vadd.f32 %v5723, %v6358
      %v6560 = vadd.f32 %v5724, %v6360
      %v6561 = vadd.f32 %v5725, %v6363
      %v6562 = vadd.f32 %v5726, %v6365
      %v6563 = vadd.f32 %v5727, %v6368
      %v6564 = vadd.f32 %v5728, %v6370
      %v6565 = vadd.f32 %v5729, %v6373
      %v6566 = vadd.f32 %v5730, %v6375
      %v6567 = vadd.f32 %v5731, %v6378
      %v6568 = vadd.f32 %v5732, %v6380
      %v6569 = vadd.f32 %v5733, %v6383
      %v6570 = vadd.f32 %v5734, %v6385
      %v6571 = vadd.f32 %v5735, %v6388
      %v6572 = vadd.f32 %v5736, %v6390
      %v6573 = vadd.f32 %v5737, %v6393
      %v6574 = vadd.f32 %v5738, %v6395
      %v6575 = vadd.f32 %v5739, %v6398
      %v6576 = vadd.f32 %v5740, %v6400
      %v6577 = vadd.f32 %v5741, %v6403
      %v6578 = vadd.f32 %v5742, %v6405
      %v6579 = vadd.f32 %v5743, %v6408
      %v6580 = vadd.f32 %v5744, %v6410
      %v6581 = vadd.f32 %v5745, %v6413
      %v6582 = vadd.f32 %v5746, %v6415
      %v6583 = vadd.f32 %v5747, %v6418
      %v6584 = vadd.f32 %v5748, %v6420
      %v6585 = vadd.f32 %v5749, %v6423
      %v6586 = vadd.f32 %v5750, %v6425
      %v6587 = vadd.f32 %v5751, %v6428
      %v6588 = vadd.f32 %v5752, %v6430
      %v6589 = vadd.f32 %v5753, %v6433
      %v6590 = vadd.f32 %v5754, %v6435
      %v6591 = vadd.f32 %v5755, %v6438
      %v6592 = vadd.f32 %v5756, %v6440
      %v6593 = vadd.f32 %v5757, %v6443
      %v6594 = vadd.f32 %v5758, %v6445
      %v6595 = vadd.f32 %v5759, %v6448
      %v6596 = vadd.f32 %v5760, %v6450
      %v6597 = vadd.f32 %v5761, %v6453
      %v6598 = vadd.f32 %v5762, %v6455
      %v6599 = vadd.f32 %v5763, %v6458
      %v6600 = vadd.f32 %v5764, %v6460
      %v6601 = vadd.f32 %v5765, %v6463
      %v6602 = vadd.f32 %v5766, %v6465
      %v6603 = vld [vmem:[%s206 + $0x20] sm:$0xc]
      %v6604 = vld [vmem:[%s206 + $0x24] sm:$0xf]
      %v6605 = vld [vmem:[%s206 + $0x28] sm:$0xf]
      %v6606 = vld [vmem:[%s206 + $0x2c] sm:$0xf]
      %v6607 = vld [vmem:[%s206 + $0x30] sm:$0xf]
      %v6608 = vld [vmem:[%s206 + $0x34] sm:$0xf]
      %v6609 = vld [vmem:[%s206 + $0x38] sm:$0xf]
      %v6610 = vld [vmem:[%s206 + $0x3c] sm:$0xf]
      %v6611 = vld [vmem:[%s206 + $0x40] sm:$0xf]
      %v6612 = vld [vmem:[%s206 + $0x44] sm:$0xf]
      %v6613 = vld [vmem:[%s206 + $0x48] sm:$0xf]
      %v6614 = vld [vmem:[%s206 + $0x4c] sm:$0xf]
      %v6615 = vld [vmem:[%s206 + $0x50] sm:$0xf]
      %v6616 = vld [vmem:[%s206 + $0x54] sm:$0xf]
      %v6617 = vld [vmem:[%s206 + $0x58] sm:$0xf]
      %v6618 = vld [vmem:[%s206 + $0x5c] sm:$0xf]
      %v6619 = vld [vmem:[%s206 + $0x60] sm:$0xf]
      %v6620 = vld [vmem:[%s206 + $0x64] sm:$0xf]
      %v6621 = vld [vmem:[%s206 + $0x68] sm:$0xf]
      %v6622 = vld [vmem:[%s206 + $0x6c] sm:$0xf]
      %v6623 = vld [vmem:[%s206 + $0x70] sm:$0xf]
      %v6624 = vld [vmem:[%s206 + $0x74] sm:$0xf]
      %v6625 = vld [vmem:[%s206 + $0x78] sm:$0xf]
      %v6626 = vld [vmem:[%s206 + $0x7c] sm:$0xf]
      %v6627 = vld [vmem:[%s206 + $0x80] sm:$0xf]
      %v6628 = vld [vmem:[%s206 + $0x84] sm:$0xf]
      %v6629 = vld [vmem:[%s206 + $0x88] sm:$0xf]
      %v6630 = vld [vmem:[%s206 + $0x8c] sm:$0xf]
      %v6631 = vld [vmem:[%s206 + $0x90] sm:$0xf]
      %v6632 = vld [vmem:[%s206 + $0x94] sm:$0xf]
      %v6633 = vld [vmem:[%s206 + $0x98] sm:$0xf]
      %v6634 = vld [vmem:[%s206 + $0x9c] sm:$0xf]
      %v6635 = vld [vmem:[%s206 + $0xa0] sm:$0xf]
      %v6636 = vld [vmem:[%s206 + $0xa4] sm:$0xf]
      %v6637 = vld [vmem:[%s206 + $0xa8] sm:$0xf]
      %v6638 = vld [vmem:[%s206 + $0xac] sm:$0xf]
      %v6639 = vld [vmem:[%s206 + $0xb0] sm:$0xf]
      %v6640 = vld [vmem:[%s206 + $0xb4] sm:$0xf]
      %v6641 = vld [vmem:[%s206 + $0xb8] sm:$0xf]
      %v6642 = vld [vmem:[%s206 + $0xbc] sm:$0xf]
      %v6643 = vld [vmem:[%s206 + $0xc0] sm:$0xf]
      %v6644 = vld [vmem:[%s206 + $0xc4] sm:$0xf]
      %v6645 = vld [vmem:[%s206 + $0xc8] sm:$0xf]
      %v6646 = vld [vmem:[%s206 + $0xcc] sm:$0xf]
      %v6647 = vld [vmem:[%s206 + $0xd0] sm:$0xf]
      %v6648 = vld [vmem:[%s206 + $0xd4] sm:$0xf]
      %v6649 = vld [vmem:[%s206 + $0xd8] sm:$0xf]
      %v6650 = vld [vmem:[%s206 + $0xdc] sm:$0xf]
      %v6651 = vld [vmem:[%s206 + $0xe0] sm:$0xf]
      %v6652 = vld [vmem:[%s206 + $0xe4] sm:$0xf]
      %v6653 = vld [vmem:[%s206 + $0xe8] sm:$0xf]
      %v6654 = vld [vmem:[%s206 + $0xec] sm:$0xf]
      %v6655 = vld [vmem:[%s206 + $0xf0] sm:$0xf]
      %v6656 = vld [vmem:[%s206 + $0xf4] sm:$0xf]
      %v6657 = vld [vmem:[%s206 + $0xf8] sm:$0xf]
      %v6658 = vld [vmem:[%s206 + $0xfc] sm:$0xf]
      %v6659 = vld [vmem:[%s206 + $0x100] sm:$0xf]
      %v6660 = vld [vmem:[%s206 + $0x104] sm:$0xf]
      %v6661 = vld [vmem:[%s206 + $0x108] sm:$0xf]
      %v6662 = vld [vmem:[%s206 + $0x10c] sm:$0xf]
      %v6663 = vld [vmem:[%s206 + $0x110] sm:$0xf]
      %v6664 = vld [vmem:[%s206 + $0x114] sm:$0xf]
      %v6665 = vld [vmem:[%s206 + $0x118] sm:$0xf]
      %v6666 = vld [vmem:[%s206 + $0x11c] sm:$0xf]
      %v6667 = vld [vmem:[%s206 + $0x120] sm:$0xf]
      %v6668 = vld [vmem:[%s206 + $0x124] sm:$0xf]
      %v6669 = vld [vmem:[%s206 + $0x128] sm:$0xf]
      %v6670 = vld [vmem:[%s206 + $0x12c] sm:$0xf]
      %v6671 = vld [vmem:[%s206 + $0x130] sm:$0xf]
      %v6672 = vld [vmem:[%s206 + $0x134] sm:$0xf]
      %v6673 = vld [vmem:[%s206 + $0x138] sm:$0xf]
      %v6674 = vld [vmem:[%s206 + $0x13c] sm:$0xf]
      %v6675 = vld [vmem:[%s206 + $0x140] sm:$0xf]
      %v6676 = vld [vmem:[%s206 + $0x144] sm:$0xf]
      %v6677 = vld [vmem:[%s206 + $0x148] sm:$0xf]
      %v6678 = vld [vmem:[%s206 + $0x14c] sm:$0xf]
      %v6679 = vld [vmem:[%s206 + $0x150] sm:$0xf]
      %v6680 = vld [vmem:[%s206 + $0x154] sm:$0xf]
      %v6681 = vld [vmem:[%s206 + $0x158] sm:$0xf]
      %v6682 = vld [vmem:[%s206 + $0x15c] sm:$0xf]
      %v6683 = vld [vmem:[%s206 + $0x160] sm:$0xf]
      %v6684 = vld [vmem:[%s206 + $0x164] sm:$0xf]
      %v6685 = vld [vmem:[%s206 + $0x168] sm:$0xf]
      %v6686 = vld [vmem:[%s206 + $0x16c] sm:$0xf]
      %v6687 = vld [vmem:[%s206 + $0x170] sm:$0xf]
      %v6688 = vld [vmem:[%s206 + $0x174] sm:$0xf]
      %v6689 = vld [vmem:[%s206 + $0x178] sm:$0xf]
      %v6690 = vld [vmem:[%s206 + $0x17c] sm:$0xf]
      %v6691 = vld [vmem:[%s206 + $0x180] sm:$0xf]
      %v6692 = vld [vmem:[%s206 + $0x184] sm:$0xf]
      %v6693 = vld [vmem:[%s206 + $0x188] sm:$0xf]
      %v6694 = vld [vmem:[%s206 + $0x18c] sm:$0xf]
      %v6695 = vld [vmem:[%s206 + $0x190] sm:$0xf]
      %v6696 = vld [vmem:[%s206 + $0x194] sm:$0xf]
      %v6697 = vld [vmem:[%s206 + $0x198] sm:$0xf]
      %v6698 = vld [vmem:[%s206 + $0x19c] sm:$0xf]
      %v6699 = vld [vmem:[%s206 + $0x1a0] sm:$0xf]
      %v6700 = vld [vmem:[%s206 + $0x1a4] sm:$0xf]
      %v6701 = vld [vmem:[%s206 + $0x1a8] sm:$0xf]
      %v6702 = vld [vmem:[%s206 + $0x1ac] sm:$0xf]
      %v6703 = vld [vmem:[%s206 + $0x1b0] sm:$0xf]
      %v6704 = vld [vmem:[%s206 + $0x1b4] sm:$0xf]
      %v6705 = vld [vmem:[%s206 + $0x1b8] sm:$0xf]
      %v6706 = vld [vmem:[%s206 + $0x1bc] sm:$0xf]
      %v6707 = vld [vmem:[%s206 + $0x1c0] sm:$0xf]
      %v6708 = vld [vmem:[%s206 + $0x1c4] sm:$0xf]
      %v6709 = vld [vmem:[%s206 + $0x1c8] sm:$0xf]
      %v6710 = vld [vmem:[%s206 + $0x1cc] sm:$0xf]
      %v6711 = vld [vmem:[%s206 + $0x1d0] sm:$0xf]
      %v6712 = vld [vmem:[%s206 + $0x1d4] sm:$0xf]
      %v6713 = vld [vmem:[%s206 + $0x1d8] sm:$0xf]
      %v6714 = vld [vmem:[%s206 + $0x1dc] sm:$0xf]
      %v6715 = vld [vmem:[%s206 + $0x1e0] sm:$0xf]
      %v6716 = vld [vmem:[%s206 + $0x1e4] sm:$0xf]
      %v6717 = vld [vmem:[%s206 + $0x1e8] sm:$0xf]
      %v6718 = vld [vmem:[%s206 + $0x1ec] sm:$0xf]
      %v6719 = vld [vmem:[%s206 + $0x1f0] sm:$0xf]
      %v6720 = vld [vmem:[%s206 + $0x1f4] sm:$0xf]
      %v6721 = vld [vmem:[%s206 + $0x1f8] sm:$0xf]
      %v6722 = vld [vmem:[%s206 + $0x1fc] sm:$0xf]
      %v6723 = vld [vmem:[%s206 + $0x200] sm:$0xf]
      %v6724 = vld [vmem:[%s206 + $0x204] sm:$0xf]
      %v6725 = vld [vmem:[%s206 + $0x208] sm:$0xf]
      %v6726 = vld [vmem:[%s206 + $0x20c] sm:$0xf]
      %v6727 = vld [vmem:[%s206 + $0x210] sm:$0xf]
      %v6728 = vld [vmem:[%s206 + $0x214] sm:$0xf]
      %v6729 = vld [vmem:[%s206 + $0x218] sm:$0xf]
      %v6730 = vld [vmem:[%s206 + $0x21c] sm:$0xf]
      %v6731 = vld [vmem:[%s206 + $0x220] sm:$0xf]
      %v6732 = vld [vmem:[%s206 + $0x224] sm:$0xf]
      %v6733 = vld [vmem:[%s206 + $0x228] sm:$0xf]
      %v6734 = vld [vmem:[%s206 + $0x22c] sm:$0xf]
      %v6735 = vld [vmem:[%s206 + $0x230] sm:$0xf]
      %v6736 = vld [vmem:[%s206 + $0x234] sm:$0xf]
      %v6737 = vld [vmem:[%s206 + $0x238] sm:$0xf]
      %v6738 = vld [vmem:[%s206 + $0x23c] sm:$0xf]
      %v6739 = vld [vmem:[%s206 + $0x240] sm:$0x3]
      %s6740 = scalar_lea.vmem %s210, 24
      %v6741 = vld [vmem:[%s6740] sm:$0xf]
      %v6879 = vunpack.c.l.b16 %v6603
      %v6880 = vunpack.c.l.b16 %v6604
      %v6881 = vunpack.c.l.b16 %v6605
      %v6882 = vunpack.c.l.b16 %v6606
      %v6883 = vunpack.c.l.b16 %v6607
      %v6884 = vunpack.c.l.b16 %v6608
      %v6885 = vunpack.c.l.b16 %v6609
      %v6886 = vunpack.c.l.b16 %v6610
      %v6887 = vunpack.c.l.b16 %v6611
      %v6888 = vunpack.c.l.b16 %v6612
      %v6889 = vunpack.c.l.b16 %v6613
      %v6890 = vunpack.c.l.b16 %v6614
      %v6891 = vunpack.c.l.b16 %v6615
      %v6892 = vunpack.c.l.b16 %v6616
      %v6893 = vunpack.c.l.b16 %v6617
      %v6894 = vunpack.c.l.b16 %v6618
      %v6895 = vunpack.c.l.b16 %v6619
      %v6896 = vunpack.c.l.b16 %v6620
      %v6897 = vunpack.c.l.b16 %v6621
      %v6898 = vunpack.c.l.b16 %v6622
      %v6899 = vunpack.c.l.b16 %v6623
      %v6900 = vunpack.c.l.b16 %v6624
      %v6901 = vunpack.c.l.b16 %v6625
      %v6902 = vunpack.c.l.b16 %v6626
      %v6903 = vunpack.c.l.b16 %v6627
      %v6904 = vunpack.c.l.b16 %v6628
      %v6905 = vunpack.c.l.b16 %v6629
      %v6906 = vunpack.c.l.b16 %v6630
      %v6907 = vunpack.c.l.b16 %v6631
      %v6908 = vunpack.c.l.b16 %v6632
      %v6909 = vunpack.c.l.b16 %v6633
      %v6910 = vunpack.c.l.b16 %v6634
      %v6911 = vunpack.c.l.b16 %v6635
      %v6912 = vunpack.c.l.b16 %v6636
      %v6913 = vunpack.c.l.b16 %v6637
      %v6914 = vunpack.c.l.b16 %v6638
      %v6915 = vunpack.c.l.b16 %v6639
      %v6916 = vunpack.c.l.b16 %v6640
      %v6917 = vunpack.c.l.b16 %v6641
      %v6918 = vunpack.c.l.b16 %v6642
      %v6919 = vunpack.c.l.b16 %v6643
      %v6920 = vunpack.c.l.b16 %v6644
      %v6921 = vunpack.c.l.b16 %v6645
      %v6922 = vunpack.c.l.b16 %v6646
      %v6923 = vunpack.c.l.b16 %v6647
      %v6924 = vunpack.c.l.b16 %v6648
      %v6925 = vunpack.c.l.b16 %v6649
      %v6926 = vunpack.c.l.b16 %v6650
      %v6927 = vunpack.c.l.b16 %v6651
      %v6928 = vunpack.c.l.b16 %v6652
      %v6929 = vunpack.c.l.b16 %v6653
      %v6930 = vunpack.c.l.b16 %v6654
      %v6931 = vunpack.c.l.b16 %v6655
      %v6932 = vunpack.c.l.b16 %v6656
      %v6933 = vunpack.c.l.b16 %v6657
      %v6934 = vunpack.c.l.b16 %v6658
      %v6935 = vunpack.c.l.b16 %v6659
      %v6936 = vunpack.c.l.b16 %v6660
      %v6937 = vunpack.c.l.b16 %v6661
      %v6938 = vunpack.c.l.b16 %v6662
      %v6939 = vunpack.c.l.b16 %v6663
      %v6940 = vunpack.c.l.b16 %v6664
      %v6941 = vunpack.c.l.b16 %v6665
      %v6942 = vunpack.c.l.b16 %v6666
      %v6943 = vunpack.c.l.b16 %v6667
      %v6944 = vunpack.c.l.b16 %v6668
      %v6945 = vunpack.c.l.b16 %v6669
      %v6946 = vunpack.c.l.b16 %v6670
      %v6947 = vunpack.c.l.b16 %v6671
      %v6948 = vunpack.c.l.b16 %v6672
      %v6949 = vunpack.c.l.b16 %v6673
      %v6950 = vunpack.c.l.b16 %v6674
      %v6951 = vunpack.c.l.b16 %v6675
      %v6952 = vunpack.c.l.b16 %v6676
      %v6953 = vunpack.c.l.b16 %v6677
      %v6954 = vunpack.c.l.b16 %v6678
      %v6955 = vunpack.c.l.b16 %v6679
      %v6956 = vunpack.c.l.b16 %v6680
      %v6957 = vunpack.c.l.b16 %v6681
      %v6958 = vunpack.c.l.b16 %v6682
      %v6959 = vunpack.c.l.b16 %v6683
      %v6960 = vunpack.c.l.b16 %v6684
      %v6961 = vunpack.c.l.b16 %v6685
      %v6962 = vunpack.c.l.b16 %v6686
      %v6963 = vunpack.c.l.b16 %v6687
      %v6964 = vunpack.c.l.b16 %v6688
      %v6965 = vunpack.c.l.b16 %v6689
      %v6966 = vunpack.c.l.b16 %v6690
      %v6967 = vunpack.c.l.b16 %v6691
      %v6968 = vunpack.c.l.b16 %v6692
      %v6969 = vunpack.c.l.b16 %v6693
      %v6970 = vunpack.c.l.b16 %v6694
      %v6971 = vunpack.c.l.b16 %v6695
      %v6972 = vunpack.c.l.b16 %v6696
      %v6973 = vunpack.c.l.b16 %v6697
      %v6974 = vunpack.c.l.b16 %v6698
      %v6975 = vunpack.c.l.b16 %v6699
      %v6976 = vunpack.c.l.b16 %v6700
      %v6977 = vunpack.c.l.b16 %v6701
      %v6978 = vunpack.c.l.b16 %v6702
      %v6979 = vunpack.c.l.b16 %v6703
      %v6980 = vunpack.c.l.b16 %v6704
      %v6981 = vunpack.c.l.b16 %v6705
      %v6982 = vunpack.c.l.b16 %v6706
      %v6983 = vunpack.c.l.b16 %v6707
      %v6984 = vunpack.c.l.b16 %v6708
      %v6985 = vunpack.c.l.b16 %v6709
      %v6986 = vunpack.c.l.b16 %v6710
      %v6987 = vunpack.c.l.b16 %v6711
      %v6988 = vunpack.c.l.b16 %v6712
      %v6989 = vunpack.c.l.b16 %v6713
      %v6990 = vunpack.c.l.b16 %v6714
      %v6991 = vunpack.c.l.b16 %v6715
      %v6992 = vunpack.c.l.b16 %v6716
      %v6993 = vunpack.c.l.b16 %v6717
      %v6994 = vunpack.c.l.b16 %v6718
      %v6995 = vunpack.c.l.b16 %v6719
      %v6996 = vunpack.c.l.b16 %v6720
      %v6997 = vunpack.c.l.b16 %v6721
      %v6998 = vunpack.c.l.b16 %v6722
      %v6999 = vunpack.c.l.b16 %v6723
      %v7000 = vunpack.c.l.b16 %v6724
      %v7001 = vunpack.c.l.b16 %v6725
      %v7002 = vunpack.c.l.b16 %v6726
      %v7003 = vunpack.c.l.b16 %v6727
      %v7004 = vunpack.c.l.b16 %v6728
      %v7005 = vunpack.c.l.b16 %v6729
      %v7006 = vunpack.c.l.b16 %v6730
      %v7007 = vunpack.c.l.b16 %v6731
      %v7008 = vunpack.c.l.b16 %v6732
      %v7009 = vunpack.c.l.b16 %v6733
      %v7010 = vunpack.c.l.b16 %v6734
      %v7011 = vunpack.c.l.b16 %v6735
      %v7012 = vunpack.c.l.b16 %v6736
      %v7013 = vunpack.c.l.b16 %v6737
      %v7014 = vunpack.c.l.b16 %v6738
      %v7015 = vunpack.c.l.b16 %v6739
      %v7016 = vpack.c.b16 %v6880, %v6879
      %v7017 = vpack.c.b16 %v6882, %v6881
      %v7018 = vpack.c.b16 %v6884, %v6883
      %v7019 = vpack.c.b16 %v6886, %v6885
      %v7020 = vpack.c.b16 %v6888, %v6887
      %v7021 = vpack.c.b16 %v6890, %v6889
      %v7022 = vpack.c.b16 %v6892, %v6891
      %v7023 = vpack.c.b16 %v6894, %v6893
      %v7024 = vpack.c.b16 %v6896, %v6895
      %v7025 = vpack.c.b16 %v6898, %v6897
      %v7026 = vpack.c.b16 %v6900, %v6899
      %v7027 = vpack.c.b16 %v6902, %v6901
      %v7028 = vpack.c.b16 %v6904, %v6903
      %v7029 = vpack.c.b16 %v6906, %v6905
      %v7030 = vpack.c.b16 %v6908, %v6907
      %v7031 = vpack.c.b16 %v6910, %v6909
      %v7032 = vpack.c.b16 %v6912, %v6911
      %v7033 = vpack.c.b16 %v6914, %v6913
      %v7034 = vpack.c.b16 %v6916, %v6915
      %v7035 = vpack.c.b16 %v6918, %v6917
      %v7036 = vpack.c.b16 %v6920, %v6919
      %v7037 = vpack.c.b16 %v6922, %v6921
      %v7038 = vpack.c.b16 %v6924, %v6923
      %v7039 = vpack.c.b16 %v6926, %v6925
      %v7040 = vpack.c.b16 %v6928, %v6927
      %v7041 = vpack.c.b16 %v6930, %v6929
      %v7042 = vpack.c.b16 %v6932, %v6931
      %v7043 = vpack.c.b16 %v6934, %v6933
      %v7044 = vpack.c.b16 %v6936, %v6935
      %v7045 = vpack.c.b16 %v6938, %v6937
      %v7046 = vpack.c.b16 %v6940, %v6939
      %v7047 = vpack.c.b16 %v6942, %v6941
      %v7048 = vpack.c.b16 %v6944, %v6943
      %v7049 = vpack.c.b16 %v6946, %v6945
      %v7050 = vpack.c.b16 %v6948, %v6947
      %v7051 = vpack.c.b16 %v6950, %v6949
      %v7052 = vpack.c.b16 %v6952, %v6951
      %v7053 = vpack.c.b16 %v6954, %v6953
      %v7054 = vpack.c.b16 %v6956, %v6955
      %v7055 = vpack.c.b16 %v6958, %v6957
      %v7056 = vpack.c.b16 %v6960, %v6959
      %v7057 = vpack.c.b16 %v6962, %v6961
      %v7058 = vpack.c.b16 %v6964, %v6963
      %v7059 = vpack.c.b16 %v6966, %v6965
      %v7060 = vpack.c.b16 %v6968, %v6967
      %v7061 = vpack.c.b16 %v6970, %v6969
      %v7062 = vpack.c.b16 %v6972, %v6971
      %v7063 = vpack.c.b16 %v6974, %v6973
      %v7064 = vpack.c.b16 %v6976, %v6975
      %v7065 = vpack.c.b16 %v6978, %v6977
      %v7066 = vpack.c.b16 %v6980, %v6979
      %v7067 = vpack.c.b16 %v6982, %v6981
      %v7068 = vpack.c.b16 %v6984, %v6983
      %v7069 = vpack.c.b16 %v6986, %v6985
      %v7070 = vpack.c.b16 %v6988, %v6987
      %v7071 = vpack.c.b16 %v6990, %v6989
      %v7072 = vpack.c.b16 %v6992, %v6991
      %v7073 = vpack.c.b16 %v6994, %v6993
      %v7074 = vpack.c.b16 %v6996, %v6995
      %v7075 = vpack.c.b16 %v6998, %v6997
      %v7076 = vpack.c.b16 %v7000, %v6999
      %v7077 = vpack.c.b16 %v7002, %v7001
      %v7078 = vpack.c.b16 %v7004, %v7003
      %v7079 = vpack.c.b16 %v7006, %v7005
      %v7080 = vpack.c.b16 %v7008, %v7007
      %v7081 = vpack.c.b16 %v7010, %v7009
      %v7082 = vpack.c.b16 %v7012, %v7011
      %v7083 = vpack.c.b16 %v7014, %v7013
      %v7084 = vpack.c.b16 %v7015, %v7015
      %v7085 = vrot.slane %v7016, 2
      %v7086 = vrot.slane %v7017, 2
      %v7087 = vsel %vm5773, %v7085, %v7086
      %v7088 = vrot.slane %v7018, 2
      %v7089 = vsel %vm5773, %v7086, %v7088
      %v7090 = vrot.slane %v7019, 2
      %v7091 = vsel %vm5773, %v7088, %v7090
      %v7092 = vrot.slane %v7020, 2
      %v7093 = vsel %vm5773, %v7090, %v7092
      %v7094 = vrot.slane %v7021, 2
      %v7095 = vsel %vm5773, %v7092, %v7094
      %v7096 = vrot.slane %v7022, 2
      %v7097 = vsel %vm5773, %v7094, %v7096
      %v7098 = vrot.slane %v7023, 2
      %v7099 = vsel %vm5773, %v7096, %v7098
      %v7100 = vrot.slane %v7024, 2
      %v7101 = vsel %vm5773, %v7098, %v7100
      %v7102 = vrot.slane %v7025, 2
      %v7103 = vsel %vm5773, %v7100, %v7102
      %v7104 = vrot.slane %v7026, 2
      %v7105 = vsel %vm5773, %v7102, %v7104
      %v7106 = vrot.slane %v7027, 2
      %v7107 = vsel %vm5773, %v7104, %v7106
      %v7108 = vrot.slane %v7028, 2
      %v7109 = vsel %vm5773, %v7106, %v7108
      %v7110 = vrot.slane %v7029, 2
      %v7111 = vsel %vm5773, %v7108, %v7110
      %v7112 = vrot.slane %v7030, 2
      %v7113 = vsel %vm5773, %v7110, %v7112
      %v7114 = vrot.slane %v7031, 2
      %v7115 = vsel %vm5773, %v7112, %v7114
      %v7116 = vrot.slane %v7032, 2
      %v7117 = vsel %vm5773, %v7114, %v7116
      %v7118 = vrot.slane %v7033, 2
      %v7119 = vsel %vm5773, %v7116, %v7118
      %v7120 = vrot.slane %v7034, 2
      %v7121 = vsel %vm5773, %v7118, %v7120
      %v7122 = vrot.slane %v7035, 2
      %v7123 = vsel %vm5773, %v7120, %v7122
      %v7124 = vrot.slane %v7036, 2
      %v7125 = vsel %vm5773, %v7122, %v7124
      %v7126 = vrot.slane %v7037, 2
      %v7127 = vsel %vm5773, %v7124, %v7126
      %v7128 = vrot.slane %v7038, 2
      %v7129 = vsel %vm5773, %v7126, %v7128
      %v7130 = vrot.slane %v7039, 2
      %v7131 = vsel %vm5773, %v7128, %v7130
      %v7132 = vrot.slane %v7040, 2
      %v7133 = vsel %vm5773, %v7130, %v7132
      %v7134 = vrot.slane %v7041, 2
      %v7135 = vsel %vm5773, %v7132, %v7134
      %v7136 = vrot.slane %v7042, 2
      %v7137 = vsel %vm5773, %v7134, %v7136
      %v7138 = vrot.slane %v7043, 2
      %v7139 = vsel %vm5773, %v7136, %v7138
      %v7140 = vrot.slane %v7044, 2
      %v7141 = vsel %vm5773, %v7138, %v7140
      %v7142 = vrot.slane %v7045, 2
      %v7143 = vsel %vm5773, %v7140, %v7142
      %v7144 = vrot.slane %v7046, 2
      %v7145 = vsel %vm5773, %v7142, %v7144
      %v7146 = vrot.slane %v7047, 2
      %v7147 = vsel %vm5773, %v7144, %v7146
      %v7148 = vrot.slane %v7048, 2
      %v7149 = vsel %vm5773, %v7146, %v7148
      %v7150 = vrot.slane %v7049, 2
      %v7151 = vsel %vm5773, %v7148, %v7150
      %v7152 = vrot.slane %v7050, 2
      %v7153 = vsel %vm5773, %v7150, %v7152
      %v7154 = vrot.slane %v7051, 2
      %v7155 = vsel %vm5773, %v7152, %v7154
      %v7156 = vrot.slane %v7052, 2
      %v7157 = vsel %vm5773, %v7154, %v7156
      %v7158 = vrot.slane %v7053, 2
      %v7159 = vsel %vm5773, %v7156, %v7158
      %v7160 = vrot.slane %v7054, 2
      %v7161 = vsel %vm5773, %v7158, %v7160
      %v7162 = vrot.slane %v7055, 2
      %v7163 = vsel %vm5773, %v7160, %v7162
      %v7164 = vrot.slane %v7056, 2
      %v7165 = vsel %vm5773, %v7162, %v7164
      %v7166 = vrot.slane %v7057, 2
      %v7167 = vsel %vm5773, %v7164, %v7166
      %v7168 = vrot.slane %v7058, 2
      %v7169 = vsel %vm5773, %v7166, %v7168
      %v7170 = vrot.slane %v7059, 2
      %v7171 = vsel %vm5773, %v7168, %v7170
      %v7172 = vrot.slane %v7060, 2
      %v7173 = vsel %vm5773, %v7170, %v7172
      %v7174 = vrot.slane %v7061, 2
      %v7175 = vsel %vm5773, %v7172, %v7174
      %v7176 = vrot.slane %v7062, 2
      %v7177 = vsel %vm5773, %v7174, %v7176
      %v7178 = vrot.slane %v7063, 2
      %v7179 = vsel %vm5773, %v7176, %v7178
      %v7180 = vrot.slane %v7064, 2
      %v7181 = vsel %vm5773, %v7178, %v7180
      %v7182 = vrot.slane %v7065, 2
      %v7183 = vsel %vm5773, %v7180, %v7182
      %v7184 = vrot.slane %v7066, 2
      %v7185 = vsel %vm5773, %v7182, %v7184
      %v7186 = vrot.slane %v7067, 2
      %v7187 = vsel %vm5773, %v7184, %v7186
      %v7188 = vrot.slane %v7068, 2
      %v7189 = vsel %vm5773, %v7186, %v7188
      %v7190 = vrot.slane %v7069, 2
      %v7191 = vsel %vm5773, %v7188, %v7190
      %v7192 = vrot.slane %v7070, 2
      %v7193 = vsel %vm5773, %v7190, %v7192
      %v7194 = vrot.slane %v7071, 2
      %v7195 = vsel %vm5773, %v7192, %v7194
      %v7196 = vrot.slane %v7072, 2
      %v7197 = vsel %vm5773, %v7194, %v7196
      %v7198 = vrot.slane %v7073, 2
      %v7199 = vsel %vm5773, %v7196, %v7198
      %v7200 = vrot.slane %v7074, 2
      %v7201 = vsel %vm5773, %v7198, %v7200
      %v7202 = vrot.slane %v7075, 2
      %v7203 = vsel %vm5773, %v7200, %v7202
      %v7204 = vrot.slane %v7076, 2
      %v7205 = vsel %vm5773, %v7202, %v7204
      %v7206 = vrot.slane %v7077, 2
      %v7207 = vsel %vm5773, %v7204, %v7206
      %v7208 = vrot.slane %v7078, 2
      %v7209 = vsel %vm5773, %v7206, %v7208
      %v7210 = vrot.slane %v7079, 2
      %v7211 = vsel %vm5773, %v7208, %v7210
      %v7212 = vrot.slane %v7080, 2
      %v7213 = vsel %vm5773, %v7210, %v7212
      %v7214 = vrot.slane %v7081, 2
      %v7215 = vsel %vm5773, %v7212, %v7214
      %v7216 = vrot.slane %v7082, 2
      %v7217 = vsel %vm5773, %v7214, %v7216
      %v7218 = vrot.slane %v7083, 2
      %v7219 = vsel %vm5773, %v7216, %v7218
      %v7220 = vrot.slane %v7084, 2
      %v7221 = vsel %vm5773, %v7218, %v7220
      %v7223 = vsel %vm1255, %v7087, 0
      %v7226 = vsel %vm1255, %v7089, 0
      %v7229 = vsel %vm1255, %v7091, 0
      %v7232 = vsel %vm1255, %v7093, 0
      %v7235 = vsel %vm1255, %v7095, 0
      %v7238 = vsel %vm1255, %v7097, 0
      %v7241 = vsel %vm1255, %v7099, 0
      %v7244 = vsel %vm1255, %v7101, 0
      %v7247 = vsel %vm1255, %v7103, 0
      %v7250 = vsel %vm1255, %v7105, 0
      %v7253 = vsel %vm1255, %v7107, 0
      %v7256 = vsel %vm1255, %v7109, 0
      %v7259 = vsel %vm1255, %v7111, 0
      %v7262 = vsel %vm1255, %v7113, 0
      %v7265 = vsel %vm1255, %v7115, 0
      %v7268 = vsel %vm1255, %v7117, 0
      %v7271 = vsel %vm1255, %v7119, 0
      %v7274 = vsel %vm1255, %v7121, 0
      %v7277 = vsel %vm1255, %v7123, 0
      %v7280 = vsel %vm1255, %v7125, 0
      %v7283 = vsel %vm1255, %v7127, 0
      %v7286 = vsel %vm1255, %v7129, 0
      %v7289 = vsel %vm1255, %v7131, 0
      %v7292 = vsel %vm1255, %v7133, 0
      %v7295 = vsel %vm1255, %v7135, 0
      %v7298 = vsel %vm1255, %v7137, 0
      %v7301 = vsel %vm1255, %v7139, 0
      %v7304 = vsel %vm1255, %v7141, 0
      %v7307 = vsel %vm1255, %v7143, 0
      %v7310 = vsel %vm1255, %v7145, 0
      %v7313 = vsel %vm1255, %v7147, 0
      %v7316 = vsel %vm1255, %v7149, 0
      %v7319 = vsel %vm1255, %v7151, 0
      %v7322 = vsel %vm1255, %v7153, 0
      %v7325 = vsel %vm1255, %v7155, 0
      %v7328 = vsel %vm1255, %v7157, 0
      %v7331 = vsel %vm1255, %v7159, 0
      %v7334 = vsel %vm1255, %v7161, 0
      %v7337 = vsel %vm1255, %v7163, 0
      %v7340 = vsel %vm1255, %v7165, 0
      %v7343 = vsel %vm1255, %v7167, 0
      %v7346 = vsel %vm1255, %v7169, 0
      %v7349 = vsel %vm1255, %v7171, 0
      %v7352 = vsel %vm1255, %v7173, 0
      %v7355 = vsel %vm1255, %v7175, 0
      %v7358 = vsel %vm1255, %v7177, 0
      %v7361 = vsel %vm1255, %v7179, 0
      %v7364 = vsel %vm1255, %v7181, 0
      %v7367 = vsel %vm1255, %v7183, 0
      %v7370 = vsel %vm1255, %v7185, 0
      %v7373 = vsel %vm1255, %v7187, 0
      %v7376 = vsel %vm1255, %v7189, 0
      %v7379 = vsel %vm1255, %v7191, 0
      %v7382 = vsel %vm1255, %v7193, 0
      %v7385 = vsel %vm1255, %v7195, 0
      %v7388 = vsel %vm1255, %v7197, 0
      %v7391 = vsel %vm1255, %v7199, 0
      %v7394 = vsel %vm1255, %v7201, 0
      %v7397 = vsel %vm1255, %v7203, 0
      %v7400 = vsel %vm1255, %v7205, 0
      %v7403 = vsel %vm1255, %v7207, 0
      %v7406 = vsel %vm1255, %v7209, 0
      %v7409 = vsel %vm1255, %v7211, 0
      %v7412 = vsel %vm1255, %v7213, 0
      %v7415 = vsel %vm1255, %v7215, 0
      %v7418 = vsel %vm1255, %v7217, 0
      %v7421 = vsel %vm1255, %v7219, 0
      %v7424 = vsel %vm1255, %v7221, 0
      %v7427 = vsel %vm1460, %v6741, 0
      %7429 = vmatpush.bf16.msra.mxu0 0
      %7430 = vmatpush.bf16.msra.mxu0 0
      %7431 = vmatpush.bf16.msra.mxu0 0
      %7432 = vmatpush.bf16.msra.mxu0 0
      %7433 = vmatpush.bf16.msra.mxu0 0
      %7434 = vmatpush.bf16.msra.mxu0 0
      %7435 = vmatpush.bf16.msra.mxu0 0
      %7436 = vmatpush.bf16.msra.mxu0 %v7427
      %7437 = vmatmul.bf16.gmra.mxu0 %v7223
      %v7438 = vpop.f32.mrf.mxu0
      %v7439 = vadd.f32 0.0, %v7438
      %v7440 = vpop.f32.mrf.mxu0
      %v7441 = vadd.f32 0.0, %v7440
      %7442 = vmatmul.bf16.gmra.mxu0 %v7226
      %v7443 = vpop.f32.mrf.mxu0
      %v7444 = vadd.f32 0.0, %v7443
      %v7445 = vpop.f32.mrf.mxu0
      %v7446 = vadd.f32 0.0, %v7445
      %7447 = vmatmul.bf16.gmra.mxu0 %v7229
      %v7448 = vpop.f32.mrf.mxu0
      %v7449 = vadd.f32 0.0, %v7448
      %v7450 = vpop.f32.mrf.mxu0
      %v7451 = vadd.f32 0.0, %v7450
      %7452 = vmatmul.bf16.gmra.mxu0 %v7232
      %v7453 = vpop.f32.mrf.mxu0
      %v7454 = vadd.f32 0.0, %v7453
      %v7455 = vpop.f32.mrf.mxu0
      %v7456 = vadd.f32 0.0, %v7455
      %7457 = vmatmul.bf16.gmra.mxu0 %v7235
      %v7458 = vpop.f32.mrf.mxu0
      %v7459 = vadd.f32 0.0, %v7458
      %v7460 = vpop.f32.mrf.mxu0
      %v7461 = vadd.f32 0.0, %v7460
      %7462 = vmatmul.bf16.gmra.mxu0 %v7238
      %v7463 = vpop.f32.mrf.mxu0
      %v7464 = vadd.f32 0.0, %v7463
      %v7465 = vpop.f32.mrf.mxu0
      %v7466 = vadd.f32 0.0, %v7465
      %7467 = vmatmul.bf16.gmra.mxu0 %v7241
      %v7468 = vpop.f32.mrf.mxu0
      %v7469 = vadd.f32 0.0, %v7468
      %v7470 = vpop.f32.mrf.mxu0
      %v7471 = vadd.f32 0.0, %v7470
      %7472 = vmatmul.bf16.gmra.mxu0 %v7244
      %v7473 = vpop.f32.mrf.mxu0
      %v7474 = vadd.f32 0.0, %v7473
      %v7475 = vpop.f32.mrf.mxu0
      %v7476 = vadd.f32 0.0, %v7475
      %7477 = vmatmul.bf16.gmra.mxu0 %v7247
      %v7478 = vpop.f32.mrf.mxu0
      %v7479 = vadd.f32 0.0, %v7478
      %v7480 = vpop.f32.mrf.mxu0
      %v7481 = vadd.f32 0.0, %v7480
      %7482 = vmatmul.bf16.gmra.mxu0 %v7250
      %v7483 = vpop.f32.mrf.mxu0
      %v7484 = vadd.f32 0.0, %v7483
      %v7485 = vpop.f32.mrf.mxu0
      %v7486 = vadd.f32 0.0, %v7485
      %7487 = vmatmul.bf16.gmra.mxu0 %v7253
      %v7488 = vpop.f32.mrf.mxu0
      %v7489 = vadd.f32 0.0, %v7488
      %v7490 = vpop.f32.mrf.mxu0
      %v7491 = vadd.f32 0.0, %v7490
      %7492 = vmatmul.bf16.gmra.mxu0 %v7256
      %v7493 = vpop.f32.mrf.mxu0
      %v7494 = vadd.f32 0.0, %v7493
      %v7495 = vpop.f32.mrf.mxu0
      %v7496 = vadd.f32 0.0, %v7495
      %7497 = vmatmul.bf16.gmra.mxu0 %v7259
      %v7498 = vpop.f32.mrf.mxu0
      %v7499 = vadd.f32 0.0, %v7498
      %v7500 = vpop.f32.mrf.mxu0
      %v7501 = vadd.f32 0.0, %v7500
      %7502 = vmatmul.bf16.gmra.mxu0 %v7262
      %v7503 = vpop.f32.mrf.mxu0
      %v7504 = vadd.f32 0.0, %v7503
      %v7505 = vpop.f32.mrf.mxu0
      %v7506 = vadd.f32 0.0, %v7505
      %7507 = vmatmul.bf16.gmra.mxu0 %v7265
      %v7508 = vpop.f32.mrf.mxu0
      %v7509 = vadd.f32 0.0, %v7508
      %v7510 = vpop.f32.mrf.mxu0
      %v7511 = vadd.f32 0.0, %v7510
      %7512 = vmatmul.bf16.gmra.mxu0 %v7268
      %v7513 = vpop.f32.mrf.mxu0
      %v7514 = vadd.f32 0.0, %v7513
      %v7515 = vpop.f32.mrf.mxu0
      %v7516 = vadd.f32 0.0, %v7515
      %7517 = vmatmul.bf16.gmra.mxu0 %v7271
      %v7518 = vpop.f32.mrf.mxu0
      %v7519 = vadd.f32 0.0, %v7518
      %v7520 = vpop.f32.mrf.mxu0
      %v7521 = vadd.f32 0.0, %v7520
      %7522 = vmatmul.bf16.gmra.mxu0 %v7274
      %v7523 = vpop.f32.mrf.mxu0
      %v7524 = vadd.f32 0.0, %v7523
      %v7525 = vpop.f32.mrf.mxu0
      %v7526 = vadd.f32 0.0, %v7525
      %7527 = vmatmul.bf16.gmra.mxu0 %v7277
      %v7528 = vpop.f32.mrf.mxu0
      %v7529 = vadd.f32 0.0, %v7528
      %v7530 = vpop.f32.mrf.mxu0
      %v7531 = vadd.f32 0.0, %v7530
      %7532 = vmatmul.bf16.gmra.mxu0 %v7280
      %v7533 = vpop.f32.mrf.mxu0
      %v7534 = vadd.f32 0.0, %v7533
      %v7535 = vpop.f32.mrf.mxu0
      %v7536 = vadd.f32 0.0, %v7535
      %7537 = vmatmul.bf16.gmra.mxu0 %v7283
      %v7538 = vpop.f32.mrf.mxu0
      %v7539 = vadd.f32 0.0, %v7538
      %v7540 = vpop.f32.mrf.mxu0
      %v7541 = vadd.f32 0.0, %v7540
      %7542 = vmatmul.bf16.gmra.mxu0 %v7286
      %v7543 = vpop.f32.mrf.mxu0
      %v7544 = vadd.f32 0.0, %v7543
      %v7545 = vpop.f32.mrf.mxu0
      %v7546 = vadd.f32 0.0, %v7545
      %7547 = vmatmul.bf16.gmra.mxu0 %v7289
      %v7548 = vpop.f32.mrf.mxu0
      %v7549 = vadd.f32 0.0, %v7548
      %v7550 = vpop.f32.mrf.mxu0
      %v7551 = vadd.f32 0.0, %v7550
      %7552 = vmatmul.bf16.gmra.mxu0 %v7292
      %v7553 = vpop.f32.mrf.mxu0
      %v7554 = vadd.f32 0.0, %v7553
      %v7555 = vpop.f32.mrf.mxu0
      %v7556 = vadd.f32 0.0, %v7555
      %7557 = vmatmul.bf16.gmra.mxu0 %v7295
      %v7558 = vpop.f32.mrf.mxu0
      %v7559 = vadd.f32 0.0, %v7558
      %v7560 = vpop.f32.mrf.mxu0
      %v7561 = vadd.f32 0.0, %v7560
      %7562 = vmatmul.bf16.gmra.mxu0 %v7298
      %v7563 = vpop.f32.mrf.mxu0
      %v7564 = vadd.f32 0.0, %v7563
      %v7565 = vpop.f32.mrf.mxu0
      %v7566 = vadd.f32 0.0, %v7565
      %7567 = vmatmul.bf16.gmra.mxu0 %v7301
      %v7568 = vpop.f32.mrf.mxu0
      %v7569 = vadd.f32 0.0, %v7568
      %v7570 = vpop.f32.mrf.mxu0
      %v7571 = vadd.f32 0.0, %v7570
      %7572 = vmatmul.bf16.gmra.mxu0 %v7304
      %v7573 = vpop.f32.mrf.mxu0
      %v7574 = vadd.f32 0.0, %v7573
      %v7575 = vpop.f32.mrf.mxu0
      %v7576 = vadd.f32 0.0, %v7575
      %7577 = vmatmul.bf16.gmra.mxu0 %v7307
      %v7578 = vpop.f32.mrf.mxu0
      %v7579 = vadd.f32 0.0, %v7578
      %v7580 = vpop.f32.mrf.mxu0
      %v7581 = vadd.f32 0.0, %v7580
      %7582 = vmatmul.bf16.gmra.mxu0 %v7310
      %v7583 = vpop.f32.mrf.mxu0
      %v7584 = vadd.f32 0.0, %v7583
      %v7585 = vpop.f32.mrf.mxu0
      %v7586 = vadd.f32 0.0, %v7585
      %7587 = vmatmul.bf16.gmra.mxu0 %v7313
      %v7588 = vpop.f32.mrf.mxu0
      %v7589 = vadd.f32 0.0, %v7588
      %v7590 = vpop.f32.mrf.mxu0
      %v7591 = vadd.f32 0.0, %v7590
      %7592 = vmatmul.bf16.gmra.mxu0 %v7316
      %v7593 = vpop.f32.mrf.mxu0
      %v7594 = vadd.f32 0.0, %v7593
      %v7595 = vpop.f32.mrf.mxu0
      %v7596 = vadd.f32 0.0, %v7595
      %7597 = vmatmul.bf16.gmra.mxu0 %v7319
      %v7598 = vpop.f32.mrf.mxu0
      %v7599 = vadd.f32 0.0, %v7598
      %v7600 = vpop.f32.mrf.mxu0
      %v7601 = vadd.f32 0.0, %v7600
      %7602 = vmatmul.bf16.gmra.mxu0 %v7322
      %v7603 = vpop.f32.mrf.mxu0
      %v7604 = vadd.f32 0.0, %v7603
      %v7605 = vpop.f32.mrf.mxu0
      %v7606 = vadd.f32 0.0, %v7605
      %7607 = vmatmul.bf16.gmra.mxu0 %v7325
      %v7608 = vpop.f32.mrf.mxu0
      %v7609 = vadd.f32 0.0, %v7608
      %v7610 = vpop.f32.mrf.mxu0
      %v7611 = vadd.f32 0.0, %v7610
      %7612 = vmatmul.bf16.gmra.mxu0 %v7328
      %v7613 = vpop.f32.mrf.mxu0
      %v7614 = vadd.f32 0.0, %v7613
      %v7615 = vpop.f32.mrf.mxu0
      %v7616 = vadd.f32 0.0, %v7615
      %7617 = vmatmul.bf16.gmra.mxu0 %v7331
      %v7618 = vpop.f32.mrf.mxu0
      %v7619 = vadd.f32 0.0, %v7618
      %v7620 = vpop.f32.mrf.mxu0
      %v7621 = vadd.f32 0.0, %v7620
      %7622 = vmatmul.bf16.gmra.mxu0 %v7334
      %v7623 = vpop.f32.mrf.mxu0
      %v7624 = vadd.f32 0.0, %v7623
      %v7625 = vpop.f32.mrf.mxu0
      %v7626 = vadd.f32 0.0, %v7625
      %7627 = vmatmul.bf16.gmra.mxu0 %v7337
      %v7628 = vpop.f32.mrf.mxu0
      %v7629 = vadd.f32 0.0, %v7628
      %v7630 = vpop.f32.mrf.mxu0
      %v7631 = vadd.f32 0.0, %v7630
      %7632 = vmatmul.bf16.gmra.mxu0 %v7340
      %v7633 = vpop.f32.mrf.mxu0
      %v7634 = vadd.f32 0.0, %v7633
      %v7635 = vpop.f32.mrf.mxu0
      %v7636 = vadd.f32 0.0, %v7635
      %7637 = vmatmul.bf16.gmra.mxu0 %v7343
      %v7638 = vpop.f32.mrf.mxu0
      %v7639 = vadd.f32 0.0, %v7638
      %v7640 = vpop.f32.mrf.mxu0
      %v7641 = vadd.f32 0.0, %v7640
      %7642 = vmatmul.bf16.gmra.mxu0 %v7346
      %v7643 = vpop.f32.mrf.mxu0
      %v7644 = vadd.f32 0.0, %v7643
      %v7645 = vpop.f32.mrf.mxu0
      %v7646 = vadd.f32 0.0, %v7645
      %7647 = vmatmul.bf16.gmra.mxu0 %v7349
      %v7648 = vpop.f32.mrf.mxu0
      %v7649 = vadd.f32 0.0, %v7648
      %v7650 = vpop.f32.mrf.mxu0
      %v7651 = vadd.f32 0.0, %v7650
      %7652 = vmatmul.bf16.gmra.mxu0 %v7352
      %v7653 = vpop.f32.mrf.mxu0
      %v7654 = vadd.f32 0.0, %v7653
      %v7655 = vpop.f32.mrf.mxu0
      %v7656 = vadd.f32 0.0, %v7655
      %7657 = vmatmul.bf16.gmra.mxu0 %v7355
      %v7658 = vpop.f32.mrf.mxu0
      %v7659 = vadd.f32 0.0, %v7658
      %v7660 = vpop.f32.mrf.mxu0
      %v7661 = vadd.f32 0.0, %v7660
      %7662 = vmatmul.bf16.gmra.mxu0 %v7358
      %v7663 = vpop.f32.mrf.mxu0
      %v7664 = vadd.f32 0.0, %v7663
      %v7665 = vpop.f32.mrf.mxu0
      %v7666 = vadd.f32 0.0, %v7665
      %7667 = vmatmul.bf16.gmra.mxu0 %v7361
      %v7668 = vpop.f32.mrf.mxu0
      %v7669 = vadd.f32 0.0, %v7668
      %v7670 = vpop.f32.mrf.mxu0
      %v7671 = vadd.f32 0.0, %v7670
      %7672 = vmatmul.bf16.gmra.mxu0 %v7364
      %v7673 = vpop.f32.mrf.mxu0
      %v7674 = vadd.f32 0.0, %v7673
      %v7675 = vpop.f32.mrf.mxu0
      %v7676 = vadd.f32 0.0, %v7675
      %7677 = vmatmul.bf16.gmra.mxu0 %v7367
      %v7678 = vpop.f32.mrf.mxu0
      %v7679 = vadd.f32 0.0, %v7678
      %v7680 = vpop.f32.mrf.mxu0
      %v7681 = vadd.f32 0.0, %v7680
      %7682 = vmatmul.bf16.gmra.mxu0 %v7370
      %v7683 = vpop.f32.mrf.mxu0
      %v7684 = vadd.f32 0.0, %v7683
      %v7685 = vpop.f32.mrf.mxu0
      %v7686 = vadd.f32 0.0, %v7685
      %7687 = vmatmul.bf16.gmra.mxu0 %v7373
      %v7688 = vpop.f32.mrf.mxu0
      %v7689 = vadd.f32 0.0, %v7688
      %v7690 = vpop.f32.mrf.mxu0
      %v7691 = vadd.f32 0.0, %v7690
      %7692 = vmatmul.bf16.gmra.mxu0 %v7376
      %v7693 = vpop.f32.mrf.mxu0
      %v7694 = vadd.f32 0.0, %v7693
      %v7695 = vpop.f32.mrf.mxu0
      %v7696 = vadd.f32 0.0, %v7695
      %7697 = vmatmul.bf16.gmra.mxu0 %v7379
      %v7698 = vpop.f32.mrf.mxu0
      %v7699 = vadd.f32 0.0, %v7698
      %v7700 = vpop.f32.mrf.mxu0
      %v7701 = vadd.f32 0.0, %v7700
      %7702 = vmatmul.bf16.gmra.mxu0 %v7382
      %v7703 = vpop.f32.mrf.mxu0
      %v7704 = vadd.f32 0.0, %v7703
      %v7705 = vpop.f32.mrf.mxu0
      %v7706 = vadd.f32 0.0, %v7705
      %7707 = vmatmul.bf16.gmra.mxu0 %v7385
      %v7708 = vpop.f32.mrf.mxu0
      %v7709 = vadd.f32 0.0, %v7708
      %v7710 = vpop.f32.mrf.mxu0
      %v7711 = vadd.f32 0.0, %v7710
      %7712 = vmatmul.bf16.gmra.mxu0 %v7388
      %v7713 = vpop.f32.mrf.mxu0
      %v7714 = vadd.f32 0.0, %v7713
      %v7715 = vpop.f32.mrf.mxu0
      %v7716 = vadd.f32 0.0, %v7715
      %7717 = vmatmul.bf16.gmra.mxu0 %v7391
      %v7718 = vpop.f32.mrf.mxu0
      %v7719 = vadd.f32 0.0, %v7718
      %v7720 = vpop.f32.mrf.mxu0
      %v7721 = vadd.f32 0.0, %v7720
      %7722 = vmatmul.bf16.gmra.mxu0 %v7394
      %v7723 = vpop.f32.mrf.mxu0
      %v7724 = vadd.f32 0.0, %v7723
      %v7725 = vpop.f32.mrf.mxu0
      %v7726 = vadd.f32 0.0, %v7725
      %7727 = vmatmul.bf16.gmra.mxu0 %v7397
      %v7728 = vpop.f32.mrf.mxu0
      %v7729 = vadd.f32 0.0, %v7728
      %v7730 = vpop.f32.mrf.mxu0
      %v7731 = vadd.f32 0.0, %v7730
      %7732 = vmatmul.bf16.gmra.mxu0 %v7400
      %v7733 = vpop.f32.mrf.mxu0
      %v7734 = vadd.f32 0.0, %v7733
      %v7735 = vpop.f32.mrf.mxu0
      %v7736 = vadd.f32 0.0, %v7735
      %7737 = vmatmul.bf16.gmra.mxu0 %v7403
      %v7738 = vpop.f32.mrf.mxu0
      %v7739 = vadd.f32 0.0, %v7738
      %v7740 = vpop.f32.mrf.mxu0
      %v7741 = vadd.f32 0.0, %v7740
      %7742 = vmatmul.bf16.gmra.mxu0 %v7406
      %v7743 = vpop.f32.mrf.mxu0
      %v7744 = vadd.f32 0.0, %v7743
      %v7745 = vpop.f32.mrf.mxu0
      %v7746 = vadd.f32 0.0, %v7745
      %7747 = vmatmul.bf16.gmra.mxu0 %v7409
      %v7748 = vpop.f32.mrf.mxu0
      %v7749 = vadd.f32 0.0, %v7748
      %v7750 = vpop.f32.mrf.mxu0
      %v7751 = vadd.f32 0.0, %v7750
      %7752 = vmatmul.bf16.gmra.mxu0 %v7412
      %v7753 = vpop.f32.mrf.mxu0
      %v7754 = vadd.f32 0.0, %v7753
      %v7755 = vpop.f32.mrf.mxu0
      %v7756 = vadd.f32 0.0, %v7755
      %7757 = vmatmul.bf16.gmra.mxu0 %v7415
      %v7758 = vpop.f32.mrf.mxu0
      %v7759 = vadd.f32 0.0, %v7758
      %v7760 = vpop.f32.mrf.mxu0
      %v7761 = vadd.f32 0.0, %v7760
      %7762 = vmatmul.bf16.gmra.mxu0 %v7418
      %v7763 = vpop.f32.mrf.mxu0
      %v7764 = vadd.f32 0.0, %v7763
      %v7765 = vpop.f32.mrf.mxu0
      %v7766 = vadd.f32 0.0, %v7765
      %7767 = vmatmul.bf16.gmra.mxu0 %v7421
      %v7768 = vpop.f32.mrf.mxu0
      %v7769 = vadd.f32 0.0, %v7768
      %v7770 = vpop.f32.mrf.mxu0
      %v7771 = vadd.f32 0.0, %v7770
      %7772 = vmatmul.bf16.gmra.mxu0 %v7424
      %v7773 = vpop.f32.mrf.mxu0
      %v7774 = vadd.f32 0.0, %v7773
      %v7775 = vpop.f32.mrf.mxu0
      %v7776 = vadd.f32 0.0, %v7775
      %7777 = vdwg.mxu0
      %v7778 = vadd.f32 %v6467, %v7439
      %v7779 = vadd.f32 %v6468, %v7441
      %v7780 = vadd.f32 %v6469, %v7444
      %v7781 = vadd.f32 %v6470, %v7446
      %v7782 = vadd.f32 %v6471, %v7449
      %v7783 = vadd.f32 %v6472, %v7451
      %v7784 = vadd.f32 %v6473, %v7454
      %v7785 = vadd.f32 %v6474, %v7456
      %v7786 = vadd.f32 %v6475, %v7459
      %v7787 = vadd.f32 %v6476, %v7461
      %v7788 = vadd.f32 %v6477, %v7464
      %v7789 = vadd.f32 %v6478, %v7466
      %v7790 = vadd.f32 %v6479, %v7469
      %v7791 = vadd.f32 %v6480, %v7471
      %v7792 = vadd.f32 %v6481, %v7474
      %v7793 = vadd.f32 %v6482, %v7476
      %v7794 = vadd.f32 %v6483, %v7479
      %v7795 = vadd.f32 %v6484, %v7481
      %v7796 = vadd.f32 %v6485, %v7484
      %v7797 = vadd.f32 %v6486, %v7486
      %v7798 = vadd.f32 %v6487, %v7489
      %v7799 = vadd.f32 %v6488, %v7491
      %v7800 = vadd.f32 %v6489, %v7494
      %v7801 = vadd.f32 %v6490, %v7496
      %v7802 = vadd.f32 %v6491, %v7499
      %v7803 = vadd.f32 %v6492, %v7501
      %v7804 = vadd.f32 %v6493, %v7504
      %v7805 = vadd.f32 %v6494, %v7506
      %v7806 = vadd.f32 %v6495, %v7509
      %v7807 = vadd.f32 %v6496, %v7511
      %v7808 = vadd.f32 %v6497, %v7514
      %v7809 = vadd.f32 %v6498, %v7516
      %v7810 = vadd.f32 %v6499, %v7519
      %v7811 = vadd.f32 %v6500, %v7521
      %v7812 = vadd.f32 %v6501, %v7524
      %v7813 = vadd.f32 %v6502, %v7526
      %v7814 = vadd.f32 %v6503, %v7529
      %v7815 = vadd.f32 %v6504, %v7531
      %v7816 = vadd.f32 %v6505, %v7534
      %v7817 = vadd.f32 %v6506, %v7536
      %v7818 = vadd.f32 %v6507, %v7539
      %v7819 = vadd.f32 %v6508, %v7541
      %v7820 = vadd.f32 %v6509, %v7544
      %v7821 = vadd.f32 %v6510, %v7546
      %v7822 = vadd.f32 %v6511, %v7549
      %v7823 = vadd.f32 %v6512, %v7551
      %v7824 = vadd.f32 %v6513, %v7554
      %v7825 = vadd.f32 %v6514, %v7556
      %v7826 = vadd.f32 %v6515, %v7559
      %v7827 = vadd.f32 %v6516, %v7561
      %v7828 = vadd.f32 %v6517, %v7564
      %v7829 = vadd.f32 %v6518, %v7566
      %v7830 = vadd.f32 %v6519, %v7569
      %v7831 = vadd.f32 %v6520, %v7571
      %v7832 = vadd.f32 %v6521, %v7574
      %v7833 = vadd.f32 %v6522, %v7576
      %v7834 = vadd.f32 %v6523, %v7579
      %v7835 = vadd.f32 %v6524, %v7581
      %v7836 = vadd.f32 %v6525, %v7584
      %v7837 = vadd.f32 %v6526, %v7586
      %v7838 = vadd.f32 %v6527, %v7589
      %v7839 = vadd.f32 %v6528, %v7591
      %v7840 = vadd.f32 %v6529, %v7594
      %v7841 = vadd.f32 %v6530, %v7596
      %v7842 = vadd.f32 %v6531, %v7599
      %v7843 = vadd.f32 %v6532, %v7601
      %v7844 = vadd.f32 %v6533, %v7604
      %v7845 = vadd.f32 %v6534, %v7606
      %v7846 = vadd.f32 %v6535, %v7609
      %v7847 = vadd.f32 %v6536, %v7611
      %v7848 = vadd.f32 %v6537, %v7614
      %v7849 = vadd.f32 %v6538, %v7616
      %v7850 = vadd.f32 %v6539, %v7619
      %v7851 = vadd.f32 %v6540, %v7621
      %v7852 = vadd.f32 %v6541, %v7624
      %v7853 = vadd.f32 %v6542, %v7626
      %v7854 = vadd.f32 %v6543, %v7629
      %v7855 = vadd.f32 %v6544, %v7631
      %v7856 = vadd.f32 %v6545, %v7634
      %v7857 = vadd.f32 %v6546, %v7636
      %v7858 = vadd.f32 %v6547, %v7639
      %v7859 = vadd.f32 %v6548, %v7641
      %v7860 = vadd.f32 %v6549, %v7644
      %v7861 = vadd.f32 %v6550, %v7646
      %v7862 = vadd.f32 %v6551, %v7649
      %v7863 = vadd.f32 %v6552, %v7651
      %v7864 = vadd.f32 %v6553, %v7654
      %v7865 = vadd.f32 %v6554, %v7656
      %v7866 = vadd.f32 %v6555, %v7659
      %v7867 = vadd.f32 %v6556, %v7661
      %v7868 = vadd.f32 %v6557, %v7664
      %v7869 = vadd.f32 %v6558, %v7666
      %v7870 = vadd.f32 %v6559, %v7669
      %v7871 = vadd.f32 %v6560, %v7671
      %v7872 = vadd.f32 %v6561, %v7674
      %v7873 = vadd.f32 %v6562, %v7676
      %v7874 = vadd.f32 %v6563, %v7679
      %v7875 = vadd.f32 %v6564, %v7681
      %v7876 = vadd.f32 %v6565, %v7684
      %v7877 = vadd.f32 %v6566, %v7686
      %v7878 = vadd.f32 %v6567, %v7689
      %v7879 = vadd.f32 %v6568, %v7691
      %v7880 = vadd.f32 %v6569, %v7694
      %v7881 = vadd.f32 %v6570, %v7696
      %v7882 = vadd.f32 %v6571, %v7699
      %v7883 = vadd.f32 %v6572, %v7701
      %v7884 = vadd.f32 %v6573, %v7704
      %v7885 = vadd.f32 %v6574, %v7706
      %v7886 = vadd.f32 %v6575, %v7709
      %v7887 = vadd.f32 %v6576, %v7711
      %v7888 = vadd.f32 %v6577, %v7714
      %v7889 = vadd.f32 %v6578, %v7716
      %v7890 = vadd.f32 %v6579, %v7719
      %v7891 = vadd.f32 %v6580, %v7721
      %v7892 = vadd.f32 %v6581, %v7724
      %v7893 = vadd.f32 %v6582, %v7726
      %v7894 = vadd.f32 %v6583, %v7729
      %v7895 = vadd.f32 %v6584, %v7731
      %v7896 = vadd.f32 %v6585, %v7734
      %v7897 = vadd.f32 %v6586, %v7736
      %v7898 = vadd.f32 %v6587, %v7739
      %v7899 = vadd.f32 %v6588, %v7741
      %v7900 = vadd.f32 %v6589, %v7744
      %v7901 = vadd.f32 %v6590, %v7746
      %v7902 = vadd.f32 %v6591, %v7749
      %v7903 = vadd.f32 %v6592, %v7751
      %v7904 = vadd.f32 %v6593, %v7754
      %v7905 = vadd.f32 %v6594, %v7756
      %v7906 = vadd.f32 %v6595, %v7759
      %v7907 = vadd.f32 %v6596, %v7761
      %v7908 = vadd.f32 %v6597, %v7764
      %v7909 = vadd.f32 %v6598, %v7766
      %v7910 = vadd.f32 %v6599, %v7769
      %v7911 = vadd.f32 %v6600, %v7771
      %v7912 = vadd.f32 %v6601, %v7774
      %v7913 = vadd.f32 %v6602, %v7776
      %v7914 = vld [vmem:[%s206 + $0x240] sm:$0x7]
      %s7915 = scalar_lea.vmem %s210, 28
      %v7916 = vld [vmem:[%s7915] sm:$0xf]
      %v7918 = vunpack.c.l.b16 %v7914
      %v7919 = vpack.c.b16 %v7918, %v7918
      %vm7920 = vsmask.f32 5376
      %v7922 = vshrl.u32 %v7016, 16
      %v7924 = vrot.slane %v7922, 2
      %v7925 = vshll.u32 %v7016, 16
      %v7927 = vrot.slane %v7925, 3
      %v7928 = vor.u32 %v7924, %v7927
      %v7930 = vshrl.u32 %v7017, 16
      %v7932 = vrot.slane %v7930, 2
      %v7933 = vshll.u32 %v7017, 16
      %v7935 = vrot.slane %v7933, 3
      %v7936 = vor.u32 %v7932, %v7935
      %v7937 = vsel %vm7920, %v7928, %v7936
      %v7939 = vshrl.u32 %v7018, 16
      %v7941 = vrot.slane %v7939, 2
      %v7942 = vshll.u32 %v7018, 16
      %v7944 = vrot.slane %v7942, 3
      %v7945 = vor.u32 %v7941, %v7944
      %v7946 = vsel %vm7920, %v7936, %v7945
      %v7948 = vshrl.u32 %v7019, 16
      %v7950 = vrot.slane %v7948, 2
      %v7951 = vshll.u32 %v7019, 16
      %v7953 = vrot.slane %v7951, 3
      %v7954 = vor.u32 %v7950, %v7953
      %v7955 = vsel %vm7920, %v7945, %v7954
      %v7957 = vshrl.u32 %v7020, 16
      %v7959 = vrot.slane %v7957, 2
      %v7960 = vshll.u32 %v7020, 16
      %v7962 = vrot.slane %v7960, 3
      %v7963 = vor.u32 %v7959, %v7962
      %v7964 = vsel %vm7920, %v7954, %v7963
      %v7966 = vshrl.u32 %v7021, 16
      %v7968 = vrot.slane %v7966, 2
      %v7969 = vshll.u32 %v7021, 16
      %v7971 = vrot.slane %v7969, 3
      %v7972 = vor.u32 %v7968, %v7971
      %v7973 = vsel %vm7920, %v7963, %v7972
      %v7975 = vshrl.u32 %v7022, 16
      %v7977 = vrot.slane %v7975, 2
      %v7978 = vshll.u32 %v7022, 16
      %v7980 = vrot.slane %v7978, 3
      %v7981 = vor.u32 %v7977, %v7980
      %v7982 = vsel %vm7920, %v7972, %v7981
      %v7984 = vshrl.u32 %v7023, 16
      %v7986 = vrot.slane %v7984, 2
      %v7987 = vshll.u32 %v7023, 16
      %v7989 = vrot.slane %v7987, 3
      %v7990 = vor.u32 %v7986, %v7989
      %v7991 = vsel %vm7920, %v7981, %v7990
      %v7993 = vshrl.u32 %v7024, 16
      %v7995 = vrot.slane %v7993, 2
      %v7996 = vshll.u32 %v7024, 16
      %v7998 = vrot.slane %v7996, 3
      %v7999 = vor.u32 %v7995, %v7998
      %v8000 = vsel %vm7920, %v7990, %v7999
      %v8002 = vshrl.u32 %v7025, 16
      %v8004 = vrot.slane %v8002, 2
      %v8005 = vshll.u32 %v7025, 16
      %v8007 = vrot.slane %v8005, 3
      %v8008 = vor.u32 %v8004, %v8007
      %v8009 = vsel %vm7920, %v7999, %v8008
      %v8011 = vshrl.u32 %v7026, 16
      %v8013 = vrot.slane %v8011, 2
      %v8014 = vshll.u32 %v7026, 16
      %v8016 = vrot.slane %v8014, 3
      %v8017 = vor.u32 %v8013, %v8016
      %v8018 = vsel %vm7920, %v8008, %v8017
      %v8020 = vshrl.u32 %v7027, 16
      %v8022 = vrot.slane %v8020, 2
      %v8023 = vshll.u32 %v7027, 16
      %v8025 = vrot.slane %v8023, 3
      %v8026 = vor.u32 %v8022, %v8025
      %v8027 = vsel %vm7920, %v8017, %v8026
      %v8029 = vshrl.u32 %v7028, 16
      %v8031 = vrot.slane %v8029, 2
      %v8032 = vshll.u32 %v7028, 16
      %v8034 = vrot.slane %v8032, 3
      %v8035 = vor.u32 %v8031, %v8034
      %v8036 = vsel %vm7920, %v8026, %v8035
      %v8038 = vshrl.u32 %v7029, 16
      %v8040 = vrot.slane %v8038, 2
      %v8041 = vshll.u32 %v7029, 16
      %v8043 = vrot.slane %v8041, 3
      %v8044 = vor.u32 %v8040, %v8043
      %v8045 = vsel %vm7920, %v8035, %v8044
      %v8047 = vshrl.u32 %v7030, 16
      %v8049 = vrot.slane %v8047, 2
      %v8050 = vshll.u32 %v7030, 16
      %v8052 = vrot.slane %v8050, 3
      %v8053 = vor.u32 %v8049, %v8052
      %v8054 = vsel %vm7920, %v8044, %v8053
      %v8056 = vshrl.u32 %v7031, 16
      %v8058 = vrot.slane %v8056, 2
      %v8059 = vshll.u32 %v7031, 16
      %v8061 = vrot.slane %v8059, 3
      %v8062 = vor.u32 %v8058, %v8061
      %v8063 = vsel %vm7920, %v8053, %v8062
      %v8065 = vshrl.u32 %v7032, 16
      %v8067 = vrot.slane %v8065, 2
      %v8068 = vshll.u32 %v7032, 16
      %v8070 = vrot.slane %v8068, 3
      %v8071 = vor.u32 %v8067, %v8070
      %v8072 = vsel %vm7920, %v8062, %v8071
      %v8074 = vshrl.u32 %v7033, 16
      %v8076 = vrot.slane %v8074, 2
      %v8077 = vshll.u32 %v7033, 16
      %v8079 = vrot.slane %v8077, 3
      %v8080 = vor.u32 %v8076, %v8079
      %v8081 = vsel %vm7920, %v8071, %v8080
      %v8083 = vshrl.u32 %v7034, 16
      %v8085 = vrot.slane %v8083, 2
      %v8086 = vshll.u32 %v7034, 16
      %v8088 = vrot.slane %v8086, 3
      %v8089 = vor.u32 %v8085, %v8088
      %v8090 = vsel %vm7920, %v8080, %v8089
      %v8092 = vshrl.u32 %v7035, 16
      %v8094 = vrot.slane %v8092, 2
      %v8095 = vshll.u32 %v7035, 16
      %v8097 = vrot.slane %v8095, 3
      %v8098 = vor.u32 %v8094, %v8097
      %v8099 = vsel %vm7920, %v8089, %v8098
      %v8101 = vshrl.u32 %v7036, 16
      %v8103 = vrot.slane %v8101, 2
      %v8104 = vshll.u32 %v7036, 16
      %v8106 = vrot.slane %v8104, 3
      %v8107 = vor.u32 %v8103, %v8106
      %v8108 = vsel %vm7920, %v8098, %v8107
      %v8110 = vshrl.u32 %v7037, 16
      %v8112 = vrot.slane %v8110, 2
      %v8113 = vshll.u32 %v7037, 16
      %v8115 = vrot.slane %v8113, 3
      %v8116 = vor.u32 %v8112, %v8115
      %v8117 = vsel %vm7920, %v8107, %v8116
      %v8119 = vshrl.u32 %v7038, 16
      %v8121 = vrot.slane %v8119, 2
      %v8122 = vshll.u32 %v7038, 16
      %v8124 = vrot.slane %v8122, 3
      %v8125 = vor.u32 %v8121, %v8124
      %v8126 = vsel %vm7920, %v8116, %v8125
      %v8128 = vshrl.u32 %v7039, 16
      %v8130 = vrot.slane %v8128, 2
      %v8131 = vshll.u32 %v7039, 16
      %v8133 = vrot.slane %v8131, 3
      %v8134 = vor.u32 %v8130, %v8133
      %v8135 = vsel %vm7920, %v8125, %v8134
      %v8137 = vshrl.u32 %v7040, 16
      %v8139 = vrot.slane %v8137, 2
      %v8140 = vshll.u32 %v7040, 16
      %v8142 = vrot.slane %v8140, 3
      %v8143 = vor.u32 %v8139, %v8142
      %v8144 = vsel %vm7920, %v8134, %v8143
      %v8146 = vshrl.u32 %v7041, 16
      %v8148 = vrot.slane %v8146, 2
      %v8149 = vshll.u32 %v7041, 16
      %v8151 = vrot.slane %v8149, 3
      %v8152 = vor.u32 %v8148, %v8151
      %v8153 = vsel %vm7920, %v8143, %v8152
      %v8155 = vshrl.u32 %v7042, 16
      %v8157 = vrot.slane %v8155, 2
      %v8158 = vshll.u32 %v7042, 16
      %v8160 = vrot.slane %v8158, 3
      %v8161 = vor.u32 %v8157, %v8160
      %v8162 = vsel %vm7920, %v8152, %v8161
      %v8164 = vshrl.u32 %v7043, 16
      %v8166 = vrot.slane %v8164, 2
      %v8167 = vshll.u32 %v7043, 16
      %v8169 = vrot.slane %v8167, 3
      %v8170 = vor.u32 %v8166, %v8169
      %v8171 = vsel %vm7920, %v8161, %v8170
      %v8173 = vshrl.u32 %v7044, 16
      %v8175 = vrot.slane %v8173, 2
      %v8176 = vshll.u32 %v7044, 16
      %v8178 = vrot.slane %v8176, 3
      %v8179 = vor.u32 %v8175, %v8178
      %v8180 = vsel %vm7920, %v8170, %v8179
      %v8182 = vshrl.u32 %v7045, 16
      %v8184 = vrot.slane %v8182, 2
      %v8185 = vshll.u32 %v7045, 16
      %v8187 = vrot.slane %v8185, 3
      %v8188 = vor.u32 %v8184, %v8187
      %v8189 = vsel %vm7920, %v8179, %v8188
      %v8191 = vshrl.u32 %v7046, 16
      %v8193 = vrot.slane %v8191, 2
      %v8194 = vshll.u32 %v7046, 16
      %v8196 = vrot.slane %v8194, 3
      %v8197 = vor.u32 %v8193, %v8196
      %v8198 = vsel %vm7920, %v8188, %v8197
      %v8200 = vshrl.u32 %v7047, 16
      %v8202 = vrot.slane %v8200, 2
      %v8203 = vshll.u32 %v7047, 16
      %v8205 = vrot.slane %v8203, 3
      %v8206 = vor.u32 %v8202, %v8205
      %v8207 = vsel %vm7920, %v8197, %v8206
      %v8209 = vshrl.u32 %v7048, 16
      %v8211 = vrot.slane %v8209, 2
      %v8212 = vshll.u32 %v7048, 16
      %v8214 = vrot.slane %v8212, 3
      %v8215 = vor.u32 %v8211, %v8214
      %v8216 = vsel %vm7920, %v8206, %v8215
      %v8218 = vshrl.u32 %v7049, 16
      %v8220 = vrot.slane %v8218, 2
      %v8221 = vshll.u32 %v7049, 16
      %v8223 = vrot.slane %v8221, 3
      %v8224 = vor.u32 %v8220, %v8223
      %v8225 = vsel %vm7920, %v8215, %v8224
      %v8227 = vshrl.u32 %v7050, 16
      %v8229 = vrot.slane %v8227, 2
      %v8230 = vshll.u32 %v7050, 16
      %v8232 = vrot.slane %v8230, 3
      %v8233 = vor.u32 %v8229, %v8232
      %v8234 = vsel %vm7920, %v8224, %v8233
      %v8236 = vshrl.u32 %v7051, 16
      %v8238 = vrot.slane %v8236, 2
      %v8239 = vshll.u32 %v7051, 16
      %v8241 = vrot.slane %v8239, 3
      %v8242 = vor.u32 %v8238, %v8241
      %v8243 = vsel %vm7920, %v8233, %v8242
      %v8245 = vshrl.u32 %v7052, 16
      %v8247 = vrot.slane %v8245, 2
      %v8248 = vshll.u32 %v7052, 16
      %v8250 = vrot.slane %v8248, 3
      %v8251 = vor.u32 %v8247, %v8250
      %v8252 = vsel %vm7920, %v8242, %v8251
      %v8254 = vshrl.u32 %v7053, 16
      %v8256 = vrot.slane %v8254, 2
      %v8257 = vshll.u32 %v7053, 16
      %v8259 = vrot.slane %v8257, 3
      %v8260 = vor.u32 %v8256, %v8259
      %v8261 = vsel %vm7920, %v8251, %v8260
      %v8263 = vshrl.u32 %v7054, 16
      %v8265 = vrot.slane %v8263, 2
      %v8266 = vshll.u32 %v7054, 16
      %v8268 = vrot.slane %v8266, 3
      %v8269 = vor.u32 %v8265, %v8268
      %v8270 = vsel %vm7920, %v8260, %v8269
      %v8272 = vshrl.u32 %v7055, 16
      %v8274 = vrot.slane %v8272, 2
      %v8275 = vshll.u32 %v7055, 16
      %v8277 = vrot.slane %v8275, 3
      %v8278 = vor.u32 %v8274, %v8277
      %v8279 = vsel %vm7920, %v8269, %v8278
      %v8281 = vshrl.u32 %v7056, 16
      %v8283 = vrot.slane %v8281, 2
      %v8284 = vshll.u32 %v7056, 16
      %v8286 = vrot.slane %v8284, 3
      %v8287 = vor.u32 %v8283, %v8286
      %v8288 = vsel %vm7920, %v8278, %v8287
      %v8290 = vshrl.u32 %v7057, 16
      %v8292 = vrot.slane %v8290, 2
      %v8293 = vshll.u32 %v7057, 16
      %v8295 = vrot.slane %v8293, 3
      %v8296 = vor.u32 %v8292, %v8295
      %v8297 = vsel %vm7920, %v8287, %v8296
      %v8299 = vshrl.u32 %v7058, 16
      %v8301 = vrot.slane %v8299, 2
      %v8302 = vshll.u32 %v7058, 16
      %v8304 = vrot.slane %v8302, 3
      %v8305 = vor.u32 %v8301, %v8304
      %v8306 = vsel %vm7920, %v8296, %v8305
      %v8308 = vshrl.u32 %v7059, 16
      %v8310 = vrot.slane %v8308, 2
      %v8311 = vshll.u32 %v7059, 16
      %v8313 = vrot.slane %v8311, 3
      %v8314 = vor.u32 %v8310, %v8313
      %v8315 = vsel %vm7920, %v8305, %v8314
      %v8317 = vshrl.u32 %v7060, 16
      %v8319 = vrot.slane %v8317, 2
      %v8320 = vshll.u32 %v7060, 16
      %v8322 = vrot.slane %v8320, 3
      %v8323 = vor.u32 %v8319, %v8322
      %v8324 = vsel %vm7920, %v8314, %v8323
      %v8326 = vshrl.u32 %v7061, 16
      %v8328 = vrot.slane %v8326, 2
      %v8329 = vshll.u32 %v7061, 16
      %v8331 = vrot.slane %v8329, 3
      %v8332 = vor.u32 %v8328, %v8331
      %v8333 = vsel %vm7920, %v8323, %v8332
      %v8335 = vshrl.u32 %v7062, 16
      %v8337 = vrot.slane %v8335, 2
      %v8338 = vshll.u32 %v7062, 16
      %v8340 = vrot.slane %v8338, 3
      %v8341 = vor.u32 %v8337, %v8340
      %v8342 = vsel %vm7920, %v8332, %v8341
      %v8344 = vshrl.u32 %v7063, 16
      %v8346 = vrot.slane %v8344, 2
      %v8347 = vshll.u32 %v7063, 16
      %v8349 = vrot.slane %v8347, 3
      %v8350 = vor.u32 %v8346, %v8349
      %v8351 = vsel %vm7920, %v8341, %v8350
      %v8353 = vshrl.u32 %v7064, 16
      %v8355 = vrot.slane %v8353, 2
      %v8356 = vshll.u32 %v7064, 16
      %v8358 = vrot.slane %v8356, 3
      %v8359 = vor.u32 %v8355, %v8358
      %v8360 = vsel %vm7920, %v8350, %v8359
      %v8362 = vshrl.u32 %v7065, 16
      %v8364 = vrot.slane %v8362, 2
      %v8365 = vshll.u32 %v7065, 16
      %v8367 = vrot.slane %v8365, 3
      %v8368 = vor.u32 %v8364, %v8367
      %v8369 = vsel %vm7920, %v8359, %v8368
      %v8371 = vshrl.u32 %v7066, 16
      %v8373 = vrot.slane %v8371, 2
      %v8374 = vshll.u32 %v7066, 16
      %v8376 = vrot.slane %v8374, 3
      %v8377 = vor.u32 %v8373, %v8376
      %v8378 = vsel %vm7920, %v8368, %v8377
      %v8380 = vshrl.u32 %v7067, 16
      %v8382 = vrot.slane %v8380, 2
      %v8383 = vshll.u32 %v7067, 16
      %v8385 = vrot.slane %v8383, 3
      %v8386 = vor.u32 %v8382, %v8385
      %v8387 = vsel %vm7920, %v8377, %v8386
      %v8389 = vshrl.u32 %v7068, 16
      %v8391 = vrot.slane %v8389, 2
      %v8392 = vshll.u32 %v7068, 16
      %v8394 = vrot.slane %v8392, 3
      %v8395 = vor.u32 %v8391, %v8394
      %v8396 = vsel %vm7920, %v8386, %v8395
      %v8398 = vshrl.u32 %v7069, 16
      %v8400 = vrot.slane %v8398, 2
      %v8401 = vshll.u32 %v7069, 16
      %v8403 = vrot.slane %v8401, 3
      %v8404 = vor.u32 %v8400, %v8403
      %v8405 = vsel %vm7920, %v8395, %v8404
      %v8407 = vshrl.u32 %v7070, 16
      %v8409 = vrot.slane %v8407, 2
      %v8410 = vshll.u32 %v7070, 16
      %v8412 = vrot.slane %v8410, 3
      %v8413 = vor.u32 %v8409, %v8412
      %v8414 = vsel %vm7920, %v8404, %v8413
      %v8416 = vshrl.u32 %v7071, 16
      %v8418 = vrot.slane %v8416, 2
      %v8419 = vshll.u32 %v7071, 16
      %v8421 = vrot.slane %v8419, 3
      %v8422 = vor.u32 %v8418, %v8421
      %v8423 = vsel %vm7920, %v8413, %v8422
      %v8425 = vshrl.u32 %v7072, 16
      %v8427 = vrot.slane %v8425, 2
      %v8428 = vshll.u32 %v7072, 16
      %v8430 = vrot.slane %v8428, 3
      %v8431 = vor.u32 %v8427, %v8430
      %v8432 = vsel %vm7920, %v8422, %v8431
      %v8434 = vshrl.u32 %v7073, 16
      %v8436 = vrot.slane %v8434, 2
      %v8437 = vshll.u32 %v7073, 16
      %v8439 = vrot.slane %v8437, 3
      %v8440 = vor.u32 %v8436, %v8439
      %v8441 = vsel %vm7920, %v8431, %v8440
      %v8443 = vshrl.u32 %v7074, 16
      %v8445 = vrot.slane %v8443, 2
      %v8446 = vshll.u32 %v7074, 16
      %v8448 = vrot.slane %v8446, 3
      %v8449 = vor.u32 %v8445, %v8448
      %v8450 = vsel %vm7920, %v8440, %v8449
      %v8452 = vshrl.u32 %v7075, 16
      %v8454 = vrot.slane %v8452, 2
      %v8455 = vshll.u32 %v7075, 16
      %v8457 = vrot.slane %v8455, 3
      %v8458 = vor.u32 %v8454, %v8457
      %v8459 = vsel %vm7920, %v8449, %v8458
      %v8461 = vshrl.u32 %v7076, 16
      %v8463 = vrot.slane %v8461, 2
      %v8464 = vshll.u32 %v7076, 16
      %v8466 = vrot.slane %v8464, 3
      %v8467 = vor.u32 %v8463, %v8466
      %v8468 = vsel %vm7920, %v8458, %v8467
      %v8470 = vshrl.u32 %v7077, 16
      %v8472 = vrot.slane %v8470, 2
      %v8473 = vshll.u32 %v7077, 16
      %v8475 = vrot.slane %v8473, 3
      %v8476 = vor.u32 %v8472, %v8475
      %v8477 = vsel %vm7920, %v8467, %v8476
      %v8479 = vshrl.u32 %v7078, 16
      %v8481 = vrot.slane %v8479, 2
      %v8482 = vshll.u32 %v7078, 16
      %v8484 = vrot.slane %v8482, 3
      %v8485 = vor.u32 %v8481, %v8484
      %v8486 = vsel %vm7920, %v8476, %v8485
      %v8488 = vshrl.u32 %v7079, 16
      %v8490 = vrot.slane %v8488, 2
      %v8491 = vshll.u32 %v7079, 16
      %v8493 = vrot.slane %v8491, 3
      %v8494 = vor.u32 %v8490, %v8493
      %v8495 = vsel %vm7920, %v8485, %v8494
      %v8497 = vshrl.u32 %v7080, 16
      %v8499 = vrot.slane %v8497, 2
      %v8500 = vshll.u32 %v7080, 16
      %v8502 = vrot.slane %v8500, 3
      %v8503 = vor.u32 %v8499, %v8502
      %v8504 = vsel %vm7920, %v8494, %v8503
      %v8506 = vshrl.u32 %v7081, 16
      %v8508 = vrot.slane %v8506, 2
      %v8509 = vshll.u32 %v7081, 16
      %v8511 = vrot.slane %v8509, 3
      %v8512 = vor.u32 %v8508, %v8511
      %v8513 = vsel %vm7920, %v8503, %v8512
      %v8515 = vshrl.u32 %v7082, 16
      %v8517 = vrot.slane %v8515, 2
      %v8518 = vshll.u32 %v7082, 16
      %v8520 = vrot.slane %v8518, 3
      %v8521 = vor.u32 %v8517, %v8520
      %v8522 = vsel %vm7920, %v8512, %v8521
      %v8524 = vshrl.u32 %v7083, 16
      %v8526 = vrot.slane %v8524, 2
      %v8527 = vshll.u32 %v7083, 16
      %v8529 = vrot.slane %v8527, 3
      %v8530 = vor.u32 %v8526, %v8529
      %v8531 = vsel %vm7920, %v8521, %v8530
      %v8533 = vshrl.u32 %v7919, 16
      %v8535 = vrot.slane %v8533, 2
      %v8536 = vshll.u32 %v7919, 16
      %v8538 = vrot.slane %v8536, 3
      %v8539 = vor.u32 %v8535, %v8538
      %v8540 = vsel %vm7920, %v8530, %v8539
      %v8542 = vsel %vm1255, %v7937, 0
      %v8545 = vsel %vm1255, %v7946, 0
      %v8548 = vsel %vm1255, %v7955, 0
      %v8551 = vsel %vm1255, %v7964, 0
      %v8554 = vsel %vm1255, %v7973, 0
      %v8557 = vsel %vm1255, %v7982, 0
      %v8560 = vsel %vm1255, %v7991, 0
      %v8563 = vsel %vm1255, %v8000, 0
      %v8566 = vsel %vm1255, %v8009, 0
      %v8569 = vsel %vm1255, %v8018, 0
      %v8572 = vsel %vm1255, %v8027, 0
      %v8575 = vsel %vm1255, %v8036, 0
      %v8578 = vsel %vm1255, %v8045, 0
      %v8581 = vsel %vm1255, %v8054, 0
      %v8584 = vsel %vm1255, %v8063, 0
      %v8587 = vsel %vm1255, %v8072, 0
      %v8590 = vsel %vm1255, %v8081, 0
      %v8593 = vsel %vm1255, %v8090, 0
      %v8596 = vsel %vm1255, %v8099, 0
      %v8599 = vsel %vm1255, %v8108, 0
      %v8602 = vsel %vm1255, %v8117, 0
      %v8605 = vsel %vm1255, %v8126, 0
      %v8608 = vsel %vm1255, %v8135, 0
      %v8611 = vsel %vm1255, %v8144, 0
      %v8614 = vsel %vm1255, %v8153, 0
      %v8617 = vsel %vm1255, %v8162, 0
      %v8620 = vsel %vm1255, %v8171, 0
      %v8623 = vsel %vm1255, %v8180, 0
      %v8626 = vsel %vm1255, %v8189, 0
      %v8629 = vsel %vm1255, %v8198, 0
      %v8632 = vsel %vm1255, %v8207, 0
      %v8635 = vsel %vm1255, %v8216, 0
      %v8638 = vsel %vm1255, %v8225, 0
      %v8641 = vsel %vm1255, %v8234, 0
      %v8644 = vsel %vm1255, %v8243, 0
      %v8647 = vsel %vm1255, %v8252, 0
      %v8650 = vsel %vm1255, %v8261, 0
      %v8653 = vsel %vm1255, %v8270, 0
      %v8656 = vsel %vm1255, %v8279, 0
      %v8659 = vsel %vm1255, %v8288, 0
      %v8662 = vsel %vm1255, %v8297, 0
      %v8665 = vsel %vm1255, %v8306, 0
      %v8668 = vsel %vm1255, %v8315, 0
      %v8671 = vsel %vm1255, %v8324, 0
      %v8674 = vsel %vm1255, %v8333, 0
      %v8677 = vsel %vm1255, %v8342, 0
      %v8680 = vsel %vm1255, %v8351, 0
      %v8683 = vsel %vm1255, %v8360, 0
      %v8686 = vsel %vm1255, %v8369, 0
      %v8689 = vsel %vm1255, %v8378, 0
      %v8692 = vsel %vm1255, %v8387, 0
      %v8695 = vsel %vm1255, %v8396, 0
      %v8698 = vsel %vm1255, %v8405, 0
      %v8701 = vsel %vm1255, %v8414, 0
      %v8704 = vsel %vm1255, %v8423, 0
      %v8707 = vsel %vm1255, %v8432, 0
      %v8710 = vsel %vm1255, %v8441, 0
      %v8713 = vsel %vm1255, %v8450, 0
      %v8716 = vsel %vm1255, %v8459, 0
      %v8719 = vsel %vm1255, %v8468, 0
      %v8722 = vsel %vm1255, %v8477, 0
      %v8725 = vsel %vm1255, %v8486, 0
      %v8728 = vsel %vm1255, %v8495, 0
      %v8731 = vsel %vm1255, %v8504, 0
      %v8734 = vsel %vm1255, %v8513, 0
      %v8737 = vsel %vm1255, %v8522, 0
      %v8740 = vsel %vm1255, %v8531, 0
      %v8743 = vsel %vm1255, %v8540, 0
      %v8746 = vsel %vm1460, %v7916, 0
      %8748 = vmatpush.bf16.msra.mxu0 0
      %8749 = vmatpush.bf16.msra.mxu0 0
      %8750 = vmatpush.bf16.msra.mxu0 0
      %8751 = vmatpush.bf16.msra.mxu0 0
      %8752 = vmatpush.bf16.msra.mxu0 0
      %8753 = vmatpush.bf16.msra.mxu0 0
      %8754 = vmatpush.bf16.msra.mxu0 0
      %8755 = vmatpush.bf16.msra.mxu0 %v8746
      %8756 = vmatmul.bf16.gmra.mxu0 %v8542
      %v8757 = vpop.f32.mrf.mxu0
      %v8758 = vadd.f32 0.0, %v8757
      %v8759 = vpop.f32.mrf.mxu0
      %v8760 = vadd.f32 0.0, %v8759
      %8761 = vmatmul.bf16.gmra.mxu0 %v8545
      %v8762 = vpop.f32.mrf.mxu0
      %v8763 = vadd.f32 0.0, %v8762
      %v8764 = vpop.f32.mrf.mxu0
      %v8765 = vadd.f32 0.0, %v8764
      %8766 = vmatmul.bf16.gmra.mxu0 %v8548
      %v8767 = vpop.f32.mrf.mxu0
      %v8768 = vadd.f32 0.0, %v8767
      %v8769 = vpop.f32.mrf.mxu0
      %v8770 = vadd.f32 0.0, %v8769
      %8771 = vmatmul.bf16.gmra.mxu0 %v8551
      %v8772 = vpop.f32.mrf.mxu0
      %v8773 = vadd.f32 0.0, %v8772
      %v8774 = vpop.f32.mrf.mxu0
      %v8775 = vadd.f32 0.0, %v8774
      %8776 = vmatmul.bf16.gmra.mxu0 %v8554
      %v8777 = vpop.f32.mrf.mxu0
      %v8778 = vadd.f32 0.0, %v8777
      %v8779 = vpop.f32.mrf.mxu0
      %v8780 = vadd.f32 0.0, %v8779
      %8781 = vmatmul.bf16.gmra.mxu0 %v8557
      %v8782 = vpop.f32.mrf.mxu0
      %v8783 = vadd.f32 0.0, %v8782
      %v8784 = vpop.f32.mrf.mxu0
      %v8785 = vadd.f32 0.0, %v8784
      %8786 = vmatmul.bf16.gmra.mxu0 %v8560
      %v8787 = vpop.f32.mrf.mxu0
      %v8788 = vadd.f32 0.0, %v8787
      %v8789 = vpop.f32.mrf.mxu0
      %v8790 = vadd.f32 0.0, %v8789
      %8791 = vmatmul.bf16.gmra.mxu0 %v8563
      %v8792 = vpop.f32.mrf.mxu0
      %v8793 = vadd.f32 0.0, %v8792
      %v8794 = vpop.f32.mrf.mxu0
      %v8795 = vadd.f32 0.0, %v8794
      %8796 = vmatmul.bf16.gmra.mxu0 %v8566
      %v8797 = vpop.f32.mrf.mxu0
      %v8798 = vadd.f32 0.0, %v8797
      %v8799 = vpop.f32.mrf.mxu0
      %v8800 = vadd.f32 0.0, %v8799
      %8801 = vmatmul.bf16.gmra.mxu0 %v8569
      %v8802 = vpop.f32.mrf.mxu0
      %v8803 = vadd.f32 0.0, %v8802
      %v8804 = vpop.f32.mrf.mxu0
      %v8805 = vadd.f32 0.0, %v8804
      %8806 = vmatmul.bf16.gmra.mxu0 %v8572
      %v8807 = vpop.f32.mrf.mxu0
      %v8808 = vadd.f32 0.0, %v8807
      %v8809 = vpop.f32.mrf.mxu0
      %v8810 = vadd.f32 0.0, %v8809
      %8811 = vmatmul.bf16.gmra.mxu0 %v8575
      %v8812 = vpop.f32.mrf.mxu0
      %v8813 = vadd.f32 0.0, %v8812
      %v8814 = vpop.f32.mrf.mxu0
      %v8815 = vadd.f32 0.0, %v8814
      %8816 = vmatmul.bf16.gmra.mxu0 %v8578
      %v8817 = vpop.f32.mrf.mxu0
      %v8818 = vadd.f32 0.0, %v8817
      %v8819 = vpop.f32.mrf.mxu0
      %v8820 = vadd.f32 0.0, %v8819
      %8821 = vmatmul.bf16.gmra.mxu0 %v8581
      %v8822 = vpop.f32.mrf.mxu0
      %v8823 = vadd.f32 0.0, %v8822
      %v8824 = vpop.f32.mrf.mxu0
      %v8825 = vadd.f32 0.0, %v8824
      %8826 = vmatmul.bf16.gmra.mxu0 %v8584
      %v8827 = vpop.f32.mrf.mxu0
      %v8828 = vadd.f32 0.0, %v8827
      %v8829 = vpop.f32.mrf.mxu0
      %v8830 = vadd.f32 0.0, %v8829
      %8831 = vmatmul.bf16.gmra.mxu0 %v8587
      %v8832 = vpop.f32.mrf.mxu0
      %v8833 = vadd.f32 0.0, %v8832
      %v8834 = vpop.f32.mrf.mxu0
      %v8835 = vadd.f32 0.0, %v8834
      %8836 = vmatmul.bf16.gmra.mxu0 %v8590
      %v8837 = vpop.f32.mrf.mxu0
      %v8838 = vadd.f32 0.0, %v8837
      %v8839 = vpop.f32.mrf.mxu0
      %v8840 = vadd.f32 0.0, %v8839
      %8841 = vmatmul.bf16.gmra.mxu0 %v8593
      %v8842 = vpop.f32.mrf.mxu0
      %v8843 = vadd.f32 0.0, %v8842
      %v8844 = vpop.f32.mrf.mxu0
      %v8845 = vadd.f32 0.0, %v8844
      %8846 = vmatmul.bf16.gmra.mxu0 %v8596
      %v8847 = vpop.f32.mrf.mxu0
      %v8848 = vadd.f32 0.0, %v8847
      %v8849 = vpop.f32.mrf.mxu0
      %v8850 = vadd.f32 0.0, %v8849
      %8851 = vmatmul.bf16.gmra.mxu0 %v8599
      %v8852 = vpop.f32.mrf.mxu0
      %v8853 = vadd.f32 0.0, %v8852
      %v8854 = vpop.f32.mrf.mxu0
      %v8855 = vadd.f32 0.0, %v8854
      %8856 = vmatmul.bf16.gmra.mxu0 %v8602
      %v8857 = vpop.f32.mrf.mxu0
      %v8858 = vadd.f32 0.0, %v8857
      %v8859 = vpop.f32.mrf.mxu0
      %v8860 = vadd.f32 0.0, %v8859
      %8861 = vmatmul.bf16.gmra.mxu0 %v8605
      %v8862 = vpop.f32.mrf.mxu0
      %v8863 = vadd.f32 0.0, %v8862
      %v8864 = vpop.f32.mrf.mxu0
      %v8865 = vadd.f32 0.0, %v8864
      %8866 = vmatmul.bf16.gmra.mxu0 %v8608
      %v8867 = vpop.f32.mrf.mxu0
      %v8868 = vadd.f32 0.0, %v8867
      %v8869 = vpop.f32.mrf.mxu0
      %v8870 = vadd.f32 0.0, %v8869
      %8871 = vmatmul.bf16.gmra.mxu0 %v8611
      %v8872 = vpop.f32.mrf.mxu0
      %v8873 = vadd.f32 0.0, %v8872
      %v8874 = vpop.f32.mrf.mxu0
      %v8875 = vadd.f32 0.0, %v8874
      %8876 = vmatmul.bf16.gmra.mxu0 %v8614
      %v8877 = vpop.f32.mrf.mxu0
      %v8878 = vadd.f32 0.0, %v8877
      %v8879 = vpop.f32.mrf.mxu0
      %v8880 = vadd.f32 0.0, %v8879
      %8881 = vmatmul.bf16.gmra.mxu0 %v8617
      %v8882 = vpop.f32.mrf.mxu0
      %v8883 = vadd.f32 0.0, %v8882
      %v8884 = vpop.f32.mrf.mxu0
      %v8885 = vadd.f32 0.0, %v8884
      %8886 = vmatmul.bf16.gmra.mxu0 %v8620
      %v8887 = vpop.f32.mrf.mxu0
      %v8888 = vadd.f32 0.0, %v8887
      %v8889 = vpop.f32.mrf.mxu0
      %v8890 = vadd.f32 0.0, %v8889
      %8891 = vmatmul.bf16.gmra.mxu0 %v8623
      %v8892 = vpop.f32.mrf.mxu0
      %v8893 = vadd.f32 0.0, %v8892
      %v8894 = vpop.f32.mrf.mxu0
      %v8895 = vadd.f32 0.0, %v8894
      %8896 = vmatmul.bf16.gmra.mxu0 %v8626
      %v8897 = vpop.f32.mrf.mxu0
      %v8898 = vadd.f32 0.0, %v8897
      %v8899 = vpop.f32.mrf.mxu0
      %v8900 = vadd.f32 0.0, %v8899
      %8901 = vmatmul.bf16.gmra.mxu0 %v8629
      %v8902 = vpop.f32.mrf.mxu0
      %v8903 = vadd.f32 0.0, %v8902
      %v8904 = vpop.f32.mrf.mxu0
      %v8905 = vadd.f32 0.0, %v8904
      %8906 = vmatmul.bf16.gmra.mxu0 %v8632
      %v8907 = vpop.f32.mrf.mxu0
      %v8908 = vadd.f32 0.0, %v8907
      %v8909 = vpop.f32.mrf.mxu0
      %v8910 = vadd.f32 0.0, %v8909
      %8911 = vmatmul.bf16.gmra.mxu0 %v8635
      %v8912 = vpop.f32.mrf.mxu0
      %v8913 = vadd.f32 0.0, %v8912
      %v8914 = vpop.f32.mrf.mxu0
      %v8915 = vadd.f32 0.0, %v8914
      %8916 = vmatmul.bf16.gmra.mxu0 %v8638
      %v8917 = vpop.f32.mrf.mxu0
      %v8918 = vadd.f32 0.0, %v8917
      %v8919 = vpop.f32.mrf.mxu0
      %v8920 = vadd.f32 0.0, %v8919
      %8921 = vmatmul.bf16.gmra.mxu0 %v8641
      %v8922 = vpop.f32.mrf.mxu0
      %v8923 = vadd.f32 0.0, %v8922
      %v8924 = vpop.f32.mrf.mxu0
      %v8925 = vadd.f32 0.0, %v8924
      %8926 = vmatmul.bf16.gmra.mxu0 %v8644
      %v8927 = vpop.f32.mrf.mxu0
      %v8928 = vadd.f32 0.0, %v8927
      %v8929 = vpop.f32.mrf.mxu0
      %v8930 = vadd.f32 0.0, %v8929
      %8931 = vmatmul.bf16.gmra.mxu0 %v8647
      %v8932 = vpop.f32.mrf.mxu0
      %v8933 = vadd.f32 0.0, %v8932
      %v8934 = vpop.f32.mrf.mxu0
      %v8935 = vadd.f32 0.0, %v8934
      %8936 = vmatmul.bf16.gmra.mxu0 %v8650
      %v8937 = vpop.f32.mrf.mxu0
      %v8938 = vadd.f32 0.0, %v8937
      %v8939 = vpop.f32.mrf.mxu0
      %v8940 = vadd.f32 0.0, %v8939
      %8941 = vmatmul.bf16.gmra.mxu0 %v8653
      %v8942 = vpop.f32.mrf.mxu0
      %v8943 = vadd.f32 0.0, %v8942
      %v8944 = vpop.f32.mrf.mxu0
      %v8945 = vadd.f32 0.0, %v8944
      %8946 = vmatmul.bf16.gmra.mxu0 %v8656
      %v8947 = vpop.f32.mrf.mxu0
      %v8948 = vadd.f32 0.0, %v8947
      %v8949 = vpop.f32.mrf.mxu0
      %v8950 = vadd.f32 0.0, %v8949
      %8951 = vmatmul.bf16.gmra.mxu0 %v8659
      %v8952 = vpop.f32.mrf.mxu0
      %v8953 = vadd.f32 0.0, %v8952
      %v8954 = vpop.f32.mrf.mxu0
      %v8955 = vadd.f32 0.0, %v8954
      %8956 = vmatmul.bf16.gmra.mxu0 %v8662
      %v8957 = vpop.f32.mrf.mxu0
      %v8958 = vadd.f32 0.0, %v8957
      %v8959 = vpop.f32.mrf.mxu0
      %v8960 = vadd.f32 0.0, %v8959
      %8961 = vmatmul.bf16.gmra.mxu0 %v8665
      %v8962 = vpop.f32.mrf.mxu0
      %v8963 = vadd.f32 0.0, %v8962
      %v8964 = vpop.f32.mrf.mxu0
      %v8965 = vadd.f32 0.0, %v8964
      %8966 = vmatmul.bf16.gmra.mxu0 %v8668
      %v8967 = vpop.f32.mrf.mxu0
      %v8968 = vadd.f32 0.0, %v8967
      %v8969 = vpop.f32.mrf.mxu0
      %v8970 = vadd.f32 0.0, %v8969
      %8971 = vmatmul.bf16.gmra.mxu0 %v8671
      %v8972 = vpop.f32.mrf.mxu0
      %v8973 = vadd.f32 0.0, %v8972
      %v8974 = vpop.f32.mrf.mxu0
      %v8975 = vadd.f32 0.0, %v8974
      %8976 = vmatmul.bf16.gmra.mxu0 %v8674
      %v8977 = vpop.f32.mrf.mxu0
      %v8978 = vadd.f32 0.0, %v8977
      %v8979 = vpop.f32.mrf.mxu0
      %v8980 = vadd.f32 0.0, %v8979
      %8981 = vmatmul.bf16.gmra.mxu0 %v8677
      %v8982 = vpop.f32.mrf.mxu0
      %v8983 = vadd.f32 0.0, %v8982
      %v8984 = vpop.f32.mrf.mxu0
      %v8985 = vadd.f32 0.0, %v8984
      %8986 = vmatmul.bf16.gmra.mxu0 %v8680
      %v8987 = vpop.f32.mrf.mxu0
      %v8988 = vadd.f32 0.0, %v8987
      %v8989 = vpop.f32.mrf.mxu0
      %v8990 = vadd.f32 0.0, %v8989
      %8991 = vmatmul.bf16.gmra.mxu0 %v8683
      %v8992 = vpop.f32.mrf.mxu0
      %v8993 = vadd.f32 0.0, %v8992
      %v8994 = vpop.f32.mrf.mxu0
      %v8995 = vadd.f32 0.0, %v8994
      %8996 = vmatmul.bf16.gmra.mxu0 %v8686
      %v8997 = vpop.f32.mrf.mxu0
      %v8998 = vadd.f32 0.0, %v8997
      %v8999 = vpop.f32.mrf.mxu0
      %v9000 = vadd.f32 0.0, %v8999
      %9001 = vmatmul.bf16.gmra.mxu0 %v8689
      %v9002 = vpop.f32.mrf.mxu0
      %v9003 = vadd.f32 0.0, %v9002
      %v9004 = vpop.f32.mrf.mxu0
      %v9005 = vadd.f32 0.0, %v9004
      %9006 = vmatmul.bf16.gmra.mxu0 %v8692
      %v9007 = vpop.f32.mrf.mxu0
      %v9008 = vadd.f32 0.0, %v9007
      %v9009 = vpop.f32.mrf.mxu0
      %v9010 = vadd.f32 0.0, %v9009
      %9011 = vmatmul.bf16.gmra.mxu0 %v8695
      %v9012 = vpop.f32.mrf.mxu0
      %v9013 = vadd.f32 0.0, %v9012
      %v9014 = vpop.f32.mrf.mxu0
      %v9015 = vadd.f32 0.0, %v9014
      %9016 = vmatmul.bf16.gmra.mxu0 %v8698
      %v9017 = vpop.f32.mrf.mxu0
      %v9018 = vadd.f32 0.0, %v9017
      %v9019 = vpop.f32.mrf.mxu0
      %v9020 = vadd.f32 0.0, %v9019
      %9021 = vmatmul.bf16.gmra.mxu0 %v8701
      %v9022 = vpop.f32.mrf.mxu0
      %v9023 = vadd.f32 0.0, %v9022
      %v9024 = vpop.f32.mrf.mxu0
      %v9025 = vadd.f32 0.0, %v9024
      %9026 = vmatmul.bf16.gmra.mxu0 %v8704
      %v9027 = vpop.f32.mrf.mxu0
      %v9028 = vadd.f32 0.0, %v9027
      %v9029 = vpop.f32.mrf.mxu0
      %v9030 = vadd.f32 0.0, %v9029
      %9031 = vmatmul.bf16.gmra.mxu0 %v8707
      %v9032 = vpop.f32.mrf.mxu0
      %v9033 = vadd.f32 0.0, %v9032
      %v9034 = vpop.f32.mrf.mxu0
      %v9035 = vadd.f32 0.0, %v9034
      %9036 = vmatmul.bf16.gmra.mxu0 %v8710
      %v9037 = vpop.f32.mrf.mxu0
      %v9038 = vadd.f32 0.0, %v9037
      %v9039 = vpop.f32.mrf.mxu0
      %v9040 = vadd.f32 0.0, %v9039
      %9041 = vmatmul.bf16.gmra.mxu0 %v8713
      %v9042 = vpop.f32.mrf.mxu0
      %v9043 = vadd.f32 0.0, %v9042
      %v9044 = vpop.f32.mrf.mxu0
      %v9045 = vadd.f32 0.0, %v9044
      %9046 = vmatmul.bf16.gmra.mxu0 %v8716
      %v9047 = vpop.f32.mrf.mxu0
      %v9048 = vadd.f32 0.0, %v9047
      %v9049 = vpop.f32.mrf.mxu0
      %v9050 = vadd.f32 0.0, %v9049
      %9051 = vmatmul.bf16.gmra.mxu0 %v8719
      %v9052 = vpop.f32.mrf.mxu0
      %v9053 = vadd.f32 0.0, %v9052
      %v9054 = vpop.f32.mrf.mxu0
      %v9055 = vadd.f32 0.0, %v9054
      %9056 = vmatmul.bf16.gmra.mxu0 %v8722
      %v9057 = vpop.f32.mrf.mxu0
      %v9058 = vadd.f32 0.0, %v9057
      %v9059 = vpop.f32.mrf.mxu0
      %v9060 = vadd.f32 0.0, %v9059
      %9061 = vmatmul.bf16.gmra.mxu0 %v8725
      %v9062 = vpop.f32.mrf.mxu0
      %v9063 = vadd.f32 0.0, %v9062
      %v9064 = vpop.f32.mrf.mxu0
      %v9065 = vadd.f32 0.0, %v9064
      %9066 = vmatmul.bf16.gmra.mxu0 %v8728
      %v9067 = vpop.f32.mrf.mxu0
      %v9068 = vadd.f32 0.0, %v9067
      %v9069 = vpop.f32.mrf.mxu0
      %v9070 = vadd.f32 0.0, %v9069
      %9071 = vmatmul.bf16.gmra.mxu0 %v8731
      %v9072 = vpop.f32.mrf.mxu0
      %v9073 = vadd.f32 0.0, %v9072
      %v9074 = vpop.f32.mrf.mxu0
      %v9075 = vadd.f32 0.0, %v9074
      %9076 = vmatmul.bf16.gmra.mxu0 %v8734
      %v9077 = vpop.f32.mrf.mxu0
      %v9078 = vadd.f32 0.0, %v9077
      %v9079 = vpop.f32.mrf.mxu0
      %v9080 = vadd.f32 0.0, %v9079
      %9081 = vmatmul.bf16.gmra.mxu0 %v8737
      %v9082 = vpop.f32.mrf.mxu0
      %v9083 = vadd.f32 0.0, %v9082
      %v9084 = vpop.f32.mrf.mxu0
      %v9085 = vadd.f32 0.0, %v9084
      %9086 = vmatmul.bf16.gmra.mxu0 %v8740
      %v9087 = vpop.f32.mrf.mxu0
      %v9088 = vadd.f32 0.0, %v9087
      %v9089 = vpop.f32.mrf.mxu0
      %v9090 = vadd.f32 0.0, %v9089
      %9091 = vmatmul.bf16.gmra.mxu0 %v8743
      %v9092 = vpop.f32.mrf.mxu0
      %v9093 = vadd.f32 0.0, %v9092
      %v9094 = vpop.f32.mrf.mxu0
      %v9095 = vadd.f32 0.0, %v9094
      %9096 = vdwg.mxu0
      %v9097 = vadd.f32 %v7778, %v8758
      %v9098 = vadd.f32 %v7779, %v8760
      %v9099 = vadd.f32 %v7780, %v8763
      %v9100 = vadd.f32 %v7781, %v8765
      %v9101 = vadd.f32 %v7782, %v8768
      %v9102 = vadd.f32 %v7783, %v8770
      %v9103 = vadd.f32 %v7784, %v8773
      %v9104 = vadd.f32 %v7785, %v8775
      %v9105 = vadd.f32 %v7786, %v8778
      %v9106 = vadd.f32 %v7787, %v8780
      %v9107 = vadd.f32 %v7788, %v8783
      %v9108 = vadd.f32 %v7789, %v8785
      %v9109 = vadd.f32 %v7790, %v8788
      %v9110 = vadd.f32 %v7791, %v8790
      %v9111 = vadd.f32 %v7792, %v8793
      %v9112 = vadd.f32 %v7793, %v8795
      %v9113 = vadd.f32 %v7794, %v8798
      %v9114 = vadd.f32 %v7795, %v8800
      %v9115 = vadd.f32 %v7796, %v8803
      %v9116 = vadd.f32 %v7797, %v8805
      %v9117 = vadd.f32 %v7798, %v8808
      %v9118 = vadd.f32 %v7799, %v8810
      %v9119 = vadd.f32 %v7800, %v8813
      %v9120 = vadd.f32 %v7801, %v8815
      %v9121 = vadd.f32 %v7802, %v8818
      %v9122 = vadd.f32 %v7803, %v8820
      %v9123 = vadd.f32 %v7804, %v8823
      %v9124 = vadd.f32 %v7805, %v8825
      %v9125 = vadd.f32 %v7806, %v8828
      %v9126 = vadd.f32 %v7807, %v8830
      %v9127 = vadd.f32 %v7808, %v8833
      %v9128 = vadd.f32 %v7809, %v8835
      %v9129 = vadd.f32 %v7810, %v8838
      %v9130 = vadd.f32 %v7811, %v8840
      %v9131 = vadd.f32 %v7812, %v8843
      %v9132 = vadd.f32 %v7813, %v8845
      %v9133 = vadd.f32 %v7814, %v8848
      %v9134 = vadd.f32 %v7815, %v8850
      %v9135 = vadd.f32 %v7816, %v8853
      %v9136 = vadd.f32 %v7817, %v8855
      %v9137 = vadd.f32 %v7818, %v8858
      %v9138 = vadd.f32 %v7819, %v8860
      %v9139 = vadd.f32 %v7820, %v8863
      %v9140 = vadd.f32 %v7821, %v8865
      %v9141 = vadd.f32 %v7822, %v8868
      %v9142 = vadd.f32 %v7823, %v8870
      %v9143 = vadd.f32 %v7824, %v8873
      %v9144 = vadd.f32 %v7825, %v8875
      %v9145 = vadd.f32 %v7826, %v8878
      %v9146 = vadd.f32 %v7827, %v8880
      %v9147 = vadd.f32 %v7828, %v8883
      %v9148 = vadd.f32 %v7829, %v8885
      %v9149 = vadd.f32 %v7830, %v8888
      %v9150 = vadd.f32 %v7831, %v8890
      %v9151 = vadd.f32 %v7832, %v8893
      %v9152 = vadd.f32 %v7833, %v8895
      %v9153 = vadd.f32 %v7834, %v8898
      %v9154 = vadd.f32 %v7835, %v8900
      %v9155 = vadd.f32 %v7836, %v8903
      %v9156 = vadd.f32 %v7837, %v8905
      %v9157 = vadd.f32 %v7838, %v8908
      %v9158 = vadd.f32 %v7839, %v8910
      %v9159 = vadd.f32 %v7840, %v8913
      %v9160 = vadd.f32 %v7841, %v8915
      %v9161 = vadd.f32 %v7842, %v8918
      %v9162 = vadd.f32 %v7843, %v8920
      %v9163 = vadd.f32 %v7844, %v8923
      %v9164 = vadd.f32 %v7845, %v8925
      %v9165 = vadd.f32 %v7846, %v8928
      %v9166 = vadd.f32 %v7847, %v8930
      %v9167 = vadd.f32 %v7848, %v8933
      %v9168 = vadd.f32 %v7849, %v8935
      %v9169 = vadd.f32 %v7850, %v8938
      %v9170 = vadd.f32 %v7851, %v8940
      %v9171 = vadd.f32 %v7852, %v8943
      %v9172 = vadd.f32 %v7853, %v8945
      %v9173 = vadd.f32 %v7854, %v8948
      %v9174 = vadd.f32 %v7855, %v8950
      %v9175 = vadd.f32 %v7856, %v8953
      %v9176 = vadd.f32 %v7857, %v8955
      %v9177 = vadd.f32 %v7858, %v8958
      %v9178 = vadd.f32 %v7859, %v8960
      %v9179 = vadd.f32 %v7860, %v8963
      %v9180 = vadd.f32 %v7861, %v8965
      %v9181 = vadd.f32 %v7862, %v8968
      %v9182 = vadd.f32 %v7863, %v8970
      %v9183 = vadd.f32 %v7864, %v8973
      %v9184 = vadd.f32 %v7865, %v8975
      %v9185 = vadd.f32 %v7866, %v8978
      %v9186 = vadd.f32 %v7867, %v8980
      %v9187 = vadd.f32 %v7868, %v8983
      %v9188 = vadd.f32 %v7869, %v8985
      %v9189 = vadd.f32 %v7870, %v8988
      %v9190 = vadd.f32 %v7871, %v8990
      %v9191 = vadd.f32 %v7872, %v8993
      %v9192 = vadd.f32 %v7873, %v8995
      %v9193 = vadd.f32 %v7874, %v8998
      %v9194 = vadd.f32 %v7875, %v9000
      %v9195 = vadd.f32 %v7876, %v9003
      %v9196 = vadd.f32 %v7877, %v9005
      %v9197 = vadd.f32 %v7878, %v9008
      %v9198 = vadd.f32 %v7879, %v9010
      %v9199 = vadd.f32 %v7880, %v9013
      %v9200 = vadd.f32 %v7881, %v9015
      %v9201 = vadd.f32 %v7882, %v9018
      %v9202 = vadd.f32 %v7883, %v9020
      %v9203 = vadd.f32 %v7884, %v9023
      %v9204 = vadd.f32 %v7885, %v9025
      %v9205 = vadd.f32 %v7886, %v9028
      %v9206 = vadd.f32 %v7887, %v9030
      %v9207 = vadd.f32 %v7888, %v9033
      %v9208 = vadd.f32 %v7889, %v9035
      %v9209 = vadd.f32 %v7890, %v9038
      %v9210 = vadd.f32 %v7891, %v9040
      %v9211 = vadd.f32 %v7892, %v9043
      %v9212 = vadd.f32 %v7893, %v9045
      %v9213 = vadd.f32 %v7894, %v9048
      %v9214 = vadd.f32 %v7895, %v9050
      %v9215 = vadd.f32 %v7896, %v9053
      %v9216 = vadd.f32 %v7897, %v9055
      %v9217 = vadd.f32 %v7898, %v9058
      %v9218 = vadd.f32 %v7899, %v9060
      %v9219 = vadd.f32 %v7900, %v9063
      %v9220 = vadd.f32 %v7901, %v9065
      %v9221 = vadd.f32 %v7902, %v9068
      %v9222 = vadd.f32 %v7903, %v9070
      %v9223 = vadd.f32 %v7904, %v9073
      %v9224 = vadd.f32 %v7905, %v9075
      %v9225 = vadd.f32 %v7906, %v9078
      %v9226 = vadd.f32 %v7907, %v9080
      %v9227 = vadd.f32 %v7908, %v9083
      %v9228 = vadd.f32 %v7909, %v9085
      %v9229 = vadd.f32 %v7910, %v9088
      %v9230 = vadd.f32 %v7911, %v9090
      %v9231 = vadd.f32 %v7912, %v9093
      %v9232 = vadd.f32 %v7913, %v9095
      %v9233 = vld [vmem:[%s206 + $0x20] sm:$0x8]
      %s9234 = scalar_lea.vmem %s210, 32
      %v9235 = vld [vmem:[%s9234] sm:$0xf]
      %v9237 = vunpack.c.l.b16 %v9233
      %v9238 = vpack.c.b16 %v6880, %v9237
      %vm9239 = vcmask 1044480
      %v9240 = vrot.slane %v9238, 3
      %v9241 = vrot.slane %v7017, 3
      %v9242 = vsel %vm9239, %v9240, %v9241
      %v9243 = vrot.slane %v7018, 3
      %v9244 = vsel %vm9239, %v9241, %v9243
      %v9245 = vrot.slane %v7019, 3
      %v9246 = vsel %vm9239, %v9243, %v9245
      %v9247 = vrot.slane %v7020, 3
      %v9248 = vsel %vm9239, %v9245, %v9247
      %v9249 = vrot.slane %v7021, 3
      %v9250 = vsel %vm9239, %v9247, %v9249
      %v9251 = vrot.slane %v7022, 3
      %v9252 = vsel %vm9239, %v9249, %v9251
      %v9253 = vrot.slane %v7023, 3
      %v9254 = vsel %vm9239, %v9251, %v9253
      %v9255 = vrot.slane %v7024, 3
      %v9256 = vsel %vm9239, %v9253, %v9255
      %v9257 = vrot.slane %v7025, 3
      %v9258 = vsel %vm9239, %v9255, %v9257
      %v9259 = vrot.slane %v7026, 3
      %v9260 = vsel %vm9239, %v9257, %v9259
      %v9261 = vrot.slane %v7027, 3
      %v9262 = vsel %vm9239, %v9259, %v9261
      %v9263 = vrot.slane %v7028, 3
      %v9264 = vsel %vm9239, %v9261, %v9263
      %v9265 = vrot.slane %v7029, 3
      %v9266 = vsel %vm9239, %v9263, %v9265
      %v9267 = vrot.slane %v7030, 3
      %v9268 = vsel %vm9239, %v9265, %v9267
      %v9269 = vrot.slane %v7031, 3
      %v9270 = vsel %vm9239, %v9267, %v9269
      %v9271 = vrot.slane %v7032, 3
      %v9272 = vsel %vm9239, %v9269, %v9271
      %v9273 = vrot.slane %v7033, 3
      %v9274 = vsel %vm9239, %v9271, %v9273
      %v9275 = vrot.slane %v7034, 3
      %v9276 = vsel %vm9239, %v9273, %v9275
      %v9277 = vrot.slane %v7035, 3
      %v9278 = vsel %vm9239, %v9275, %v9277
      %v9279 = vrot.slane %v7036, 3
      %v9280 = vsel %vm9239, %v9277, %v9279
      %v9281 = vrot.slane %v7037, 3
      %v9282 = vsel %vm9239, %v9279, %v9281
      %v9283 = vrot.slane %v7038, 3
      %v9284 = vsel %vm9239, %v9281, %v9283
      %v9285 = vrot.slane %v7039, 3
      %v9286 = vsel %vm9239, %v9283, %v9285
      %v9287 = vrot.slane %v7040, 3
      %v9288 = vsel %vm9239, %v9285, %v9287
      %v9289 = vrot.slane %v7041, 3
      %v9290 = vsel %vm9239, %v9287, %v9289
      %v9291 = vrot.slane %v7042, 3
      %v9292 = vsel %vm9239, %v9289, %v9291
      %v9293 = vrot.slane %v7043, 3
      %v9294 = vsel %vm9239, %v9291, %v9293
      %v9295 = vrot.slane %v7044, 3
      %v9296 = vsel %vm9239, %v9293, %v9295
      %v9297 = vrot.slane %v7045, 3
      %v9298 = vsel %vm9239, %v9295, %v9297
      %v9299 = vrot.slane %v7046, 3
      %v9300 = vsel %vm9239, %v9297, %v9299
      %v9301 = vrot.slane %v7047, 3
      %v9302 = vsel %vm9239, %v9299, %v9301
      %v9303 = vrot.slane %v7048, 3
      %v9304 = vsel %vm9239, %v9301, %v9303
      %v9305 = vrot.slane %v7049, 3
      %v9306 = vsel %vm9239, %v9303, %v9305
      %v9307 = vrot.slane %v7050, 3
      %v9308 = vsel %vm9239, %v9305, %v9307
      %v9309 = vrot.slane %v7051, 3
      %v9310 = vsel %vm9239, %v9307, %v9309
      %v9311 = vrot.slane %v7052, 3
      %v9312 = vsel %vm9239, %v9309, %v9311
      %v9313 = vrot.slane %v7053, 3
      %v9314 = vsel %vm9239, %v9311, %v9313
      %v9315 = vrot.slane %v7054, 3
      %v9316 = vsel %vm9239, %v9313, %v9315
      %v9317 = vrot.slane %v7055, 3
      %v9318 = vsel %vm9239, %v9315, %v9317
      %v9319 = vrot.slane %v7056, 3
      %v9320 = vsel %vm9239, %v9317, %v9319
      %v9321 = vrot.slane %v7057, 3
      %v9322 = vsel %vm9239, %v9319, %v9321
      %v9323 = vrot.slane %v7058, 3
      %v9324 = vsel %vm9239, %v9321, %v9323
      %v9325 = vrot.slane %v7059, 3
      %v9326 = vsel %vm9239, %v9323, %v9325
      %v9327 = vrot.slane %v7060, 3
      %v9328 = vsel %vm9239, %v9325, %v9327
      %v9329 = vrot.slane %v7061, 3
      %v9330 = vsel %vm9239, %v9327, %v9329
      %v9331 = vrot.slane %v7062, 3
      %v9332 = vsel %vm9239, %v9329, %v9331
      %v9333 = vrot.slane %v7063, 3
      %v9334 = vsel %vm9239, %v9331, %v9333
      %v9335 = vrot.slane %v7064, 3
      %v9336 = vsel %vm9239, %v9333, %v9335
      %v9337 = vrot.slane %v7065, 3
      %v9338 = vsel %vm9239, %v9335, %v9337
      %v9339 = vrot.slane %v7066, 3
      %v9340 = vsel %vm9239, %v9337, %v9339
      %v9341 = vrot.slane %v7067, 3
      %v9342 = vsel %vm9239, %v9339, %v9341
      %v9343 = vrot.slane %v7068, 3
      %v9344 = vsel %vm9239, %v9341, %v9343
      %v9345 = vrot.slane %v7069, 3
      %v9346 = vsel %vm9239, %v9343, %v9345
      %v9347 = vrot.slane %v7070, 3
      %v9348 = vsel %vm9239, %v9345, %v9347
      %v9349 = vrot.slane %v7071, 3
      %v9350 = vsel %vm9239, %v9347, %v9349
      %v9351 = vrot.slane %v7072, 3
      %v9352 = vsel %vm9239, %v9349, %v9351
      %v9353 = vrot.slane %v7073, 3
      %v9354 = vsel %vm9239, %v9351, %v9353
      %v9355 = vrot.slane %v7074, 3
      %v9356 = vsel %vm9239, %v9353, %v9355
      %v9357 = vrot.slane %v7075, 3
      %v9358 = vsel %vm9239, %v9355, %v9357
      %v9359 = vrot.slane %v7076, 3
      %v9360 = vsel %vm9239, %v9357, %v9359
      %v9361 = vrot.slane %v7077, 3
      %v9362 = vsel %vm9239, %v9359, %v9361
      %v9363 = vrot.slane %v7078, 3
      %v9364 = vsel %vm9239, %v9361, %v9363
      %v9365 = vrot.slane %v7079, 3
      %v9366 = vsel %vm9239, %v9363, %v9365
      %v9367 = vrot.slane %v7080, 3
      %v9368 = vsel %vm9239, %v9365, %v9367
      %v9369 = vrot.slane %v7081, 3
      %v9370 = vsel %vm9239, %v9367, %v9369
      %v9371 = vrot.slane %v7082, 3
      %v9372 = vsel %vm9239, %v9369, %v9371
      %v9373 = vrot.slane %v7083, 3
      %v9374 = vsel %vm9239, %v9371, %v9373
      %v9375 = vrot.slane %v7919, 3
      %v9376 = vsel %vm9239, %v9373, %v9375
      %v9378 = vsel %vm1255, %v9242, 0
      %v9381 = vsel %vm1255, %v9244, 0
      %v9384 = vsel %vm1255, %v9246, 0
      %v9387 = vsel %vm1255, %v9248, 0
      %v9390 = vsel %vm1255, %v9250, 0
      %v9393 = vsel %vm1255, %v9252, 0
      %v9396 = vsel %vm1255, %v9254, 0
      %v9399 = vsel %vm1255, %v9256, 0
      %v9402 = vsel %vm1255, %v9258, 0
      %v9405 = vsel %vm1255, %v9260, 0
      %v9408 = vsel %vm1255, %v9262, 0
      %v9411 = vsel %vm1255, %v9264, 0
      %v9414 = vsel %vm1255, %v9266, 0
      %v9417 = vsel %vm1255, %v9268, 0
      %v9420 = vsel %vm1255, %v9270, 0
      %v9423 = vsel %vm1255, %v9272, 0
      %v9426 = vsel %vm1255, %v9274, 0
      %v9429 = vsel %vm1255, %v9276, 0
      %v9432 = vsel %vm1255, %v9278, 0
      %v9435 = vsel %vm1255, %v9280, 0
      %v9438 = vsel %vm1255, %v9282, 0
      %v9441 = vsel %vm1255, %v9284, 0
      %v9444 = vsel %vm1255, %v9286, 0
      %v9447 = vsel %vm1255, %v9288, 0
      %v9450 = vsel %vm1255, %v9290, 0
      %v9453 = vsel %vm1255, %v9292, 0
      %v9456 = vsel %vm1255, %v9294, 0
      %v9459 = vsel %vm1255, %v9296, 0
      %v9462 = vsel %vm1255, %v9298, 0
      %v9465 = vsel %vm1255, %v9300, 0
      %v9468 = vsel %vm1255, %v9302, 0
      %v9471 = vsel %vm1255, %v9304, 0
      %v9474 = vsel %vm1255, %v9306, 0
      %v9477 = vsel %vm1255, %v9308, 0
      %v9480 = vsel %vm1255, %v9310, 0
      %v9483 = vsel %vm1255, %v9312, 0
      %v9486 = vsel %vm1255, %v9314, 0
      %v9489 = vsel %vm1255, %v9316, 0
      %v9492 = vsel %vm1255, %v9318, 0
      %v9495 = vsel %vm1255, %v9320, 0
      %v9498 = vsel %vm1255, %v9322, 0
      %v9501 = vsel %vm1255, %v9324, 0
      %v9504 = vsel %vm1255, %v9326, 0
      %v9507 = vsel %vm1255, %v9328, 0
      %v9510 = vsel %vm1255, %v9330, 0
      %v9513 = vsel %vm1255, %v9332, 0
      %v9516 = vsel %vm1255, %v9334, 0
      %v9519 = vsel %vm1255, %v9336, 0
      %v9522 = vsel %vm1255, %v9338, 0
      %v9525 = vsel %vm1255, %v9340, 0
      %v9528 = vsel %vm1255, %v9342, 0
      %v9531 = vsel %vm1255, %v9344, 0
      %v9534 = vsel %vm1255, %v9346, 0
      %v9537 = vsel %vm1255, %v9348, 0
      %v9540 = vsel %vm1255, %v9350, 0
      %v9543 = vsel %vm1255, %v9352, 0
      %v9546 = vsel %vm1255, %v9354, 0
      %v9549 = vsel %vm1255, %v9356, 0
      %v9552 = vsel %vm1255, %v9358, 0
      %v9555 = vsel %vm1255, %v9360, 0
      %v9558 = vsel %vm1255, %v9362, 0
      %v9561 = vsel %vm1255, %v9364, 0
      %v9564 = vsel %vm1255, %v9366, 0
      %v9567 = vsel %vm1255, %v9368, 0
      %v9570 = vsel %vm1255, %v9370, 0
      %v9573 = vsel %vm1255, %v9372, 0
      %v9576 = vsel %vm1255, %v9374, 0
      %v9579 = vsel %vm1255, %v9376, 0
      %v9582 = vsel %vm1460, %v9235, 0
      %9584 = vmatpush.bf16.msra.mxu0 0
      %9585 = vmatpush.bf16.msra.mxu0 0
      %9586 = vmatpush.bf16.msra.mxu0 0
      %9587 = vmatpush.bf16.msra.mxu0 0
      %9588 = vmatpush.bf16.msra.mxu0 0
      %9589 = vmatpush.bf16.msra.mxu0 0
      %9590 = vmatpush.bf16.msra.mxu0 0
      %9591 = vmatpush.bf16.msra.mxu0 %v9582
      %9592 = vmatmul.bf16.gmra.mxu0 %v9378
      %v9593 = vpop.f32.mrf.mxu0
      %v9594 = vadd.f32 0.0, %v9593
      %v9595 = vpop.f32.mrf.mxu0
      %v9596 = vadd.f32 0.0, %v9595
      %9597 = vmatmul.bf16.gmra.mxu0 %v9381
      %v9598 = vpop.f32.mrf.mxu0
      %v9599 = vadd.f32 0.0, %v9598
      %v9600 = vpop.f32.mrf.mxu0
      %v9601 = vadd.f32 0.0, %v9600
      %9602 = vmatmul.bf16.gmra.mxu0 %v9384
      %v9603 = vpop.f32.mrf.mxu0
      %v9604 = vadd.f32 0.0, %v9603
      %v9605 = vpop.f32.mrf.mxu0
      %v9606 = vadd.f32 0.0, %v9605
      %9607 = vmatmul.bf16.gmra.mxu0 %v9387
      %v9608 = vpop.f32.mrf.mxu0
      %v9609 = vadd.f32 0.0, %v9608
      %v9610 = vpop.f32.mrf.mxu0
      %v9611 = vadd.f32 0.0, %v9610
      %9612 = vmatmul.bf16.gmra.mxu0 %v9390
      %v9613 = vpop.f32.mrf.mxu0
      %v9614 = vadd.f32 0.0, %v9613
      %v9615 = vpop.f32.mrf.mxu0
      %v9616 = vadd.f32 0.0, %v9615
      %9617 = vmatmul.bf16.gmra.mxu0 %v9393
      %v9618 = vpop.f32.mrf.mxu0
      %v9619 = vadd.f32 0.0, %v9618
      %v9620 = vpop.f32.mrf.mxu0
      %v9621 = vadd.f32 0.0, %v9620
      %9622 = vmatmul.bf16.gmra.mxu0 %v9396
      %v9623 = vpop.f32.mrf.mxu0
      %v9624 = vadd.f32 0.0, %v9623
      %v9625 = vpop.f32.mrf.mxu0
      %v9626 = vadd.f32 0.0, %v9625
      %9627 = vmatmul.bf16.gmra.mxu0 %v9399
      %v9628 = vpop.f32.mrf.mxu0
      %v9629 = vadd.f32 0.0, %v9628
      %v9630 = vpop.f32.mrf.mxu0
      %v9631 = vadd.f32 0.0, %v9630
      %9632 = vmatmul.bf16.gmra.mxu0 %v9402
      %v9633 = vpop.f32.mrf.mxu0
      %v9634 = vadd.f32 0.0, %v9633
      %v9635 = vpop.f32.mrf.mxu0
      %v9636 = vadd.f32 0.0, %v9635
      %9637 = vmatmul.bf16.gmra.mxu0 %v9405
      %v9638 = vpop.f32.mrf.mxu0
      %v9639 = vadd.f32 0.0, %v9638
      %v9640 = vpop.f32.mrf.mxu0
      %v9641 = vadd.f32 0.0, %v9640
      %9642 = vmatmul.bf16.gmra.mxu0 %v9408
      %v9643 = vpop.f32.mrf.mxu0
      %v9644 = vadd.f32 0.0, %v9643
      %v9645 = vpop.f32.mrf.mxu0
      %v9646 = vadd.f32 0.0, %v9645
      %9647 = vmatmul.bf16.gmra.mxu0 %v9411
      %v9648 = vpop.f32.mrf.mxu0
      %v9649 = vadd.f32 0.0, %v9648
      %v9650 = vpop.f32.mrf.mxu0
      %v9651 = vadd.f32 0.0, %v9650
      %9652 = vmatmul.bf16.gmra.mxu0 %v9414
      %v9653 = vpop.f32.mrf.mxu0
      %v9654 = vadd.f32 0.0, %v9653
      %v9655 = vpop.f32.mrf.mxu0
      %v9656 = vadd.f32 0.0, %v9655
      %9657 = vmatmul.bf16.gmra.mxu0 %v9417
      %v9658 = vpop.f32.mrf.mxu0
      %v9659 = vadd.f32 0.0, %v9658
      %v9660 = vpop.f32.mrf.mxu0
      %v9661 = vadd.f32 0.0, %v9660
      %9662 = vmatmul.bf16.gmra.mxu0 %v9420
      %v9663 = vpop.f32.mrf.mxu0
      %v9664 = vadd.f32 0.0, %v9663
      %v9665 = vpop.f32.mrf.mxu0
      %v9666 = vadd.f32 0.0, %v9665
      %9667 = vmatmul.bf16.gmra.mxu0 %v9423
      %v9668 = vpop.f32.mrf.mxu0
      %v9669 = vadd.f32 0.0, %v9668
      %v9670 = vpop.f32.mrf.mxu0
      %v9671 = vadd.f32 0.0, %v9670
      %9672 = vmatmul.bf16.gmra.mxu0 %v9426
      %v9673 = vpop.f32.mrf.mxu0
      %v9674 = vadd.f32 0.0, %v9673
      %v9675 = vpop.f32.mrf.mxu0
      %v9676 = vadd.f32 0.0, %v9675
      %9677 = vmatmul.bf16.gmra.mxu0 %v9429
      %v9678 = vpop.f32.mrf.mxu0
      %v9679 = vadd.f32 0.0, %v9678
      %v9680 = vpop.f32.mrf.mxu0
      %v9681 = vadd.f32 0.0, %v9680
      %9682 = vmatmul.bf16.gmra.mxu0 %v9432
      %v9683 = vpop.f32.mrf.mxu0
      %v9684 = vadd.f32 0.0, %v9683
      %v9685 = vpop.f32.mrf.mxu0
      %v9686 = vadd.f32 0.0, %v9685
      %9687 = vmatmul.bf16.gmra.mxu0 %v9435
      %v9688 = vpop.f32.mrf.mxu0
      %v9689 = vadd.f32 0.0, %v9688
      %v9690 = vpop.f32.mrf.mxu0
      %v9691 = vadd.f32 0.0, %v9690
      %9692 = vmatmul.bf16.gmra.mxu0 %v9438
      %v9693 = vpop.f32.mrf.mxu0
      %v9694 = vadd.f32 0.0, %v9693
      %v9695 = vpop.f32.mrf.mxu0
      %v9696 = vadd.f32 0.0, %v9695
      %9697 = vmatmul.bf16.gmra.mxu0 %v9441
      %v9698 = vpop.f32.mrf.mxu0
      %v9699 = vadd.f32 0.0, %v9698
      %v9700 = vpop.f32.mrf.mxu0
      %v9701 = vadd.f32 0.0, %v9700
      %9702 = vmatmul.bf16.gmra.mxu0 %v9444
      %v9703 = vpop.f32.mrf.mxu0
      %v9704 = vadd.f32 0.0, %v9703
      %v9705 = vpop.f32.mrf.mxu0
      %v9706 = vadd.f32 0.0, %v9705
      %9707 = vmatmul.bf16.gmra.mxu0 %v9447
      %v9708 = vpop.f32.mrf.mxu0
      %v9709 = vadd.f32 0.0, %v9708
      %v9710 = vpop.f32.mrf.mxu0
      %v9711 = vadd.f32 0.0, %v9710
      %9712 = vmatmul.bf16.gmra.mxu0 %v9450
      %v9713 = vpop.f32.mrf.mxu0
      %v9714 = vadd.f32 0.0, %v9713
      %v9715 = vpop.f32.mrf.mxu0
      %v9716 = vadd.f32 0.0, %v9715
      %9717 = vmatmul.bf16.gmra.mxu0 %v9453
      %v9718 = vpop.f32.mrf.mxu0
      %v9719 = vadd.f32 0.0, %v9718
      %v9720 = vpop.f32.mrf.mxu0
      %v9721 = vadd.f32 0.0, %v9720
      %9722 = vmatmul.bf16.gmra.mxu0 %v9456
      %v9723 = vpop.f32.mrf.mxu0
      %v9724 = vadd.f32 0.0, %v9723
      %v9725 = vpop.f32.mrf.mxu0
      %v9726 = vadd.f32 0.0, %v9725
      %9727 = vmatmul.bf16.gmra.mxu0 %v9459
      %v9728 = vpop.f32.mrf.mxu0
      %v9729 = vadd.f32 0.0, %v9728
      %v9730 = vpop.f32.mrf.mxu0
      %v9731 = vadd.f32 0.0, %v9730
      %9732 = vmatmul.bf16.gmra.mxu0 %v9462
      %v9733 = vpop.f32.mrf.mxu0
      %v9734 = vadd.f32 0.0, %v9733
      %v9735 = vpop.f32.mrf.mxu0
      %v9736 = vadd.f32 0.0, %v9735
      %9737 = vmatmul.bf16.gmra.mxu0 %v9465
      %v9738 = vpop.f32.mrf.mxu0
      %v9739 = vadd.f32 0.0, %v9738
      %v9740 = vpop.f32.mrf.mxu0
      %v9741 = vadd.f32 0.0, %v9740
      %9742 = vmatmul.bf16.gmra.mxu0 %v9468
      %v9743 = vpop.f32.mrf.mxu0
      %v9744 = vadd.f32 0.0, %v9743
      %v9745 = vpop.f32.mrf.mxu0
      %v9746 = vadd.f32 0.0, %v9745
      %9747 = vmatmul.bf16.gmra.mxu0 %v9471
      %v9748 = vpop.f32.mrf.mxu0
      %v9749 = vadd.f32 0.0, %v9748
      %v9750 = vpop.f32.mrf.mxu0
      %v9751 = vadd.f32 0.0, %v9750
      %9752 = vmatmul.bf16.gmra.mxu0 %v9474
      %v9753 = vpop.f32.mrf.mxu0
      %v9754 = vadd.f32 0.0, %v9753
      %v9755 = vpop.f32.mrf.mxu0
      %v9756 = vadd.f32 0.0, %v9755
      %9757 = vmatmul.bf16.gmra.mxu0 %v9477
      %v9758 = vpop.f32.mrf.mxu0
      %v9759 = vadd.f32 0.0, %v9758
      %v9760 = vpop.f32.mrf.mxu0
      %v9761 = vadd.f32 0.0, %v9760
      %9762 = vmatmul.bf16.gmra.mxu0 %v9480
      %v9763 = vpop.f32.mrf.mxu0
      %v9764 = vadd.f32 0.0, %v9763
      %v9765 = vpop.f32.mrf.mxu0
      %v9766 = vadd.f32 0.0, %v9765
      %9767 = vmatmul.bf16.gmra.mxu0 %v9483
      %v9768 = vpop.f32.mrf.mxu0
      %v9769 = vadd.f32 0.0, %v9768
      %v9770 = vpop.f32.mrf.mxu0
      %v9771 = vadd.f32 0.0, %v9770
      %9772 = vmatmul.bf16.gmra.mxu0 %v9486
      %v9773 = vpop.f32.mrf.mxu0
      %v9774 = vadd.f32 0.0, %v9773
      %v9775 = vpop.f32.mrf.mxu0
      %v9776 = vadd.f32 0.0, %v9775
      %9777 = vmatmul.bf16.gmra.mxu0 %v9489
      %v9778 = vpop.f32.mrf.mxu0
      %v9779 = vadd.f32 0.0, %v9778
      %v9780 = vpop.f32.mrf.mxu0
      %v9781 = vadd.f32 0.0, %v9780
      %9782 = vmatmul.bf16.gmra.mxu0 %v9492
      %v9783 = vpop.f32.mrf.mxu0
      %v9784 = vadd.f32 0.0, %v9783
      %v9785 = vpop.f32.mrf.mxu0
      %v9786 = vadd.f32 0.0, %v9785
      %9787 = vmatmul.bf16.gmra.mxu0 %v9495
      %v9788 = vpop.f32.mrf.mxu0
      %v9789 = vadd.f32 0.0, %v9788
      %v9790 = vpop.f32.mrf.mxu0
      %v9791 = vadd.f32 0.0, %v9790
      %9792 = vmatmul.bf16.gmra.mxu0 %v9498
      %v9793 = vpop.f32.mrf.mxu0
      %v9794 = vadd.f32 0.0, %v9793
      %v9795 = vpop.f32.mrf.mxu0
      %v9796 = vadd.f32 0.0, %v9795
      %9797 = vmatmul.bf16.gmra.mxu0 %v9501
      %v9798 = vpop.f32.mrf.mxu0
      %v9799 = vadd.f32 0.0, %v9798
      %v9800 = vpop.f32.mrf.mxu0
      %v9801 = vadd.f32 0.0, %v9800
      %9802 = vmatmul.bf16.gmra.mxu0 %v9504
      %v9803 = vpop.f32.mrf.mxu0
      %v9804 = vadd.f32 0.0, %v9803
      %v9805 = vpop.f32.mrf.mxu0
      %v9806 = vadd.f32 0.0, %v9805
      %9807 = vmatmul.bf16.gmra.mxu0 %v9507
      %v9808 = vpop.f32.mrf.mxu0
      %v9809 = vadd.f32 0.0, %v9808
      %v9810 = vpop.f32.mrf.mxu0
      %v9811 = vadd.f32 0.0, %v9810
      %9812 = vmatmul.bf16.gmra.mxu0 %v9510
      %v9813 = vpop.f32.mrf.mxu0
      %v9814 = vadd.f32 0.0, %v9813
      %v9815 = vpop.f32.mrf.mxu0
      %v9816 = vadd.f32 0.0, %v9815
      %9817 = vmatmul.bf16.gmra.mxu0 %v9513
      %v9818 = vpop.f32.mrf.mxu0
      %v9819 = vadd.f32 0.0, %v9818
      %v9820 = vpop.f32.mrf.mxu0
      %v9821 = vadd.f32 0.0, %v9820
      %9822 = vmatmul.bf16.gmra.mxu0 %v9516
      %v9823 = vpop.f32.mrf.mxu0
      %v9824 = vadd.f32 0.0, %v9823
      %v9825 = vpop.f32.mrf.mxu0
      %v9826 = vadd.f32 0.0, %v9825
      %9827 = vmatmul.bf16.gmra.mxu0 %v9519
      %v9828 = vpop.f32.mrf.mxu0
      %v9829 = vadd.f32 0.0, %v9828
      %v9830 = vpop.f32.mrf.mxu0
      %v9831 = vadd.f32 0.0, %v9830
      %9832 = vmatmul.bf16.gmra.mxu0 %v9522
      %v9833 = vpop.f32.mrf.mxu0
      %v9834 = vadd.f32 0.0, %v9833
      %v9835 = vpop.f32.mrf.mxu0
      %v9836 = vadd.f32 0.0, %v9835
      %9837 = vmatmul.bf16.gmra.mxu0 %v9525
      %v9838 = vpop.f32.mrf.mxu0
      %v9839 = vadd.f32 0.0, %v9838
      %v9840 = vpop.f32.mrf.mxu0
      %v9841 = vadd.f32 0.0, %v9840
      %9842 = vmatmul.bf16.gmra.mxu0 %v9528
      %v9843 = vpop.f32.mrf.mxu0
      %v9844 = vadd.f32 0.0, %v9843
      %v9845 = vpop.f32.mrf.mxu0
      %v9846 = vadd.f32 0.0, %v9845
      %9847 = vmatmul.bf16.gmra.mxu0 %v9531
      %v9848 = vpop.f32.mrf.mxu0
      %v9849 = vadd.f32 0.0, %v9848
      %v9850 = vpop.f32.mrf.mxu0
      %v9851 = vadd.f32 0.0, %v9850
      %9852 = vmatmul.bf16.gmra.mxu0 %v9534
      %v9853 = vpop.f32.mrf.mxu0
      %v9854 = vadd.f32 0.0, %v9853
      %v9855 = vpop.f32.mrf.mxu0
      %v9856 = vadd.f32 0.0, %v9855
      %9857 = vmatmul.bf16.gmra.mxu0 %v9537
      %v9858 = vpop.f32.mrf.mxu0
      %v9859 = vadd.f32 0.0, %v9858
      %v9860 = vpop.f32.mrf.mxu0
      %v9861 = vadd.f32 0.0, %v9860
      %9862 = vmatmul.bf16.gmra.mxu0 %v9540
      %v9863 = vpop.f32.mrf.mxu0
      %v9864 = vadd.f32 0.0, %v9863
      %v9865 = vpop.f32.mrf.mxu0
      %v9866 = vadd.f32 0.0, %v9865
      %9867 = vmatmul.bf16.gmra.mxu0 %v9543
      %v9868 = vpop.f32.mrf.mxu0
      %v9869 = vadd.f32 0.0, %v9868
      %v9870 = vpop.f32.mrf.mxu0
      %v9871 = vadd.f32 0.0, %v9870
      %9872 = vmatmul.bf16.gmra.mxu0 %v9546
      %v9873 = vpop.f32.mrf.mxu0
      %v9874 = vadd.f32 0.0, %v9873
      %v9875 = vpop.f32.mrf.mxu0
      %v9876 = vadd.f32 0.0, %v9875
      %9877 = vmatmul.bf16.gmra.mxu0 %v9549
      %v9878 = vpop.f32.mrf.mxu0
      %v9879 = vadd.f32 0.0, %v9878
      %v9880 = vpop.f32.mrf.mxu0
      %v9881 = vadd.f32 0.0, %v9880
      %9882 = vmatmul.bf16.gmra.mxu0 %v9552
      %v9883 = vpop.f32.mrf.mxu0
      %v9884 = vadd.f32 0.0, %v9883
      %v9885 = vpop.f32.mrf.mxu0
      %v9886 = vadd.f32 0.0, %v9885
      %9887 = vmatmul.bf16.gmra.mxu0 %v9555
      %v9888 = vpop.f32.mrf.mxu0
      %v9889 = vadd.f32 0.0, %v9888
      %v9890 = vpop.f32.mrf.mxu0
      %v9891 = vadd.f32 0.0, %v9890
      %9892 = vmatmul.bf16.gmra.mxu0 %v9558
      %v9893 = vpop.f32.mrf.mxu0
      %v9894 = vadd.f32 0.0, %v9893
      %v9895 = vpop.f32.mrf.mxu0
      %v9896 = vadd.f32 0.0, %v9895
      %9897 = vmatmul.bf16.gmra.mxu0 %v9561
      %v9898 = vpop.f32.mrf.mxu0
      %v9899 = vadd.f32 0.0, %v9898
      %v9900 = vpop.f32.mrf.mxu0
      %v9901 = vadd.f32 0.0, %v9900
      %9902 = vmatmul.bf16.gmra.mxu0 %v9564
      %v9903 = vpop.f32.mrf.mxu0
      %v9904 = vadd.f32 0.0, %v9903
      %v9905 = vpop.f32.mrf.mxu0
      %v9906 = vadd.f32 0.0, %v9905
      %9907 = vmatmul.bf16.gmra.mxu0 %v9567
      %v9908 = vpop.f32.mrf.mxu0
      %v9909 = vadd.f32 0.0, %v9908
      %v9910 = vpop.f32.mrf.mxu0
      %v9911 = vadd.f32 0.0, %v9910
      %9912 = vmatmul.bf16.gmra.mxu0 %v9570
      %v9913 = vpop.f32.mrf.mxu0
      %v9914 = vadd.f32 0.0, %v9913
      %v9915 = vpop.f32.mrf.mxu0
      %v9916 = vadd.f32 0.0, %v9915
      %9917 = vmatmul.bf16.gmra.mxu0 %v9573
      %v9918 = vpop.f32.mrf.mxu0
      %v9919 = vadd.f32 0.0, %v9918
      %v9920 = vpop.f32.mrf.mxu0
      %v9921 = vadd.f32 0.0, %v9920
      %9922 = vmatmul.bf16.gmra.mxu0 %v9576
      %v9923 = vpop.f32.mrf.mxu0
      %v9924 = vadd.f32 0.0, %v9923
      %v9925 = vpop.f32.mrf.mxu0
      %v9926 = vadd.f32 0.0, %v9925
      %9927 = vmatmul.bf16.gmra.mxu0 %v9579
      %v9928 = vpop.f32.mrf.mxu0
      %v9929 = vadd.f32 0.0, %v9928
      %v9930 = vpop.f32.mrf.mxu0
      %v9931 = vadd.f32 0.0, %v9930
      %9932 = vdwg.mxu0
      %v9933 = vadd.f32 %v9097, %v9594
      %v9934 = vadd.f32 %v9098, %v9596
      %v9935 = vadd.f32 %v9099, %v9599
      %v9936 = vadd.f32 %v9100, %v9601
      %v9937 = vadd.f32 %v9101, %v9604
      %v9938 = vadd.f32 %v9102, %v9606
      %v9939 = vadd.f32 %v9103, %v9609
      %v9940 = vadd.f32 %v9104, %v9611
      %v9941 = vadd.f32 %v9105, %v9614
      %v9942 = vadd.f32 %v9106, %v9616
      %v9943 = vadd.f32 %v9107, %v9619
      %v9944 = vadd.f32 %v9108, %v9621
      %v9945 = vadd.f32 %v9109, %v9624
      %v9946 = vadd.f32 %v9110, %v9626
      %v9947 = vadd.f32 %v9111, %v9629
      %v9948 = vadd.f32 %v9112, %v9631
      %v9949 = vadd.f32 %v9113, %v9634
      %v9950 = vadd.f32 %v9114, %v9636
      %v9951 = vadd.f32 %v9115, %v9639
      %v9952 = vadd.f32 %v9116, %v9641
      %v9953 = vadd.f32 %v9117, %v9644
      %v9954 = vadd.f32 %v9118, %v9646
      %v9955 = vadd.f32 %v9119, %v9649
      %v9956 = vadd.f32 %v9120, %v9651
      %v9957 = vadd.f32 %v9121, %v9654
      %v9958 = vadd.f32 %v9122, %v9656
      %v9959 = vadd.f32 %v9123, %v9659
      %v9960 = vadd.f32 %v9124, %v9661
      %v9961 = vadd.f32 %v9125, %v9664
      %v9962 = vadd.f32 %v9126, %v9666
      %v9963 = vadd.f32 %v9127, %v9669
      %v9964 = vadd.f32 %v9128, %v9671
      %v9965 = vadd.f32 %v9129, %v9674
      %v9966 = vadd.f32 %v9130, %v9676
      %v9967 = vadd.f32 %v9131, %v9679
      %v9968 = vadd.f32 %v9132, %v9681
      %v9969 = vadd.f32 %v9133, %v9684
      %v9970 = vadd.f32 %v9134, %v9686
      %v9971 = vadd.f32 %v9135, %v9689
      %v9972 = vadd.f32 %v9136, %v9691
      %v9973 = vadd.f32 %v9137, %v9694
      %v9974 = vadd.f32 %v9138, %v9696
      %v9975 = vadd.f32 %v9139, %v9699
      %v9976 = vadd.f32 %v9140, %v9701
      %v9977 = vadd.f32 %v9141, %v9704
      %v9978 = vadd.f32 %v9142, %v9706
      %v9979 = vadd.f32 %v9143, %v9709
      %v9980 = vadd.f32 %v9144, %v9711
      %v9981 = vadd.f32 %v9145, %v9714
      %v9982 = vadd.f32 %v9146, %v9716
      %v9983 = vadd.f32 %v9147, %v9719
      %v9984 = vadd.f32 %v9148, %v9721
      %v9985 = vadd.f32 %v9149, %v9724
      %v9986 = vadd.f32 %v9150, %v9726
      %v9987 = vadd.f32 %v9151, %v9729
      %v9988 = vadd.f32 %v9152, %v9731
      %v9989 = vadd.f32 %v9153, %v9734
      %v9990 = vadd.f32 %v9154, %v9736
      %v9991 = vadd.f32 %v9155, %v9739
      %v9992 = vadd.f32 %v9156, %v9741
      %v9993 = vadd.f32 %v9157, %v9744
      %v9994 = vadd.f32 %v9158, %v9746
      %v9995 = vadd.f32 %v9159, %v9749
      %v9996 = vadd.f32 %v9160, %v9751
      %v9997 = vadd.f32 %v9161, %v9754
      %v9998 = vadd.f32 %v9162, %v9756
      %v9999 = vadd.f32 %v9163, %v9759
      %v10000 = vadd.f32 %v9164, %v9761
      %v10001 = vadd.f32 %v9165, %v9764
      %v10002 = vadd.f32 %v9166, %v9766
      %v10003 = vadd.f32 %v9167, %v9769
      %v10004 = vadd.f32 %v9168, %v9771
      %v10005 = vadd.f32 %v9169, %v9774
      %v10006 = vadd.f32 %v9170, %v9776
      %v10007 = vadd.f32 %v9171, %v9779
      %v10008 = vadd.f32 %v9172, %v9781
      %v10009 = vadd.f32 %v9173, %v9784
      %v10010 = vadd.f32 %v9174, %v9786
      %v10011 = vadd.f32 %v9175, %v9789
      %v10012 = vadd.f32 %v9176, %v9791
      %v10013 = vadd.f32 %v9177, %v9794
      %v10014 = vadd.f32 %v9178, %v9796
      %v10015 = vadd.f32 %v9179, %v9799
      %v10016 = vadd.f32 %v9180, %v9801
      %v10017 = vadd.f32 %v9181, %v9804
      %v10018 = vadd.f32 %v9182, %v9806
      %v10019 = vadd.f32 %v9183, %v9809
      %v10020 = vadd.f32 %v9184, %v9811
      %v10021 = vadd.f32 %v9185, %v9814
      %v10022 = vadd.f32 %v9186, %v9816
      %v10023 = vadd.f32 %v9187, %v9819
      %v10024 = vadd.f32 %v9188, %v9821
      %v10025 = vadd.f32 %v9189, %v9824
      %v10026 = vadd.f32 %v9190, %v9826
      %v10027 = vadd.f32 %v9191, %v9829
      %v10028 = vadd.f32 %v9192, %v9831
      %v10029 = vadd.f32 %v9193, %v9834
      %v10030 = vadd.f32 %v9194, %v9836
      %v10031 = vadd.f32 %v9195, %v9839
      %v10032 = vadd.f32 %v9196, %v9841
      %v10033 = vadd.f32 %v9197, %v9844
      %v10034 = vadd.f32 %v9198, %v9846
      %v10035 = vadd.f32 %v9199, %v9849
      %v10036 = vadd.f32 %v9200, %v9851
      %v10037 = vadd.f32 %v9201, %v9854
      %v10038 = vadd.f32 %v9202, %v9856
      %v10039 = vadd.f32 %v9203, %v9859
      %v10040 = vadd.f32 %v9204, %v9861
      %v10041 = vadd.f32 %v9205, %v9864
      %v10042 = vadd.f32 %v9206, %v9866
      %v10043 = vadd.f32 %v9207, %v9869
      %v10044 = vadd.f32 %v9208, %v9871
      %v10045 = vadd.f32 %v9209, %v9874
      %v10046 = vadd.f32 %v9210, %v9876
      %v10047 = vadd.f32 %v9211, %v9879
      %v10048 = vadd.f32 %v9212, %v9881
      %v10049 = vadd.f32 %v9213, %v9884
      %v10050 = vadd.f32 %v9214, %v9886
      %v10051 = vadd.f32 %v9215, %v9889
      %v10052 = vadd.f32 %v9216, %v9891
      %v10053 = vadd.f32 %v9217, %v9894
      %v10054 = vadd.f32 %v9218, %v9896
      %v10055 = vadd.f32 %v9219, %v9899
      %v10056 = vadd.f32 %v9220, %v9901
      %v10057 = vadd.f32 %v9221, %v9904
      %v10058 = vadd.f32 %v9222, %v9906
      %v10059 = vadd.f32 %v9223, %v9909
      %v10060 = vadd.f32 %v9224, %v9911
      %v10061 = vadd.f32 %v9225, %v9914
      %v10062 = vadd.f32 %v9226, %v9916
      %v10063 = vadd.f32 %v9227, %v9919
      %v10064 = vadd.f32 %v9228, %v9921
      %v10065 = vadd.f32 %v9229, %v9924
      %v10066 = vadd.f32 %v9230, %v9926
      %v10067 = vadd.f32 %v9231, %v9929
      %v10068 = vadd.f32 %v9232, %v9931
      %v10069 = vld [vmem:[%s213] sm:$0x1]
      %v10071 = vperm.slane %v10069, 0
      %v10073 = vadd.f32 %v9933, %v10071
      %v10074 = vadd.f32 %v9934, %v10071
      %v10075 = vadd.f32 %v9935, %v10071
      %v10076 = vadd.f32 %v9936, %v10071
      %v10077 = vadd.f32 %v9937, %v10071
      %v10078 = vadd.f32 %v9938, %v10071
      %v10079 = vadd.f32 %v9939, %v10071
      %v10080 = vadd.f32 %v9940, %v10071
      %v10081 = vadd.f32 %v9941, %v10071
      %v10082 = vadd.f32 %v9942, %v10071
      %v10083 = vadd.f32 %v9943, %v10071
      %v10084 = vadd.f32 %v9944, %v10071
      %v10085 = vadd.f32 %v9945, %v10071
      %v10086 = vadd.f32 %v9946, %v10071
      %v10087 = vadd.f32 %v9947, %v10071
      %v10088 = vadd.f32 %v9948, %v10071
      %v10089 = vadd.f32 %v9949, %v10071
      %v10090 = vadd.f32 %v9950, %v10071
      %v10091 = vadd.f32 %v9951, %v10071
      %v10092 = vadd.f32 %v9952, %v10071
      %v10093 = vadd.f32 %v9953, %v10071
      %v10094 = vadd.f32 %v9954, %v10071
      %v10095 = vadd.f32 %v9955, %v10071
      %v10096 = vadd.f32 %v9956, %v10071
      %v10097 = vadd.f32 %v9957, %v10071
      %v10098 = vadd.f32 %v9958, %v10071
      %v10099 = vadd.f32 %v9959, %v10071
      %v10100 = vadd.f32 %v9960, %v10071
      %v10101 = vadd.f32 %v9961, %v10071
      %v10102 = vadd.f32 %v9962, %v10071
      %v10103 = vadd.f32 %v9963, %v10071
      %v10104 = vadd.f32 %v9964, %v10071
      %v10105 = vadd.f32 %v9965, %v10071
      %v10106 = vadd.f32 %v9966, %v10071
      %v10107 = vadd.f32 %v9967, %v10071
      %v10108 = vadd.f32 %v9968, %v10071
      %v10109 = vadd.f32 %v9969, %v10071
      %v10110 = vadd.f32 %v9970, %v10071
      %v10111 = vadd.f32 %v9971, %v10071
      %v10112 = vadd.f32 %v9972, %v10071
      %v10113 = vadd.f32 %v9973, %v10071
      %v10114 = vadd.f32 %v9974, %v10071
      %v10115 = vadd.f32 %v9975, %v10071
      %v10116 = vadd.f32 %v9976, %v10071
      %v10117 = vadd.f32 %v9977, %v10071
      %v10118 = vadd.f32 %v9978, %v10071
      %v10119 = vadd.f32 %v9979, %v10071
      %v10120 = vadd.f32 %v9980, %v10071
      %v10121 = vadd.f32 %v9981, %v10071
      %v10122 = vadd.f32 %v9982, %v10071
      %v10123 = vadd.f32 %v9983, %v10071
      %v10124 = vadd.f32 %v9984, %v10071
      %v10125 = vadd.f32 %v9985, %v10071
      %v10126 = vadd.f32 %v9986, %v10071
      %v10127 = vadd.f32 %v9987, %v10071
      %v10128 = vadd.f32 %v9988, %v10071
      %v10129 = vadd.f32 %v9989, %v10071
      %v10130 = vadd.f32 %v9990, %v10071
      %v10131 = vadd.f32 %v9991, %v10071
      %v10132 = vadd.f32 %v9992, %v10071
      %v10133 = vadd.f32 %v9993, %v10071
      %v10134 = vadd.f32 %v9994, %v10071
      %v10135 = vadd.f32 %v9995, %v10071
      %v10136 = vadd.f32 %v9996, %v10071
      %v10137 = vadd.f32 %v9997, %v10071
      %v10138 = vadd.f32 %v9998, %v10071
      %v10139 = vadd.f32 %v9999, %v10071
      %v10140 = vadd.f32 %v10000, %v10071
      %v10141 = vadd.f32 %v10001, %v10071
      %v10142 = vadd.f32 %v10002, %v10071
      %v10143 = vadd.f32 %v10003, %v10071
      %v10144 = vadd.f32 %v10004, %v10071
      %v10145 = vadd.f32 %v10005, %v10071
      %v10146 = vadd.f32 %v10006, %v10071
      %v10147 = vadd.f32 %v10007, %v10071
      %v10148 = vadd.f32 %v10008, %v10071
      %v10149 = vadd.f32 %v10009, %v10071
      %v10150 = vadd.f32 %v10010, %v10071
      %v10151 = vadd.f32 %v10011, %v10071
      %v10152 = vadd.f32 %v10012, %v10071
      %v10153 = vadd.f32 %v10013, %v10071
      %v10154 = vadd.f32 %v10014, %v10071
      %v10155 = vadd.f32 %v10015, %v10071
      %v10156 = vadd.f32 %v10016, %v10071
      %v10157 = vadd.f32 %v10017, %v10071
      %v10158 = vadd.f32 %v10018, %v10071
      %v10159 = vadd.f32 %v10019, %v10071
      %v10160 = vadd.f32 %v10020, %v10071
      %v10161 = vadd.f32 %v10021, %v10071
      %v10162 = vadd.f32 %v10022, %v10071
      %v10163 = vadd.f32 %v10023, %v10071
      %v10164 = vadd.f32 %v10024, %v10071
      %v10165 = vadd.f32 %v10025, %v10071
      %v10166 = vadd.f32 %v10026, %v10071
      %v10167 = vadd.f32 %v10027, %v10071
      %v10168 = vadd.f32 %v10028, %v10071
      %v10169 = vadd.f32 %v10029, %v10071
      %v10170 = vadd.f32 %v10030, %v10071
      %v10171 = vadd.f32 %v10031, %v10071
      %v10172 = vadd.f32 %v10032, %v10071
      %v10173 = vadd.f32 %v10033, %v10071
      %v10174 = vadd.f32 %v10034, %v10071
      %v10175 = vadd.f32 %v10035, %v10071
      %v10176 = vadd.f32 %v10036, %v10071
      %v10177 = vadd.f32 %v10037, %v10071
      %v10178 = vadd.f32 %v10038, %v10071
      %v10179 = vadd.f32 %v10039, %v10071
      %v10180 = vadd.f32 %v10040, %v10071
      %v10181 = vadd.f32 %v10041, %v10071
      %v10182 = vadd.f32 %v10042, %v10071
      %v10183 = vadd.f32 %v10043, %v10071
      %v10184 = vadd.f32 %v10044, %v10071
      %v10185 = vadd.f32 %v10045, %v10071
      %v10186 = vadd.f32 %v10046, %v10071
      %v10187 = vadd.f32 %v10047, %v10071
      %v10188 = vadd.f32 %v10048, %v10071
      %v10189 = vadd.f32 %v10049, %v10071
      %v10190 = vadd.f32 %v10050, %v10071
      %v10191 = vadd.f32 %v10051, %v10071
      %v10192 = vadd.f32 %v10052, %v10071
      %v10193 = vadd.f32 %v10053, %v10071
      %v10194 = vadd.f32 %v10054, %v10071
      %v10195 = vadd.f32 %v10055, %v10071
      %v10196 = vadd.f32 %v10056, %v10071
      %v10197 = vadd.f32 %v10057, %v10071
      %v10198 = vadd.f32 %v10058, %v10071
      %v10199 = vadd.f32 %v10059, %v10071
      %v10200 = vadd.f32 %v10060, %v10071
      %v10201 = vadd.f32 %v10061, %v10071
      %v10202 = vadd.f32 %v10062, %v10071
      %v10203 = vadd.f32 %v10063, %v10071
      %v10204 = vadd.f32 %v10064, %v10071
      %v10205 = vadd.f32 %v10065, %v10071
      %v10206 = vadd.f32 %v10066, %v10071
      %v10207 = vadd.f32 %v10067, %v10071
      %v10208 = vadd.f32 %v10068, %v10071
      %v10209 = vmax.f32 %v10073, 0.0
      %v10210 = vmax.f32 %v10074, 0.0
      %v10211 = vmax.f32 %v10075, 0.0
      %v10212 = vmax.f32 %v10076, 0.0
      %v10213 = vmax.f32 %v10077, 0.0
      %v10214 = vmax.f32 %v10078, 0.0
      %v10215 = vmax.f32 %v10079, 0.0
      %v10216 = vmax.f32 %v10080, 0.0
      %v10217 = vmax.f32 %v10081, 0.0
      %v10218 = vmax.f32 %v10082, 0.0
      %v10219 = vmax.f32 %v10083, 0.0
      %v10220 = vmax.f32 %v10084, 0.0
      %v10221 = vmax.f32 %v10085, 0.0
      %v10222 = vmax.f32 %v10086, 0.0
      %v10223 = vmax.f32 %v10087, 0.0
      %v10224 = vmax.f32 %v10088, 0.0
      %v10225 = vmax.f32 %v10089, 0.0
      %v10226 = vmax.f32 %v10090, 0.0
      %v10227 = vmax.f32 %v10091, 0.0
      %v10228 = vmax.f32 %v10092, 0.0
      %v10229 = vmax.f32 %v10093, 0.0
      %v10230 = vmax.f32 %v10094, 0.0
      %v10231 = vmax.f32 %v10095, 0.0
      %v10232 = vmax.f32 %v10096, 0.0
      %v10233 = vmax.f32 %v10097, 0.0
      %v10234 = vmax.f32 %v10098, 0.0
      %v10235 = vmax.f32 %v10099, 0.0
      %v10236 = vmax.f32 %v10100, 0.0
      %v10237 = vmax.f32 %v10101, 0.0
      %v10238 = vmax.f32 %v10102, 0.0
      %v10239 = vmax.f32 %v10103, 0.0
      %v10240 = vmax.f32 %v10104, 0.0
      %v10241 = vmax.f32 %v10105, 0.0
      %v10242 = vmax.f32 %v10106, 0.0
      %v10243 = vmax.f32 %v10107, 0.0
      %v10244 = vmax.f32 %v10108, 0.0
      %v10245 = vmax.f32 %v10109, 0.0
      %v10246 = vmax.f32 %v10110, 0.0
      %v10247 = vmax.f32 %v10111, 0.0
      %v10248 = vmax.f32 %v10112, 0.0
      %v10249 = vmax.f32 %v10113, 0.0
      %v10250 = vmax.f32 %v10114, 0.0
      %v10251 = vmax.f32 %v10115, 0.0
      %v10252 = vmax.f32 %v10116, 0.0
      %v10253 = vmax.f32 %v10117, 0.0
      %v10254 = vmax.f32 %v10118, 0.0
      %v10255 = vmax.f32 %v10119, 0.0
      %v10256 = vmax.f32 %v10120, 0.0
      %v10257 = vmax.f32 %v10121, 0.0
      %v10258 = vmax.f32 %v10122, 0.0
      %v10259 = vmax.f32 %v10123, 0.0
      %v10260 = vmax.f32 %v10124, 0.0
      %v10261 = vmax.f32 %v10125, 0.0
      %v10262 = vmax.f32 %v10126, 0.0
      %v10263 = vmax.f32 %v10127, 0.0
      %v10264 = vmax.f32 %v10128, 0.0
      %v10265 = vmax.f32 %v10129, 0.0
      %v10266 = vmax.f32 %v10130, 0.0
      %v10267 = vmax.f32 %v10131, 0.0
      %v10268 = vmax.f32 %v10132, 0.0
      %v10269 = vmax.f32 %v10133, 0.0
      %v10270 = vmax.f32 %v10134, 0.0
      %v10271 = vmax.f32 %v10135, 0.0
      %v10272 = vmax.f32 %v10136, 0.0
      %v10273 = vmax.f32 %v10137, 0.0
      %v10274 = vmax.f32 %v10138, 0.0
      %v10275 = vmax.f32 %v10139, 0.0
      %v10276 = vmax.f32 %v10140, 0.0
      %v10277 = vmax.f32 %v10141, 0.0
      %v10278 = vmax.f32 %v10142, 0.0
      %v10279 = vmax.f32 %v10143, 0.0
      %v10280 = vmax.f32 %v10144, 0.0
      %v10281 = vmax.f32 %v10145, 0.0
      %v10282 = vmax.f32 %v10146, 0.0
      %v10283 = vmax.f32 %v10147, 0.0
      %v10284 = vmax.f32 %v10148, 0.0
      %v10285 = vmax.f32 %v10149, 0.0
      %v10286 = vmax.f32 %v10150, 0.0
      %v10287 = vmax.f32 %v10151, 0.0
      %v10288 = vmax.f32 %v10152, 0.0
      %v10289 = vmax.f32 %v10153, 0.0
      %v10290 = vmax.f32 %v10154, 0.0
      %v10291 = vmax.f32 %v10155, 0.0
      %v10292 = vmax.f32 %v10156, 0.0
      %v10293 = vmax.f32 %v10157, 0.0
      %v10294 = vmax.f32 %v10158, 0.0
      %v10295 = vmax.f32 %v10159, 0.0
      %v10296 = vmax.f32 %v10160, 0.0
      %v10297 = vmax.f32 %v10161, 0.0
      %v10298 = vmax.f32 %v10162, 0.0
      %v10299 = vmax.f32 %v10163, 0.0
      %v10300 = vmax.f32 %v10164, 0.0
      %v10301 = vmax.f32 %v10165, 0.0
      %v10302 = vmax.f32 %v10166, 0.0
      %v10303 = vmax.f32 %v10167, 0.0
      %v10304 = vmax.f32 %v10168, 0.0
      %v10305 = vmax.f32 %v10169, 0.0
      %v10306 = vmax.f32 %v10170, 0.0
      %v10307 = vmax.f32 %v10171, 0.0
      %v10308 = vmax.f32 %v10172, 0.0
      %v10309 = vmax.f32 %v10173, 0.0
      %v10310 = vmax.f32 %v10174, 0.0
      %v10311 = vmax.f32 %v10175, 0.0
      %v10312 = vmax.f32 %v10176, 0.0
      %v10313 = vmax.f32 %v10177, 0.0
      %v10314 = vmax.f32 %v10178, 0.0
      %v10315 = vmax.f32 %v10179, 0.0
      %v10316 = vmax.f32 %v10180, 0.0
      %v10317 = vmax.f32 %v10181, 0.0
      %v10318 = vmax.f32 %v10182, 0.0
      %v10319 = vmax.f32 %v10183, 0.0
      %v10320 = vmax.f32 %v10184, 0.0
      %v10321 = vmax.f32 %v10185, 0.0
      %v10322 = vmax.f32 %v10186, 0.0
      %v10323 = vmax.f32 %v10187, 0.0
      %v10324 = vmax.f32 %v10188, 0.0
      %v10325 = vmax.f32 %v10189, 0.0
      %v10326 = vmax.f32 %v10190, 0.0
      %v10327 = vmax.f32 %v10191, 0.0
      %v10328 = vmax.f32 %v10192, 0.0
      %v10329 = vmax.f32 %v10193, 0.0
      %v10330 = vmax.f32 %v10194, 0.0
      %v10331 = vmax.f32 %v10195, 0.0
      %v10332 = vmax.f32 %v10196, 0.0
      %v10333 = vmax.f32 %v10197, 0.0
      %v10334 = vmax.f32 %v10198, 0.0
      %v10335 = vmax.f32 %v10199, 0.0
      %v10336 = vmax.f32 %v10200, 0.0
      %v10337 = vmax.f32 %v10201, 0.0
      %v10338 = vmax.f32 %v10202, 0.0
      %v10339 = vmax.f32 %v10203, 0.0
      %v10340 = vmax.f32 %v10204, 0.0
      %v10341 = vmax.f32 %v10205, 0.0
      %v10342 = vmax.f32 %v10206, 0.0
      %v10343 = vmax.f32 %v10207, 0.0
      %v10344 = vmax.f32 %v10208, 0.0
      %vm10345 = vcmask 523264
      %10346 = vst.msk [vmem:[%s221] sm:$0xff] %vm10345, %v10209
      %10347 = vst.msk [vmem:[%s221 + $0x8] sm:$0xff] %vm10345, %v10210
      %10348 = vst.msk [vmem:[%s221 + $0x10] sm:$0xff] %vm10345, %v10211
      %10349 = vst.msk [vmem:[%s221 + $0x18] sm:$0xff] %vm10345, %v10212
      %10350 = vst.msk [vmem:[%s221 + $0x20] sm:$0xff] %vm10345, %v10213
      %10351 = vst.msk [vmem:[%s221 + $0x28] sm:$0xff] %vm10345, %v10214
      %10352 = vst.msk [vmem:[%s221 + $0x30] sm:$0xff] %vm10345, %v10215
      %10353 = vst.msk [vmem:[%s221 + $0x38] sm:$0xff] %vm10345, %v10216
      %10354 = vst.msk [vmem:[%s221 + $0x40] sm:$0xff] %vm10345, %v10217
      %10355 = vst.msk [vmem:[%s221 + $0x48] sm:$0xff] %vm10345, %v10218
      %10356 = vst.msk [vmem:[%s221 + $0x50] sm:$0xff] %vm10345, %v10219
      %10357 = vst.msk [vmem:[%s221 + $0x58] sm:$0xff] %vm10345, %v10220
      %10358 = vst.msk [vmem:[%s221 + $0x60] sm:$0xff] %vm10345, %v10221
      %10359 = vst.msk [vmem:[%s221 + $0x68] sm:$0xff] %vm10345, %v10222
      %10360 = vst.msk [vmem:[%s221 + $0x70] sm:$0xff] %vm10345, %v10223
      %10361 = vst.msk [vmem:[%s221 + $0x78] sm:$0xff] %vm10345, %v10224
      %10362 = vst.msk [vmem:[%s221 + $0x80] sm:$0xff] %vm10345, %v10225
      %10363 = vst.msk [vmem:[%s221 + $0x88] sm:$0xff] %vm10345, %v10226
      %10364 = vst.msk [vmem:[%s221 + $0x90] sm:$0xff] %vm10345, %v10227
      %10365 = vst.msk [vmem:[%s221 + $0x98] sm:$0xff] %vm10345, %v10228
      %10366 = vst.msk [vmem:[%s221 + $0xa0] sm:$0xff] %vm10345, %v10229
      %10367 = vst.msk [vmem:[%s221 + $0xa8] sm:$0xff] %vm10345, %v10230
      %10368 = vst.msk [vmem:[%s221 + $0xb0] sm:$0xff] %vm10345, %v10231
      %10369 = vst.msk [vmem:[%s221 + $0xb8] sm:$0xff] %vm10345, %v10232
      %10370 = vst.msk [vmem:[%s221 + $0xc0] sm:$0xff] %vm10345, %v10233
      %10371 = vst.msk [vmem:[%s221 + $0xc8] sm:$0xff] %vm10345, %v10234
      %10372 = vst.msk [vmem:[%s221 + $0xd0] sm:$0xff] %vm10345, %v10235
      %10373 = vst.msk [vmem:[%s221 + $0xd8] sm:$0xff] %vm10345, %v10236
      %10374 = vst.msk [vmem:[%s221 + $0xe0] sm:$0xff] %vm10345, %v10237
      %10375 = vst.msk [vmem:[%s221 + $0xe8] sm:$0xff] %vm10345, %v10238
      %10376 = vst.msk [vmem:[%s221 + $0xf0] sm:$0xff] %vm10345, %v10239
      %10377 = vst.msk [vmem:[%s221 + $0xf8] sm:$0xff] %vm10345, %v10240
      %10378 = vst.msk [vmem:[%s221 + $0x100] sm:$0xff] %vm10345, %v10241
      %10379 = vst.msk [vmem:[%s221 + $0x108] sm:$0xff] %vm10345, %v10242
      %10380 = vst.msk [vmem:[%s221 + $0x110] sm:$0xff] %vm10345, %v10243
      %10381 = vst.msk [vmem:[%s221 + $0x118] sm:$0xff] %vm10345, %v10244
      %10382 = vst.msk [vmem:[%s221 + $0x120] sm:$0xff] %vm10345, %v10245
      %10383 = vst.msk [vmem:[%s221 + $0x128] sm:$0xff] %vm10345, %v10246
      %10384 = vst.msk [vmem:[%s221 + $0x130] sm:$0xff] %vm10345, %v10247
      %10385 = vst.msk [vmem:[%s221 + $0x138] sm:$0xff] %vm10345, %v10248
      %10386 = vst.msk [vmem:[%s221 + $0x140] sm:$0xff] %vm10345, %v10249
      %10387 = vst.msk [vmem:[%s221 + $0x148] sm:$0xff] %vm10345, %v10250
      %10388 = vst.msk [vmem:[%s221 + $0x150] sm:$0xff] %vm10345, %v10251
      %10389 = vst.msk [vmem:[%s221 + $0x158] sm:$0xff] %vm10345, %v10252
      %10390 = vst.msk [vmem:[%s221 + $0x160] sm:$0xff] %vm10345, %v10253
      %10391 = vst.msk [vmem:[%s221 + $0x168] sm:$0xff] %vm10345, %v10254
      %10392 = vst.msk [vmem:[%s221 + $0x170] sm:$0xff] %vm10345, %v10255
      %10393 = vst.msk [vmem:[%s221 + $0x178] sm:$0xff] %vm10345, %v10256
      %10394 = vst.msk [vmem:[%s221 + $0x180] sm:$0xff] %vm10345, %v10257
      %10395 = vst.msk [vmem:[%s221 + $0x188] sm:$0xff] %vm10345, %v10258
      %10396 = vst.msk [vmem:[%s221 + $0x190] sm:$0xff] %vm10345, %v10259
      %10397 = vst.msk [vmem:[%s221 + $0x198] sm:$0xff] %vm10345, %v10260
      %10398 = vst.msk [vmem:[%s221 + $0x1a0] sm:$0xff] %vm10345, %v10261
      %10399 = vst.msk [vmem:[%s221 + $0x1a8] sm:$0xff] %vm10345, %v10262
      %10400 = vst.msk [vmem:[%s221 + $0x1b0] sm:$0xff] %vm10345, %v10263
      %10401 = vst.msk [vmem:[%s221 + $0x1b8] sm:$0xff] %vm10345, %v10264
      %10402 = vst.msk [vmem:[%s221 + $0x1c0] sm:$0xff] %vm10345, %v10265
      %10403 = vst.msk [vmem:[%s221 + $0x1c8] sm:$0xff] %vm10345, %v10266
      %10404 = vst.msk [vmem:[%s221 + $0x1d0] sm:$0xff] %vm10345, %v10267
      %10405 = vst.msk [vmem:[%s221 + $0x1d8] sm:$0xff] %vm10345, %v10268
      %10406 = vst.msk [vmem:[%s221 + $0x1e0] sm:$0xff] %vm10345, %v10269
      %10407 = vst.msk [vmem:[%s221 + $0x1e8] sm:$0xff] %vm10345, %v10270
      %10408 = vst.msk [vmem:[%s221 + $0x1f0] sm:$0xff] %vm10345, %v10271
      %10409 = vst.msk [vmem:[%s221 + $0x1f8] sm:$0xff] %vm10345, %v10272
      %10410 = vst.msk [vmem:[%s221 + $0x200] sm:$0xff] %vm10345, %v10273
      %10411 = vst.msk [vmem:[%s221 + $0x208] sm:$0xff] %vm10345, %v10274
      %10412 = vst.msk [vmem:[%s221 + $0x210] sm:$0xff] %vm10345, %v10275
      %10413 = vst.msk [vmem:[%s221 + $0x218] sm:$0xff] %vm10345, %v10276
      %10414 = vst.msk [vmem:[%s221 + $0x220] sm:$0xff] %vm10345, %v10277
      %10415 = vst.msk [vmem:[%s221 + $0x228] sm:$0xff] %vm10345, %v10278
      %10416 = vst.msk [vmem:[%s221 + $0x230] sm:$0xff] %vm10345, %v10279
      %10417 = vst.msk [vmem:[%s221 + $0x238] sm:$0xff] %vm10345, %v10280
      %10418 = vst.msk [vmem:[%s221 + $0x240] sm:$0xff] %vm10345, %v10281
      %10419 = vst.msk [vmem:[%s221 + $0x248] sm:$0xff] %vm10345, %v10282
      %10420 = vst.msk [vmem:[%s221 + $0x250] sm:$0xff] %vm10345, %v10283
      %10421 = vst.msk [vmem:[%s221 + $0x258] sm:$0xff] %vm10345, %v10284
      %10422 = vst.msk [vmem:[%s221 + $0x260] sm:$0xff] %vm10345, %v10285
      %10423 = vst.msk [vmem:[%s221 + $0x268] sm:$0xff] %vm10345, %v10286
      %10424 = vst.msk [vmem:[%s221 + $0x270] sm:$0xff] %vm10345, %v10287
      %10425 = vst.msk [vmem:[%s221 + $0x278] sm:$0xff] %vm10345, %v10288
      %10426 = vst.msk [vmem:[%s221 + $0x280] sm:$0xff] %vm10345, %v10289
      %10427 = vst.msk [vmem:[%s221 + $0x288] sm:$0xff] %vm10345, %v10290
      %10428 = vst.msk [vmem:[%s221 + $0x290] sm:$0xff] %vm10345, %v10291
      %10429 = vst.msk [vmem:[%s221 + $0x298] sm:$0xff] %vm10345, %v10292
      %10430 = vst.msk [vmem:[%s221 + $0x2a0] sm:$0xff] %vm10345, %v10293
      %10431 = vst.msk [vmem:[%s221 + $0x2a8] sm:$0xff] %vm10345, %v10294
      %10432 = vst.msk [vmem:[%s221 + $0x2b0] sm:$0xff] %vm10345, %v10295
      %10433 = vst.msk [vmem:[%s221 + $0x2b8] sm:$0xff] %vm10345, %v10296
      %10434 = vst.msk [vmem:[%s221 + $0x2c0] sm:$0xff] %vm10345, %v10297
      %10435 = vst.msk [vmem:[%s221 + $0x2c8] sm:$0xff] %vm10345, %v10298
      %10436 = vst.msk [vmem:[%s221 + $0x2d0] sm:$0xff] %vm10345, %v10299
      %10437 = vst.msk [vmem:[%s221 + $0x2d8] sm:$0xff] %vm10345, %v10300
      %10438 = vst.msk [vmem:[%s221 + $0x2e0] sm:$0xff] %vm10345, %v10301
      %10439 = vst.msk [vmem:[%s221 + $0x2e8] sm:$0xff] %vm10345, %v10302
      %10440 = vst.msk [vmem:[%s221 + $0x2f0] sm:$0xff] %vm10345, %v10303
      %10441 = vst.msk [vmem:[%s221 + $0x2f8] sm:$0xff] %vm10345, %v10304
      %10442 = vst.msk [vmem:[%s221 + $0x300] sm:$0xff] %vm10345, %v10305
      %10443 = vst.msk [vmem:[%s221 + $0x308] sm:$0xff] %vm10345, %v10306
      %10444 = vst.msk [vmem:[%s221 + $0x310] sm:$0xff] %vm10345, %v10307
      %10445 = vst.msk [vmem:[%s221 + $0x318] sm:$0xff] %vm10345, %v10308
      %10446 = vst.msk [vmem:[%s221 + $0x320] sm:$0xff] %vm10345, %v10309
      %10447 = vst.msk [vmem:[%s221 + $0x328] sm:$0xff] %vm10345, %v10310
      %10448 = vst.msk [vmem:[%s221 + $0x330] sm:$0xff] %vm10345, %v10311
      %10449 = vst.msk [vmem:[%s221 + $0x338] sm:$0xff] %vm10345, %v10312
      %10450 = vst.msk [vmem:[%s221 + $0x340] sm:$0xff] %vm10345, %v10313
      %10451 = vst.msk [vmem:[%s221 + $0x348] sm:$0xff] %vm10345, %v10314
      %10452 = vst.msk [vmem:[%s221 + $0x350] sm:$0xff] %vm10345, %v10315
      %10453 = vst.msk [vmem:[%s221 + $0x358] sm:$0xff] %vm10345, %v10316
      %10454 = vst.msk [vmem:[%s221 + $0x360] sm:$0xff] %vm10345, %v10317
      %10455 = vst.msk [vmem:[%s221 + $0x368] sm:$0xff] %vm10345, %v10318
      %10456 = vst.msk [vmem:[%s221 + $0x370] sm:$0xff] %vm10345, %v10319
      %10457 = vst.msk [vmem:[%s221 + $0x378] sm:$0xff] %vm10345, %v10320
      %10458 = vst.msk [vmem:[%s221 + $0x380] sm:$0xff] %vm10345, %v10321
      %10459 = vst.msk [vmem:[%s221 + $0x388] sm:$0xff] %vm10345, %v10322
      %10460 = vst.msk [vmem:[%s221 + $0x390] sm:$0xff] %vm10345, %v10323
      %10461 = vst.msk [vmem:[%s221 + $0x398] sm:$0xff] %vm10345, %v10324
      %10462 = vst.msk [vmem:[%s221 + $0x3a0] sm:$0xff] %vm10345, %v10325
      %10463 = vst.msk [vmem:[%s221 + $0x3a8] sm:$0xff] %vm10345, %v10326
      %10464 = vst.msk [vmem:[%s221 + $0x3b0] sm:$0xff] %vm10345, %v10327
      %10465 = vst.msk [vmem:[%s221 + $0x3b8] sm:$0xff] %vm10345, %v10328
      %10466 = vst.msk [vmem:[%s221 + $0x3c0] sm:$0xff] %vm10345, %v10329
      %10467 = vst.msk [vmem:[%s221 + $0x3c8] sm:$0xff] %vm10345, %v10330
      %10468 = vst.msk [vmem:[%s221 + $0x3d0] sm:$0xff] %vm10345, %v10331
      %10469 = vst.msk [vmem:[%s221 + $0x3d8] sm:$0xff] %vm10345, %v10332
      %10470 = vst.msk [vmem:[%s221 + $0x3e0] sm:$0xff] %vm10345, %v10333
      %10471 = vst.msk [vmem:[%s221 + $0x3e8] sm:$0xff] %vm10345, %v10334
      %10472 = vst.msk [vmem:[%s221 + $0x3f0] sm:$0xff] %vm10345, %v10335
      %10473 = vst.msk [vmem:[%s221 + $0x3f8] sm:$0xff] %vm10345, %v10336
      %10474 = vst.msk [vmem:[%s221 + $0x400] sm:$0xff] %vm10345, %v10337
      %10475 = vst.msk [vmem:[%s221 + $0x408] sm:$0xff] %vm10345, %v10338
      %10476 = vst.msk [vmem:[%s221 + $0x410] sm:$0xff] %vm10345, %v10339
      %10477 = vst.msk [vmem:[%s221 + $0x418] sm:$0xff] %vm10345, %v10340
      %10478 = vst.msk [vmem:[%s221 + $0x420] sm:$0xff] %vm10345, %v10341
      %10479 = vst.msk [vmem:[%s221 + $0x428] sm:$0xff] %vm10345, %v10342
      %10480 = vst.msk [vmem:[%s221 + $0x430] sm:$0xff] %vm10345, %v10343
      %10481 = vst.msk [vmem:[%s221 + $0x438] sm:$0xff] %vm10345, %v10344
      %p10482 = scmp.lt.s32.totalorder %s18, 1
      %s10483 = scalar_select %p10482, %s18, 1
      %p10484 = scmp.lt.s32.totalorder %s19, 0
      %s10485 = scalar_select %p10484, %s19, 0
      %s10486 = smul.addr %s10483, 136
      %s10487 = sadd.s32 %s10485, %s10486
      %s10488 = smul.addr %s10487, 8
      %s10489 = scalar_lea.vmem %s3, %s10488
      // Predicated region
      $region33: #{conv2d.1} parent=31 // pred_check
        %p10490 = pneg %p124
      $region34: #{conv2d.1} parent=31 // pred_check_branch
        %10492 = sbr.rel (%p10490) target = $region36
      $region35: #{conv2d.1} parent=31 // pred_region
        _
      $region36: #{conv2d.1} parent=31 // pred_fallthru
        _
    $region32: #{conv2d.1} parent=5 // pred_fallthru
      _
    %p10493 = scmp.le.s32.totalorder 2, %s9
    // Predicated region
    $region37: #{conv2d.1} parent=5 // pred_check
      %p10494 = pneg %p10493
    $region38: #{conv2d.1} parent=5 // pred_check_branch
      %10496 = sbr.rel (%p10494) target = $region40
    $region39: #{conv2d.1} parent=5 // pred_region
      %s10497 = ssub.s32 %s9, 2
      // Predicated region
      $region41: #{conv2d.1} parent=39 // pred_check
        %p10498 = pneg %p130
      $region42: #{conv2d.1} parent=39 // pred_check_branch
        %10500 = sbr.rel (%p10498) target = $region44
      $region43: #{conv2d.1} parent=39 // pred_region
        %p10501 = scmp.lt.s32.totalorder %s20, 1
        %s10502 = scalar_select %p10501, %s20, 1
        %p10503 = scmp.lt.s32.totalorder %s21, 0
        %s10504 = scalar_select %p10503, %s21, 0
        %s10505 = smul.addr %s10502, 136
        %s10506 = sadd.s32 %s10504, %s10505
        %s10507 = smul.addr %s10506, 8
        %s10508 = scalar_lea.vmem %s3, %s10507
      $region44: #{conv2d.1} parent=39 // pred_fallthru
        _
    $region40: #{conv2d.1} parent=5 // pred_fallthru
      _
  $region6: #{conv2d.1} parent=0 // loop_footer
    %s13 = sadd.s32 1, %s9
  $region7: #{conv2d.1} parent=0 // loop_footer_branch
    %8 = sbr.rel target = $region3
  $region8: #{conv2d.1} parent=0 // loop_exit
    _

</llo_original>
